<compile_context>
chip_gen: v7x
topology: tpu7x:2x2x1
jax: 0.10.0
libtpu: 0.0.40
codegen_flags: <defaults>
</compile_context>

<pallas_src>
import functools

import jax
import jax.numpy as jnp
from jax.experimental import pallas as pl
from jax.experimental.pallas import tpu as pltpu

# ----- hyperparameters (real model width; small batch / sequence) -----
N_EMBED = 384                    # n_embed (3 * 128 lanes)
N_HEAD = 6                       # n_head
HEAD_SIZE = N_EMBED // N_HEAD    # 64
SEQ_LEN = 32                     # T (<= block_size = 256 in the PyTorch module)
BATCH = 2
HIDDEN = 4 * N_EMBED             # 1536
LN_EPS = 1e-5

# Rows of the packed (8, HIDDEN) f32 parameter-vector slab.
_ROW_LN1_G, _ROW_LN1_B, _ROW_LN2_G, _ROW_LN2_B = 0, 1, 2, 3
_ROW_BPROJ, _ROW_B2, _ROW_B1 = 4, 5, 6


def _layernorm(h, gamma, beta):
    """One-pass LayerNorm: var = E[x^2] - mean^2 (single reduction sweep)."""
    mu = jnp.mean(h, axis=-1, keepdims=True)
    ms = jnp.mean(h * h, axis=-1, keepdims=True)
    var = ms - mu * mu
    return (h - mu) * jax.lax.rsqrt(var + LN_EPS) * gamma + beta


def block_kernel(x_ref, wq_ref, wk_ref, wv_ref, wp_ref, vecs_ref,
                 w1_hbm_ref, w2_hbm_ref,
                 out_ref,
                 w1_vmem, w2_vmem, dma_sem, *, n_head):
    # ---- kick off FFN weight DMAs; they overlap LN1 + QKV + attention ----
    w1_cp = pltpu.make_async_copy(w1_hbm_ref, w1_vmem, dma_sem.at[0])
    w2_cp = pltpu.make_async_copy(w2_hbm_ref, w2_vmem, dma_sem.at[1])
    w1_cp.start()
    w2_cp.start()

    x = x_ref[...]                                   # (B, T, C) f32
    B, T, C = x.shape
    hs = C // n_head

    # Packed parameter vectors (static ref slices; cheap).
    ln1_g = vecs_ref[_ROW_LN1_G:_ROW_LN1_G + 1, :C]  # (1, C)
    ln1_b = vecs_ref[_ROW_LN1_B:_ROW_LN1_B + 1, :C]
    ln2_g = vecs_ref[_ROW_LN2_G:_ROW_LN2_G + 1, :C]
    ln2_b = vecs_ref[_ROW_LN2_B:_ROW_LN2_B + 1, :C]
    bproj = vecs_ref[_ROW_BPROJ:_ROW_BPROJ + 1, :C]
    b2 = vecs_ref[_ROW_B2:_ROW_B2 + 1, :C]
    b1 = vecs_ref[_ROW_B1:_ROW_B1 + 1, :]            # (1, HIDDEN)

    # ---- residual 1: x + MHA(LN1(x)) ----
    h = _layernorm(x, ln1_g, ln1_b)                  # f32
    h2d = h.reshape(B * T, C).astype(jnp.bfloat16)   # (B*T, C) bf16 rows

    # QKV projections: one (B*T, C) @ (C, C) MXU matmul each, f32 accumulation,
    # immediately narrowed to bf16 (no f32 q/k/v kept live).
    # 1/sqrt(head_size) is pre-folded into wq at parameter-prep time.
    q = jnp.dot(h2d, wq_ref[...],
                preferred_element_type=jnp.float32).astype(jnp.bfloat16)
    k = jnp.dot(h2d, wk_ref[...],
                preferred_element_type=jnp.float32).astype(jnp.bfloat16)
    v = jnp.dot(h2d, wv_ref[...],
                preferred_element_type=jnp.float32).astype(jnp.bfloat16)
    q = q.reshape(B, T, C)
    k = k.reshape(B, T, C)
    v = v.reshape(B, T, C)

    # Causal mask, built once (finite fill -> no -inf arithmetic).
    rows = jax.lax.broadcasted_iota(jnp.int32, (T, T), 0)
    cols = jax.lax.broadcasted_iota(jnp.int32, (T, T), 1)
    causal = cols <= rows
    neg_big = jnp.float32(-1e9)

    # Per-head attention (static 6-way unroll), batched over B with 3-D einsums.
    # Each head's output is a small bf16 slab; the output projection is done
    # once below with K=384 against the full wproj (no per-head K=64 dots, no
    # persistent f32 accumulator).
    head_outs = []
    for hd in range(n_head):
        lo = hd * hs
        qh = q[:, :, lo:lo + hs]                     # (B, T, hs) bf16
        kh = k[:, :, lo:lo + hs]
        vh = v[:, :, lo:lo + hs]
        s = jnp.einsum('bqd,bkd->bqk', qh, kh,
                       preferred_element_type=jnp.float32)       # (B, T, T) f32
        s = jnp.where(causal, s, neg_big)
        s = s - jnp.max(s, axis=-1, keepdims=True)
        p = jnp.exp(s)
        p = p * pl.reciprocal(jnp.sum(p, axis=-1, keepdims=True), approx=True)
        # dropout(p) -> identity (eval mode)
        oh = jnp.einsum('bqk,bkd->bqd', p.astype(jnp.bfloat16), vh,
                        preferred_element_type=jnp.float32)      # (B, T, hs) f32
        head_outs.append(oh.astype(jnp.bfloat16))

    o = jnp.concatenate(head_outs, axis=-1).reshape(B * T, C)    # (B*T, C) bf16
    attn = jnp.dot(o, wp_ref[...],
                   preferred_element_type=jnp.float32) + bproj   # (B*T, C) f32
    # dropout(attn) -> identity (eval mode)
    x1 = x + attn.reshape(B, T, C)                   # residual 1

    # ---- residual 2: x1 + FFN(LN2(x1)) ----
    h2 = _layernorm(x1, ln2_g, ln2_b)
    h2d2 = h2.reshape(B * T, C).astype(jnp.bfloat16)

    w1_cp.wait()                                     # w1 now resident in VMEM
    f = jnp.dot(h2d2, w1_vmem[...],
                preferred_element_type=jnp.float32) + b1         # (B*T, H) f32
    f = jnp.maximum(f, 0.0)                          # ReLU (f32)

    w2_cp.wait()                                     # w2 hidden behind 1st matmul
    f = jnp.dot(f.astype(jnp.bfloat16), w2_vmem[...],
                preferred_element_type=jnp.float32) + b2
    # dropout(f) -> identity (eval mode)
    out_ref[...] = x1 + f.reshape(B, T, C)           # residual 2


def block_forward(x, kparams):
    B, T, C = x.shape
    H = HIDDEN
    kernel = functools.partial(block_kernel, n_head=N_HEAD)
    vmem = pltpu.MemorySpace.VMEM
    # Single invocation, no grid. Static VMEM footprint < 4 MiB; the FFN
    # weights (2.25 MiB bf16) are streamed in by in-kernel DMA.
    return pl.pallas_call(
        kernel,
        out_shape=jax.ShapeDtypeStruct((B, T, C), jnp.float32),
        in_specs=[
            pl.BlockSpec(memory_space=vmem),      # x
            pl.BlockSpec(memory_space=vmem),      # wq
            pl.BlockSpec(memory_space=vmem),      # wk
            pl.BlockSpec(memory_space=vmem),      # wv
            pl.BlockSpec(memory_space=vmem),      # wproj
            pl.BlockSpec(memory_space=vmem),      # packed bias/LN vectors
            pl.BlockSpec(memory_space=pl.ANY),    # w1 (HBM; DMA'd in-kernel)
            pl.BlockSpec(memory_space=pl.ANY),    # w2 (HBM; DMA'd in-kernel)
        ],
        out_specs=pl.BlockSpec(memory_space=vmem),
        scratch_shapes=[
            pltpu.VMEM((C, H), jnp.bfloat16),     # w1 landing buffer
            pltpu.VMEM((H, C), jnp.bfloat16),     # w2 landing buffer
            pltpu.SemaphoreType.DMA((2,)),
        ],
        compiler_params=pltpu.CompilerParams(
            vmem_limit_bytes=16 * 1024 * 1024),   # honest budget, fits v7x too
    )(x,
      kparams["wq"], kparams["wk"], kparams["wv"], kparams["wproj"],
      kparams["vecs"], kparams["w1"], kparams["w2"])


def init_params(key, C):
    """f32 parameters; linear weights stored pre-transposed (in, out) for x @ W."""
    H = 4 * C
    ks = jax.random.split(key, 6)
    s = 0.02
    return {
        "wq": s * jax.random.normal(ks[0], (C, C), jnp.float32),
        "wk": s * jax.random.normal(ks[1], (C, C), jnp.float32),
        "wv": s * jax.random.normal(ks[2], (C, C), jnp.float32),
        "wproj": s * jax.random.normal(ks[3], (C, C), jnp.float32),
        "bproj": jnp.zeros((1, C), jnp.float32),
        "ln1_g": jnp.ones((1, C), jnp.float32),
        "ln1_b": jnp.zeros((1, C), jnp.float32),
        "ln2_g": jnp.ones((1, C), jnp.float32),
        "ln2_b": jnp.zeros((1, C), jnp.float32),
        "w1": s * jax.random.normal(ks[4], (C, H), jnp.float32),
        "b1": jnp.zeros((1, H), jnp.float32),
        "w2": s * jax.random.normal(ks[5], (H, C), jnp.float32),
        "b2": jnp.zeros((1, C), jnp.float32),
    }


def prepare_kernel_params(p, C):
    """One-time prep: fold 1/sqrt(head_size) into wq, bf16 matmul weights,
    and pack the seven small bias / LayerNorm vectors into one (8, H) slab."""
    hs = C // N_HEAD
    H = 4 * C
    kp = {
        "wq": (p["wq"] * hs ** (-0.5)).astype(jnp.bfloat16),
        "wk": p["wk"].astype(jnp.bfloat16),
        "wv": p["wv"].astype(jnp.bfloat16),
        "wproj": p["wproj"].astype(jnp.bfloat16),
        "w1": p["w1"].astype(jnp.bfloat16),
        "w2": p["w2"].astype(jnp.bfloat16),
    }

    def put(buf, row, vec):
        v = jnp.asarray(vec, jnp.float32).reshape(-1)
        return buf.at[row, :v.shape[0]].set(v)

    vecs = jnp.zeros((8, H), jnp.float32)
    vecs = put(vecs, _ROW_LN1_G, p["ln1_g"])
    vecs = put(vecs, _ROW_LN1_B, p["ln1_b"])
    vecs = put(vecs, _ROW_LN2_G, p["ln2_g"])
    vecs = put(vecs, _ROW_LN2_B, p["ln2_b"])
    vecs = put(vecs, _ROW_BPROJ, p["bproj"])
    vecs = put(vecs, _ROW_B2, p["b2"])
    vecs = put(vecs, _ROW_B1, p["b1"])
    kp["vecs"] = vecs
    return kp


def reference_forward(x, p):
    """Pure-JAX f32 reference with the PyTorch module's semantics (eval mode)."""
    def ln(h, g, b):
        mu = jnp.mean(h, axis=-1, keepdims=True)
        var = jnp.mean((h - mu) ** 2, axis=-1, keepdims=True)
        return (h - mu) / jnp.sqrt(var + LN_EPS) * g[0] + b[0]

    B, T, C = x.shape
    hs = C // N_HEAD
    h = ln(x, p["ln1_g"], p["ln1_b"])
    q = h @ p["wq"]; k = h @ p["wk"]; v = h @ p["wv"]
    mask = jnp.tril(jnp.ones((T, T), bool))
    outs = []
    for hd in range(N_HEAD):
        sl = slice(hd * hs, (hd + 1) * hs)
        wei = (q[..., sl] @ jnp.swapaxes(k[..., sl], -1, -2)) * hs ** (-0.5)
        wei = jnp.where(mask, wei, -jnp.inf)
        wei = jax.nn.softmax(wei, axis=-1)
        outs.append(wei @ v[..., sl])
    attn = jnp.concatenate(outs, axis=-1) @ p["wproj"] + p["bproj"][0]
    x1 = x + attn
    h2 = ln(x1, p["ln2_g"], p["ln2_b"])
    f = jnp.maximum(h2 @ p["w1"] + p["b1"][0], 0.0) @ p["w2"] + p["b2"][0]
    return x1 + f


if __name__ == "__main__":
    key = jax.random.PRNGKey(0)
    kx, kp = jax.random.split(key)
    x = jax.random.normal(kx, (BATCH, SEQ_LEN, N_EMBED), jnp.float32)
    params = init_params(kp, N_EMBED)
    kernel_params = prepare_kernel_params(params, N_EMBED)

    out = block_forward(x, kernel_params)
    out = jax.block_until_ready(out)

    ref = reference_forward(x, params)
    assert out.shape == (BATCH, SEQ_LEN, N_EMBED)
    assert bool(jnp.all(jnp.isfinite(out)))
    # bf16 matmul operands + approximate reciprocal in the kernel vs. an f32
    # reference -> compare with a modest tolerance.
    assert jnp.allclose(out, ref, rtol=2e-2, atol=2e-2), float(
        jnp.max(jnp.abs(out - ref)))

    print("KERNEL_OK")
</pallas_src>

<mosaic_0001>
module attributes {stable_mosaic.version = 11 : i64} {
  func.func @block_kernel(%arg0: memref<2x32x384xf32, #tpu.memory_space<vmem>>, %arg1: memref<384x384xbf16, #tpu.memory_space<vmem>>, %arg2: memref<384x384xbf16, #tpu.memory_space<vmem>>, %arg3: memref<384x384xbf16, #tpu.memory_space<vmem>>, %arg4: memref<384x384xbf16, #tpu.memory_space<vmem>>, %arg5: memref<8x1536xf32, #tpu.memory_space<vmem>>, %arg6: memref<384x1536xbf16, #tpu.memory_space<any>>, %arg7: memref<1536x384xbf16, #tpu.memory_space<any>>, %arg8: memref<2x32x384xf32, #tpu.memory_space<vmem>>, %arg9: memref<384x1536xbf16, #tpu.memory_space<vmem>>, %arg10: memref<1536x384xbf16, #tpu.memory_space<vmem>>, %arg11: memref<2x!tpu.dma_semaphore, #tpu.memory_space<semaphore_mem>>) attributes {dimension_semantics = [], scalar_prefetch = 0 : i64, scratch_operands = 3 : i64, tpu.core_type = #tpu.core_type<tc>} {
    %c0_i32 = arith.constant 0 : i32
    %0 = tpu.memref_slice %arg11[%c0_i32] : memref<2x!tpu.dma_semaphore, #tpu.memory_space<semaphore_mem>> -> memref<1x!tpu.dma_semaphore, #tpu.memory_space<semaphore_mem>>
    %1 = tpu.memref_squeeze %0 : memref<1x!tpu.dma_semaphore, #tpu.memory_space<semaphore_mem>> -> memref<!tpu.dma_semaphore, #tpu.memory_space<semaphore_mem>>
    tpu.enqueue_dma source(%arg6 : memref<384x1536xbf16, #tpu.memory_space<any>>) target(%arg9 : memref<384x1536xbf16, #tpu.memory_space<vmem>>) target_semaphore(%1 : memref<!tpu.dma_semaphore, #tpu.memory_space<semaphore_mem>>)
    %c1_i32 = arith.constant 1 : i32
    %2 = tpu.memref_slice %arg11[%c1_i32] : memref<2x!tpu.dma_semaphore, #tpu.memory_space<semaphore_mem>> -> memref<1x!tpu.dma_semaphore, #tpu.memory_space<semaphore_mem>>
    %3 = tpu.memref_squeeze %2 : memref<1x!tpu.dma_semaphore, #tpu.memory_space<semaphore_mem>> -> memref<!tpu.dma_semaphore, #tpu.memory_space<semaphore_mem>>
    tpu.enqueue_dma source(%arg7 : memref<1536x384xbf16, #tpu.memory_space<any>>) target(%arg10 : memref<1536x384xbf16, #tpu.memory_space<vmem>>) target_semaphore(%3 : memref<!tpu.dma_semaphore, #tpu.memory_space<semaphore_mem>>)
    %c0 = arith.constant 0 : index
    %c0_0 = arith.constant 0 : index
    %c0_1 = arith.constant 0 : index
    %4 = vector.load %arg0[%c0, %c0_0, %c0_1] : memref<2x32x384xf32, #tpu.memory_space<vmem>>, vector<2x32x384xf32>
    %c0_2 = arith.constant 0 : index
    %c0_3 = arith.constant 0 : index
    %5 = vector.load %arg5[%c0_2, %c0_3] : memref<8x1536xf32, #tpu.memory_space<vmem>>, vector<1x384xf32>
    %c1 = arith.constant 1 : index
    %c0_4 = arith.constant 0 : index
    %6 = vector.load %arg5[%c1, %c0_4] : memref<8x1536xf32, #tpu.memory_space<vmem>>, vector<1x384xf32>
    %c2 = arith.constant 2 : index
    %c0_5 = arith.constant 0 : index
    %7 = vector.load %arg5[%c2, %c0_5] : memref<8x1536xf32, #tpu.memory_space<vmem>>, vector<1x384xf32>
    %c3 = arith.constant 3 : index
    %c0_6 = arith.constant 0 : index
    %8 = vector.load %arg5[%c3, %c0_6] : memref<8x1536xf32, #tpu.memory_space<vmem>>, vector<1x384xf32>
    %c4 = arith.constant 4 : index
    %c0_7 = arith.constant 0 : index
    %9 = vector.load %arg5[%c4, %c0_7] : memref<8x1536xf32, #tpu.memory_space<vmem>>, vector<1x384xf32>
    %c5 = arith.constant 5 : index
    %c0_8 = arith.constant 0 : index
    %10 = vector.load %arg5[%c5, %c0_8] : memref<8x1536xf32, #tpu.memory_space<vmem>>, vector<1x384xf32>
    %c6 = arith.constant 6 : index
    %c0_9 = arith.constant 0 : index
    %11 = vector.load %arg5[%c6, %c0_9] : memref<8x1536xf32, #tpu.memory_space<vmem>>, vector<1x1536xf32>
    %cst = arith.constant dense<0.000000e+00> : vector<2x32xf32>
    %12 = vector.multi_reduction <add>, %4, %cst [2] : vector<2x32x384xf32> to vector<2x32xf32>
    %13 = vector.shape_cast %12 : vector<2x32xf32> to vector<2x32x1xf32>
    %cst_10 = arith.constant 3.840000e+02 : f32
    %14 = vector.broadcast %cst_10 : f32 to vector<2x32x1xf32>
    %15 = arith.divf %13, %14 : vector<2x32x1xf32>
    %16 = arith.mulf %4, %4 : vector<2x32x384xf32>
    %cst_11 = arith.constant dense<0.000000e+00> : vector<2x32xf32>
    %17 = vector.multi_reduction <add>, %16, %cst_11 [2] : vector<2x32x384xf32> to vector<2x32xf32>
    %18 = vector.shape_cast %17 : vector<2x32xf32> to vector<2x32x1xf32>
    %cst_12 = arith.constant 3.840000e+02 : f32
    %19 = vector.broadcast %cst_12 : f32 to vector<2x32x1xf32>
    %20 = arith.divf %18, %19 : vector<2x32x1xf32>
    %21 = arith.mulf %15, %15 : vector<2x32x1xf32>
    %22 = arith.subf %20, %21 : vector<2x32x1xf32>
    %23 = vector.broadcast %15 : vector<2x32x1xf32> to vector<2x32x384xf32>
    %24 = arith.subf %4, %23 : vector<2x32x384xf32>
    %cst_13 = arith.constant 9.99999974E-6 : f32
    %25 = vector.broadcast %cst_13 : f32 to vector<2x32x1xf32>
    %26 = arith.addf %22, %25 : vector<2x32x1xf32>
    %27 = math.rsqrt %26 : vector<2x32x1xf32>
    %28 = vector.broadcast %27 : vector<2x32x1xf32> to vector<2x32x384xf32>
    %29 = arith.mulf %24, %28 : vector<2x32x384xf32>
    %30 = vector.shape_cast %5 : vector<1x384xf32> to vector<1x1x384xf32>
    %31 = vector.broadcast %30 : vector<1x1x384xf32> to vector<2x32x384xf32>
    %32 = arith.mulf %29, %31 : vector<2x32x384xf32>
    %33 = vector.shape_cast %6 : vector<1x384xf32> to vector<1x1x384xf32>
    %34 = vector.broadcast %33 : vector<1x1x384xf32> to vector<2x32x384xf32>
    %35 = arith.addf %32, %34 : vector<2x32x384xf32>
    %36 = vector.shape_cast %35 : vector<2x32x384xf32> to vector<64x384xf32>
    %37 = arith.truncf %36 : vector<64x384xf32> to vector<64x384xbf16>
    %c0_14 = arith.constant 0 : index
    %c0_15 = arith.constant 0 : index
    %38 = vector.load %arg1[%c0_14, %c0_15] : memref<384x384xbf16, #tpu.memory_space<vmem>>, vector<384x384xbf16>
    %cst_16 = arith.constant dense<0.000000e+00> : vector<64x384xf32>
    %39 = tpu.matmul %37, %38, %cst_16 {dimension_numbers = #tpu.dot_dimension_numbers<[1], [0], [0], [1], [0, 0, 1, 1], [], []>} : vector<64x384xbf16>, vector<384x384xbf16>, vector<64x384xf32> -> vector<64x384xf32>
    %40 = arith.truncf %39 : vector<64x384xf32> to vector<64x384xbf16>
    %c0_17 = arith.constant 0 : index
    %c0_18 = arith.constant 0 : index
    %41 = vector.load %arg2[%c0_17, %c0_18] : memref<384x384xbf16, #tpu.memory_space<vmem>>, vector<384x384xbf16>
    %cst_19 = arith.constant dense<0.000000e+00> : vector<64x384xf32>
    %42 = tpu.matmul %37, %41, %cst_19 {dimension_numbers = #tpu.dot_dimension_numbers<[1], [0], [0], [1], [0, 0, 1, 1], [], []>} : vector<64x384xbf16>, vector<384x384xbf16>, vector<64x384xf32> -> vector<64x384xf32>
    %43 = arith.truncf %42 : vector<64x384xf32> to vector<64x384xbf16>
    %c0_20 = arith.constant 0 : index
    %c0_21 = arith.constant 0 : index
    %44 = vector.load %arg3[%c0_20, %c0_21] : memref<384x384xbf16, #tpu.memory_space<vmem>>, vector<384x384xbf16>
    %cst_22 = arith.constant dense<0.000000e+00> : vector<64x384xf32>
    %45 = tpu.matmul %37, %44, %cst_22 {dimension_numbers = #tpu.dot_dimension_numbers<[1], [0], [0], [1], [0, 0, 1, 1], [], []>} : vector<64x384xbf16>, vector<384x384xbf16>, vector<64x384xf32> -> vector<64x384xf32>
    %46 = arith.truncf %45 : vector<64x384xf32> to vector<64x384xbf16>
    %47 = vector.shape_cast %40 : vector<64x384xbf16> to vector<2x32x384xbf16>
    %48 = vector.shape_cast %43 : vector<64x384xbf16> to vector<2x32x384xbf16>
    %49 = vector.shape_cast %46 : vector<64x384xbf16> to vector<2x32x384xbf16>
    %50 = tpu.iota {dimensions = array<i32: 0>} : vector<32x32xi32>
    %51 = tpu.iota {dimensions = array<i32: 1>} : vector<32x32xi32>
    %52 = arith.cmpi sle, %51, %50 : vector<32x32xi32>
    %53 = vector.extract_strided_slice %47 {offsets = [0, 0, 0], sizes = [2, 32, 64], strides = [1, 1, 1]} : vector<2x32x384xbf16> to vector<2x32x64xbf16>
    %54 = vector.extract_strided_slice %48 {offsets = [0, 0, 0], sizes = [2, 32, 64], strides = [1, 1, 1]} : vector<2x32x384xbf16> to vector<2x32x64xbf16>
    %55 = vector.extract_strided_slice %49 {offsets = [0, 0, 0], sizes = [2, 32, 64], strides = [1, 1, 1]} : vector<2x32x384xbf16> to vector<2x32x64xbf16>
    "tpu.trace_start"() <{level = 10 : i32, message = "bqd,bkd->bqk"}> : () -> ()
    %cst_23 = arith.constant dense<0.000000e+00> : vector<2x32x32xf32>
    %56 = tpu.matmul %53, %54, %cst_23 {dimension_numbers = #tpu.dot_dimension_numbers<[2], [2], [1], [1], [0, 0, 0, 1, 1, 1], [0], [0]>} : vector<2x32x64xbf16>, vector<2x32x64xbf16>, vector<2x32x32xf32> -> vector<2x32x32xf32>
    %cst_24 = arith.constant -1.000000e+09 : f32
    "tpu.trace_stop"() : () -> ()
    %57 = vector.shape_cast %52 : vector<32x32xi1> to vector<1x32x32xi1>
    %58 = vector.broadcast %57 : vector<1x32x32xi1> to vector<2x32x32xi1>
    %59 = vector.broadcast %cst_24 : f32 to vector<2x32x32xf32>
    %60 = arith.select %58, %56, %59 : vector<2x32x32xi1>, vector<2x32x32xf32>
    %cst_25 = arith.constant dense<0xFF800000> : vector<2x32xf32>
    %61 = vector.multi_reduction <maximumf>, %60, %cst_25 [2] : vector<2x32x32xf32> to vector<2x32xf32>
    %62 = vector.shape_cast %61 : vector<2x32xf32> to vector<2x32x1xf32>
    %63 = vector.broadcast %62 : vector<2x32x1xf32> to vector<2x32x32xf32>
    %64 = arith.subf %60, %63 : vector<2x32x32xf32>
    %65 = math.exp %64 : vector<2x32x32xf32>
    %cst_26 = arith.constant dense<0.000000e+00> : vector<2x32xf32>
    %66 = vector.multi_reduction <add>, %65, %cst_26 [2] : vector<2x32x32xf32> to vector<2x32xf32>
    %67 = vector.shape_cast %66 : vector<2x32xf32> to vector<2x32x1xf32>
    %68 = tpu.reciprocal %67 {approx = true} : vector<2x32x1xf32> -> vector<2x32x1xf32>
    %69 = vector.broadcast %68 : vector<2x32x1xf32> to vector<2x32x32xf32>
    %70 = arith.mulf %65, %69 : vector<2x32x32xf32>
    %71 = arith.truncf %70 : vector<2x32x32xf32> to vector<2x32x32xbf16>
    "tpu.trace_start"() <{level = 10 : i32, message = "bqk,bkd->bqd"}> : () -> ()
    %cst_27 = arith.constant dense<0.000000e+00> : vector<2x32x64xf32>
    %72 = tpu.matmul %71, %55, %cst_27 {dimension_numbers = #tpu.dot_dimension_numbers<[2], [1], [1], [2], [0, 0, 0, 1, 1, 2], [0], [0]>} : vector<2x32x32xbf16>, vector<2x32x64xbf16>, vector<2x32x64xf32> -> vector<2x32x64xf32>
    "tpu.trace_stop"() : () -> ()
    %73 = arith.truncf %72 : vector<2x32x64xf32> to vector<2x32x64xbf16>
    %74 = vector.extract_strided_slice %47 {offsets = [0, 0, 64], sizes = [2, 32, 64], strides = [1, 1, 1]} : vector<2x32x384xbf16> to vector<2x32x64xbf16>
    %75 = vector.extract_strided_slice %48 {offsets = [0, 0, 64], sizes = [2, 32, 64], strides = [1, 1, 1]} : vector<2x32x384xbf16> to vector<2x32x64xbf16>
    %76 = vector.extract_strided_slice %49 {offsets = [0, 0, 64], sizes = [2, 32, 64], strides = [1, 1, 1]} : vector<2x32x384xbf16> to vector<2x32x64xbf16>
    "tpu.trace_start"() <{level = 10 : i32, message = "bqd,bkd->bqk"}> : () -> ()
    %cst_28 = arith.constant dense<0.000000e+00> : vector<2x32x32xf32>
    %77 = tpu.matmul %74, %75, %cst_28 {dimension_numbers = #tpu.dot_dimension_numbers<[2], [2], [1], [1], [0, 0, 0, 1, 1, 1], [0], [0]>} : vector<2x32x64xbf16>, vector<2x32x64xbf16>, vector<2x32x32xf32> -> vector<2x32x32xf32>
    %cst_29 = arith.constant -1.000000e+09 : f32
    "tpu.trace_stop"() : () -> ()
    %78 = vector.shape_cast %52 : vector<32x32xi1> to vector<1x32x32xi1>
    %79 = vector.broadcast %78 : vector<1x32x32xi1> to vector<2x32x32xi1>
    %80 = vector.broadcast %cst_29 : f32 to vector<2x32x32xf32>
    %81 = arith.select %79, %77, %80 : vector<2x32x32xi1>, vector<2x32x32xf32>
    %cst_30 = arith.constant dense<0xFF800000> : vector<2x32xf32>
    %82 = vector.multi_reduction <maximumf>, %81, %cst_30 [2] : vector<2x32x32xf32> to vector<2x32xf32>
    %83 = vector.shape_cast %82 : vector<2x32xf32> to vector<2x32x1xf32>
    %84 = vector.broadcast %83 : vector<2x32x1xf32> to vector<2x32x32xf32>
    %85 = arith.subf %81, %84 : vector<2x32x32xf32>
    %86 = math.exp %85 : vector<2x32x32xf32>
    %cst_31 = arith.constant dense<0.000000e+00> : vector<2x32xf32>
    %87 = vector.multi_reduction <add>, %86, %cst_31 [2] : vector<2x32x32xf32> to vector<2x32xf32>
    %88 = vector.shape_cast %87 : vector<2x32xf32> to vector<2x32x1xf32>
    %89 = tpu.reciprocal %88 {approx = true} : vector<2x32x1xf32> -> vector<2x32x1xf32>
    %90 = vector.broadcast %89 : vector<2x32x1xf32> to vector<2x32x32xf32>
    %91 = arith.mulf %86, %90 : vector<2x32x32xf32>
    %92 = arith.truncf %91 : vector<2x32x32xf32> to vector<2x32x32xbf16>
    "tpu.trace_start"() <{level = 10 : i32, message = "bqk,bkd->bqd"}> : () -> ()
    %cst_32 = arith.constant dense<0.000000e+00> : vector<2x32x64xf32>
    %93 = tpu.matmul %92, %76, %cst_32 {dimension_numbers = #tpu.dot_dimension_numbers<[2], [1], [1], [2], [0, 0, 0, 1, 1, 2], [0], [0]>} : vector<2x32x32xbf16>, vector<2x32x64xbf16>, vector<2x32x64xf32> -> vector<2x32x64xf32>
    "tpu.trace_stop"() : () -> ()
    %94 = arith.truncf %93 : vector<2x32x64xf32> to vector<2x32x64xbf16>
    %95 = vector.extract_strided_slice %47 {offsets = [0, 0, 128], sizes = [2, 32, 64], strides = [1, 1, 1]} : vector<2x32x384xbf16> to vector<2x32x64xbf16>
    %96 = vector.extract_strided_slice %48 {offsets = [0, 0, 128], sizes = [2, 32, 64], strides = [1, 1, 1]} : vector<2x32x384xbf16> to vector<2x32x64xbf16>
    %97 = vector.extract_strided_slice %49 {offsets = [0, 0, 128], sizes = [2, 32, 64], strides = [1, 1, 1]} : vector<2x32x384xbf16> to vector<2x32x64xbf16>
    "tpu.trace_start"() <{level = 10 : i32, message = "bqd,bkd->bqk"}> : () -> ()
    %cst_33 = arith.constant dense<0.000000e+00> : vector<2x32x32xf32>
    %98 = tpu.matmul %95, %96, %cst_33 {dimension_numbers = #tpu.dot_dimension_numbers<[2], [2], [1], [1], [0, 0, 0, 1, 1, 1], [0], [0]>} : vector<2x32x64xbf16>, vector<2x32x64xbf16>, vector<2x32x32xf32> -> vector<2x32x32xf32>
    %cst_34 = arith.constant -1.000000e+09 : f32
    "tpu.trace_stop"() : () -> ()
    %99 = vector.shape_cast %52 : vector<32x32xi1> to vector<1x32x32xi1>
    %100 = vector.broadcast %99 : vector<1x32x32xi1> to vector<2x32x32xi1>
    %101 = vector.broadcast %cst_34 : f32 to vector<2x32x32xf32>
    %102 = arith.select %100, %98, %101 : vector<2x32x32xi1>, vector<2x32x32xf32>
    %cst_35 = arith.constant dense<0xFF800000> : vector<2x32xf32>
    %103 = vector.multi_reduction <maximumf>, %102, %cst_35 [2] : vector<2x32x32xf32> to vector<2x32xf32>
    %104 = vector.shape_cast %103 : vector<2x32xf32> to vector<2x32x1xf32>
    %105 = vector.broadcast %104 : vector<2x32x1xf32> to vector<2x32x32xf32>
    %106 = arith.subf %102, %105 : vector<2x32x32xf32>
    %107 = math.exp %106 : vector<2x32x32xf32>
    %cst_36 = arith.constant dense<0.000000e+00> : vector<2x32xf32>
    %108 = vector.multi_reduction <add>, %107, %cst_36 [2] : vector<2x32x32xf32> to vector<2x32xf32>
    %109 = vector.shape_cast %108 : vector<2x32xf32> to vector<2x32x1xf32>
    %110 = tpu.reciprocal %109 {approx = true} : vector<2x32x1xf32> -> vector<2x32x1xf32>
    %111 = vector.broadcast %110 : vector<2x32x1xf32> to vector<2x32x32xf32>
    %112 = arith.mulf %107, %111 : vector<2x32x32xf32>
    %113 = arith.truncf %112 : vector<2x32x32xf32> to vector<2x32x32xbf16>
    "tpu.trace_start"() <{level = 10 : i32, message = "bqk,bkd->bqd"}> : () -> ()
    %cst_37 = arith.constant dense<0.000000e+00> : vector<2x32x64xf32>
    %114 = tpu.matmul %113, %97, %cst_37 {dimension_numbers = #tpu.dot_dimension_numbers<[2], [1], [1], [2], [0, 0, 0, 1, 1, 2], [0], [0]>} : vector<2x32x32xbf16>, vector<2x32x64xbf16>, vector<2x32x64xf32> -> vector<2x32x64xf32>
    "tpu.trace_stop"() : () -> ()
    %115 = arith.truncf %114 : vector<2x32x64xf32> to vector<2x32x64xbf16>
    %116 = vector.extract_strided_slice %47 {offsets = [0, 0, 192], sizes = [2, 32, 64], strides = [1, 1, 1]} : vector<2x32x384xbf16> to vector<2x32x64xbf16>
    %117 = vector.extract_strided_slice %48 {offsets = [0, 0, 192], sizes = [2, 32, 64], strides = [1, 1, 1]} : vector<2x32x384xbf16> to vector<2x32x64xbf16>
    %118 = vector.extract_strided_slice %49 {offsets = [0, 0, 192], sizes = [2, 32, 64], strides = [1, 1, 1]} : vector<2x32x384xbf16> to vector<2x32x64xbf16>
    "tpu.trace_start"() <{level = 10 : i32, message = "bqd,bkd->bqk"}> : () -> ()
    %cst_38 = arith.constant dense<0.000000e+00> : vector<2x32x32xf32>
    %119 = tpu.matmul %116, %117, %cst_38 {dimension_numbers = #tpu.dot_dimension_numbers<[2], [2], [1], [1], [0, 0, 0, 1, 1, 1], [0], [0]>} : vector<2x32x64xbf16>, vector<2x32x64xbf16>, vector<2x32x32xf32> -> vector<2x32x32xf32>
    %cst_39 = arith.constant -1.000000e+09 : f32
    "tpu.trace_stop"() : () -> ()
    %120 = vector.shape_cast %52 : vector<32x32xi1> to vector<1x32x32xi1>
    %121 = vector.broadcast %120 : vector<1x32x32xi1> to vector<2x32x32xi1>
    %122 = vector.broadcast %cst_39 : f32 to vector<2x32x32xf32>
    %123 = arith.select %121, %119, %122 : vector<2x32x32xi1>, vector<2x32x32xf32>
    %cst_40 = arith.constant dense<0xFF800000> : vector<2x32xf32>
    %124 = vector.multi_reduction <maximumf>, %123, %cst_40 [2] : vector<2x32x32xf32> to vector<2x32xf32>
    %125 = vector.shape_cast %124 : vector<2x32xf32> to vector<2x32x1xf32>
    %126 = vector.broadcast %125 : vector<2x32x1xf32> to vector<2x32x32xf32>
    %127 = arith.subf %123, %126 : vector<2x32x32xf32>
    %128 = math.exp %127 : vector<2x32x32xf32>
    %cst_41 = arith.constant dense<0.000000e+00> : vector<2x32xf32>
    %129 = vector.multi_reduction <add>, %128, %cst_41 [2] : vector<2x32x32xf32> to vector<2x32xf32>
    %130 = vector.shape_cast %129 : vector<2x32xf32> to vector<2x32x1xf32>
    %131 = tpu.reciprocal %130 {approx = true} : vector<2x32x1xf32> -> vector<2x32x1xf32>
    %132 = vector.broadcast %131 : vector<2x32x1xf32> to vector<2x32x32xf32>
    %133 = arith.mulf %128, %132 : vector<2x32x32xf32>
    %134 = arith.truncf %133 : vector<2x32x32xf32> to vector<2x32x32xbf16>
    "tpu.trace_start"() <{level = 10 : i32, message = "bqk,bkd->bqd"}> : () -> ()
    %cst_42 = arith.constant dense<0.000000e+00> : vector<2x32x64xf32>
    %135 = tpu.matmul %134, %118, %cst_42 {dimension_numbers = #tpu.dot_dimension_numbers<[2], [1], [1], [2], [0, 0, 0, 1, 1, 2], [0], [0]>} : vector<2x32x32xbf16>, vector<2x32x64xbf16>, vector<2x32x64xf32> -> vector<2x32x64xf32>
    "tpu.trace_stop"() : () -> ()
    %136 = arith.truncf %135 : vector<2x32x64xf32> to vector<2x32x64xbf16>
    %137 = vector.extract_strided_slice %47 {offsets = [0, 0, 256], sizes = [2, 32, 64], strides = [1, 1, 1]} : vector<2x32x384xbf16> to vector<2x32x64xbf16>
    %138 = vector.extract_strided_slice %48 {offsets = [0, 0, 256], sizes = [2, 32, 64], strides = [1, 1, 1]} : vector<2x32x384xbf16> to vector<2x32x64xbf16>
    %139 = vector.extract_strided_slice %49 {offsets = [0, 0, 256], sizes = [2, 32, 64], strides = [1, 1, 1]} : vector<2x32x384xbf16> to vector<2x32x64xbf16>
    "tpu.trace_start"() <{level = 10 : i32, message = "bqd,bkd->bqk"}> : () -> ()
    %cst_43 = arith.constant dense<0.000000e+00> : vector<2x32x32xf32>
    %140 = tpu.matmul %137, %138, %cst_43 {dimension_numbers = #tpu.dot_dimension_numbers<[2], [2], [1], [1], [0, 0, 0, 1, 1, 1], [0], [0]>} : vector<2x32x64xbf16>, vector<2x32x64xbf16>, vector<2x32x32xf32> -> vector<2x32x32xf32>
    %cst_44 = arith.constant -1.000000e+09 : f32
    "tpu.trace_stop"() : () -> ()
    %141 = vector.shape_cast %52 : vector<32x32xi1> to vector<1x32x32xi1>
    %142 = vector.broadcast %141 : vector<1x32x32xi1> to vector<2x32x32xi1>
    %143 = vector.broadcast %cst_44 : f32 to vector<2x32x32xf32>
    %144 = arith.select %142, %140, %143 : vector<2x32x32xi1>, vector<2x32x32xf32>
    %cst_45 = arith.constant dense<0xFF800000> : vector<2x32xf32>
    %145 = vector.multi_reduction <maximumf>, %144, %cst_45 [2] : vector<2x32x32xf32> to vector<2x32xf32>
    %146 = vector.shape_cast %145 : vector<2x32xf32> to vector<2x32x1xf32>
    %147 = vector.broadcast %146 : vector<2x32x1xf32> to vector<2x32x32xf32>
    %148 = arith.subf %144, %147 : vector<2x32x32xf32>
    %149 = math.exp %148 : vector<2x32x32xf32>
    %cst_46 = arith.constant dense<0.000000e+00> : vector<2x32xf32>
    %150 = vector.multi_reduction <add>, %149, %cst_46 [2] : vector<2x32x32xf32> to vector<2x32xf32>
    %151 = vector.shape_cast %150 : vector<2x32xf32> to vector<2x32x1xf32>
    %152 = tpu.reciprocal %151 {approx = true} : vector<2x32x1xf32> -> vector<2x32x1xf32>
    %153 = vector.broadcast %152 : vector<2x32x1xf32> to vector<2x32x32xf32>
    %154 = arith.mulf %149, %153 : vector<2x32x32xf32>
    %155 = arith.truncf %154 : vector<2x32x32xf32> to vector<2x32x32xbf16>
    "tpu.trace_start"() <{level = 10 : i32, message = "bqk,bkd->bqd"}> : () -> ()
    %cst_47 = arith.constant dense<0.000000e+00> : vector<2x32x64xf32>
    %156 = tpu.matmul %155, %139, %cst_47 {dimension_numbers = #tpu.dot_dimension_numbers<[2], [1], [1], [2], [0, 0, 0, 1, 1, 2], [0], [0]>} : vector<2x32x32xbf16>, vector<2x32x64xbf16>, vector<2x32x64xf32> -> vector<2x32x64xf32>
    "tpu.trace_stop"() : () -> ()
    %157 = arith.truncf %156 : vector<2x32x64xf32> to vector<2x32x64xbf16>
    %158 = vector.extract_strided_slice %47 {offsets = [0, 0, 320], sizes = [2, 32, 64], strides = [1, 1, 1]} : vector<2x32x384xbf16> to vector<2x32x64xbf16>
    %159 = vector.extract_strided_slice %48 {offsets = [0, 0, 320], sizes = [2, 32, 64], strides = [1, 1, 1]} : vector<2x32x384xbf16> to vector<2x32x64xbf16>
    %160 = vector.extract_strided_slice %49 {offsets = [0, 0, 320], sizes = [2, 32, 64], strides = [1, 1, 1]} : vector<2x32x384xbf16> to vector<2x32x64xbf16>
    "tpu.trace_start"() <{level = 10 : i32, message = "bqd,bkd->bqk"}> : () -> ()
    %cst_48 = arith.constant dense<0.000000e+00> : vector<2x32x32xf32>
    %161 = tpu.matmul %158, %159, %cst_48 {dimension_numbers = #tpu.dot_dimension_numbers<[2], [2], [1], [1], [0, 0, 0, 1, 1, 1], [0], [0]>} : vector<2x32x64xbf16>, vector<2x32x64xbf16>, vector<2x32x32xf32> -> vector<2x32x32xf32>
    %cst_49 = arith.constant -1.000000e+09 : f32
    "tpu.trace_stop"() : () -> ()
    %162 = vector.shape_cast %52 : vector<32x32xi1> to vector<1x32x32xi1>
    %163 = vector.broadcast %162 : vector<1x32x32xi1> to vector<2x32x32xi1>
    %164 = vector.broadcast %cst_49 : f32 to vector<2x32x32xf32>
    %165 = arith.select %163, %161, %164 : vector<2x32x32xi1>, vector<2x32x32xf32>
    %cst_50 = arith.constant dense<0xFF800000> : vector<2x32xf32>
    %166 = vector.multi_reduction <maximumf>, %165, %cst_50 [2] : vector<2x32x32xf32> to vector<2x32xf32>
    %167 = vector.shape_cast %166 : vector<2x32xf32> to vector<2x32x1xf32>
    %168 = vector.broadcast %167 : vector<2x32x1xf32> to vector<2x32x32xf32>
    %169 = arith.subf %165, %168 : vector<2x32x32xf32>
    %170 = math.exp %169 : vector<2x32x32xf32>
    %cst_51 = arith.constant dense<0.000000e+00> : vector<2x32xf32>
    %171 = vector.multi_reduction <add>, %170, %cst_51 [2] : vector<2x32x32xf32> to vector<2x32xf32>
    %172 = vector.shape_cast %171 : vector<2x32xf32> to vector<2x32x1xf32>
    %173 = tpu.reciprocal %172 {approx = true} : vector<2x32x1xf32> -> vector<2x32x1xf32>
    %174 = vector.broadcast %173 : vector<2x32x1xf32> to vector<2x32x32xf32>
    %175 = arith.mulf %170, %174 : vector<2x32x32xf32>
    %176 = arith.truncf %175 : vector<2x32x32xf32> to vector<2x32x32xbf16>
    "tpu.trace_start"() <{level = 10 : i32, message = "bqk,bkd->bqd"}> : () -> ()
    %cst_52 = arith.constant dense<0.000000e+00> : vector<2x32x64xf32>
    %177 = tpu.matmul %176, %160, %cst_52 {dimension_numbers = #tpu.dot_dimension_numbers<[2], [1], [1], [2], [0, 0, 0, 1, 1, 2], [0], [0]>} : vector<2x32x32xbf16>, vector<2x32x64xbf16>, vector<2x32x64xf32> -> vector<2x32x64xf32>
    "tpu.trace_stop"() : () -> ()
    %178 = arith.truncf %177 : vector<2x32x64xf32> to vector<2x32x64xbf16>
    %179 = tpu.concatenate %73, %94, %115, %136, %157, %178 in 2 : vector<2x32x64xbf16>, vector<2x32x64xbf16>, vector<2x32x64xbf16>, vector<2x32x64xbf16>, vector<2x32x64xbf16>, vector<2x32x64xbf16> -> vector<2x32x384xbf16>
    %180 = vector.shape_cast %179 : vector<2x32x384xbf16> to vector<64x384xbf16>
    %c0_53 = arith.constant 0 : index
    %c0_54 = arith.constant 0 : index
    %181 = vector.load %arg4[%c0_53, %c0_54] : memref<384x384xbf16, #tpu.memory_space<vmem>>, vector<384x384xbf16>
    %cst_55 = arith.constant dense<0.000000e+00> : vector<64x384xf32>
    %182 = tpu.matmul %180, %181, %cst_55 {dimension_numbers = #tpu.dot_dimension_numbers<[1], [0], [0], [1], [0, 0, 1, 1], [], []>} : vector<64x384xbf16>, vector<384x384xbf16>, vector<64x384xf32> -> vector<64x384xf32>
    %183 = vector.broadcast %9 : vector<1x384xf32> to vector<64x384xf32>
    %184 = arith.addf %182, %183 : vector<64x384xf32>
    %185 = vector.shape_cast %184 : vector<64x384xf32> to vector<2x32x384xf32>
    %186 = arith.addf %4, %185 : vector<2x32x384xf32>
    %cst_56 = arith.constant dense<0.000000e+00> : vector<2x32xf32>
    %187 = vector.multi_reduction <add>, %186, %cst_56 [2] : vector<2x32x384xf32> to vector<2x32xf32>
    %188 = vector.shape_cast %187 : vector<2x32xf32> to vector<2x32x1xf32>
    %cst_57 = arith.constant 3.840000e+02 : f32
    %189 = vector.broadcast %cst_57 : f32 to vector<2x32x1xf32>
    %190 = arith.divf %188, %189 : vector<2x32x1xf32>
    %191 = arith.mulf %186, %186 : vector<2x32x384xf32>
    %cst_58 = arith.constant dense<0.000000e+00> : vector<2x32xf32>
    %192 = vector.multi_reduction <add>, %191, %cst_58 [2] : vector<2x32x384xf32> to vector<2x32xf32>
    %193 = vector.shape_cast %192 : vector<2x32xf32> to vector<2x32x1xf32>
    %cst_59 = arith.constant 3.840000e+02 : f32
    %194 = vector.broadcast %cst_59 : f32 to vector<2x32x1xf32>
    %195 = arith.divf %193, %194 : vector<2x32x1xf32>
    %196 = arith.mulf %190, %190 : vector<2x32x1xf32>
    %197 = arith.subf %195, %196 : vector<2x32x1xf32>
    %198 = vector.broadcast %190 : vector<2x32x1xf32> to vector<2x32x384xf32>
    %199 = arith.subf %186, %198 : vector<2x32x384xf32>
    %cst_60 = arith.constant 9.99999974E-6 : f32
    %200 = vector.broadcast %cst_60 : f32 to vector<2x32x1xf32>
    %201 = arith.addf %197, %200 : vector<2x32x1xf32>
    %202 = math.rsqrt %201 : vector<2x32x1xf32>
    %203 = vector.broadcast %202 : vector<2x32x1xf32> to vector<2x32x384xf32>
    %204 = arith.mulf %199, %203 : vector<2x32x384xf32>
    %205 = vector.shape_cast %7 : vector<1x384xf32> to vector<1x1x384xf32>
    %206 = vector.broadcast %205 : vector<1x1x384xf32> to vector<2x32x384xf32>
    %207 = arith.mulf %204, %206 : vector<2x32x384xf32>
    %208 = vector.shape_cast %8 : vector<1x384xf32> to vector<1x1x384xf32>
    %209 = vector.broadcast %208 : vector<1x1x384xf32> to vector<2x32x384xf32>
    %210 = arith.addf %207, %209 : vector<2x32x384xf32>
    %211 = vector.shape_cast %210 : vector<2x32x384xf32> to vector<64x384xf32>
    %212 = arith.truncf %211 : vector<64x384xf32> to vector<64x384xbf16>
    %c0_i32_61 = arith.constant 0 : i32
    %213 = tpu.memref_slice %arg11[%c0_i32_61] : memref<2x!tpu.dma_semaphore, #tpu.memory_space<semaphore_mem>> -> memref<1x!tpu.dma_semaphore, #tpu.memory_space<semaphore_mem>>
    %214 = tpu.memref_squeeze %213 : memref<1x!tpu.dma_semaphore, #tpu.memory_space<semaphore_mem>> -> memref<!tpu.dma_semaphore, #tpu.memory_space<semaphore_mem>>
    tpu.wait_dma2 semaphore(%214 : memref<!tpu.dma_semaphore, #tpu.memory_space<semaphore_mem>>) src(%arg6 : memref<384x1536xbf16, #tpu.memory_space<any>>) dst(%arg9 : memref<384x1536xbf16, #tpu.memory_space<vmem>>)
    %c0_62 = arith.constant 0 : index
    %c0_63 = arith.constant 0 : index
    %215 = vector.load %arg9[%c0_62, %c0_63] : memref<384x1536xbf16, #tpu.memory_space<vmem>>, vector<384x1536xbf16>
    %cst_64 = arith.constant dense<0.000000e+00> : vector<64x1536xf32>
    %216 = tpu.matmul %212, %215, %cst_64 {dimension_numbers = #tpu.dot_dimension_numbers<[1], [0], [0], [1], [0, 0, 1, 1], [], []>} : vector<64x384xbf16>, vector<384x1536xbf16>, vector<64x1536xf32> -> vector<64x1536xf32>
    %217 = vector.broadcast %11 : vector<1x1536xf32> to vector<64x1536xf32>
    %218 = arith.addf %216, %217 : vector<64x1536xf32>
    %cst_65 = arith.constant 0.000000e+00 : f32
    %219 = vector.broadcast %cst_65 : f32 to vector<64x1536xf32>
    %220 = arith.maximumf %218, %219 : vector<64x1536xf32>
    %c1_i32_66 = arith.constant 1 : i32
    %221 = tpu.memref_slice %arg11[%c1_i32_66] : memref<2x!tpu.dma_semaphore, #tpu.memory_space<semaphore_mem>> -> memref<1x!tpu.dma_semaphore, #tpu.memory_space<semaphore_mem>>
    %222 = tpu.memref_squeeze %221 : memref<1x!tpu.dma_semaphore, #tpu.memory_space<semaphore_mem>> -> memref<!tpu.dma_semaphore, #tpu.memory_space<semaphore_mem>>
    tpu.wait_dma2 semaphore(%222 : memref<!tpu.dma_semaphore, #tpu.memory_space<semaphore_mem>>) src(%arg7 : memref<1536x384xbf16, #tpu.memory_space<any>>) dst(%arg10 : memref<1536x384xbf16, #tpu.memory_space<vmem>>)
    %223 = arith.truncf %220 : vector<64x1536xf32> to vector<64x1536xbf16>
    %c0_67 = arith.constant 0 : index
    %c0_68 = arith.constant 0 : index
    %224 = vector.load %arg10[%c0_67, %c0_68] : memref<1536x384xbf16, #tpu.memory_space<vmem>>, vector<1536x384xbf16>
    %cst_69 = arith.constant dense<0.000000e+00> : vector<64x384xf32>
    %225 = tpu.matmul %223, %224, %cst_69 {dimension_numbers = #tpu.dot_dimension_numbers<[1], [0], [0], [1], [0, 0, 1, 1], [], []>} : vector<64x1536xbf16>, vector<1536x384xbf16>, vector<64x384xf32> -> vector<64x384xf32>
    %226 = vector.broadcast %10 : vector<1x384xf32> to vector<64x384xf32>
    %227 = arith.addf %225, %226 : vector<64x384xf32>
    %228 = vector.shape_cast %227 : vector<64x384xf32> to vector<2x32x384xf32>
    %229 = arith.addf %186, %228 : vector<2x32x384xf32>
    %c0_70 = arith.constant 0 : index
    %c0_71 = arith.constant 0 : index
    %c0_72 = arith.constant 0 : index
    %230 = vector.load %arg8[%c0_70, %c0_71, %c0_72] : memref<2x32x384xf32, #tpu.memory_space<vmem>>, vector<2x32x384xf32>
    tpu.vector_store %arg8[%c0_70, %c0_71, %c0_72], %229 {strides = array<i32>} : memref<2x32x384xf32, #tpu.memory_space<vmem>>, vector<2x32x384xf32>,
    return
  }
}

</mosaic_0001>

<llo_original>
// kernel: tpu_custom_call.1
$region0: #{tpu_custom_call.1}
  #allocation0 [shape = 'u32[]', space=smem, size = 0x4, offset = 0x4, fixed_abs, tag = 'smem constant byte address 0x4 - core index']
  #allocation1 [shape = 'u32[144,128]{1,0:T(1,128)}', space=vmem, size = 0x12000, scoped, tag = 'internal scratch']
  #allocation2 [shape = 'bf16[384,1536]{1,0:T(16,128)(2,1)}', space=vmem, size = 0x120000, scoped, tag = 'scratch operand']
  #allocation3 [shape = 'bf16[1536,384]{1,0:T(16,128)(2,1)}', space=vmem, size = 0x120000, scoped, tag = 'scratch operand']
  #allocation4 [shape = 's32[2]{0}', space=sflag, size = 0x8, scoped, tag = 'scratch operand']
  #allocation17 [shape = 's32[]', space=sflag, size = 0x4, offset = 0, fixed_abs, tag = 'sflag constant byte address 0x0 - dummy sync flag']
  #allocation19 [shape = 's32[]', space=sflag, size = 0x4, offset = 0, fixed_abs, tag = 'sflag constant byte address 0x0 - dummy sync flag']
  %s0 = inlined_call_operand.hbm [shape: f32[2,32,384], index: 0, kind: input, shape index: {}]
  %s1 = inlined_call_operand.hbm [shape: bf16[384,384], index: 1, kind: input, shape index: {}]
  %s2 = inlined_call_operand.hbm [shape: bf16[384,384], index: 2, kind: input, shape index: {}]
  %s3 = inlined_call_operand.hbm [shape: bf16[384,384], index: 3, kind: input, shape index: {}]
  %s4 = inlined_call_operand.hbm [shape: bf16[384,384], index: 4, kind: input, shape index: {}]
  %s5 = inlined_call_operand.hbm [shape: f32[8,1536], index: 5, kind: input, shape index: {}]
  %s6 = inlined_call_operand.hbm [shape: bf16[384,1536], index: 6, kind: input, shape index: {}]
  %s7 = inlined_call_operand.hbm [shape: bf16[1536,384], index: 7, kind: input, shape index: {}]
  %s8 = inlined_call_operand.hbm [shape: f32[2,32,384], index: 8, kind: output, shape index: {}]
  %s9 = sld [smem:[#allocation0]]
  $region58: #{tpu_custom_call.1} parent=0
    _
  %s11 = ssub.s32 1, %s9
  %s12 = scalar_select 0, %s11, %s9
  $region1: #{tpu_custom_call.1} parent=0
    #allocation5 [shape = 'u8[98304]{0}', space=vmem, size = 0x18000, scoped, tag = 'input window, operand 0, single buffered']
    #allocation6 [shape = 's32[1]{0}', space=sflag, size = 0x4, scoped, tag = 'scoped memory for tpu_custom_call.1']
    #allocation7 [shape = 's32[1]{0}', space=sflag, size = 0x4, scoped, tag = 'scoped memory for tpu_custom_call.1']
    #allocation8 [shape = 'u8[294912]{0}', space=vmem, size = 0x48000, scoped, tag = 'input window, operand 1, single buffered']
    #allocation9 [shape = 's32[1]{0}', space=sflag, size = 0x4, scoped, tag = 'scoped memory for tpu_custom_call.1']
    #allocation10 [shape = 'u8[294912]{0}', space=vmem, size = 0x48000, scoped, tag = 'input window, operand 2, single buffered']
    #allocation11 [shape = 'u8[294912]{0}', space=vmem, size = 0x48000, scoped, tag = 'input window, operand 3, single buffered']
    #allocation12 [shape = 's32[1]{0}', space=sflag, size = 0x4, scoped, tag = 'scoped memory for tpu_custom_call.1']
    #allocation13 [shape = 'u8[294912]{0}', space=vmem, size = 0x48000, scoped, tag = 'input window, operand 4, single buffered']
    #allocation14 [shape = 'u8[49152]{0}', space=vmem, size = 0xc000, scoped, tag = 'input window, operand 5, single buffered']
    #allocation15 [shape = 's32[1]{0}', space=sflag, size = 0x4, scoped, tag = 'scoped memory for tpu_custom_call.1']
    #allocation16 [shape = 'u8[98304]{0}', space=vmem, size = 0x18000, scoped, tag = 'output window, operand 0, single buffered']
    #allocation18 [shape = 'u32[9]{0}', space=smem, size = 0x24, scoped, tag = 'DMA stride descriptor']
    #allocation20 [shape = 'u32[9]{0}', space=smem, size = 0x24, scoped, tag = 'DMA stride descriptor']
    %13 = vsyncpa [#allocation6], 0
    %14 = vsyncpa [#allocation9], 0
    %15 = vsyncpa [#allocation12], 0
    %16 = vsyncpa [#allocation15], 0
    %17 = vsyncpa [#allocation7], 0
    // Predicated region
    $region2: #{tpu_custom_call.1} parent=1 // pred_check
      _
    $region3: #{tpu_custom_call.1} parent=1 // pred_check_branch
      %19 = sbr.rel (0) target = $region5
    $region4: #{tpu_custom_call.1} parent=1 // pred_region
      %s21 = ssub.s32 3072, 3072
      %22 = vsyncadd [#allocation6], %s21
      %s23 = sshll.u32 [#allocation5], 4
      %s24 = int_to_ptr.vmem [resolvable:$true] %s23
      %29 = dma.hbm_to_vmem [thread:$0]  %s0, 3072, %s24, [#allocation6], 384, 384, 24
    $region5: #{tpu_custom_call.1} parent=1 // pred_fallthru
      _
    // Predicated region
    $region6: #{tpu_custom_call.1} parent=1 // pred_check
      _
    $region7: #{tpu_custom_call.1} parent=1 // pred_check_branch
      %31 = sbr.rel (0) target = $region9
    $region8: #{tpu_custom_call.1} parent=1 // pred_region
      %s33 = ssub.s32 9216, 9216
      %34 = vsyncadd [#allocation9], %s33
      %s35 = sshll.u32 [#allocation8], 4
      %s36 = int_to_ptr.vmem [resolvable:$true] %s35
      %41 = dma.hbm_to_vmem [thread:$0]  %s1, 9216, %s36, [#allocation9], 192, 192, 12
    $region9: #{tpu_custom_call.1} parent=1 // pred_fallthru
      _
    // Predicated region
    $region10: #{tpu_custom_call.1} parent=1 // pred_check
      _
    $region11: #{tpu_custom_call.1} parent=1 // pred_check_branch
      %43 = sbr.rel (0) target = $region13
    $region12: #{tpu_custom_call.1} parent=1 // pred_region
      %s45 = ssub.s32 9216, 9216
      %46 = vsyncadd [#allocation9], %s45
      %s47 = sshll.u32 [#allocation10], 4
      %s48 = int_to_ptr.vmem [resolvable:$true] %s47
      %53 = dma.hbm_to_vmem [thread:$0]  %s2, 9216, %s48, [#allocation9], 192, 192, 12
    $region13: #{tpu_custom_call.1} parent=1 // pred_fallthru
      _
    // Predicated region
    $region14: #{tpu_custom_call.1} parent=1 // pred_check
      _
    $region15: #{tpu_custom_call.1} parent=1 // pred_check_branch
      %55 = sbr.rel (0) target = $region17
    $region16: #{tpu_custom_call.1} parent=1 // pred_region
      %s57 = ssub.s32 9216, 9216
      %58 = vsyncadd [#allocation12], %s57
      %s59 = sshll.u32 [#allocation11], 4
      %s60 = int_to_ptr.vmem [resolvable:$true] %s59
      %65 = dma.hbm_to_vmem [thread:$0]  %s3, 9216, %s60, [#allocation12], 192, 192, 12
    $region17: #{tpu_custom_call.1} parent=1 // pred_fallthru
      _
    // Predicated region
    $region18: #{tpu_custom_call.1} parent=1 // pred_check
      _
    $region19: #{tpu_custom_call.1} parent=1 // pred_check_branch
      %67 = sbr.rel (0) target = $region21
    $region20: #{tpu_custom_call.1} parent=1 // pred_region
      %s69 = ssub.s32 9216, 9216
      %70 = vsyncadd [#allocation12], %s69
      %s71 = sshll.u32 [#allocation13], 4
      %s72 = int_to_ptr.vmem [resolvable:$true] %s71
      %77 = dma.hbm_to_vmem [thread:$0]  %s4, 9216, %s72, [#allocation12], 192, 192, 12
    $region21: #{tpu_custom_call.1} parent=1 // pred_fallthru
      _
    // Predicated region
    $region22: #{tpu_custom_call.1} parent=1 // pred_check
      _
    $region23: #{tpu_custom_call.1} parent=1 // pred_check_branch
      %79 = sbr.rel (0) target = $region25
    $region24: #{tpu_custom_call.1} parent=1 // pred_region
      %s81 = ssub.s32 1536, 1536
      %82 = vsyncadd [#allocation15], %s81
      %s84 = sshll.u32 [#allocation14], 4
      %s85 = int_to_ptr.vmem [resolvable:$true] %s84
      %87 = dma.hbm_to_vmem [thread:$0]  %s5, 1536, %s85, [#allocation15]
    $region25: #{tpu_custom_call.1} parent=1 // pred_fallthru
      _
    // Predicated region
    $region26: #{tpu_custom_call.1} parent=1 // pred_check
      _
    $region27: #{tpu_custom_call.1} parent=1 // pred_check_branch
      %89 = sbr.rel (0) target = $region29
    $region28: #{tpu_custom_call.1} parent=1 // pred_region
      %90 = dma.done [#allocation6], 3072
    $region29: #{tpu_custom_call.1} parent=1 // pred_fallthru
      _
    // Predicated region
    $region30: #{tpu_custom_call.1} parent=1 // pred_check
      _
    $region31: #{tpu_custom_call.1} parent=1 // pred_check_branch
      %92 = sbr.rel (0) target = $region33
    $region32: #{tpu_custom_call.1} parent=1 // pred_region
      %93 = dma.done [#allocation9], 9216
    $region33: #{tpu_custom_call.1} parent=1 // pred_fallthru
      _
    // Predicated region
    $region34: #{tpu_custom_call.1} parent=1 // pred_check
      _
    $region35: #{tpu_custom_call.1} parent=1 // pred_check_branch
      %95 = sbr.rel (0) target = $region37
    $region36: #{tpu_custom_call.1} parent=1 // pred_region
      %96 = dma.done [#allocation9], 9216
    $region37: #{tpu_custom_call.1} parent=1 // pred_fallthru
      _
    // Predicated region
    $region38: #{tpu_custom_call.1} parent=1 // pred_check
      _
    $region39: #{tpu_custom_call.1} parent=1 // pred_check_branch
      %98 = sbr.rel (0) target = $region41
    $region40: #{tpu_custom_call.1} parent=1 // pred_region
      %99 = dma.done [#allocation12], 9216
    $region41: #{tpu_custom_call.1} parent=1 // pred_fallthru
      _
    // Predicated region
    $region42: #{tpu_custom_call.1} parent=1 // pred_check
      _
    $region43: #{tpu_custom_call.1} parent=1 // pred_check_branch
      %101 = sbr.rel (0) target = $region45
    $region44: #{tpu_custom_call.1} parent=1 // pred_region
      %102 = dma.done [#allocation12], 9216
    $region45: #{tpu_custom_call.1} parent=1 // pred_fallthru
      _
    // Predicated region
    $region46: #{tpu_custom_call.1} parent=1 // pred_check
      _
    $region47: #{tpu_custom_call.1} parent=1 // pred_check_branch
      %104 = sbr.rel (0) target = $region49
    $region48: #{tpu_custom_call.1} parent=1 // pred_region
      %105 = dma.done [#allocation15], 1536
    $region49: #{tpu_custom_call.1} parent=1 // pred_fallthru
      _
    %s108 = sshll.u32 1, 14
    %s109 = sxor.u32 4294967295, %s108
    %s111 = sld [smem:[#allocation0]]
    %s112 = sadd.s32 2, %s111
    %s114 = sshll.u32 7, 26
    %s115 = sxor.u32 4294967295, %s114
    %s116 = sand.u32 0, %s115
    %s117 = sshll.u32 %s112, 26
    %s118 = sor.u32 %s116, %s117
    %s119 = sshll.u32 [#allocation2], 4
    %s120 = int_to_ptr.vmem [resolvable:$true] %s119
    %123 = sst [smem:[#allocation18]] 1536
    %s124 = scalar_lea.smem [#allocation18], 1
    %125 = sst [smem:[%s124]] 1536
    %s126 = scalar_lea.smem [#allocation18], 2
    %127 = sst [smem:[%s126]] 12
    %s128 = scalar_lea.smem [#allocation18], 3
    %129 = sst [smem:[%s128]] 64
    %s130 = scalar_lea.smem [#allocation18], 4
    %131 = sst [smem:[%s130]] 128
    %s132 = scalar_lea.smem [#allocation18], 5
    %133 = sst [smem:[%s132]] 2
    %s134 = scalar_lea.smem [#allocation18], 6
    %135 = sst [smem:[%s134]] 768
    %s136 = scalar_lea.smem [#allocation18], 7
    %137 = sst [smem:[%s136]] 64
    %s138 = scalar_lea.smem [#allocation18], 8
    %139 = sst [smem:[%s138]] 4
    %141 = dma.general %s6, 36864, %s120, [#allocation4], [#allocation17], [#allocation18], %s118, 0
    %s142 = scalar_lea.sflag [#allocation4], 1
    %s144 = sshll.u32 1, 14
    %s145 = sxor.u32 4294967295, %s144
    %s147 = sadd.s32 2, %s111
    %s149 = sshll.u32 7, 26
    %s150 = sxor.u32 4294967295, %s149
    %s151 = sand.u32 0, %s150
    %s152 = sshll.u32 %s147, 26
    %s153 = sor.u32 %s151, %s152
    %s154 = sshll.u32 [#allocation3], 4
    %s155 = int_to_ptr.vmem [resolvable:$true] %s154
    %158 = sst [smem:[#allocation20]] 384
    %s159 = scalar_lea.smem [#allocation20], 1
    %160 = sst [smem:[%s159]] 384
    %s161 = scalar_lea.smem [#allocation20], 2
    %162 = sst [smem:[%s161]] 3
    %s163 = scalar_lea.smem [#allocation20], 3
    %164 = sst [smem:[%s163]] 64
    %s165 = scalar_lea.smem [#allocation20], 4
    %166 = sst [smem:[%s165]] 128
    %s167 = scalar_lea.smem [#allocation20], 5
    %168 = sst [smem:[%s167]] 2
    %s169 = scalar_lea.smem [#allocation20], 6
    %170 = sst [smem:[%s169]] 192
    %s171 = scalar_lea.smem [#allocation20], 7
    %172 = sst [smem:[%s171]] 64
    %s173 = scalar_lea.smem [#allocation20], 8
    %174 = sst [smem:[%s173]] 4
    %176 = dma.general %s7, 36864, %s155, %s142, [#allocation19], [#allocation20], %s153, 0
    %v177 = vld [vmem:[#allocation5] sm:$0xff]
    %v178 = vld [vmem:[#allocation5 + $0x8] sm:$0xff]
    %v179 = vld [vmem:[#allocation5 + $0x10] sm:$0xff]
    %v180 = vld [vmem:[#allocation5 + $0x18] sm:$0xff]
    %v181 = vld [vmem:[#allocation5 + $0x20] sm:$0xff]
    %v182 = vld [vmem:[#allocation5 + $0x28] sm:$0xff]
    %v183 = vld [vmem:[#allocation5 + $0x30] sm:$0xff]
    %v184 = vld [vmem:[#allocation5 + $0x38] sm:$0xff]
    %v185 = vld [vmem:[#allocation5 + $0x40] sm:$0xff]
    %v186 = vld [vmem:[#allocation5 + $0x48] sm:$0xff]
    %v187 = vld [vmem:[#allocation5 + $0x50] sm:$0xff]
    %v188 = vld [vmem:[#allocation5 + $0x58] sm:$0xff]
    %v189 = vld [vmem:[#allocation5 + $0x60] sm:$0xff]
    %v190 = vld [vmem:[#allocation5 + $0x68] sm:$0xff]
    %v191 = vld [vmem:[#allocation5 + $0x70] sm:$0xff]
    %v192 = vld [vmem:[#allocation5 + $0x78] sm:$0xff]
    %v193 = vld [vmem:[#allocation5 + $0x80] sm:$0xff]
    %v194 = vld [vmem:[#allocation5 + $0x88] sm:$0xff]
    %v195 = vld [vmem:[#allocation5 + $0x90] sm:$0xff]
    %v196 = vld [vmem:[#allocation5 + $0x98] sm:$0xff]
    %v197 = vld [vmem:[#allocation5 + $0xa0] sm:$0xff]
    %v198 = vld [vmem:[#allocation5 + $0xa8] sm:$0xff]
    %v199 = vld [vmem:[#allocation5 + $0xb0] sm:$0xff]
    %v200 = vld [vmem:[#allocation5 + $0xb8] sm:$0xff]
    %v201 = vld [vmem:[#allocation14] ss:$8 sm:$0x7]
    %s202 = scalar_lea.vmem [#allocation14], 1
    %v203 = vld [vmem:[%s202] ss:$8 sm:$0x7]
    %s204 = scalar_lea.vmem [#allocation14], 2
    %v205 = vld [vmem:[%s204] ss:$8 sm:$0x7]
    %s206 = scalar_lea.vmem [#allocation14], 3
    %v207 = vld [vmem:[%s206] ss:$8 sm:$0x7]
    %s208 = scalar_lea.vmem [#allocation14], 4
    %v209 = vld [vmem:[%s208] ss:$8 sm:$0x7]
    %s210 = scalar_lea.vmem [#allocation14], 5
    %v211 = vld [vmem:[%s210] ss:$8 sm:$0x7]
    %s212 = scalar_lea.vmem [#allocation14], 6
    %v213 = vld [vmem:[%s212] ss:$8 sm:$0xf]
    %v214 = vld [vmem:[%s212] ss:$8 sm:$0xf0]
    %v215 = vor.u32 %v213, %v214
    %s216 = scalar_lea.vmem [#allocation14], 70
    %v217 = vld [vmem:[%s216] ss:$8 sm:$0xf]
    %v218 = vadd.f32 %v177, %v178
    %v219 = vadd.f32 %v218, %v179
    %220 = vadd.xlane.f32.xlu0 %v219
    %v221 = vpop.xlane.xlu0 %220
    %v222 = vadd.f32 %v180, %v181
    %v223 = vadd.f32 %v222, %v182
    %224 = vadd.xlane.f32.xlu0 %v223
    %v225 = vpop.xlane.xlu0 %224
    %v226 = vadd.f32 %v183, %v184
    %v227 = vadd.f32 %v226, %v185
    %228 = vadd.xlane.f32.xlu0 %v227
    %v229 = vpop.xlane.xlu0 %228
    %v230 = vadd.f32 %v186, %v187
    %v231 = vadd.f32 %v230, %v188
    %232 = vadd.xlane.f32.xlu0 %v231
    %v233 = vpop.xlane.xlu0 %232
    %v234 = vadd.f32 %v189, %v190
    %v235 = vadd.f32 %v234, %v191
    %236 = vadd.xlane.f32.xlu0 %v235
    %v237 = vpop.xlane.xlu0 %236
    %v238 = vadd.f32 %v192, %v193
    %v239 = vadd.f32 %v238, %v194
    %240 = vadd.xlane.f32.xlu0 %v239
    %v241 = vpop.xlane.xlu0 %240
    %v242 = vadd.f32 %v195, %v196
    %v243 = vadd.f32 %v242, %v197
    %244 = vadd.xlane.f32.xlu0 %v243
    %v245 = vpop.xlane.xlu0 %244
    %v246 = vadd.f32 %v198, %v199
    %v247 = vadd.f32 %v246, %v200
    %248 = vadd.xlane.f32.xlu0 %v247
    %v249 = vpop.xlane.xlu0 %248
    %v250 = vrcp.pop 384.0
    %v251 = vmul.f32 %v221, %v250
    %v252 = vmul.f32 %v225, %v250
    %v253 = vmul.f32 %v229, %v250
    %v254 = vmul.f32 %v233, %v250
    %v255 = vmul.f32 %v237, %v250
    %v256 = vmul.f32 %v241, %v250
    %v257 = vmul.f32 %v245, %v250
    %v258 = vmul.f32 %v249, %v250
    %v259 = vmul.f32 %v177, %v177
    %v260 = vmul.f32 %v178, %v178
    %v261 = vmul.f32 %v179, %v179
    %v262 = vmul.f32 %v180, %v180
    %v263 = vmul.f32 %v181, %v181
    %v264 = vmul.f32 %v182, %v182
    %v265 = vmul.f32 %v183, %v183
    %v266 = vmul.f32 %v184, %v184
    %v267 = vmul.f32 %v185, %v185
    %v268 = vmul.f32 %v186, %v186
    %v269 = vmul.f32 %v187, %v187
    %v270 = vmul.f32 %v188, %v188
    %v271 = vmul.f32 %v189, %v189
    %v272 = vmul.f32 %v190, %v190
    %v273 = vmul.f32 %v191, %v191
    %v274 = vmul.f32 %v192, %v192
    %v275 = vmul.f32 %v193, %v193
    %v276 = vmul.f32 %v194, %v194
    %v277 = vmul.f32 %v195, %v195
    %v278 = vmul.f32 %v196, %v196
    %v279 = vmul.f32 %v197, %v197
    %v280 = vmul.f32 %v198, %v198
    %v281 = vmul.f32 %v199, %v199
    %v282 = vmul.f32 %v200, %v200
    %v283 = vadd.f32 %v259, %v260
    %v284 = vadd.f32 %v283, %v261
    %285 = vadd.xlane.f32.xlu0 %v284
    %v286 = vpop.xlane.xlu0 %285
    %v287 = vadd.f32 %v262, %v263
    %v288 = vadd.f32 %v287, %v264
    %289 = vadd.xlane.f32.xlu0 %v288
    %v290 = vpop.xlane.xlu0 %289
    %v291 = vadd.f32 %v265, %v266
    %v292 = vadd.f32 %v291, %v267
    %293 = vadd.xlane.f32.xlu0 %v292
    %v294 = vpop.xlane.xlu0 %293
    %v295 = vadd.f32 %v268, %v269
    %v296 = vadd.f32 %v295, %v270
    %297 = vadd.xlane.f32.xlu0 %v296
    %v298 = vpop.xlane.xlu0 %297
    %v299 = vadd.f32 %v271, %v272
    %v300 = vadd.f32 %v299, %v273
    %301 = vadd.xlane.f32.xlu0 %v300
    %v302 = vpop.xlane.xlu0 %301
    %v303 = vadd.f32 %v274, %v275
    %v304 = vadd.f32 %v303, %v276
    %305 = vadd.xlane.f32.xlu0 %v304
    %v306 = vpop.xlane.xlu0 %305
    %v307 = vadd.f32 %v277, %v278
    %v308 = vadd.f32 %v307, %v279
    %309 = vadd.xlane.f32.xlu0 %v308
    %v310 = vpop.xlane.xlu0 %309
    %v311 = vadd.f32 %v280, %v281
    %v312 = vadd.f32 %v311, %v282
    %313 = vadd.xlane.f32.xlu0 %v312
    %v314 = vpop.xlane.xlu0 %313
    %v315 = vmul.f32 %v286, %v250
    %v316 = vmul.f32 %v290, %v250
    %v317 = vmul.f32 %v294, %v250
    %v318 = vmul.f32 %v298, %v250
    %v319 = vmul.f32 %v302, %v250
    %v320 = vmul.f32 %v306, %v250
    %v321 = vmul.f32 %v310, %v250
    %v322 = vmul.f32 %v314, %v250
    %v323 = vmul.f32 %v251, %v251
    %v324 = vmul.f32 %v252, %v252
    %v325 = vmul.f32 %v253, %v253
    %v326 = vmul.f32 %v254, %v254
    %v327 = vmul.f32 %v255, %v255
    %v328 = vmul.f32 %v256, %v256
    %v329 = vmul.f32 %v257, %v257
    %v330 = vmul.f32 %v258, %v258
    %v331 = vsub.f32 %v315, %v323
    %v332 = vsub.f32 %v316, %v324
    %v333 = vsub.f32 %v317, %v325
    %v334 = vsub.f32 %v318, %v326
    %v335 = vsub.f32 %v319, %v327
    %v336 = vsub.f32 %v320, %v328
    %v337 = vsub.f32 %v321, %v329
    %v338 = vsub.f32 %v322, %v330
    %v339 = vsub.f32 %v177, %v251
    %v340 = vsub.f32 %v178, %v251
    %v341 = vsub.f32 %v179, %v251
    %v342 = vsub.f32 %v180, %v252
    %v343 = vsub.f32 %v181, %v252
    %v344 = vsub.f32 %v182, %v252
    %v345 = vsub.f32 %v183, %v253
    %v346 = vsub.f32 %v184, %v253
    %v347 = vsub.f32 %v185, %v253
    %v348 = vsub.f32 %v186, %v254
    %v349 = vsub.f32 %v187, %v254
    %v350 = vsub.f32 %v188, %v254
    %v351 = vsub.f32 %v189, %v255
    %v352 = vsub.f32 %v190, %v255
    %v353 = vsub.f32 %v191, %v255
    %v354 = vsub.f32 %v192, %v256
    %v355 = vsub.f32 %v193, %v256
    %v356 = vsub.f32 %v194, %v256
    %v357 = vsub.f32 %v195, %v257
    %v358 = vsub.f32 %v196, %v257
    %v359 = vsub.f32 %v197, %v257
    %v360 = vsub.f32 %v198, %v258
    %v361 = vsub.f32 %v199, %v258
    %v362 = vsub.f32 %v200, %v258
    %v363 = vadd.f32 %v331, 1e-05
    %v364 = vadd.f32 %v332, 1e-05
    %v365 = vadd.f32 %v333, 1e-05
    %v366 = vadd.f32 %v334, 1e-05
    %v367 = vadd.f32 %v335, 1e-05
    %v368 = vadd.f32 %v336, 1e-05
    %v369 = vadd.f32 %v337, 1e-05
    %v370 = vadd.f32 %v338, 1e-05
    %v371 = vrsqrt.pop %v363
    %v372 = vrsqrt.pop %v364
    %v373 = vrsqrt.pop %v365
    %v374 = vrsqrt.pop %v366
    %v375 = vrsqrt.pop %v367
    %v376 = vrsqrt.pop %v368
    %v377 = vrsqrt.pop %v369
    %v378 = vrsqrt.pop %v370
    %v379 = vmul.f32 %v339, %v371
    %v380 = vmul.f32 %v340, %v371
    %v381 = vmul.f32 %v341, %v371
    %v382 = vmul.f32 %v342, %v372
    %v383 = vmul.f32 %v343, %v372
    %v384 = vmul.f32 %v344, %v372
    %v385 = vmul.f32 %v345, %v373
    %v386 = vmul.f32 %v346, %v373
    %v387 = vmul.f32 %v347, %v373
    %v388 = vmul.f32 %v348, %v374
    %v389 = vmul.f32 %v349, %v374
    %v390 = vmul.f32 %v350, %v374
    %v391 = vmul.f32 %v351, %v375
    %v392 = vmul.f32 %v352, %v375
    %v393 = vmul.f32 %v353, %v375
    %v394 = vmul.f32 %v354, %v376
    %v395 = vmul.f32 %v355, %v376
    %v396 = vmul.f32 %v356, %v376
    %v397 = vmul.f32 %v357, %v377
    %v398 = vmul.f32 %v358, %v377
    %v399 = vmul.f32 %v359, %v377
    %v400 = vmul.f32 %v360, %v378
    %v401 = vmul.f32 %v361, %v378
    %v402 = vmul.f32 %v362, %v378
    %v404 = vlaneseq
    %v405 = vshrl.u32 %v404, 7
    %v406 = vsub.s32 0, %v405
    %v407 = vrot.slane %v201, %v406
    %v408 = vlaneseq
    %v409 = vshrl.u32 %v408, 7
    %v410 = vsub.s32 1, %v409
    %v411 = vrot.slane %v201, %v410
    %v412 = vlaneseq
    %v413 = vshrl.u32 %v412, 7
    %v414 = vsub.s32 2, %v413
    %v415 = vrot.slane %v201, %v414
    %v419 = vmul.f32 %v379, %v407
    %v420 = vmul.f32 %v380, %v411
    %v421 = vmul.f32 %v381, %v415
    %v422 = vmul.f32 %v382, %v407
    %v423 = vmul.f32 %v383, %v411
    %v424 = vmul.f32 %v384, %v415
    %v425 = vmul.f32 %v385, %v407
    %v426 = vmul.f32 %v386, %v411
    %v427 = vmul.f32 %v387, %v415
    %v428 = vmul.f32 %v388, %v407
    %v429 = vmul.f32 %v389, %v411
    %v430 = vmul.f32 %v390, %v415
    %v431 = vmul.f32 %v391, %v407
    %v432 = vmul.f32 %v392, %v411
    %v433 = vmul.f32 %v393, %v415
    %v434 = vmul.f32 %v394, %v407
    %v435 = vmul.f32 %v395, %v411
    %v436 = vmul.f32 %v396, %v415
    %v437 = vmul.f32 %v397, %v407
    %v438 = vmul.f32 %v398, %v411
    %v439 = vmul.f32 %v399, %v415
    %v440 = vmul.f32 %v400, %v407
    %v441 = vmul.f32 %v401, %v411
    %v442 = vmul.f32 %v402, %v415
    %v444 = vlaneseq
    %v445 = vshrl.u32 %v444, 7
    %v446 = vsub.s32 0, %v445
    %v447 = vrot.slane %v203, %v446
    %v448 = vlaneseq
    %v449 = vshrl.u32 %v448, 7
    %v450 = vsub.s32 1, %v449
    %v451 = vrot.slane %v203, %v450
    %v452 = vlaneseq
    %v453 = vshrl.u32 %v452, 7
    %v454 = vsub.s32 2, %v453
    %v455 = vrot.slane %v203, %v454
    %v459 = vadd.f32 %v419, %v447
    %v460 = vadd.f32 %v420, %v451
    %v461 = vadd.f32 %v421, %v455
    %v462 = vadd.f32 %v422, %v447
    %v463 = vadd.f32 %v423, %v451
    %v464 = vadd.f32 %v424, %v455
    %v465 = vadd.f32 %v425, %v447
    %v466 = vadd.f32 %v426, %v451
    %v467 = vadd.f32 %v427, %v455
    %v468 = vadd.f32 %v428, %v447
    %v469 = vadd.f32 %v429, %v451
    %v470 = vadd.f32 %v430, %v455
    %v471 = vadd.f32 %v431, %v447
    %v472 = vadd.f32 %v432, %v451
    %v473 = vadd.f32 %v433, %v455
    %v474 = vadd.f32 %v434, %v447
    %v475 = vadd.f32 %v435, %v451
    %v476 = vadd.f32 %v436, %v455
    %v477 = vadd.f32 %v437, %v447
    %v478 = vadd.f32 %v438, %v451
    %v479 = vadd.f32 %v439, %v455
    %v480 = vadd.f32 %v440, %v447
    %v481 = vadd.f32 %v441, %v451
    %v482 = vadd.f32 %v442, %v455
    %v483 = vpack.c.bf16 %v462, %v459
    %v484 = vpack.c.bf16 %v463, %v460
    %v485 = vpack.c.bf16 %v464, %v461
    %v486 = vpack.c.bf16 %v468, %v465
    %v487 = vpack.c.bf16 %v469, %v466
    %v488 = vpack.c.bf16 %v470, %v467
    %v489 = vpack.c.bf16 %v474, %v471
    %v490 = vpack.c.bf16 %v475, %v472
    %v491 = vpack.c.bf16 %v476, %v473
    %v492 = vpack.c.bf16 %v480, %v477
    %v493 = vpack.c.bf16 %v481, %v478
    %v494 = vpack.c.bf16 %v482, %v479
    %v495 = vld [vmem:[#allocation8] sm:$0xff]
    %v496 = vld [vmem:[#allocation8 + $0x8] sm:$0xf]
    %v497 = vld [vmem:[#allocation8 + $0xc] sm:$0xff]
    %v498 = vld [vmem:[#allocation8 + $0x14] sm:$0xf]
    %v499 = vld [vmem:[#allocation8 + $0x18] sm:$0xff]
    %v500 = vld [vmem:[#allocation8 + $0x20] sm:$0xf]
    %v501 = vld [vmem:[#allocation8 + $0x24] sm:$0xff]
    %v502 = vld [vmem:[#allocation8 + $0x2c] sm:$0xf]
    %v503 = vld [vmem:[#allocation8 + $0x30] sm:$0xff]
    %v504 = vld [vmem:[#allocation8 + $0x38] sm:$0xf]
    %v505 = vld [vmem:[#allocation8 + $0x3c] sm:$0xff]
    %v506 = vld [vmem:[#allocation8 + $0x44] sm:$0xf]
    %v507 = vld [vmem:[#allocation8 + $0x48] sm:$0xff]
    %v508 = vld [vmem:[#allocation8 + $0x50] sm:$0xf]
    %v509 = vld [vmem:[#allocation8 + $0x54] sm:$0xff]
    %v510 = vld [vmem:[#allocation8 + $0x5c] sm:$0xf]
    %v511 = vld [vmem:[#allocation8 + $0x60] sm:$0xff]
    %v512 = vld [vmem:[#allocation8 + $0x68] sm:$0xf]
    %v513 = vld [vmem:[#allocation8 + $0x6c] sm:$0xff]
    %v514 = vld [vmem:[#allocation8 + $0x74] sm:$0xf]
    %v515 = vld [vmem:[#allocation8 + $0x78] sm:$0xff]
    %v516 = vld [vmem:[#allocation8 + $0x80] sm:$0xf]
    %v517 = vld [vmem:[#allocation8 + $0x84] sm:$0xff]
    %v518 = vld [vmem:[#allocation8 + $0x8c] sm:$0xf]
    %v519 = vld [vmem:[#allocation8 + $0x90] sm:$0xff]
    %v520 = vld [vmem:[#allocation8 + $0x98] sm:$0xf]
    %v521 = vld [vmem:[#allocation8 + $0x9c] sm:$0xff]
    %v522 = vld [vmem:[#allocation8 + $0xa4] sm:$0xf]
    %v523 = vld [vmem:[#allocation8 + $0xa8] sm:$0xff]
    %v524 = vld [vmem:[#allocation8 + $0xb0] sm:$0xf]
    %v525 = vld [vmem:[#allocation8 + $0xb4] sm:$0xff]
    %v526 = vld [vmem:[#allocation8 + $0xbc] sm:$0xf]
    %v527 = vld [vmem:[#allocation8 + $0xc0] sm:$0xff]
    %v528 = vld [vmem:[#allocation8 + $0xc8] sm:$0xf]
    %v529 = vld [vmem:[#allocation8 + $0xcc] sm:$0xff]
    %v530 = vld [vmem:[#allocation8 + $0xd4] sm:$0xf]
    %v531 = vld [vmem:[#allocation8 + $0xd8] sm:$0xff]
    %v532 = vld [vmem:[#allocation8 + $0xe0] sm:$0xf]
    %v533 = vld [vmem:[#allocation8 + $0xe4] sm:$0xff]
    %v534 = vld [vmem:[#allocation8 + $0xec] sm:$0xf]
    %v535 = vld [vmem:[#allocation8 + $0xf0] sm:$0xff]
    %v536 = vld [vmem:[#allocation8 + $0xf8] sm:$0xf]
    %v537 = vld [vmem:[#allocation8 + $0xfc] sm:$0xff]
    %v538 = vld [vmem:[#allocation8 + $0x104] sm:$0xf]
    %v539 = vld [vmem:[#allocation8 + $0x108] sm:$0xff]
    %v540 = vld [vmem:[#allocation8 + $0x110] sm:$0xf]
    %v541 = vld [vmem:[#allocation8 + $0x114] sm:$0xff]
    %v542 = vld [vmem:[#allocation8 + $0x11c] sm:$0xf]
    %v543 = vld [vmem:[#allocation8 + $0x120] sm:$0xff]
    %v544 = vld [vmem:[#allocation8 + $0x128] sm:$0xf]
    %v545 = vld [vmem:[#allocation8 + $0x12c] sm:$0xff]
    %v546 = vld [vmem:[#allocation8 + $0x134] sm:$0xf]
    %v547 = vld [vmem:[#allocation8 + $0x138] sm:$0xff]
    %v548 = vld [vmem:[#allocation8 + $0x140] sm:$0xf]
    %v549 = vld [vmem:[#allocation8 + $0x144] sm:$0xff]
    %v550 = vld [vmem:[#allocation8 + $0x14c] sm:$0xf]
    %v551 = vld [vmem:[#allocation8 + $0x150] sm:$0xff]
    %v552 = vld [vmem:[#allocation8 + $0x158] sm:$0xf]
    %v553 = vld [vmem:[#allocation8 + $0x15c] sm:$0xff]
    %v554 = vld [vmem:[#allocation8 + $0x164] sm:$0xf]
    %v555 = vld [vmem:[#allocation8 + $0x168] sm:$0xff]
    %v556 = vld [vmem:[#allocation8 + $0x170] sm:$0xf]
    %v557 = vld [vmem:[#allocation8 + $0x174] sm:$0xff]
    %v558 = vld [vmem:[#allocation8 + $0x17c] sm:$0xf]
    %v559 = vld [vmem:[#allocation8 + $0x180] sm:$0xff]
    %v560 = vld [vmem:[#allocation8 + $0x188] sm:$0xf]
    %v561 = vld [vmem:[#allocation8 + $0x18c] sm:$0xff]
    %v562 = vld [vmem:[#allocation8 + $0x194] sm:$0xf]
    %v563 = vld [vmem:[#allocation8 + $0x198] sm:$0xff]
    %v564 = vld [vmem:[#allocation8 + $0x1a0] sm:$0xf]
    %v565 = vld [vmem:[#allocation8 + $0x1a4] sm:$0xff]
    %v566 = vld [vmem:[#allocation8 + $0x1ac] sm:$0xf]
    %v567 = vld [vmem:[#allocation8 + $0x1b0] sm:$0xff]
    %v568 = vld [vmem:[#allocation8 + $0x1b8] sm:$0xf]
    %v569 = vld [vmem:[#allocation8 + $0x1bc] sm:$0xff]
    %v570 = vld [vmem:[#allocation8 + $0x1c4] sm:$0xf]
    %v571 = vld [vmem:[#allocation8 + $0x1c8] sm:$0xff]
    %v572 = vld [vmem:[#allocation8 + $0x1d0] sm:$0xf]
    %v573 = vld [vmem:[#allocation8 + $0x1d4] sm:$0xff]
    %v574 = vld [vmem:[#allocation8 + $0x1dc] sm:$0xf]
    %v575 = vld [vmem:[#allocation8 + $0x1e0] sm:$0xff]
    %v576 = vld [vmem:[#allocation8 + $0x1e8] sm:$0xf]
    %v577 = vld [vmem:[#allocation8 + $0x1ec] sm:$0xff]
    %v578 = vld [vmem:[#allocation8 + $0x1f4] sm:$0xf]
    %v579 = vld [vmem:[#allocation8 + $0x1f8] sm:$0xff]
    %v580 = vld [vmem:[#allocation8 + $0x200] sm:$0xf]
    %v581 = vld [vmem:[#allocation8 + $0x204] sm:$0xff]
    %v582 = vld [vmem:[#allocation8 + $0x20c] sm:$0xf]
    %v583 = vld [vmem:[#allocation8 + $0x210] sm:$0xff]
    %v584 = vld [vmem:[#allocation8 + $0x218] sm:$0xf]
    %v585 = vld [vmem:[#allocation8 + $0x21c] sm:$0xff]
    %v586 = vld [vmem:[#allocation8 + $0x224] sm:$0xf]
    %v587 = vld [vmem:[#allocation8 + $0x228] sm:$0xff]
    %v588 = vld [vmem:[#allocation8 + $0x230] sm:$0xf]
    %v589 = vld [vmem:[#allocation8 + $0x234] sm:$0xff]
    %v590 = vld [vmem:[#allocation8 + $0x23c] sm:$0xf]
    %v687 = vunpack.c.l.b16 %v495
    %v688 = vunpack.c.h.b16 %v495
    %v689 = vunpack.c.l.b16 %v496
    %v690 = vunpack.c.l.b16 %v497
    %v691 = vunpack.c.h.b16 %v497
    %v692 = vunpack.c.l.b16 %v498
    %v693 = vunpack.c.l.b16 %v499
    %v694 = vunpack.c.h.b16 %v499
    %v695 = vunpack.c.l.b16 %v500
    %v696 = vunpack.c.l.b16 %v501
    %v697 = vunpack.c.h.b16 %v501
    %v698 = vunpack.c.l.b16 %v502
    %v699 = vunpack.c.l.b16 %v503
    %v700 = vunpack.c.h.b16 %v503
    %v701 = vunpack.c.l.b16 %v504
    %v702 = vunpack.c.l.b16 %v505
    %v703 = vunpack.c.h.b16 %v505
    %v704 = vunpack.c.l.b16 %v506
    %v705 = vunpack.c.l.b16 %v507
    %v706 = vunpack.c.h.b16 %v507
    %v707 = vunpack.c.l.b16 %v508
    %v708 = vunpack.c.l.b16 %v509
    %v709 = vunpack.c.h.b16 %v509
    %v710 = vunpack.c.l.b16 %v510
    %v711 = vunpack.c.l.b16 %v511
    %v712 = vunpack.c.h.b16 %v511
    %v713 = vunpack.c.l.b16 %v512
    %v714 = vunpack.c.l.b16 %v513
    %v715 = vunpack.c.h.b16 %v513
    %v716 = vunpack.c.l.b16 %v514
    %v717 = vunpack.c.l.b16 %v515
    %v718 = vunpack.c.h.b16 %v515
    %v719 = vunpack.c.l.b16 %v516
    %v720 = vunpack.c.l.b16 %v517
    %v721 = vunpack.c.h.b16 %v517
    %v722 = vunpack.c.l.b16 %v518
    %v723 = vunpack.c.l.b16 %v519
    %v724 = vunpack.c.h.b16 %v519
    %v725 = vunpack.c.l.b16 %v520
    %v726 = vunpack.c.l.b16 %v521
    %v727 = vunpack.c.h.b16 %v521
    %v728 = vunpack.c.l.b16 %v522
    %v729 = vunpack.c.l.b16 %v523
    %v730 = vunpack.c.h.b16 %v523
    %v731 = vunpack.c.l.b16 %v524
    %v732 = vunpack.c.l.b16 %v525
    %v733 = vunpack.c.h.b16 %v525
    %v734 = vunpack.c.l.b16 %v526
    %v735 = vunpack.c.l.b16 %v527
    %v736 = vunpack.c.h.b16 %v527
    %v737 = vunpack.c.l.b16 %v528
    %v738 = vunpack.c.l.b16 %v529
    %v739 = vunpack.c.h.b16 %v529
    %v740 = vunpack.c.l.b16 %v530
    %v741 = vunpack.c.l.b16 %v531
    %v742 = vunpack.c.h.b16 %v531
    %v743 = vunpack.c.l.b16 %v532
    %v744 = vunpack.c.l.b16 %v533
    %v745 = vunpack.c.h.b16 %v533
    %v746 = vunpack.c.l.b16 %v534
    %v747 = vunpack.c.l.b16 %v535
    %v748 = vunpack.c.h.b16 %v535
    %v749 = vunpack.c.l.b16 %v536
    %v750 = vunpack.c.l.b16 %v537
    %v751 = vunpack.c.h.b16 %v537
    %v752 = vunpack.c.l.b16 %v538
    %v753 = vunpack.c.l.b16 %v539
    %v754 = vunpack.c.h.b16 %v539
    %v755 = vunpack.c.l.b16 %v540
    %v756 = vunpack.c.l.b16 %v541
    %v757 = vunpack.c.h.b16 %v541
    %v758 = vunpack.c.l.b16 %v542
    %v759 = vunpack.c.l.b16 %v543
    %v760 = vunpack.c.h.b16 %v543
    %v761 = vunpack.c.l.b16 %v544
    %v762 = vunpack.c.l.b16 %v545
    %v763 = vunpack.c.h.b16 %v545
    %v764 = vunpack.c.l.b16 %v546
    %v765 = vunpack.c.l.b16 %v547
    %v766 = vunpack.c.h.b16 %v547
    %v767 = vunpack.c.l.b16 %v548
    %v768 = vunpack.c.l.b16 %v549
    %v769 = vunpack.c.h.b16 %v549
    %v770 = vunpack.c.l.b16 %v550
    %v771 = vunpack.c.l.b16 %v551
    %v772 = vunpack.c.h.b16 %v551
    %v773 = vunpack.c.l.b16 %v552
    %v774 = vunpack.c.l.b16 %v553
    %v775 = vunpack.c.h.b16 %v553
    %v776 = vunpack.c.l.b16 %v554
    %v777 = vunpack.c.l.b16 %v555
    %v778 = vunpack.c.h.b16 %v555
    %v779 = vunpack.c.l.b16 %v556
    %v780 = vunpack.c.l.b16 %v557
    %v781 = vunpack.c.h.b16 %v557
    %v782 = vunpack.c.l.b16 %v558
    %v783 = vunpack.c.l.b16 %v559
    %v784 = vunpack.c.h.b16 %v559
    %v785 = vunpack.c.l.b16 %v560
    %v786 = vunpack.c.l.b16 %v561
    %v787 = vunpack.c.h.b16 %v561
    %v788 = vunpack.c.l.b16 %v562
    %v789 = vunpack.c.l.b16 %v563
    %v790 = vunpack.c.h.b16 %v563
    %v791 = vunpack.c.l.b16 %v564
    %v792 = vunpack.c.l.b16 %v565
    %v793 = vunpack.c.h.b16 %v565
    %v794 = vunpack.c.l.b16 %v566
    %v795 = vunpack.c.l.b16 %v567
    %v796 = vunpack.c.h.b16 %v567
    %v797 = vunpack.c.l.b16 %v568
    %v798 = vunpack.c.l.b16 %v569
    %v799 = vunpack.c.h.b16 %v569
    %v800 = vunpack.c.l.b16 %v570
    %v801 = vunpack.c.l.b16 %v571
    %v802 = vunpack.c.h.b16 %v571
    %v803 = vunpack.c.l.b16 %v572
    %v804 = vunpack.c.l.b16 %v573
    %v805 = vunpack.c.h.b16 %v573
    %v806 = vunpack.c.l.b16 %v574
    %v807 = vunpack.c.l.b16 %v575
    %v808 = vunpack.c.h.b16 %v575
    %v809 = vunpack.c.l.b16 %v576
    %v810 = vunpack.c.l.b16 %v577
    %v811 = vunpack.c.h.b16 %v577
    %v812 = vunpack.c.l.b16 %v578
    %v813 = vunpack.c.l.b16 %v579
    %v814 = vunpack.c.h.b16 %v579
    %v815 = vunpack.c.l.b16 %v580
    %v816 = vunpack.c.l.b16 %v581
    %v817 = vunpack.c.h.b16 %v581
    %v818 = vunpack.c.l.b16 %v582
    %v819 = vunpack.c.l.b16 %v583
    %v820 = vunpack.c.h.b16 %v583
    %v821 = vunpack.c.l.b16 %v584
    %v822 = vunpack.c.l.b16 %v585
    %v823 = vunpack.c.h.b16 %v585
    %v824 = vunpack.c.l.b16 %v586
    %v825 = vunpack.c.l.b16 %v587
    %v826 = vunpack.c.h.b16 %v587
    %v827 = vunpack.c.l.b16 %v588
    %v828 = vunpack.c.l.b16 %v589
    %v829 = vunpack.c.h.b16 %v589
    %v830 = vunpack.c.l.b16 %v590
    %v831 = vpack.c.b16 %v690, %v687
    %v832 = vpack.c.b16 %v691, %v688
    %v833 = vpack.c.b16 %v692, %v689
    %v834 = vpack.c.b16 %v696, %v693
    %v835 = vpack.c.b16 %v697, %v694
    %v836 = vpack.c.b16 %v698, %v695
    %v837 = vpack.c.b16 %v702, %v699
    %v838 = vpack.c.b16 %v703, %v700
    %v839 = vpack.c.b16 %v704, %v701
    %v840 = vpack.c.b16 %v708, %v705
    %v841 = vpack.c.b16 %v709, %v706
    %v842 = vpack.c.b16 %v710, %v707
    %v843 = vpack.c.b16 %v714, %v711
    %v844 = vpack.c.b16 %v715, %v712
    %v845 = vpack.c.b16 %v716, %v713
    %v846 = vpack.c.b16 %v720, %v717
    %v847 = vpack.c.b16 %v721, %v718
    %v848 = vpack.c.b16 %v722, %v719
    %v849 = vpack.c.b16 %v726, %v723
    %v850 = vpack.c.b16 %v727, %v724
    %v851 = vpack.c.b16 %v728, %v725
    %v852 = vpack.c.b16 %v732, %v729
    %v853 = vpack.c.b16 %v733, %v730
    %v854 = vpack.c.b16 %v734, %v731
    %v855 = vpack.c.b16 %v738, %v735
    %v856 = vpack.c.b16 %v739, %v736
    %v857 = vpack.c.b16 %v740, %v737
    %v858 = vpack.c.b16 %v744, %v741
    %v859 = vpack.c.b16 %v745, %v742
    %v860 = vpack.c.b16 %v746, %v743
    %v861 = vpack.c.b16 %v750, %v747
    %v862 = vpack.c.b16 %v751, %v748
    %v863 = vpack.c.b16 %v752, %v749
    %v864 = vpack.c.b16 %v756, %v753
    %v865 = vpack.c.b16 %v757, %v754
    %v866 = vpack.c.b16 %v758, %v755
    %v867 = vpack.c.b16 %v762, %v759
    %v868 = vpack.c.b16 %v763, %v760
    %v869 = vpack.c.b16 %v764, %v761
    %v870 = vpack.c.b16 %v768, %v765
    %v871 = vpack.c.b16 %v769, %v766
    %v872 = vpack.c.b16 %v770, %v767
    %v873 = vpack.c.b16 %v774, %v771
    %v874 = vpack.c.b16 %v775, %v772
    %v875 = vpack.c.b16 %v776, %v773
    %v876 = vpack.c.b16 %v780, %v777
    %v877 = vpack.c.b16 %v781, %v778
    %v878 = vpack.c.b16 %v782, %v779
    %v879 = vpack.c.b16 %v786, %v783
    %v880 = vpack.c.b16 %v787, %v784
    %v881 = vpack.c.b16 %v788, %v785
    %v882 = vpack.c.b16 %v792, %v789
    %v883 = vpack.c.b16 %v793, %v790
    %v884 = vpack.c.b16 %v794, %v791
    %v885 = vpack.c.b16 %v798, %v795
    %v886 = vpack.c.b16 %v799, %v796
    %v887 = vpack.c.b16 %v800, %v797
    %v888 = vpack.c.b16 %v804, %v801
    %v889 = vpack.c.b16 %v805, %v802
    %v890 = vpack.c.b16 %v806, %v803
    %v891 = vpack.c.b16 %v810, %v807
    %v892 = vpack.c.b16 %v811, %v808
    %v893 = vpack.c.b16 %v812, %v809
    %v894 = vpack.c.b16 %v816, %v813
    %v895 = vpack.c.b16 %v817, %v814
    %v896 = vpack.c.b16 %v818, %v815
    %v897 = vpack.c.b16 %v822, %v819
    %v898 = vpack.c.b16 %v823, %v820
    %v899 = vpack.c.b16 %v824, %v821
    %v900 = vpack.c.b16 %v828, %v825
    %v901 = vpack.c.b16 %v829, %v826
    %v902 = vpack.c.b16 %v830, %v827
    %975 = vmatprep.subr.bf16.mxu0 %v832
    %976 = vmatpush1.bf16.msra.mxu0 %v831
    %977 = vmatprep.subr.bf16.mxu0 %v835
    %978 = vmatpush1.bf16.msra.mxu0 %v834
    %979 = vmatprep.subr.bf16.mxu0 %v838
    %980 = vmatpush1.bf16.msra.mxu0 %v837
    %981 = vmatprep.subr.bf16.mxu0 %v841
    %982 = vmatpush1.bf16.msra.mxu0 %v840
    %983 = vmatprep.subr.bf16.mxu0 %v844
    %984 = vmatpush1.bf16.msra.mxu0 %v843
    %985 = vmatprep.subr.bf16.mxu0 %v847
    %986 = vmatpush1.bf16.msra.mxu0 %v846
    %987 = vmatprep.subr.bf16.mxu0 %v850
    %988 = vmatpush1.bf16.msra.mxu0 %v849
    %989 = vmatprep.subr.bf16.mxu0 %v853
    %990 = vmatpush1.bf16.msra.mxu0 %v852
    %991 = vmatprep.subr.bf16.mxu0 %v856
    %992 = vmatpush1.bf16.msra.mxu0 %v855
    %993 = vmatprep.subr.bf16.mxu0 %v859
    %994 = vmatpush1.bf16.msra.mxu0 %v858
    %995 = vmatprep.subr.bf16.mxu0 %v862
    %996 = vmatpush1.bf16.msra.mxu0 %v861
    %997 = vmatprep.subr.bf16.mxu0 %v865
    %998 = vmatpush1.bf16.msra.mxu0 %v864
    %999 = vmatprep.subr.bf16.mxu0 %v868
    %1000 = vmatpush1.bf16.msra.mxu0 %v867
    %1001 = vmatprep.subr.bf16.mxu0 %v871
    %1002 = vmatpush1.bf16.msra.mxu0 %v870
    %1003 = vmatprep.subr.bf16.mxu0 %v874
    %1004 = vmatpush1.bf16.msra.mxu0 %v873
    %1005 = vmatprep.subr.bf16.mxu0 %v877
    %1006 = vmatpush1.bf16.msra.mxu0 %v876
    %1007 = vmatprep.mubr.bf16.mxu0 %v484
    %1008 = vmatmul.mubr.bf16.gmra.mrb[0].mxu0 %v483
    %v1009 = vpop.f32.mrb[0].mxu0
    %v1010 = vadd.f32 0.0, %v1009
    %v1011 = vpop.f32.mrb[0].mxu0
    %v1012 = vadd.f32 0.0, %v1011
    %v1013 = vpop.f32.mrb[0].mxu0
    %v1014 = vadd.f32 0.0, %v1013
    %v1015 = vpop.f32.mrb[0].mxu0
    %v1016 = vadd.f32 0.0, %v1015
    %1017 = vmatprep.mubr.bf16.mxu0 %v487
    %1018 = vmatmul.mubr.bf16.gmra.mrb[0].mxu0 %v486
    %v1019 = vpop.f32.mrb[0].mxu0
    %v1020 = vadd.f32 0.0, %v1019
    %v1021 = vpop.f32.mrb[0].mxu0
    %v1022 = vadd.f32 0.0, %v1021
    %v1023 = vpop.f32.mrb[0].mxu0
    %v1024 = vadd.f32 0.0, %v1023
    %v1025 = vpop.f32.mrb[0].mxu0
    %v1026 = vadd.f32 0.0, %v1025
    %1027 = vmatprep.mubr.bf16.mxu0 %v490
    %1028 = vmatmul.mubr.bf16.gmra.mrb[0].mxu0 %v489
    %v1029 = vpop.f32.mrb[0].mxu0
    %v1030 = vadd.f32 0.0, %v1029
    %v1031 = vpop.f32.mrb[0].mxu0
    %v1032 = vadd.f32 0.0, %v1031
    %v1033 = vpop.f32.mrb[0].mxu0
    %v1034 = vadd.f32 0.0, %v1033
    %v1035 = vpop.f32.mrb[0].mxu0
    %v1036 = vadd.f32 0.0, %v1035
    %1037 = vmatprep.mubr.bf16.mxu0 %v493
    %1038 = vmatmul.mubr.bf16.gmra.mrb[0].mxu0 %v492
    %v1039 = vpop.f32.mrb[0].mxu0
    %v1040 = vadd.f32 0.0, %v1039
    %v1041 = vpop.f32.mrb[0].mxu0
    %v1042 = vadd.f32 0.0, %v1041
    %v1043 = vpop.f32.mrb[0].mxu0
    %v1044 = vadd.f32 0.0, %v1043
    %v1045 = vpop.f32.mrb[0].mxu0
    %v1046 = vadd.f32 0.0, %v1045
    %1047 = vdwg.mxu0
    %1048 = vmatprep.subr.bf16.mxu0 %v880
    %1049 = vmatpush1.bf16.msra.mxu0 %v879
    %1050 = vmatprep.subr.bf16.mxu0 %v883
    %1051 = vmatpush1.bf16.msra.mxu0 %v882
    %1052 = vmatprep.subr.bf16.mxu0 %v886
    %1053 = vmatpush1.bf16.msra.mxu0 %v885
    %1054 = vmatprep.subr.bf16.mxu0 %v889
    %1055 = vmatpush1.bf16.msra.mxu0 %v888
    %1056 = vmatprep.subr.bf16.mxu0 %v892
    %1057 = vmatpush1.bf16.msra.mxu0 %v891
    %1058 = vmatprep.subr.bf16.mxu0 %v895
    %1059 = vmatpush1.bf16.msra.mxu0 %v894
    %1060 = vmatprep.subr.bf16.mxu0 %v898
    %1061 = vmatpush1.bf16.msra.mxu0 %v897
    %1062 = vmatprep.subr.bf16.mxu0 %v901
    %1063 = vmatpush1.bf16.msra.mxu0 %v900
    %1064 = vmatprep.subr.bf16.mxu0 0
    %1065 = vmatpush1.bf16.msra.mxu0 0
    %1066 = vmatprep.subr.bf16.mxu0 0
    %1067 = vmatpush1.bf16.msra.mxu0 0
    %1068 = vmatprep.subr.bf16.mxu0 0
    %1069 = vmatpush1.bf16.msra.mxu0 0
    %1070 = vmatprep.subr.bf16.mxu0 0
    %1071 = vmatpush1.bf16.msra.mxu0 0
    %1072 = vmatprep.subr.bf16.mxu0 0
    %1073 = vmatpush1.bf16.msra.mxu0 0
    %1074 = vmatprep.subr.bf16.mxu0 0
    %1075 = vmatpush1.bf16.msra.mxu0 0
    %1076 = vmatprep.subr.bf16.mxu0 0
    %1077 = vmatpush1.bf16.msra.mxu0 0
    %1078 = vmatprep.subr.bf16.mxu0 0
    %1079 = vmatpush1.bf16.msra.mxu0 0
    %1080 = vmatprep.mubr.bf16.mxu0 0
    %1081 = vmatmul.mubr.bf16.gmra.mrb[0].mxu0 %v485
    %v1082 = vpop.f32.mrb[0].mxu0
    %v1083 = vadd.f32 %v1010, %v1082
    %v1084 = vpop.f32.mrb[0].mxu0
    %v1085 = vadd.f32 %v1012, %v1084
    %v1086 = vpop.f32.mrb[0].mxu0
    %v1087 = vadd.f32 %v1014, %v1086
    %v1088 = vpop.f32.mrb[0].mxu0
    %v1089 = vadd.f32 %v1016, %v1088
    %1090 = vmatprep.mubr.bf16.mxu0 0
    %1091 = vmatmul.mubr.bf16.gmra.mrb[0].mxu0 %v488
    %v1092 = vpop.f32.mrb[0].mxu0
    %v1093 = vadd.f32 %v1020, %v1092
    %v1094 = vpop.f32.mrb[0].mxu0
    %v1095 = vadd.f32 %v1022, %v1094
    %v1096 = vpop.f32.mrb[0].mxu0
    %v1097 = vadd.f32 %v1024, %v1096
    %v1098 = vpop.f32.mrb[0].mxu0
    %v1099 = vadd.f32 %v1026, %v1098
    %1100 = vmatprep.mubr.bf16.mxu0 0
    %1101 = vmatmul.mubr.bf16.gmra.mrb[0].mxu0 %v491
    %v1102 = vpop.f32.mrb[0].mxu0
    %v1103 = vadd.f32 %v1030, %v1102
    %v1104 = vpop.f32.mrb[0].mxu0
    %v1105 = vadd.f32 %v1032, %v1104
    %v1106 = vpop.f32.mrb[0].mxu0
    %v1107 = vadd.f32 %v1034, %v1106
    %v1108 = vpop.f32.mrb[0].mxu0
    %v1109 = vadd.f32 %v1036, %v1108
    %1110 = vmatprep.mubr.bf16.mxu0 0
    %1111 = vmatmul.mubr.bf16.gmra.mrb[0].mxu0 %v494
    %v1112 = vpop.f32.mrb[0].mxu0
    %v1113 = vadd.f32 %v1040, %v1112
    %v1114 = vpop.f32.mrb[0].mxu0
    %v1115 = vadd.f32 %v1042, %v1114
    %v1116 = vpop.f32.mrb[0].mxu0
    %v1117 = vadd.f32 %v1044, %v1116
    %v1118 = vpop.f32.mrb[0].mxu0
    %v1119 = vadd.f32 %v1046, %v1118
    %1120 = vdwg.mxu0
    %1121 = vmatprep.subr.bf16.mxu0 0
    %1122 = vmatpush1.bf16.msra.mxu0 %v833
    %1123 = vmatprep.subr.bf16.mxu0 0
    %1124 = vmatpush1.bf16.msra.mxu0 %v836
    %1125 = vmatprep.subr.bf16.mxu0 0
    %1126 = vmatpush1.bf16.msra.mxu0 %v839
    %1127 = vmatprep.subr.bf16.mxu0 0
    %1128 = vmatpush1.bf16.msra.mxu0 %v842
    %1129 = vmatprep.subr.bf16.mxu0 0
    %1130 = vmatpush1.bf16.msra.mxu0 %v845
    %1131 = vmatprep.subr.bf16.mxu0 0
    %1132 = vmatpush1.bf16.msra.mxu0 %v848
    %1133 = vmatprep.subr.bf16.mxu0 0
    %1134 = vmatpush1.bf16.msra.mxu0 %v851
    %1135 = vmatprep.subr.bf16.mxu0 0
    %1136 = vmatpush1.bf16.msra.mxu0 %v854
    %1137 = vmatprep.subr.bf16.mxu0 0
    %1138 = vmatpush1.bf16.msra.mxu0 %v857
    %1139 = vmatprep.subr.bf16.mxu0 0
    %1140 = vmatpush1.bf16.msra.mxu0 %v860
    %1141 = vmatprep.subr.bf16.mxu0 0
    %1142 = vmatpush1.bf16.msra.mxu0 %v863
    %1143 = vmatprep.subr.bf16.mxu0 0
    %1144 = vmatpush1.bf16.msra.mxu0 %v866
    %1145 = vmatprep.subr.bf16.mxu0 0
    %1146 = vmatpush1.bf16.msra.mxu0 %v869
    %1147 = vmatprep.subr.bf16.mxu0 0
    %1148 = vmatpush1.bf16.msra.mxu0 %v872
    %1149 = vmatprep.subr.bf16.mxu0 0
    %1150 = vmatpush1.bf16.msra.mxu0 %v875
    %1151 = vmatprep.subr.bf16.mxu0 0
    %1152 = vmatpush1.bf16.msra.mxu0 %v878
    %1153 = vmatprep.mubr.bf16.mxu0 %v484
    %1154 = vmatmul.mubr.bf16.gmra.mrb[0].mxu0 %v483
    %v1155 = vpop.f32.mrb[0].mxu0
    %v1156 = vadd.f32 0.0, %v1155
    %v1157 = vpop.f32.mrb[0].mxu0
    %v1158 = vpop.f32.mrb[0].mxu0
    %v1159 = vadd.f32 0.0, %v1158
    %v1160 = vpop.f32.mrb[0].mxu0
    %1161 = vmatprep.mubr.bf16.mxu0 %v487
    %1162 = vmatmul.mubr.bf16.gmra.mrb[0].mxu0 %v486
    %v1163 = vpop.f32.mrb[0].mxu0
    %v1164 = vadd.f32 0.0, %v1163
    %v1165 = vpop.f32.mrb[0].mxu0
    %v1166 = vpop.f32.mrb[0].mxu0
    %v1167 = vadd.f32 0.0, %v1166
    %v1168 = vpop.f32.mrb[0].mxu0
    %1169 = vmatprep.mubr.bf16.mxu0 %v490
    %1170 = vmatmul.mubr.bf16.gmra.mrb[0].mxu0 %v489
    %v1171 = vpop.f32.mrb[0].mxu0
    %v1172 = vadd.f32 0.0, %v1171
    %v1173 = vpop.f32.mrb[0].mxu0
    %v1174 = vpop.f32.mrb[0].mxu0
    %v1175 = vadd.f32 0.0, %v1174
    %v1176 = vpop.f32.mrb[0].mxu0
    %1177 = vmatprep.mubr.bf16.mxu0 %v493
    %1178 = vmatmul.mubr.bf16.gmra.mrb[0].mxu0 %v492
    %v1179 = vpop.f32.mrb[0].mxu0
    %v1180 = vadd.f32 0.0, %v1179
    %v1181 = vpop.f32.mrb[0].mxu0
    %v1182 = vpop.f32.mrb[0].mxu0
    %v1183 = vadd.f32 0.0, %v1182
    %v1184 = vpop.f32.mrb[0].mxu0
    %1185 = vdwg.mxu0
    %1186 = vmatprep.subr.bf16.mxu0 0
    %1187 = vmatpush1.bf16.msra.mxu0 %v881
    %1188 = vmatprep.subr.bf16.mxu0 0
    %1189 = vmatpush1.bf16.msra.mxu0 %v884
    %1190 = vmatprep.subr.bf16.mxu0 0
    %1191 = vmatpush1.bf16.msra.mxu0 %v887
    %1192 = vmatprep.subr.bf16.mxu0 0
    %1193 = vmatpush1.bf16.msra.mxu0 %v890
    %1194 = vmatprep.subr.bf16.mxu0 0
    %1195 = vmatpush1.bf16.msra.mxu0 %v893
    %1196 = vmatprep.subr.bf16.mxu0 0
    %1197 = vmatpush1.bf16.msra.mxu0 %v896
    %1198 = vmatprep.subr.bf16.mxu0 0
    %1199 = vmatpush1.bf16.msra.mxu0 %v899
    %1200 = vmatprep.subr.bf16.mxu0 0
    %1201 = vmatpush1.bf16.msra.mxu0 %v902
    %1202 = vmatprep.subr.bf16.mxu0 0
    %1203 = vmatpush1.bf16.msra.mxu0 0
    %1204 = vmatprep.subr.bf16.mxu0 0
    %1205 = vmatpush1.bf16.msra.mxu0 0
    %1206 = vmatprep.subr.bf16.mxu0 0
    %1207 = vmatpush1.bf16.msra.mxu0 0
    %1208 = vmatprep.subr.bf16.mxu0 0
    %1209 = vmatpush1.bf16.msra.mxu0 0
    %1210 = vmatprep.subr.bf16.mxu0 0
    %1211 = vmatpush1.bf16.msra.mxu0 0
    %1212 = vmatprep.subr.bf16.mxu0 0
    %1213 = vmatpush1.bf16.msra.mxu0 0
    %1214 = vmatprep.subr.bf16.mxu0 0
    %1215 = vmatpush1.bf16.msra.mxu0 0
    %1216 = vmatprep.subr.bf16.mxu0 0
    %1217 = vmatpush1.bf16.msra.mxu0 0
    %1218 = vmatprep.mubr.bf16.mxu0 0
    %1219 = vmatmul.mubr.bf16.gmra.mrb[0].mxu0 %v485
    %v1220 = vpop.f32.mrb[0].mxu0
    %v1221 = vadd.f32 %v1156, %v1220
    %v1222 = vpop.f32.mrb[0].mxu0
    %v1223 = vpop.f32.mrb[0].mxu0
    %v1224 = vadd.f32 %v1159, %v1223
    %v1225 = vpop.f32.mrb[0].mxu0
    %1226 = vmatprep.mubr.bf16.mxu0 0
    %1227 = vmatmul.mubr.bf16.gmra.mrb[0].mxu0 %v488
    %v1228 = vpop.f32.mrb[0].mxu0
    %v1229 = vadd.f32 %v1164, %v1228
    %v1230 = vpop.f32.mrb[0].mxu0
    %v1231 = vpop.f32.mrb[0].mxu0
    %v1232 = vadd.f32 %v1167, %v1231
    %v1233 = vpop.f32.mrb[0].mxu0
    %1234 = vmatprep.mubr.bf16.mxu0 0
    %1235 = vmatmul.mubr.bf16.gmra.mrb[0].mxu0 %v491
    %v1236 = vpop.f32.mrb[0].mxu0
    %v1237 = vadd.f32 %v1172, %v1236
    %v1238 = vpop.f32.mrb[0].mxu0
    %v1239 = vpop.f32.mrb[0].mxu0
    %v1240 = vadd.f32 %v1175, %v1239
    %v1241 = vpop.f32.mrb[0].mxu0
    %1242 = vmatprep.mubr.bf16.mxu0 0
    %1243 = vmatmul.mubr.bf16.gmra.mrb[0].mxu0 %v494
    %v1244 = vpop.f32.mrb[0].mxu0
    %v1245 = vadd.f32 %v1180, %v1244
    %v1246 = vpop.f32.mrb[0].mxu0
    %v1247 = vpop.f32.mrb[0].mxu0
    %v1248 = vadd.f32 %v1183, %v1247
    %v1249 = vpop.f32.mrb[0].mxu0
    %1250 = vdwg.mxu0
    %v1251 = vpack.c.bf16 %v1087, %v1083
    %v1252 = vpack.c.bf16 %v1089, %v1085
    %v1253 = vpack.c.bf16 %v1224, %v1221
    %v1254 = vpack.c.bf16 %v1097, %v1093
    %v1255 = vpack.c.bf16 %v1099, %v1095
    %v1256 = vpack.c.bf16 %v1232, %v1229
    %v1257 = vpack.c.bf16 %v1107, %v1103
    %v1258 = vpack.c.bf16 %v1109, %v1105
    %v1259 = vpack.c.bf16 %v1240, %v1237
    %v1260 = vpack.c.bf16 %v1117, %v1113
    %v1261 = vpack.c.bf16 %v1119, %v1115
    %v1262 = vpack.c.bf16 %v1248, %v1245
    %v1263 = vld [vmem:[#allocation10] sm:$0xff]
    %v1264 = vld [vmem:[#allocation10 + $0x8] sm:$0xf]
    %v1265 = vld [vmem:[#allocation10 + $0xc] sm:$0xff]
    %v1266 = vld [vmem:[#allocation10 + $0x14] sm:$0xf]
    %v1267 = vld [vmem:[#allocation10 + $0x18] sm:$0xff]
    %v1268 = vld [vmem:[#allocation10 + $0x20] sm:$0xf]
    %v1269 = vld [vmem:[#allocation10 + $0x24] sm:$0xff]
    %v1270 = vld [vmem:[#allocation10 + $0x2c] sm:$0xf]
    %v1271 = vld [vmem:[#allocation10 + $0x30] sm:$0xff]
    %v1272 = vld [vmem:[#allocation10 + $0x38] sm:$0xf]
    %v1273 = vld [vmem:[#allocation10 + $0x3c] sm:$0xff]
    %v1274 = vld [vmem:[#allocation10 + $0x44] sm:$0xf]
    %v1275 = vld [vmem:[#allocation10 + $0x48] sm:$0xff]
    %v1276 = vld [vmem:[#allocation10 + $0x50] sm:$0xf]
    %v1277 = vld [vmem:[#allocation10 + $0x54] sm:$0xff]
    %v1278 = vld [vmem:[#allocation10 + $0x5c] sm:$0xf]
    %v1279 = vld [vmem:[#allocation10 + $0x60] sm:$0xff]
    %v1280 = vld [vmem:[#allocation10 + $0x68] sm:$0xf]
    %v1281 = vld [vmem:[#allocation10 + $0x6c] sm:$0xff]
    %v1282 = vld [vmem:[#allocation10 + $0x74] sm:$0xf]
    %v1283 = vld [vmem:[#allocation10 + $0x78] sm:$0xff]
    %v1284 = vld [vmem:[#allocation10 + $0x80] sm:$0xf]
    %v1285 = vld [vmem:[#allocation10 + $0x84] sm:$0xff]
    %v1286 = vld [vmem:[#allocation10 + $0x8c] sm:$0xf]
    %v1287 = vld [vmem:[#allocation10 + $0x90] sm:$0xff]
    %v1288 = vld [vmem:[#allocation10 + $0x98] sm:$0xf]
    %v1289 = vld [vmem:[#allocation10 + $0x9c] sm:$0xff]
    %v1290 = vld [vmem:[#allocation10 + $0xa4] sm:$0xf]
    %v1291 = vld [vmem:[#allocation10 + $0xa8] sm:$0xff]
    %v1292 = vld [vmem:[#allocation10 + $0xb0] sm:$0xf]
    %v1293 = vld [vmem:[#allocation10 + $0xb4] sm:$0xff]
    %v1294 = vld [vmem:[#allocation10 + $0xbc] sm:$0xf]
    %v1295 = vld [vmem:[#allocation10 + $0xc0] sm:$0xff]
    %v1296 = vld [vmem:[#allocation10 + $0xc8] sm:$0xf]
    %v1297 = vld [vmem:[#allocation10 + $0xcc] sm:$0xff]
    %v1298 = vld [vmem:[#allocation10 + $0xd4] sm:$0xf]
    %v1299 = vld [vmem:[#allocation10 + $0xd8] sm:$0xff]
    %v1300 = vld [vmem:[#allocation10 + $0xe0] sm:$0xf]
    %v1301 = vld [vmem:[#allocation10 + $0xe4] sm:$0xff]
    %v1302 = vld [vmem:[#allocation10 + $0xec] sm:$0xf]
    %v1303 = vld [vmem:[#allocation10 + $0xf0] sm:$0xff]
    %v1304 = vld [vmem:[#allocation10 + $0xf8] sm:$0xf]
    %v1305 = vld [vmem:[#allocation10 + $0xfc] sm:$0xff]
    %v1306 = vld [vmem:[#allocation10 + $0x104] sm:$0xf]
    %v1307 = vld [vmem:[#allocation10 + $0x108] sm:$0xff]
    %v1308 = vld [vmem:[#allocation10 + $0x110] sm:$0xf]
    %v1309 = vld [vmem:[#allocation10 + $0x114] sm:$0xff]
    %v1310 = vld [vmem:[#allocation10 + $0x11c] sm:$0xf]
    %v1311 = vld [vmem:[#allocation10 + $0x120] sm:$0xff]
    %v1312 = vld [vmem:[#allocation10 + $0x128] sm:$0xf]
    %v1313 = vld [vmem:[#allocation10 + $0x12c] sm:$0xff]
    %v1314 = vld [vmem:[#allocation10 + $0x134] sm:$0xf]
    %v1315 = vld [vmem:[#allocation10 + $0x138] sm:$0xff]
    %v1316 = vld [vmem:[#allocation10 + $0x140] sm:$0xf]
    %v1317 = vld [vmem:[#allocation10 + $0x144] sm:$0xff]
    %v1318 = vld [vmem:[#allocation10 + $0x14c] sm:$0xf]
    %v1319 = vld [vmem:[#allocation10 + $0x150] sm:$0xff]
    %v1320 = vld [vmem:[#allocation10 + $0x158] sm:$0xf]
    %v1321 = vld [vmem:[#allocation10 + $0x15c] sm:$0xff]
    %v1322 = vld [vmem:[#allocation10 + $0x164] sm:$0xf]
    %v1323 = vld [vmem:[#allocation10 + $0x168] sm:$0xff]
    %v1324 = vld [vmem:[#allocation10 + $0x170] sm:$0xf]
    %v1325 = vld [vmem:[#allocation10 + $0x174] sm:$0xff]
    %v1326 = vld [vmem:[#allocation10 + $0x17c] sm:$0xf]
    %v1327 = vld [vmem:[#allocation10 + $0x180] sm:$0xff]
    %v1328 = vld [vmem:[#allocation10 + $0x188] sm:$0xf]
    %v1329 = vld [vmem:[#allocation10 + $0x18c] sm:$0xff]
    %v1330 = vld [vmem:[#allocation10 + $0x194] sm:$0xf]
    %v1331 = vld [vmem:[#allocation10 + $0x198] sm:$0xff]
    %v1332 = vld [vmem:[#allocation10 + $0x1a0] sm:$0xf]
    %v1333 = vld [vmem:[#allocation10 + $0x1a4] sm:$0xff]
    %v1334 = vld [vmem:[#allocation10 + $0x1ac] sm:$0xf]
    %v1335 = vld [vmem:[#allocation10 + $0x1b0] sm:$0xff]
    %v1336 = vld [vmem:[#allocation10 + $0x1b8] sm:$0xf]
    %v1337 = vld [vmem:[#allocation10 + $0x1bc] sm:$0xff]
    %v1338 = vld [vmem:[#allocation10 + $0x1c4] sm:$0xf]
    %v1339 = vld [vmem:[#allocation10 + $0x1c8] sm:$0xff]
    %v1340 = vld [vmem:[#allocation10 + $0x1d0] sm:$0xf]
    %v1341 = vld [vmem:[#allocation10 + $0x1d4] sm:$0xff]
    %v1342 = vld [vmem:[#allocation10 + $0x1dc] sm:$0xf]
    %v1343 = vld [vmem:[#allocation10 + $0x1e0] sm:$0xff]
    %v1344 = vld [vmem:[#allocation10 + $0x1e8] sm:$0xf]
    %v1345 = vld [vmem:[#allocation10 + $0x1ec] sm:$0xff]
    %v1346 = vld [vmem:[#allocation10 + $0x1f4] sm:$0xf]
    %v1347 = vld [vmem:[#allocation10 + $0x1f8] sm:$0xff]
    %v1348 = vld [vmem:[#allocation10 + $0x200] sm:$0xf]
    %v1349 = vld [vmem:[#allocation10 + $0x204] sm:$0xff]
    %v1350 = vld [vmem:[#allocation10 + $0x20c] sm:$0xf]
    %v1351 = vld [vmem:[#allocation10 + $0x210] sm:$0xff]
    %v1352 = vld [vmem:[#allocation10 + $0x218] sm:$0xf]
    %v1353 = vld [vmem:[#allocation10 + $0x21c] sm:$0xff]
    %v1354 = vld [vmem:[#allocation10 + $0x224] sm:$0xf]
    %v1355 = vld [vmem:[#allocation10 + $0x228] sm:$0xff]
    %v1356 = vld [vmem:[#allocation10 + $0x230] sm:$0xf]
    %v1357 = vld [vmem:[#allocation10 + $0x234] sm:$0xff]
    %v1358 = vld [vmem:[#allocation10 + $0x23c] sm:$0xf]
    %v1455 = vunpack.c.l.b16 %v1263
    %v1456 = vunpack.c.h.b16 %v1263
    %v1457 = vunpack.c.l.b16 %v1264
    %v1458 = vunpack.c.l.b16 %v1265
    %v1459 = vunpack.c.h.b16 %v1265
    %v1460 = vunpack.c.l.b16 %v1266
    %v1461 = vunpack.c.l.b16 %v1267
    %v1462 = vunpack.c.h.b16 %v1267
    %v1463 = vunpack.c.l.b16 %v1268
    %v1464 = vunpack.c.l.b16 %v1269
    %v1465 = vunpack.c.h.b16 %v1269
    %v1466 = vunpack.c.l.b16 %v1270
    %v1467 = vunpack.c.l.b16 %v1271
    %v1468 = vunpack.c.h.b16 %v1271
    %v1469 = vunpack.c.l.b16 %v1272
    %v1470 = vunpack.c.l.b16 %v1273
    %v1471 = vunpack.c.h.b16 %v1273
    %v1472 = vunpack.c.l.b16 %v1274
    %v1473 = vunpack.c.l.b16 %v1275
    %v1474 = vunpack.c.h.b16 %v1275
    %v1475 = vunpack.c.l.b16 %v1276
    %v1476 = vunpack.c.l.b16 %v1277
    %v1477 = vunpack.c.h.b16 %v1277
    %v1478 = vunpack.c.l.b16 %v1278
    %v1479 = vunpack.c.l.b16 %v1279
    %v1480 = vunpack.c.h.b16 %v1279
    %v1481 = vunpack.c.l.b16 %v1280
    %v1482 = vunpack.c.l.b16 %v1281
    %v1483 = vunpack.c.h.b16 %v1281
    %v1484 = vunpack.c.l.b16 %v1282
    %v1485 = vunpack.c.l.b16 %v1283
    %v1486 = vunpack.c.h.b16 %v1283
    %v1487 = vunpack.c.l.b16 %v1284
    %v1488 = vunpack.c.l.b16 %v1285
    %v1489 = vunpack.c.h.b16 %v1285
    %v1490 = vunpack.c.l.b16 %v1286
    %v1491 = vunpack.c.l.b16 %v1287
    %v1492 = vunpack.c.h.b16 %v1287
    %v1493 = vunpack.c.l.b16 %v1288
    %v1494 = vunpack.c.l.b16 %v1289
    %v1495 = vunpack.c.h.b16 %v1289
    %v1496 = vunpack.c.l.b16 %v1290
    %v1497 = vunpack.c.l.b16 %v1291
    %v1498 = vunpack.c.h.b16 %v1291
    %v1499 = vunpack.c.l.b16 %v1292
    %v1500 = vunpack.c.l.b16 %v1293
    %v1501 = vunpack.c.h.b16 %v1293
    %v1502 = vunpack.c.l.b16 %v1294
    %v1503 = vunpack.c.l.b16 %v1295
    %v1504 = vunpack.c.h.b16 %v1295
    %v1505 = vunpack.c.l.b16 %v1296
    %v1506 = vunpack.c.l.b16 %v1297
    %v1507 = vunpack.c.h.b16 %v1297
    %v1508 = vunpack.c.l.b16 %v1298
    %v1509 = vunpack.c.l.b16 %v1299
    %v1510 = vunpack.c.h.b16 %v1299
    %v1511 = vunpack.c.l.b16 %v1300
    %v1512 = vunpack.c.l.b16 %v1301
    %v1513 = vunpack.c.h.b16 %v1301
    %v1514 = vunpack.c.l.b16 %v1302
    %v1515 = vunpack.c.l.b16 %v1303
    %v1516 = vunpack.c.h.b16 %v1303
    %v1517 = vunpack.c.l.b16 %v1304
    %v1518 = vunpack.c.l.b16 %v1305
    %v1519 = vunpack.c.h.b16 %v1305
    %v1520 = vunpack.c.l.b16 %v1306
    %v1521 = vunpack.c.l.b16 %v1307
    %v1522 = vunpack.c.h.b16 %v1307
    %v1523 = vunpack.c.l.b16 %v1308
    %v1524 = vunpack.c.l.b16 %v1309
    %v1525 = vunpack.c.h.b16 %v1309
    %v1526 = vunpack.c.l.b16 %v1310
    %v1527 = vunpack.c.l.b16 %v1311
    %v1528 = vunpack.c.h.b16 %v1311
    %v1529 = vunpack.c.l.b16 %v1312
    %v1530 = vunpack.c.l.b16 %v1313
    %v1531 = vunpack.c.h.b16 %v1313
    %v1532 = vunpack.c.l.b16 %v1314
    %v1533 = vunpack.c.l.b16 %v1315
    %v1534 = vunpack.c.h.b16 %v1315
    %v1535 = vunpack.c.l.b16 %v1316
    %v1536 = vunpack.c.l.b16 %v1317
    %v1537 = vunpack.c.h.b16 %v1317
    %v1538 = vunpack.c.l.b16 %v1318
    %v1539 = vunpack.c.l.b16 %v1319
    %v1540 = vunpack.c.h.b16 %v1319
    %v1541 = vunpack.c.l.b16 %v1320
    %v1542 = vunpack.c.l.b16 %v1321
    %v1543 = vunpack.c.h.b16 %v1321
    %v1544 = vunpack.c.l.b16 %v1322
    %v1545 = vunpack.c.l.b16 %v1323
    %v1546 = vunpack.c.h.b16 %v1323
    %v1547 = vunpack.c.l.b16 %v1324
    %v1548 = vunpack.c.l.b16 %v1325
    %v1549 = vunpack.c.h.b16 %v1325
    %v1550 = vunpack.c.l.b16 %v1326
    %v1551 = vunpack.c.l.b16 %v1327
    %v1552 = vunpack.c.h.b16 %v1327
    %v1553 = vunpack.c.l.b16 %v1328
    %v1554 = vunpack.c.l.b16 %v1329
    %v1555 = vunpack.c.h.b16 %v1329
    %v1556 = vunpack.c.l.b16 %v1330
    %v1557 = vunpack.c.l.b16 %v1331
    %v1558 = vunpack.c.h.b16 %v1331
    %v1559 = vunpack.c.l.b16 %v1332
    %v1560 = vunpack.c.l.b16 %v1333
    %v1561 = vunpack.c.h.b16 %v1333
    %v1562 = vunpack.c.l.b16 %v1334
    %v1563 = vunpack.c.l.b16 %v1335
    %v1564 = vunpack.c.h.b16 %v1335
    %v1565 = vunpack.c.l.b16 %v1336
    %v1566 = vunpack.c.l.b16 %v1337
    %v1567 = vunpack.c.h.b16 %v1337
    %v1568 = vunpack.c.l.b16 %v1338
    %v1569 = vunpack.c.l.b16 %v1339
    %v1570 = vunpack.c.h.b16 %v1339
    %v1571 = vunpack.c.l.b16 %v1340
    %v1572 = vunpack.c.l.b16 %v1341
    %v1573 = vunpack.c.h.b16 %v1341
    %v1574 = vunpack.c.l.b16 %v1342
    %v1575 = vunpack.c.l.b16 %v1343
    %v1576 = vunpack.c.h.b16 %v1343
    %v1577 = vunpack.c.l.b16 %v1344
    %v1578 = vunpack.c.l.b16 %v1345
    %v1579 = vunpack.c.h.b16 %v1345
    %v1580 = vunpack.c.l.b16 %v1346
    %v1581 = vunpack.c.l.b16 %v1347
    %v1582 = vunpack.c.h.b16 %v1347
    %v1583 = vunpack.c.l.b16 %v1348
    %v1584 = vunpack.c.l.b16 %v1349
    %v1585 = vunpack.c.h.b16 %v1349
    %v1586 = vunpack.c.l.b16 %v1350
    %v1587 = vunpack.c.l.b16 %v1351
    %v1588 = vunpack.c.h.b16 %v1351
    %v1589 = vunpack.c.l.b16 %v1352
    %v1590 = vunpack.c.l.b16 %v1353
    %v1591 = vunpack.c.h.b16 %v1353
    %v1592 = vunpack.c.l.b16 %v1354
    %v1593 = vunpack.c.l.b16 %v1355
    %v1594 = vunpack.c.h.b16 %v1355
    %v1595 = vunpack.c.l.b16 %v1356
    %v1596 = vunpack.c.l.b16 %v1357
    %v1597 = vunpack.c.h.b16 %v1357
    %v1598 = vunpack.c.l.b16 %v1358
    %v1599 = vpack.c.b16 %v1458, %v1455
    %v1600 = vpack.c.b16 %v1459, %v1456
    %v1601 = vpack.c.b16 %v1460, %v1457
    %v1602 = vpack.c.b16 %v1464, %v1461
    %v1603 = vpack.c.b16 %v1465, %v1462
    %v1604 = vpack.c.b16 %v1466, %v1463
    %v1605 = vpack.c.b16 %v1470, %v1467
    %v1606 = vpack.c.b16 %v1471, %v1468
    %v1607 = vpack.c.b16 %v1472, %v1469
    %v1608 = vpack.c.b16 %v1476, %v1473
    %v1609 = vpack.c.b16 %v1477, %v1474
    %v1610 = vpack.c.b16 %v1478, %v1475
    %v1611 = vpack.c.b16 %v1482, %v1479
    %v1612 = vpack.c.b16 %v1483, %v1480
    %v1613 = vpack.c.b16 %v1484, %v1481
    %v1614 = vpack.c.b16 %v1488, %v1485
    %v1615 = vpack.c.b16 %v1489, %v1486
    %v1616 = vpack.c.b16 %v1490, %v1487
    %v1617 = vpack.c.b16 %v1494, %v1491
    %v1618 = vpack.c.b16 %v1495, %v1492
    %v1619 = vpack.c.b16 %v1496, %v1493
    %v1620 = vpack.c.b16 %v1500, %v1497
    %v1621 = vpack.c.b16 %v1501, %v1498
    %v1622 = vpack.c.b16 %v1502, %v1499
    %v1623 = vpack.c.b16 %v1506, %v1503
    %v1624 = vpack.c.b16 %v1507, %v1504
    %v1625 = vpack.c.b16 %v1508, %v1505
    %v1626 = vpack.c.b16 %v1512, %v1509
    %v1627 = vpack.c.b16 %v1513, %v1510
    %v1628 = vpack.c.b16 %v1514, %v1511
    %v1629 = vpack.c.b16 %v1518, %v1515
    %v1630 = vpack.c.b16 %v1519, %v1516
    %v1631 = vpack.c.b16 %v1520, %v1517
    %v1632 = vpack.c.b16 %v1524, %v1521
    %v1633 = vpack.c.b16 %v1525, %v1522
    %v1634 = vpack.c.b16 %v1526, %v1523
    %v1635 = vpack.c.b16 %v1530, %v1527
    %v1636 = vpack.c.b16 %v1531, %v1528
    %v1637 = vpack.c.b16 %v1532, %v1529
    %v1638 = vpack.c.b16 %v1536, %v1533
    %v1639 = vpack.c.b16 %v1537, %v1534
    %v1640 = vpack.c.b16 %v1538, %v1535
    %v1641 = vpack.c.b16 %v1542, %v1539
    %v1642 = vpack.c.b16 %v1543, %v1540
    %v1643 = vpack.c.b16 %v1544, %v1541
    %v1644 = vpack.c.b16 %v1548, %v1545
    %v1645 = vpack.c.b16 %v1549, %v1546
    %v1646 = vpack.c.b16 %v1550, %v1547
    %v1647 = vpack.c.b16 %v1554, %v1551
    %v1648 = vpack.c.b16 %v1555, %v1552
    %v1649 = vpack.c.b16 %v1556, %v1553
    %v1650 = vpack.c.b16 %v1560, %v1557
    %v1651 = vpack.c.b16 %v1561, %v1558
    %v1652 = vpack.c.b16 %v1562, %v1559
    %v1653 = vpack.c.b16 %v1566, %v1563
    %v1654 = vpack.c.b16 %v1567, %v1564
    %v1655 = vpack.c.b16 %v1568, %v1565
    %v1656 = vpack.c.b16 %v1572, %v1569
    %v1657 = vpack.c.b16 %v1573, %v1570
    %v1658 = vpack.c.b16 %v1574, %v1571
    %v1659 = vpack.c.b16 %v1578, %v1575
    %v1660 = vpack.c.b16 %v1579, %v1576
    %v1661 = vpack.c.b16 %v1580, %v1577
    %v1662 = vpack.c.b16 %v1584, %v1581
    %v1663 = vpack.c.b16 %v1585, %v1582
    %v1664 = vpack.c.b16 %v1586, %v1583
    %v1665 = vpack.c.b16 %v1590, %v1587
    %v1666 = vpack.c.b16 %v1591, %v1588
    %v1667 = vpack.c.b16 %v1592, %v1589
    %v1668 = vpack.c.b16 %v1596, %v1593
    %v1669 = vpack.c.b16 %v1597, %v1594
    %v1670 = vpack.c.b16 %v1598, %v1595
    %1743 = vmatprep.subr.bf16.mxu0 %v1600
    %1744 = vmatpush1.bf16.msra.mxu0 %v1599
    %1745 = vmatprep.subr.bf16.mxu0 %v1603
    %1746 = vmatpush1.bf16.msra.mxu0 %v1602
    %1747 = vmatprep.subr.bf16.mxu0 %v1606
    %1748 = vmatpush1.bf16.msra.mxu0 %v1605
    %1749 = vmatprep.subr.bf16.mxu0 %v1609
    %1750 = vmatpush1.bf16.msra.mxu0 %v1608
    %1751 = vmatprep.subr.bf16.mxu0 %v1612
    %1752 = vmatpush1.bf16.msra.mxu0 %v1611
    %1753 = vmatprep.subr.bf16.mxu0 %v1615
    %1754 = vmatpush1.bf16.msra.mxu0 %v1614
    %1755 = vmatprep.subr.bf16.mxu0 %v1618
    %1756 = vmatpush1.bf16.msra.mxu0 %v1617
    %1757 = vmatprep.subr.bf16.mxu0 %v1621
    %1758 = vmatpush1.bf16.msra.mxu0 %v1620
    %1759 = vmatprep.subr.bf16.mxu0 %v1624
    %1760 = vmatpush1.bf16.msra.mxu0 %v1623
    %1761 = vmatprep.subr.bf16.mxu0 %v1627
    %1762 = vmatpush1.bf16.msra.mxu0 %v1626
    %1763 = vmatprep.subr.bf16.mxu0 %v1630
    %1764 = vmatpush1.bf16.msra.mxu0 %v1629
    %1765 = vmatprep.subr.bf16.mxu0 %v1633
    %1766 = vmatpush1.bf16.msra.mxu0 %v1632
    %1767 = vmatprep.subr.bf16.mxu0 %v1636
    %1768 = vmatpush1.bf16.msra.mxu0 %v1635
    %1769 = vmatprep.subr.bf16.mxu0 %v1639
    %1770 = vmatpush1.bf16.msra.mxu0 %v1638
    %1771 = vmatprep.subr.bf16.mxu0 %v1642
    %1772 = vmatpush1.bf16.msra.mxu0 %v1641
    %1773 = vmatprep.subr.bf16.mxu0 %v1645
    %1774 = vmatpush1.bf16.msra.mxu0 %v1644
    %1775 = vmatprep.mubr.bf16.mxu0 %v484
    %1776 = vmatmul.mubr.bf16.gmra.mrb[0].mxu0 %v483
    %v1777 = vpop.f32.mrb[0].mxu0
    %v1778 = vadd.f32 0.0, %v1777
    %v1779 = vpop.f32.mrb[0].mxu0
    %v1780 = vadd.f32 0.0, %v1779
    %v1781 = vpop.f32.mrb[0].mxu0
    %v1782 = vadd.f32 0.0, %v1781
    %v1783 = vpop.f32.mrb[0].mxu0
    %v1784 = vadd.f32 0.0, %v1783
    %1785 = vmatprep.mubr.bf16.mxu0 %v487
    %1786 = vmatmul.mubr.bf16.gmra.mrb[0].mxu0 %v486
    %v1787 = vpop.f32.mrb[0].mxu0
    %v1788 = vadd.f32 0.0, %v1787
    %v1789 = vpop.f32.mrb[0].mxu0
    %v1790 = vadd.f32 0.0, %v1789
    %v1791 = vpop.f32.mrb[0].mxu0
    %v1792 = vadd.f32 0.0, %v1791
    %v1793 = vpop.f32.mrb[0].mxu0
    %v1794 = vadd.f32 0.0, %v1793
    %1795 = vmatprep.mubr.bf16.mxu0 %v490
    %1796 = vmatmul.mubr.bf16.gmra.mrb[0].mxu0 %v489
    %v1797 = vpop.f32.mrb[0].mxu0
    %v1798 = vadd.f32 0.0, %v1797
    %v1799 = vpop.f32.mrb[0].mxu0
    %v1800 = vadd.f32 0.0, %v1799
    %v1801 = vpop.f32.mrb[0].mxu0
    %v1802 = vadd.f32 0.0, %v1801
    %v1803 = vpop.f32.mrb[0].mxu0
    %v1804 = vadd.f32 0.0, %v1803
    %1805 = vmatprep.mubr.bf16.mxu0 %v493
    %1806 = vmatmul.mubr.bf16.gmra.mrb[0].mxu0 %v492
    %v1807 = vpop.f32.mrb[0].mxu0
    %v1808 = vadd.f32 0.0, %v1807
    %v1809 = vpop.f32.mrb[0].mxu0
    %v1810 = vadd.f32 0.0, %v1809
    %v1811 = vpop.f32.mrb[0].mxu0
    %v1812 = vadd.f32 0.0, %v1811
    %v1813 = vpop.f32.mrb[0].mxu0
    %v1814 = vadd.f32 0.0, %v1813
    %1815 = vdwg.mxu0
    %1816 = vmatprep.subr.bf16.mxu0 %v1648
    %1817 = vmatpush1.bf16.msra.mxu0 %v1647
    %1818 = vmatprep.subr.bf16.mxu0 %v1651
    %1819 = vmatpush1.bf16.msra.mxu0 %v1650
    %1820 = vmatprep.subr.bf16.mxu0 %v1654
    %1821 = vmatpush1.bf16.msra.mxu0 %v1653
    %1822 = vmatprep.subr.bf16.mxu0 %v1657
    %1823 = vmatpush1.bf16.msra.mxu0 %v1656
    %1824 = vmatprep.subr.bf16.mxu0 %v1660
    %1825 = vmatpush1.bf16.msra.mxu0 %v1659
    %1826 = vmatprep.subr.bf16.mxu0 %v1663
    %1827 = vmatpush1.bf16.msra.mxu0 %v1662
    %1828 = vmatprep.subr.bf16.mxu0 %v1666
    %1829 = vmatpush1.bf16.msra.mxu0 %v1665
    %1830 = vmatprep.subr.bf16.mxu0 %v1669
    %1831 = vmatpush1.bf16.msra.mxu0 %v1668
    %1832 = vmatprep.subr.bf16.mxu0 0
    %1833 = vmatpush1.bf16.msra.mxu0 0
    %1834 = vmatprep.subr.bf16.mxu0 0
    %1835 = vmatpush1.bf16.msra.mxu0 0
    %1836 = vmatprep.subr.bf16.mxu0 0
    %1837 = vmatpush1.bf16.msra.mxu0 0
    %1838 = vmatprep.subr.bf16.mxu0 0
    %1839 = vmatpush1.bf16.msra.mxu0 0
    %1840 = vmatprep.subr.bf16.mxu0 0
    %1841 = vmatpush1.bf16.msra.mxu0 0
    %1842 = vmatprep.subr.bf16.mxu0 0
    %1843 = vmatpush1.bf16.msra.mxu0 0
    %1844 = vmatprep.subr.bf16.mxu0 0
    %1845 = vmatpush1.bf16.msra.mxu0 0
    %1846 = vmatprep.subr.bf16.mxu0 0
    %1847 = vmatpush1.bf16.msra.mxu0 0
    %1848 = vmatprep.mubr.bf16.mxu0 0
    %1849 = vmatmul.mubr.bf16.gmra.mrb[0].mxu0 %v485
    %v1850 = vpop.f32.mrb[0].mxu0
    %v1851 = vadd.f32 %v1778, %v1850
    %v1852 = vpop.f32.mrb[0].mxu0
    %v1853 = vadd.f32 %v1780, %v1852
    %v1854 = vpop.f32.mrb[0].mxu0
    %v1855 = vadd.f32 %v1782, %v1854
    %v1856 = vpop.f32.mrb[0].mxu0
    %v1857 = vadd.f32 %v1784, %v1856
    %1858 = vmatprep.mubr.bf16.mxu0 0
    %1859 = vmatmul.mubr.bf16.gmra.mrb[0].mxu0 %v488
    %v1860 = vpop.f32.mrb[0].mxu0
    %v1861 = vadd.f32 %v1788, %v1860
    %v1862 = vpop.f32.mrb[0].mxu0
    %v1863 = vadd.f32 %v1790, %v1862
    %v1864 = vpop.f32.mrb[0].mxu0
    %v1865 = vadd.f32 %v1792, %v1864
    %v1866 = vpop.f32.mrb[0].mxu0
    %v1867 = vadd.f32 %v1794, %v1866
    %1868 = vmatprep.mubr.bf16.mxu0 0
    %1869 = vmatmul.mubr.bf16.gmra.mrb[0].mxu0 %v491
    %v1870 = vpop.f32.mrb[0].mxu0
    %v1871 = vadd.f32 %v1798, %v1870
    %v1872 = vpop.f32.mrb[0].mxu0
    %v1873 = vadd.f32 %v1800, %v1872
    %v1874 = vpop.f32.mrb[0].mxu0
    %v1875 = vadd.f32 %v1802, %v1874
    %v1876 = vpop.f32.mrb[0].mxu0
    %v1877 = vadd.f32 %v1804, %v1876
    %1878 = vmatprep.mubr.bf16.mxu0 0
    %1879 = vmatmul.mubr.bf16.gmra.mrb[0].mxu0 %v494
    %v1880 = vpop.f32.mrb[0].mxu0
    %v1881 = vadd.f32 %v1808, %v1880
    %v1882 = vpop.f32.mrb[0].mxu0
    %v1883 = vadd.f32 %v1810, %v1882
    %v1884 = vpop.f32.mrb[0].mxu0
    %v1885 = vadd.f32 %v1812, %v1884
    %v1886 = vpop.f32.mrb[0].mxu0
    %v1887 = vadd.f32 %v1814, %v1886
    %1888 = vdwg.mxu0
    %1889 = vmatprep.subr.bf16.mxu0 0
    %1890 = vmatpush1.bf16.msra.mxu0 %v1601
    %1891 = vmatprep.subr.bf16.mxu0 0
    %1892 = vmatpush1.bf16.msra.mxu0 %v1604
    %1893 = vmatprep.subr.bf16.mxu0 0
    %1894 = vmatpush1.bf16.msra.mxu0 %v1607
    %1895 = vmatprep.subr.bf16.mxu0 0
    %1896 = vmatpush1.bf16.msra.mxu0 %v1610
    %1897 = vmatprep.subr.bf16.mxu0 0
    %1898 = vmatpush1.bf16.msra.mxu0 %v1613
    %1899 = vmatprep.subr.bf16.mxu0 0
    %1900 = vmatpush1.bf16.msra.mxu0 %v1616
    %1901 = vmatprep.subr.bf16.mxu0 0
    %1902 = vmatpush1.bf16.msra.mxu0 %v1619
    %1903 = vmatprep.subr.bf16.mxu0 0
    %1904 = vmatpush1.bf16.msra.mxu0 %v1622
    %1905 = vmatprep.subr.bf16.mxu0 0
    %1906 = vmatpush1.bf16.msra.mxu0 %v1625
    %1907 = vmatprep.subr.bf16.mxu0 0
    %1908 = vmatpush1.bf16.msra.mxu0 %v1628
    %1909 = vmatprep.subr.bf16.mxu0 0
    %1910 = vmatpush1.bf16.msra.mxu0 %v1631
    %1911 = vmatprep.subr.bf16.mxu0 0
    %1912 = vmatpush1.bf16.msra.mxu0 %v1634
    %1913 = vmatprep.subr.bf16.mxu0 0
    %1914 = vmatpush1.bf16.msra.mxu0 %v1637
    %1915 = vmatprep.subr.bf16.mxu0 0
    %1916 = vmatpush1.bf16.msra.mxu0 %v1640
    %1917 = vmatprep.subr.bf16.mxu0 0
    %1918 = vmatpush1.bf16.msra.mxu0 %v1643
    %1919 = vmatprep.subr.bf16.mxu0 0
    %1920 = vmatpush1.bf16.msra.mxu0 %v1646
    %1921 = vmatprep.mubr.bf16.mxu0 %v484
    %1922 = vmatmul.mubr.bf16.gmra.mrb[0].mxu0 %v483
    %v1923 = vpop.f32.mrb[0].mxu0
    %v1924 = vadd.f32 0.0, %v1923
    %v1925 = vpop.f32.mrb[0].mxu0
    %v1926 = vpop.f32.mrb[0].mxu0
    %v1927 = vadd.f32 0.0, %v1926
    %v1928 = vpop.f32.mrb[0].mxu0
    %1929 = vmatprep.mubr.bf16.mxu0 %v487
    %1930 = vmatmul.mubr.bf16.gmra.mrb[0].mxu0 %v486
    %v1931 = vpop.f32.mrb[0].mxu0
    %v1932 = vadd.f32 0.0, %v1931
    %v1933 = vpop.f32.mrb[0].mxu0
    %v1934 = vpop.f32.mrb[0].mxu0
    %v1935 = vadd.f32 0.0, %v1934
    %v1936 = vpop.f32.mrb[0].mxu0
    %1937 = vmatprep.mubr.bf16.mxu0 %v490
    %1938 = vmatmul.mubr.bf16.gmra.mrb[0].mxu0 %v489
    %v1939 = vpop.f32.mrb[0].mxu0
    %v1940 = vadd.f32 0.0, %v1939
    %v1941 = vpop.f32.mrb[0].mxu0
    %v1942 = vpop.f32.mrb[0].mxu0
    %v1943 = vadd.f32 0.0, %v1942
    %v1944 = vpop.f32.mrb[0].mxu0
    %1945 = vmatprep.mubr.bf16.mxu0 %v493
    %1946 = vmatmul.mubr.bf16.gmra.mrb[0].mxu0 %v492
    %v1947 = vpop.f32.mrb[0].mxu0
    %v1948 = vadd.f32 0.0, %v1947
    %v1949 = vpop.f32.mrb[0].mxu0
    %v1950 = vpop.f32.mrb[0].mxu0
    %v1951 = vadd.f32 0.0, %v1950
    %v1952 = vpop.f32.mrb[0].mxu0
    %1953 = vdwg.mxu0
    %1954 = vmatprep.subr.bf16.mxu0 0
    %1955 = vmatpush1.bf16.msra.mxu0 %v1649
    %1956 = vmatprep.subr.bf16.mxu0 0
    %1957 = vmatpush1.bf16.msra.mxu0 %v1652
    %1958 = vmatprep.subr.bf16.mxu0 0
    %1959 = vmatpush1.bf16.msra.mxu0 %v1655
    %1960 = vmatprep.subr.bf16.mxu0 0
    %1961 = vmatpush1.bf16.msra.mxu0 %v1658
    %1962 = vmatprep.subr.bf16.mxu0 0
    %1963 = vmatpush1.bf16.msra.mxu0 %v1661
    %1964 = vmatprep.subr.bf16.mxu0 0
    %1965 = vmatpush1.bf16.msra.mxu0 %v1664
    %1966 = vmatprep.subr.bf16.mxu0 0
    %1967 = vmatpush1.bf16.msra.mxu0 %v1667
    %1968 = vmatprep.subr.bf16.mxu0 0
    %1969 = vmatpush1.bf16.msra.mxu0 %v1670
    %1970 = vmatprep.subr.bf16.mxu0 0
    %1971 = vmatpush1.bf16.msra.mxu0 0
    %1972 = vmatprep.subr.bf16.mxu0 0
    %1973 = vmatpush1.bf16.msra.mxu0 0
    %1974 = vmatprep.subr.bf16.mxu0 0
    %1975 = vmatpush1.bf16.msra.mxu0 0
    %1976 = vmatprep.subr.bf16.mxu0 0
    %1977 = vmatpush1.bf16.msra.mxu0 0
    %1978 = vmatprep.subr.bf16.mxu0 0
    %1979 = vmatpush1.bf16.msra.mxu0 0
    %1980 = vmatprep.subr.bf16.mxu0 0
    %1981 = vmatpush1.bf16.msra.mxu0 0
    %1982 = vmatprep.subr.bf16.mxu0 0
    %1983 = vmatpush1.bf16.msra.mxu0 0
    %1984 = vmatprep.subr.bf16.mxu0 0
    %1985 = vmatpush1.bf16.msra.mxu0 0
    %1986 = vmatprep.mubr.bf16.mxu0 0
    %1987 = vmatmul.mubr.bf16.gmra.mrb[0].mxu0 %v485
    %v1988 = vpop.f32.mrb[0].mxu0
    %v1989 = vadd.f32 %v1924, %v1988
    %v1990 = vpop.f32.mrb[0].mxu0
    %v1991 = vpop.f32.mrb[0].mxu0
    %v1992 = vadd.f32 %v1927, %v1991
    %v1993 = vpop.f32.mrb[0].mxu0
    %1994 = vmatprep.mubr.bf16.mxu0 0
    %1995 = vmatmul.mubr.bf16.gmra.mrb[0].mxu0 %v488
    %v1996 = vpop.f32.mrb[0].mxu0
    %v1997 = vadd.f32 %v1932, %v1996
    %v1998 = vpop.f32.mrb[0].mxu0
    %v1999 = vpop.f32.mrb[0].mxu0
    %v2000 = vadd.f32 %v1935, %v1999
    %v2001 = vpop.f32.mrb[0].mxu0
    %2002 = vmatprep.mubr.bf16.mxu0 0
    %2003 = vmatmul.mubr.bf16.gmra.mrb[0].mxu0 %v491
    %v2004 = vpop.f32.mrb[0].mxu0
    %v2005 = vadd.f32 %v1940, %v2004
    %v2006 = vpop.f32.mrb[0].mxu0
    %v2007 = vpop.f32.mrb[0].mxu0
    %v2008 = vadd.f32 %v1943, %v2007
    %v2009 = vpop.f32.mrb[0].mxu0
    %2010 = vmatprep.mubr.bf16.mxu0 0
    %2011 = vmatmul.mubr.bf16.gmra.mrb[0].mxu0 %v494
    %v2012 = vpop.f32.mrb[0].mxu0
    %v2013 = vadd.f32 %v1948, %v2012
    %v2014 = vpop.f32.mrb[0].mxu0
    %v2015 = vpop.f32.mrb[0].mxu0
    %v2016 = vadd.f32 %v1951, %v2015
    %v2017 = vpop.f32.mrb[0].mxu0
    %2018 = vdwg.mxu0
    %v2019 = vpack.c.bf16 %v1855, %v1851
    %v2020 = vpack.c.bf16 %v1857, %v1853
    %v2021 = vpack.c.bf16 %v1992, %v1989
    %v2022 = vpack.c.bf16 %v1865, %v1861
    %v2023 = vpack.c.bf16 %v1867, %v1863
    %v2024 = vpack.c.bf16 %v2000, %v1997
    %v2025 = vpack.c.bf16 %v1875, %v1871
    %v2026 = vpack.c.bf16 %v1877, %v1873
    %v2027 = vpack.c.bf16 %v2008, %v2005
    %v2028 = vpack.c.bf16 %v1885, %v1881
    %v2029 = vpack.c.bf16 %v1887, %v1883
    %v2030 = vpack.c.bf16 %v2016, %v2013
    %v2031 = vld [vmem:[#allocation11] sm:$0xff]
    %v2032 = vld [vmem:[#allocation11 + $0x8] sm:$0xf]
    %v2033 = vld [vmem:[#allocation11 + $0xc] sm:$0xff]
    %v2034 = vld [vmem:[#allocation11 + $0x14] sm:$0xf]
    %v2035 = vld [vmem:[#allocation11 + $0x18] sm:$0xff]
    %v2036 = vld [vmem:[#allocation11 + $0x20] sm:$0xf]
    %v2037 = vld [vmem:[#allocation11 + $0x24] sm:$0xff]
    %v2038 = vld [vmem:[#allocation11 + $0x2c] sm:$0xf]
    %v2039 = vld [vmem:[#allocation11 + $0x30] sm:$0xff]
    %v2040 = vld [vmem:[#allocation11 + $0x38] sm:$0xf]
    %v2041 = vld [vmem:[#allocation11 + $0x3c] sm:$0xff]
    %v2042 = vld [vmem:[#allocation11 + $0x44] sm:$0xf]
    %v2043 = vld [vmem:[#allocation11 + $0x48] sm:$0xff]
    %v2044 = vld [vmem:[#allocation11 + $0x50] sm:$0xf]
    %v2045 = vld [vmem:[#allocation11 + $0x54] sm:$0xff]
    %v2046 = vld [vmem:[#allocation11 + $0x5c] sm:$0xf]
    %v2047 = vld [vmem:[#allocation11 + $0x60] sm:$0xff]
    %v2048 = vld [vmem:[#allocation11 + $0x68] sm:$0xf]
    %v2049 = vld [vmem:[#allocation11 + $0x6c] sm:$0xff]
    %v2050 = vld [vmem:[#allocation11 + $0x74] sm:$0xf]
    %v2051 = vld [vmem:[#allocation11 + $0x78] sm:$0xff]
    %v2052 = vld [vmem:[#allocation11 + $0x80] sm:$0xf]
    %v2053 = vld [vmem:[#allocation11 + $0x84] sm:$0xff]
    %v2054 = vld [vmem:[#allocation11 + $0x8c] sm:$0xf]
    %v2055 = vld [vmem:[#allocation11 + $0x90] sm:$0xff]
    %v2056 = vld [vmem:[#allocation11 + $0x98] sm:$0xf]
    %v2057 = vld [vmem:[#allocation11 + $0x9c] sm:$0xff]
    %v2058 = vld [vmem:[#allocation11 + $0xa4] sm:$0xf]
    %v2059 = vld [vmem:[#allocation11 + $0xa8] sm:$0xff]
    %v2060 = vld [vmem:[#allocation11 + $0xb0] sm:$0xf]
    %v2061 = vld [vmem:[#allocation11 + $0xb4] sm:$0xff]
    %v2062 = vld [vmem:[#allocation11 + $0xbc] sm:$0xf]
    %v2063 = vld [vmem:[#allocation11 + $0xc0] sm:$0xff]
    %v2064 = vld [vmem:[#allocation11 + $0xc8] sm:$0xf]
    %v2065 = vld [vmem:[#allocation11 + $0xcc] sm:$0xff]
    %v2066 = vld [vmem:[#allocation11 + $0xd4] sm:$0xf]
    %v2067 = vld [vmem:[#allocation11 + $0xd8] sm:$0xff]
    %v2068 = vld [vmem:[#allocation11 + $0xe0] sm:$0xf]
    %v2069 = vld [vmem:[#allocation11 + $0xe4] sm:$0xff]
    %v2070 = vld [vmem:[#allocation11 + $0xec] sm:$0xf]
    %v2071 = vld [vmem:[#allocation11 + $0xf0] sm:$0xff]
    %v2072 = vld [vmem:[#allocation11 + $0xf8] sm:$0xf]
    %v2073 = vld [vmem:[#allocation11 + $0xfc] sm:$0xff]
    %v2074 = vld [vmem:[#allocation11 + $0x104] sm:$0xf]
    %v2075 = vld [vmem:[#allocation11 + $0x108] sm:$0xff]
    %v2076 = vld [vmem:[#allocation11 + $0x110] sm:$0xf]
    %v2077 = vld [vmem:[#allocation11 + $0x114] sm:$0xff]
    %v2078 = vld [vmem:[#allocation11 + $0x11c] sm:$0xf]
    %v2079 = vld [vmem:[#allocation11 + $0x120] sm:$0xff]
    %v2080 = vld [vmem:[#allocation11 + $0x128] sm:$0xf]
    %v2081 = vld [vmem:[#allocation11 + $0x12c] sm:$0xff]
    %v2082 = vld [vmem:[#allocation11 + $0x134] sm:$0xf]
    %v2083 = vld [vmem:[#allocation11 + $0x138] sm:$0xff]
    %v2084 = vld [vmem:[#allocation11 + $0x140] sm:$0xf]
    %v2085 = vld [vmem:[#allocation11 + $0x144] sm:$0xff]
    %v2086 = vld [vmem:[#allocation11 + $0x14c] sm:$0xf]
    %v2087 = vld [vmem:[#allocation11 + $0x150] sm:$0xff]
    %v2088 = vld [vmem:[#allocation11 + $0x158] sm:$0xf]
    %v2089 = vld [vmem:[#allocation11 + $0x15c] sm:$0xff]
    %v2090 = vld [vmem:[#allocation11 + $0x164] sm:$0xf]
    %v2091 = vld [vmem:[#allocation11 + $0x168] sm:$0xff]
    %v2092 = vld [vmem:[#allocation11 + $0x170] sm:$0xf]
    %v2093 = vld [vmem:[#allocation11 + $0x174] sm:$0xff]
    %v2094 = vld [vmem:[#allocation11 + $0x17c] sm:$0xf]
    %v2095 = vld [vmem:[#allocation11 + $0x180] sm:$0xff]
    %v2096 = vld [vmem:[#allocation11 + $0x188] sm:$0xf]
    %v2097 = vld [vmem:[#allocation11 + $0x18c] sm:$0xff]
    %v2098 = vld [vmem:[#allocation11 + $0x194] sm:$0xf]
    %v2099 = vld [vmem:[#allocation11 + $0x198] sm:$0xff]
    %v2100 = vld [vmem:[#allocation11 + $0x1a0] sm:$0xf]
    %v2101 = vld [vmem:[#allocation11 + $0x1a4] sm:$0xff]
    %v2102 = vld [vmem:[#allocation11 + $0x1ac] sm:$0xf]
    %v2103 = vld [vmem:[#allocation11 + $0x1b0] sm:$0xff]
    %v2104 = vld [vmem:[#allocation11 + $0x1b8] sm:$0xf]
    %v2105 = vld [vmem:[#allocation11 + $0x1bc] sm:$0xff]
    %v2106 = vld [vmem:[#allocation11 + $0x1c4] sm:$0xf]
    %v2107 = vld [vmem:[#allocation11 + $0x1c8] sm:$0xff]
    %v2108 = vld [vmem:[#allocation11 + $0x1d0] sm:$0xf]
    %v2109 = vld [vmem:[#allocation11 + $0x1d4] sm:$0xff]
    %v2110 = vld [vmem:[#allocation11 + $0x1dc] sm:$0xf]
    %v2111 = vld [vmem:[#allocation11 + $0x1e0] sm:$0xff]
    %v2112 = vld [vmem:[#allocation11 + $0x1e8] sm:$0xf]
    %v2113 = vld [vmem:[#allocation11 + $0x1ec] sm:$0xff]
    %v2114 = vld [vmem:[#allocation11 + $0x1f4] sm:$0xf]
    %v2115 = vld [vmem:[#allocation11 + $0x1f8] sm:$0xff]
    %v2116 = vld [vmem:[#allocation11 + $0x200] sm:$0xf]
    %v2117 = vld [vmem:[#allocation11 + $0x204] sm:$0xff]
    %v2118 = vld [vmem:[#allocation11 + $0x20c] sm:$0xf]
    %v2119 = vld [vmem:[#allocation11 + $0x210] sm:$0xff]
    %v2120 = vld [vmem:[#allocation11 + $0x218] sm:$0xf]
    %v2121 = vld [vmem:[#allocation11 + $0x21c] sm:$0xff]
    %v2122 = vld [vmem:[#allocation11 + $0x224] sm:$0xf]
    %v2123 = vld [vmem:[#allocation11 + $0x228] sm:$0xff]
    %v2124 = vld [vmem:[#allocation11 + $0x230] sm:$0xf]
    %v2125 = vld [vmem:[#allocation11 + $0x234] sm:$0xff]
    %v2126 = vld [vmem:[#allocation11 + $0x23c] sm:$0xf]
    %v2223 = vunpack.c.l.b16 %v2031
    %v2224 = vunpack.c.h.b16 %v2031
    %v2225 = vunpack.c.l.b16 %v2032
    %v2226 = vunpack.c.l.b16 %v2033
    %v2227 = vunpack.c.h.b16 %v2033
    %v2228 = vunpack.c.l.b16 %v2034
    %v2229 = vunpack.c.l.b16 %v2035
    %v2230 = vunpack.c.h.b16 %v2035
    %v2231 = vunpack.c.l.b16 %v2036
    %v2232 = vunpack.c.l.b16 %v2037
    %v2233 = vunpack.c.h.b16 %v2037
    %v2234 = vunpack.c.l.b16 %v2038
    %v2235 = vunpack.c.l.b16 %v2039
    %v2236 = vunpack.c.h.b16 %v2039
    %v2237 = vunpack.c.l.b16 %v2040
    %v2238 = vunpack.c.l.b16 %v2041
    %v2239 = vunpack.c.h.b16 %v2041
    %v2240 = vunpack.c.l.b16 %v2042
    %v2241 = vunpack.c.l.b16 %v2043
    %v2242 = vunpack.c.h.b16 %v2043
    %v2243 = vunpack.c.l.b16 %v2044
    %v2244 = vunpack.c.l.b16 %v2045
    %v2245 = vunpack.c.h.b16 %v2045
    %v2246 = vunpack.c.l.b16 %v2046
    %v2247 = vunpack.c.l.b16 %v2047
    %v2248 = vunpack.c.h.b16 %v2047
    %v2249 = vunpack.c.l.b16 %v2048
    %v2250 = vunpack.c.l.b16 %v2049
    %v2251 = vunpack.c.h.b16 %v2049
    %v2252 = vunpack.c.l.b16 %v2050
    %v2253 = vunpack.c.l.b16 %v2051
    %v2254 = vunpack.c.h.b16 %v2051
    %v2255 = vunpack.c.l.b16 %v2052
    %v2256 = vunpack.c.l.b16 %v2053
    %v2257 = vunpack.c.h.b16 %v2053
    %v2258 = vunpack.c.l.b16 %v2054
    %v2259 = vunpack.c.l.b16 %v2055
    %v2260 = vunpack.c.h.b16 %v2055
    %v2261 = vunpack.c.l.b16 %v2056
    %v2262 = vunpack.c.l.b16 %v2057
    %v2263 = vunpack.c.h.b16 %v2057
    %v2264 = vunpack.c.l.b16 %v2058
    %v2265 = vunpack.c.l.b16 %v2059
    %v2266 = vunpack.c.h.b16 %v2059
    %v2267 = vunpack.c.l.b16 %v2060
    %v2268 = vunpack.c.l.b16 %v2061
    %v2269 = vunpack.c.h.b16 %v2061
    %v2270 = vunpack.c.l.b16 %v2062
    %v2271 = vunpack.c.l.b16 %v2063
    %v2272 = vunpack.c.h.b16 %v2063
    %v2273 = vunpack.c.l.b16 %v2064
    %v2274 = vunpack.c.l.b16 %v2065
    %v2275 = vunpack.c.h.b16 %v2065
    %v2276 = vunpack.c.l.b16 %v2066
    %v2277 = vunpack.c.l.b16 %v2067
    %v2278 = vunpack.c.h.b16 %v2067
    %v2279 = vunpack.c.l.b16 %v2068
    %v2280 = vunpack.c.l.b16 %v2069
    %v2281 = vunpack.c.h.b16 %v2069
    %v2282 = vunpack.c.l.b16 %v2070
    %v2283 = vunpack.c.l.b16 %v2071
    %v2284 = vunpack.c.h.b16 %v2071
    %v2285 = vunpack.c.l.b16 %v2072
    %v2286 = vunpack.c.l.b16 %v2073
    %v2287 = vunpack.c.h.b16 %v2073
    %v2288 = vunpack.c.l.b16 %v2074
    %v2289 = vunpack.c.l.b16 %v2075
    %v2290 = vunpack.c.h.b16 %v2075
    %v2291 = vunpack.c.l.b16 %v2076
    %v2292 = vunpack.c.l.b16 %v2077
    %v2293 = vunpack.c.h.b16 %v2077
    %v2294 = vunpack.c.l.b16 %v2078
    %v2295 = vunpack.c.l.b16 %v2079
    %v2296 = vunpack.c.h.b16 %v2079
    %v2297 = vunpack.c.l.b16 %v2080
    %v2298 = vunpack.c.l.b16 %v2081
    %v2299 = vunpack.c.h.b16 %v2081
    %v2300 = vunpack.c.l.b16 %v2082
    %v2301 = vunpack.c.l.b16 %v2083
    %v2302 = vunpack.c.h.b16 %v2083
    %v2303 = vunpack.c.l.b16 %v2084
    %v2304 = vunpack.c.l.b16 %v2085
    %v2305 = vunpack.c.h.b16 %v2085
    %v2306 = vunpack.c.l.b16 %v2086
    %v2307 = vunpack.c.l.b16 %v2087
    %v2308 = vunpack.c.h.b16 %v2087
    %v2309 = vunpack.c.l.b16 %v2088
    %v2310 = vunpack.c.l.b16 %v2089
    %v2311 = vunpack.c.h.b16 %v2089
    %v2312 = vunpack.c.l.b16 %v2090
    %v2313 = vunpack.c.l.b16 %v2091
    %v2314 = vunpack.c.h.b16 %v2091
    %v2315 = vunpack.c.l.b16 %v2092
    %v2316 = vunpack.c.l.b16 %v2093
    %v2317 = vunpack.c.h.b16 %v2093
    %v2318 = vunpack.c.l.b16 %v2094
    %v2319 = vunpack.c.l.b16 %v2095
    %v2320 = vunpack.c.h.b16 %v2095
    %v2321 = vunpack.c.l.b16 %v2096
    %v2322 = vunpack.c.l.b16 %v2097
    %v2323 = vunpack.c.h.b16 %v2097
    %v2324 = vunpack.c.l.b16 %v2098
    %v2325 = vunpack.c.l.b16 %v2099
    %v2326 = vunpack.c.h.b16 %v2099
    %v2327 = vunpack.c.l.b16 %v2100
    %v2328 = vunpack.c.l.b16 %v2101
    %v2329 = vunpack.c.h.b16 %v2101
    %v2330 = vunpack.c.l.b16 %v2102
    %v2331 = vunpack.c.l.b16 %v2103
    %v2332 = vunpack.c.h.b16 %v2103
    %v2333 = vunpack.c.l.b16 %v2104
    %v2334 = vunpack.c.l.b16 %v2105
    %v2335 = vunpack.c.h.b16 %v2105
    %v2336 = vunpack.c.l.b16 %v2106
    %v2337 = vunpack.c.l.b16 %v2107
    %v2338 = vunpack.c.h.b16 %v2107
    %v2339 = vunpack.c.l.b16 %v2108
    %v2340 = vunpack.c.l.b16 %v2109
    %v2341 = vunpack.c.h.b16 %v2109
    %v2342 = vunpack.c.l.b16 %v2110
    %v2343 = vunpack.c.l.b16 %v2111
    %v2344 = vunpack.c.h.b16 %v2111
    %v2345 = vunpack.c.l.b16 %v2112
    %v2346 = vunpack.c.l.b16 %v2113
    %v2347 = vunpack.c.h.b16 %v2113
    %v2348 = vunpack.c.l.b16 %v2114
    %v2349 = vunpack.c.l.b16 %v2115
    %v2350 = vunpack.c.h.b16 %v2115
    %v2351 = vunpack.c.l.b16 %v2116
    %v2352 = vunpack.c.l.b16 %v2117
    %v2353 = vunpack.c.h.b16 %v2117
    %v2354 = vunpack.c.l.b16 %v2118
    %v2355 = vunpack.c.l.b16 %v2119
    %v2356 = vunpack.c.h.b16 %v2119
    %v2357 = vunpack.c.l.b16 %v2120
    %v2358 = vunpack.c.l.b16 %v2121
    %v2359 = vunpack.c.h.b16 %v2121
    %v2360 = vunpack.c.l.b16 %v2122
    %v2361 = vunpack.c.l.b16 %v2123
    %v2362 = vunpack.c.h.b16 %v2123
    %v2363 = vunpack.c.l.b16 %v2124
    %v2364 = vunpack.c.l.b16 %v2125
    %v2365 = vunpack.c.h.b16 %v2125
    %v2366 = vunpack.c.l.b16 %v2126
    %v2367 = vpack.c.b16 %v2226, %v2223
    %v2368 = vpack.c.b16 %v2227, %v2224
    %v2369 = vpack.c.b16 %v2228, %v2225
    %v2370 = vpack.c.b16 %v2232, %v2229
    %v2371 = vpack.c.b16 %v2233, %v2230
    %v2372 = vpack.c.b16 %v2234, %v2231
    %v2373 = vpack.c.b16 %v2238, %v2235
    %v2374 = vpack.c.b16 %v2239, %v2236
    %v2375 = vpack.c.b16 %v2240, %v2237
    %v2376 = vpack.c.b16 %v2244, %v2241
    %v2377 = vpack.c.b16 %v2245, %v2242
    %v2378 = vpack.c.b16 %v2246, %v2243
    %v2379 = vpack.c.b16 %v2250, %v2247
    %v2380 = vpack.c.b16 %v2251, %v2248
    %v2381 = vpack.c.b16 %v2252, %v2249
    %v2382 = vpack.c.b16 %v2256, %v2253
    %v2383 = vpack.c.b16 %v2257, %v2254
    %v2384 = vpack.c.b16 %v2258, %v2255
    %v2385 = vpack.c.b16 %v2262, %v2259
    %v2386 = vpack.c.b16 %v2263, %v2260
    %v2387 = vpack.c.b16 %v2264, %v2261
    %v2388 = vpack.c.b16 %v2268, %v2265
    %v2389 = vpack.c.b16 %v2269, %v2266
    %v2390 = vpack.c.b16 %v2270, %v2267
    %v2391 = vpack.c.b16 %v2274, %v2271
    %v2392 = vpack.c.b16 %v2275, %v2272
    %v2393 = vpack.c.b16 %v2276, %v2273
    %v2394 = vpack.c.b16 %v2280, %v2277
    %v2395 = vpack.c.b16 %v2281, %v2278
    %v2396 = vpack.c.b16 %v2282, %v2279
    %v2397 = vpack.c.b16 %v2286, %v2283
    %v2398 = vpack.c.b16 %v2287, %v2284
    %v2399 = vpack.c.b16 %v2288, %v2285
    %v2400 = vpack.c.b16 %v2292, %v2289
    %v2401 = vpack.c.b16 %v2293, %v2290
    %v2402 = vpack.c.b16 %v2294, %v2291
    %v2403 = vpack.c.b16 %v2298, %v2295
    %v2404 = vpack.c.b16 %v2299, %v2296
    %v2405 = vpack.c.b16 %v2300, %v2297
    %v2406 = vpack.c.b16 %v2304, %v2301
    %v2407 = vpack.c.b16 %v2305, %v2302
    %v2408 = vpack.c.b16 %v2306, %v2303
    %v2409 = vpack.c.b16 %v2310, %v2307
    %v2410 = vpack.c.b16 %v2311, %v2308
    %v2411 = vpack.c.b16 %v2312, %v2309
    %v2412 = vpack.c.b16 %v2316, %v2313
    %v2413 = vpack.c.b16 %v2317, %v2314
    %v2414 = vpack.c.b16 %v2318, %v2315
    %v2415 = vpack.c.b16 %v2322, %v2319
    %v2416 = vpack.c.b16 %v2323, %v2320
    %v2417 = vpack.c.b16 %v2324, %v2321
    %v2418 = vpack.c.b16 %v2328, %v2325
    %v2419 = vpack.c.b16 %v2329, %v2326
    %v2420 = vpack.c.b16 %v2330, %v2327
    %v2421 = vpack.c.b16 %v2334, %v2331
    %v2422 = vpack.c.b16 %v2335, %v2332
    %v2423 = vpack.c.b16 %v2336, %v2333
    %v2424 = vpack.c.b16 %v2340, %v2337
    %v2425 = vpack.c.b16 %v2341, %v2338
    %v2426 = vpack.c.b16 %v2342, %v2339
    %v2427 = vpack.c.b16 %v2346, %v2343
    %v2428 = vpack.c.b16 %v2347, %v2344
    %v2429 = vpack.c.b16 %v2348, %v2345
    %v2430 = vpack.c.b16 %v2352, %v2349
    %v2431 = vpack.c.b16 %v2353, %v2350
    %v2432 = vpack.c.b16 %v2354, %v2351
    %v2433 = vpack.c.b16 %v2358, %v2355
    %v2434 = vpack.c.b16 %v2359, %v2356
    %v2435 = vpack.c.b16 %v2360, %v2357
    %v2436 = vpack.c.b16 %v2364, %v2361
    %v2437 = vpack.c.b16 %v2365, %v2362
    %v2438 = vpack.c.b16 %v2366, %v2363
    %2511 = vmatprep.subr.bf16.mxu0 %v2368
    %2512 = vmatpush1.bf16.msra.mxu0 %v2367
    %2513 = vmatprep.subr.bf16.mxu0 %v2371
    %2514 = vmatpush1.bf16.msra.mxu0 %v2370
    %2515 = vmatprep.subr.bf16.mxu0 %v2374
    %2516 = vmatpush1.bf16.msra.mxu0 %v2373
    %2517 = vmatprep.subr.bf16.mxu0 %v2377
    %2518 = vmatpush1.bf16.msra.mxu0 %v2376
    %2519 = vmatprep.subr.bf16.mxu0 %v2380
    %2520 = vmatpush1.bf16.msra.mxu0 %v2379
    %2521 = vmatprep.subr.bf16.mxu0 %v2383
    %2522 = vmatpush1.bf16.msra.mxu0 %v2382
    %2523 = vmatprep.subr.bf16.mxu0 %v2386
    %2524 = vmatpush1.bf16.msra.mxu0 %v2385
    %2525 = vmatprep.subr.bf16.mxu0 %v2389
    %2526 = vmatpush1.bf16.msra.mxu0 %v2388
    %2527 = vmatprep.subr.bf16.mxu0 %v2392
    %2528 = vmatpush1.bf16.msra.mxu0 %v2391
    %2529 = vmatprep.subr.bf16.mxu0 %v2395
    %2530 = vmatpush1.bf16.msra.mxu0 %v2394
    %2531 = vmatprep.subr.bf16.mxu0 %v2398
    %2532 = vmatpush1.bf16.msra.mxu0 %v2397
    %2533 = vmatprep.subr.bf16.mxu0 %v2401
    %2534 = vmatpush1.bf16.msra.mxu0 %v2400
    %2535 = vmatprep.subr.bf16.mxu0 %v2404
    %2536 = vmatpush1.bf16.msra.mxu0 %v2403
    %2537 = vmatprep.subr.bf16.mxu0 %v2407
    %2538 = vmatpush1.bf16.msra.mxu0 %v2406
    %2539 = vmatprep.subr.bf16.mxu0 %v2410
    %2540 = vmatpush1.bf16.msra.mxu0 %v2409
    %2541 = vmatprep.subr.bf16.mxu0 %v2413
    %2542 = vmatpush1.bf16.msra.mxu0 %v2412
    %2543 = vmatprep.mubr.bf16.mxu0 %v484
    %2544 = vmatmul.mubr.bf16.gmra.mrb[0].mxu0 %v483
    %v2545 = vpop.f32.mrb[0].mxu0
    %v2546 = vadd.f32 0.0, %v2545
    %v2547 = vpop.f32.mrb[0].mxu0
    %v2548 = vadd.f32 0.0, %v2547
    %v2549 = vpop.f32.mrb[0].mxu0
    %v2550 = vadd.f32 0.0, %v2549
    %v2551 = vpop.f32.mrb[0].mxu0
    %v2552 = vadd.f32 0.0, %v2551
    %2553 = vmatprep.mubr.bf16.mxu0 %v487
    %2554 = vmatmul.mubr.bf16.gmra.mrb[0].mxu0 %v486
    %v2555 = vpop.f32.mrb[0].mxu0
    %v2556 = vadd.f32 0.0, %v2555
    %v2557 = vpop.f32.mrb[0].mxu0
    %v2558 = vadd.f32 0.0, %v2557
    %v2559 = vpop.f32.mrb[0].mxu0
    %v2560 = vadd.f32 0.0, %v2559
    %v2561 = vpop.f32.mrb[0].mxu0
    %v2562 = vadd.f32 0.0, %v2561
    %2563 = vmatprep.mubr.bf16.mxu0 %v490
    %2564 = vmatmul.mubr.bf16.gmra.mrb[0].mxu0 %v489
    %v2565 = vpop.f32.mrb[0].mxu0
    %v2566 = vadd.f32 0.0, %v2565
    %v2567 = vpop.f32.mrb[0].mxu0
    %v2568 = vadd.f32 0.0, %v2567
    %v2569 = vpop.f32.mrb[0].mxu0
    %v2570 = vadd.f32 0.0, %v2569
    %v2571 = vpop.f32.mrb[0].mxu0
    %v2572 = vadd.f32 0.0, %v2571
    %2573 = vmatprep.mubr.bf16.mxu0 %v493
    %2574 = vmatmul.mubr.bf16.gmra.mrb[0].mxu0 %v492
    %v2575 = vpop.f32.mrb[0].mxu0
    %v2576 = vadd.f32 0.0, %v2575
    %v2577 = vpop.f32.mrb[0].mxu0
    %v2578 = vadd.f32 0.0, %v2577
    %v2579 = vpop.f32.mrb[0].mxu0
    %v2580 = vadd.f32 0.0, %v2579
    %v2581 = vpop.f32.mrb[0].mxu0
    %v2582 = vadd.f32 0.0, %v2581
    %2583 = vdwg.mxu0
    %2584 = vmatprep.subr.bf16.mxu0 %v2416
    %2585 = vmatpush1.bf16.msra.mxu0 %v2415
    %2586 = vmatprep.subr.bf16.mxu0 %v2419
    %2587 = vmatpush1.bf16.msra.mxu0 %v2418
    %2588 = vmatprep.subr.bf16.mxu0 %v2422
    %2589 = vmatpush1.bf16.msra.mxu0 %v2421
    %2590 = vmatprep.subr.bf16.mxu0 %v2425
    %2591 = vmatpush1.bf16.msra.mxu0 %v2424
    %2592 = vmatprep.subr.bf16.mxu0 %v2428
    %2593 = vmatpush1.bf16.msra.mxu0 %v2427
    %2594 = vmatprep.subr.bf16.mxu0 %v2431
    %2595 = vmatpush1.bf16.msra.mxu0 %v2430
    %2596 = vmatprep.subr.bf16.mxu0 %v2434
    %2597 = vmatpush1.bf16.msra.mxu0 %v2433
    %2598 = vmatprep.subr.bf16.mxu0 %v2437
    %2599 = vmatpush1.bf16.msra.mxu0 %v2436
    %2600 = vmatprep.subr.bf16.mxu0 0
    %2601 = vmatpush1.bf16.msra.mxu0 0
    %2602 = vmatprep.subr.bf16.mxu0 0
    %2603 = vmatpush1.bf16.msra.mxu0 0
    %2604 = vmatprep.subr.bf16.mxu0 0
    %2605 = vmatpush1.bf16.msra.mxu0 0
    %2606 = vmatprep.subr.bf16.mxu0 0
    %2607 = vmatpush1.bf16.msra.mxu0 0
    %2608 = vmatprep.subr.bf16.mxu0 0
    %2609 = vmatpush1.bf16.msra.mxu0 0
    %2610 = vmatprep.subr.bf16.mxu0 0
    %2611 = vmatpush1.bf16.msra.mxu0 0
    %2612 = vmatprep.subr.bf16.mxu0 0
    %2613 = vmatpush1.bf16.msra.mxu0 0
    %2614 = vmatprep.subr.bf16.mxu0 0
    %2615 = vmatpush1.bf16.msra.mxu0 0
    %2616 = vmatprep.mubr.bf16.mxu0 0
    %2617 = vmatmul.mubr.bf16.gmra.mrb[0].mxu0 %v485
    %v2618 = vpop.f32.mrb[0].mxu0
    %v2619 = vadd.f32 %v2546, %v2618
    %v2620 = vpop.f32.mrb[0].mxu0
    %v2621 = vadd.f32 %v2548, %v2620
    %v2622 = vpop.f32.mrb[0].mxu0
    %v2623 = vadd.f32 %v2550, %v2622
    %v2624 = vpop.f32.mrb[0].mxu0
    %v2625 = vadd.f32 %v2552, %v2624
    %2626 = vmatprep.mubr.bf16.mxu0 0
    %2627 = vmatmul.mubr.bf16.gmra.mrb[0].mxu0 %v488
    %v2628 = vpop.f32.mrb[0].mxu0
    %v2629 = vadd.f32 %v2556, %v2628
    %v2630 = vpop.f32.mrb[0].mxu0
    %v2631 = vadd.f32 %v2558, %v2630
    %v2632 = vpop.f32.mrb[0].mxu0
    %v2633 = vadd.f32 %v2560, %v2632
    %v2634 = vpop.f32.mrb[0].mxu0
    %v2635 = vadd.f32 %v2562, %v2634
    %2636 = vmatprep.mubr.bf16.mxu0 0
    %2637 = vmatmul.mubr.bf16.gmra.mrb[0].mxu0 %v491
    %v2638 = vpop.f32.mrb[0].mxu0
    %v2639 = vadd.f32 %v2566, %v2638
    %v2640 = vpop.f32.mrb[0].mxu0
    %v2641 = vadd.f32 %v2568, %v2640
    %v2642 = vpop.f32.mrb[0].mxu0
    %v2643 = vadd.f32 %v2570, %v2642
    %v2644 = vpop.f32.mrb[0].mxu0
    %v2645 = vadd.f32 %v2572, %v2644
    %2646 = vmatprep.mubr.bf16.mxu0 0
    %2647 = vmatmul.mubr.bf16.gmra.mrb[0].mxu0 %v494
    %v2648 = vpop.f32.mrb[0].mxu0
    %v2649 = vadd.f32 %v2576, %v2648
    %v2650 = vpop.f32.mrb[0].mxu0
    %v2651 = vadd.f32 %v2578, %v2650
    %v2652 = vpop.f32.mrb[0].mxu0
    %v2653 = vadd.f32 %v2580, %v2652
    %v2654 = vpop.f32.mrb[0].mxu0
    %v2655 = vadd.f32 %v2582, %v2654
    %2656 = vdwg.mxu0
    %2657 = vmatprep.subr.bf16.mxu0 0
    %2658 = vmatpush1.bf16.msra.mxu0 %v2369
    %2659 = vmatprep.subr.bf16.mxu0 0
    %2660 = vmatpush1.bf16.msra.mxu0 %v2372
    %2661 = vmatprep.subr.bf16.mxu0 0
    %2662 = vmatpush1.bf16.msra.mxu0 %v2375
    %2663 = vmatprep.subr.bf16.mxu0 0
    %2664 = vmatpush1.bf16.msra.mxu0 %v2378
    %2665 = vmatprep.subr.bf16.mxu0 0
    %2666 = vmatpush1.bf16.msra.mxu0 %v2381
    %2667 = vmatprep.subr.bf16.mxu0 0
    %2668 = vmatpush1.bf16.msra.mxu0 %v2384
    %2669 = vmatprep.subr.bf16.mxu0 0
    %2670 = vmatpush1.bf16.msra.mxu0 %v2387
    %2671 = vmatprep.subr.bf16.mxu0 0
    %2672 = vmatpush1.bf16.msra.mxu0 %v2390
    %2673 = vmatprep.subr.bf16.mxu0 0
    %2674 = vmatpush1.bf16.msra.mxu0 %v2393
    %2675 = vmatprep.subr.bf16.mxu0 0
    %2676 = vmatpush1.bf16.msra.mxu0 %v2396
    %2677 = vmatprep.subr.bf16.mxu0 0
    %2678 = vmatpush1.bf16.msra.mxu0 %v2399
    %2679 = vmatprep.subr.bf16.mxu0 0
    %2680 = vmatpush1.bf16.msra.mxu0 %v2402
    %2681 = vmatprep.subr.bf16.mxu0 0
    %2682 = vmatpush1.bf16.msra.mxu0 %v2405
    %2683 = vmatprep.subr.bf16.mxu0 0
    %2684 = vmatpush1.bf16.msra.mxu0 %v2408
    %2685 = vmatprep.subr.bf16.mxu0 0
    %2686 = vmatpush1.bf16.msra.mxu0 %v2411
    %2687 = vmatprep.subr.bf16.mxu0 0
    %2688 = vmatpush1.bf16.msra.mxu0 %v2414
    %2689 = vmatprep.mubr.bf16.mxu0 %v484
    %2690 = vmatmul.mubr.bf16.gmra.mrb[0].mxu0 %v483
    %v2691 = vpop.f32.mrb[0].mxu0
    %v2692 = vadd.f32 0.0, %v2691
    %v2693 = vpop.f32.mrb[0].mxu0
    %v2694 = vpop.f32.mrb[0].mxu0
    %v2695 = vadd.f32 0.0, %v2694
    %v2696 = vpop.f32.mrb[0].mxu0
    %2697 = vmatprep.mubr.bf16.mxu0 %v487
    %2698 = vmatmul.mubr.bf16.gmra.mrb[0].mxu0 %v486
    %v2699 = vpop.f32.mrb[0].mxu0
    %v2700 = vadd.f32 0.0, %v2699
    %v2701 = vpop.f32.mrb[0].mxu0
    %v2702 = vpop.f32.mrb[0].mxu0
    %v2703 = vadd.f32 0.0, %v2702
    %v2704 = vpop.f32.mrb[0].mxu0
    %2705 = vmatprep.mubr.bf16.mxu0 %v490
    %2706 = vmatmul.mubr.bf16.gmra.mrb[0].mxu0 %v489
    %v2707 = vpop.f32.mrb[0].mxu0
    %v2708 = vadd.f32 0.0, %v2707
    %v2709 = vpop.f32.mrb[0].mxu0
    %v2710 = vpop.f32.mrb[0].mxu0
    %v2711 = vadd.f32 0.0, %v2710
    %v2712 = vpop.f32.mrb[0].mxu0
    %2713 = vmatprep.mubr.bf16.mxu0 %v493
    %2714 = vmatmul.mubr.bf16.gmra.mrb[0].mxu0 %v492
    %v2715 = vpop.f32.mrb[0].mxu0
    %v2716 = vadd.f32 0.0, %v2715
    %v2717 = vpop.f32.mrb[0].mxu0
    %v2718 = vpop.f32.mrb[0].mxu0
    %v2719 = vadd.f32 0.0, %v2718
    %v2720 = vpop.f32.mrb[0].mxu0
    %2721 = vdwg.mxu0
    %2722 = vmatprep.subr.bf16.mxu0 0
    %2723 = vmatpush1.bf16.msra.mxu0 %v2417
    %2724 = vmatprep.subr.bf16.mxu0 0
    %2725 = vmatpush1.bf16.msra.mxu0 %v2420
    %2726 = vmatprep.subr.bf16.mxu0 0
    %2727 = vmatpush1.bf16.msra.mxu0 %v2423
    %2728 = vmatprep.subr.bf16.mxu0 0
    %2729 = vmatpush1.bf16.msra.mxu0 %v2426
    %2730 = vmatprep.subr.bf16.mxu0 0
    %2731 = vmatpush1.bf16.msra.mxu0 %v2429
    %2732 = vmatprep.subr.bf16.mxu0 0
    %2733 = vmatpush1.bf16.msra.mxu0 %v2432
    %2734 = vmatprep.subr.bf16.mxu0 0
    %2735 = vmatpush1.bf16.msra.mxu0 %v2435
    %2736 = vmatprep.subr.bf16.mxu0 0
    %2737 = vmatpush1.bf16.msra.mxu0 %v2438
    %2738 = vmatprep.subr.bf16.mxu0 0
    %2739 = vmatpush1.bf16.msra.mxu0 0
    %2740 = vmatprep.subr.bf16.mxu0 0
    %2741 = vmatpush1.bf16.msra.mxu0 0
    %2742 = vmatprep.subr.bf16.mxu0 0
    %2743 = vmatpush1.bf16.msra.mxu0 0
    %2744 = vmatprep.subr.bf16.mxu0 0
    %2745 = vmatpush1.bf16.msra.mxu0 0
    %2746 = vmatprep.subr.bf16.mxu0 0
    %2747 = vmatpush1.bf16.msra.mxu0 0
    %2748 = vmatprep.subr.bf16.mxu0 0
    %2749 = vmatpush1.bf16.msra.mxu0 0
    %2750 = vmatprep.subr.bf16.mxu0 0
    %2751 = vmatpush1.bf16.msra.mxu0 0
    %2752 = vmatprep.subr.bf16.mxu0 0
    %2753 = vmatpush1.bf16.msra.mxu0 0
    %2754 = vmatprep.mubr.bf16.mxu0 0
    %2755 = vmatmul.mubr.bf16.gmra.mrb[0].mxu0 %v485
    %v2756 = vpop.f32.mrb[0].mxu0
    %v2757 = vadd.f32 %v2692, %v2756
    %v2758 = vpop.f32.mrb[0].mxu0
    %v2759 = vpop.f32.mrb[0].mxu0
    %v2760 = vadd.f32 %v2695, %v2759
    %v2761 = vpop.f32.mrb[0].mxu0
    %2762 = vmatprep.mubr.bf16.mxu0 0
    %2763 = vmatmul.mubr.bf16.gmra.mrb[0].mxu0 %v488
    %v2764 = vpop.f32.mrb[0].mxu0
    %v2765 = vadd.f32 %v2700, %v2764
    %v2766 = vpop.f32.mrb[0].mxu0
    %v2767 = vpop.f32.mrb[0].mxu0
    %v2768 = vadd.f32 %v2703, %v2767
    %v2769 = vpop.f32.mrb[0].mxu0
    %2770 = vmatprep.mubr.bf16.mxu0 0
    %2771 = vmatmul.mubr.bf16.gmra.mrb[0].mxu0 %v491
    %v2772 = vpop.f32.mrb[0].mxu0
    %v2773 = vadd.f32 %v2708, %v2772
    %v2774 = vpop.f32.mrb[0].mxu0
    %v2775 = vpop.f32.mrb[0].mxu0
    %v2776 = vadd.f32 %v2711, %v2775
    %v2777 = vpop.f32.mrb[0].mxu0
    %2778 = vmatprep.mubr.bf16.mxu0 0
    %2779 = vmatmul.mubr.bf16.gmra.mrb[0].mxu0 %v494
    %v2780 = vpop.f32.mrb[0].mxu0
    %v2781 = vadd.f32 %v2716, %v2780
    %v2782 = vpop.f32.mrb[0].mxu0
    %v2783 = vpop.f32.mrb[0].mxu0
    %v2784 = vadd.f32 %v2719, %v2783
    %v2785 = vpop.f32.mrb[0].mxu0
    %2786 = vdwg.mxu0
    %v2787 = vpack.c.bf16 %v2623, %v2619
    %v2788 = vpack.c.bf16 %v2625, %v2621
    %v2789 = vpack.c.bf16 %v2760, %v2757
    %v2790 = vpack.c.bf16 %v2633, %v2629
    %v2791 = vpack.c.bf16 %v2635, %v2631
    %v2792 = vpack.c.bf16 %v2768, %v2765
    %v2793 = vpack.c.bf16 %v2643, %v2639
    %v2794 = vpack.c.bf16 %v2645, %v2641
    %v2795 = vpack.c.bf16 %v2776, %v2773
    %v2796 = vpack.c.bf16 %v2653, %v2649
    %v2797 = vpack.c.bf16 %v2655, %v2651
    %v2798 = vpack.c.bf16 %v2784, %v2781
    %v2799 = vlaneseq
    %v2800 = vshrl.u32 %v2799, 7
    %v2801 = vadd.s32 %v2800, 8
    %v2802 = vadd.s32 %v2800, 16
    %v2803 = vadd.s32 %v2800, 24
    %v2804 = vlaneseq
    %v2805 = vand.u32 %v2804, 127
    %vm2806 = vcmp.le.s32.totalorder %v2805, %v2800
    %vm2807 = vcmp.le.s32.totalorder %v2805, %v2801
    %vm2808 = vcmp.le.s32.totalorder %v2805, %v2802
    %vm2809 = vcmp.le.s32.totalorder %v2805, %v2803
    %vm2810 = vcmask 523264
    %v2812 = vsel %vm2810, %v1251, 0
    %v2815 = vsel %vm2810, %v1254, 0
    %v2818 = vsel %vm2810, %v2019, 0
    %v2821 = vsel %vm2810, %v2022, 0
    %2823 = vmatprep.subr.bf16.mxu0 0
    %2824 = vmatpush1.bf16.xpose.msra.mxu0 %v2818
    %2825 = vmatprep.subr.bf16.mxu0 0
    %2826 = vmatpush1.bf16.xpose.msra.mxu0 %v2821
    %2827 = vmatprep.subr.bf16.mxu0 0
    %2828 = vmatpush1.bf16.xpose.msra.mxu0 0
    %2829 = vmatprep.subr.bf16.mxu0 0
    %2830 = vmatpush1.bf16.xpose.msra.mxu0 0
    %2831 = vmatprep.subr.bf16.mxu0 0
    %2832 = vmatpush1.bf16.xpose.msra.mxu0 0
    %2833 = vmatprep.subr.bf16.mxu0 0
    %2834 = vmatpush1.bf16.xpose.msra.mxu0 0
    %2835 = vmatprep.subr.bf16.mxu0 0
    %2836 = vmatpush1.bf16.xpose.msra.mxu0 0
    %2837 = vmatprep.subr.bf16.mxu0 0
    %2838 = vmatpush1.bf16.xpose.msra.mxu0 0
    %2839 = vmatprep.subr.bf16.mxu0 0
    %2840 = vmatpush1.bf16.xpose.msra.mxu0 0
    %2841 = vmatprep.subr.bf16.mxu0 0
    %2842 = vmatpush1.bf16.xpose.msra.mxu0 0
    %2843 = vmatprep.subr.bf16.mxu0 0
    %2844 = vmatpush1.bf16.xpose.msra.mxu0 0
    %2845 = vmatprep.subr.bf16.mxu0 0
    %2846 = vmatpush1.bf16.xpose.msra.mxu0 0
    %2847 = vmatprep.subr.bf16.mxu0 0
    %2848 = vmatpush1.bf16.xpose.msra.mxu0 0
    %2849 = vmatprep.subr.bf16.mxu0 0
    %2850 = vmatpush1.bf16.xpose.msra.mxu0 0
    %2851 = vmatprep.subr.bf16.mxu0 0
    %2852 = vmatpush1.bf16.xpose.msra.mxu0 0
    %2853 = vmatprep.subr.bf16.mxu0 0
    %2854 = vmatpush1.bf16.xpose.msra.mxu0 0
    %2855 = vmatprep.mubr.bf16.mxu0 0
    %2856 = vmatmul.mubr.bf16.gmra.mrb[0].mxu0 %v2812
    %v2857 = vpop.f32.mrb[0].mxu0
    %v2858 = vadd.f32 0.0, %v2857
    %v2859 = vpop.f32.mrb[0].mxu0
    %v2860 = vpop.f32.mrb[0].mxu0
    %v2861 = vadd.f32 0.0, %v2860
    %v2862 = vpop.f32.mrb[0].mxu0
    %2863 = vmatprep.mubr.bf16.mxu0 0
    %2864 = vmatmul.mubr.bf16.gmra.mrb[0].mxu0 %v2815
    %v2865 = vpop.f32.mrb[0].mxu0
    %v2866 = vadd.f32 0.0, %v2865
    %v2867 = vpop.f32.mrb[0].mxu0
    %v2868 = vpop.f32.mrb[0].mxu0
    %v2869 = vadd.f32 0.0, %v2868
    %v2870 = vpop.f32.mrb[0].mxu0
    %2871 = vdwg.mxu0
    %v2873 = vsel %vm2810, %v1257, 0
    %v2876 = vsel %vm2810, %v1260, 0
    %v2879 = vsel %vm2810, %v2025, 0
    %v2882 = vsel %vm2810, %v2028, 0
    %2884 = vmatprep.subr.bf16.mxu0 0
    %2885 = vmatpush1.bf16.xpose.msra.mxu0 %v2879
    %2886 = vmatprep.subr.bf16.mxu0 0
    %2887 = vmatpush1.bf16.xpose.msra.mxu0 %v2882
    %2888 = vmatprep.subr.bf16.mxu0 0
    %2889 = vmatpush1.bf16.xpose.msra.mxu0 0
    %2890 = vmatprep.subr.bf16.mxu0 0
    %2891 = vmatpush1.bf16.xpose.msra.mxu0 0
    %2892 = vmatprep.subr.bf16.mxu0 0
    %2893 = vmatpush1.bf16.xpose.msra.mxu0 0
    %2894 = vmatprep.subr.bf16.mxu0 0
    %2895 = vmatpush1.bf16.xpose.msra.mxu0 0
    %2896 = vmatprep.subr.bf16.mxu0 0
    %2897 = vmatpush1.bf16.xpose.msra.mxu0 0
    %2898 = vmatprep.subr.bf16.mxu0 0
    %2899 = vmatpush1.bf16.xpose.msra.mxu0 0
    %2900 = vmatprep.subr.bf16.mxu0 0
    %2901 = vmatpush1.bf16.xpose.msra.mxu0 0
    %2902 = vmatprep.subr.bf16.mxu0 0
    %2903 = vmatpush1.bf16.xpose.msra.mxu0 0
    %2904 = vmatprep.subr.bf16.mxu0 0
    %2905 = vmatpush1.bf16.xpose.msra.mxu0 0
    %2906 = vmatprep.subr.bf16.mxu0 0
    %2907 = vmatpush1.bf16.xpose.msra.mxu0 0
    %2908 = vmatprep.subr.bf16.mxu0 0
    %2909 = vmatpush1.bf16.xpose.msra.mxu0 0
    %2910 = vmatprep.subr.bf16.mxu0 0
    %2911 = vmatpush1.bf16.xpose.msra.mxu0 0
    %2912 = vmatprep.subr.bf16.mxu0 0
    %2913 = vmatpush1.bf16.xpose.msra.mxu0 0
    %2914 = vmatprep.subr.bf16.mxu0 0
    %2915 = vmatpush1.bf16.xpose.msra.mxu0 0
    %2916 = vmatprep.mubr.bf16.mxu0 0
    %2917 = vmatmul.mubr.bf16.gmra.mrb[0].mxu0 %v2873
    %v2918 = vpop.f32.mrb[0].mxu0
    %v2919 = vadd.f32 0.0, %v2918
    %v2920 = vpop.f32.mrb[0].mxu0
    %v2921 = vpop.f32.mrb[0].mxu0
    %v2922 = vadd.f32 0.0, %v2921
    %v2923 = vpop.f32.mrb[0].mxu0
    %2924 = vmatprep.mubr.bf16.mxu0 0
    %2925 = vmatmul.mubr.bf16.gmra.mrb[0].mxu0 %v2876
    %v2926 = vpop.f32.mrb[0].mxu0
    %v2927 = vadd.f32 0.0, %v2926
    %v2928 = vpop.f32.mrb[0].mxu0
    %v2929 = vpop.f32.mrb[0].mxu0
    %v2930 = vadd.f32 0.0, %v2929
    %v2931 = vpop.f32.mrb[0].mxu0
    %2932 = vdwg.mxu0
    %v2933 = vsel %vm2806, 1, 0
    %v2934 = vsel %vm2807, 1, 0
    %v2935 = vsel %vm2808, 1, 0
    %v2936 = vsel %vm2809, 1, 0
    %vm2937 = vcmp.eq.s32.totalorder %v2933, 1
    %vm2938 = vcmp.eq.s32.totalorder %v2934, 1
    %vm2939 = vcmp.eq.s32.totalorder %v2935, 1
    %vm2940 = vcmp.eq.s32.totalorder %v2936, 1
    %v2941 = vsel %vm2937, %v2858, -1e+09
    %v2942 = vsel %vm2938, %v2861, -1e+09
    %v2943 = vsel %vm2939, %v2866, -1e+09
    %v2944 = vsel %vm2940, %v2869, -1e+09
    %v2945 = vsel %vm2937, %v2919, -1e+09
    %v2946 = vsel %vm2938, %v2922, -1e+09
    %v2947 = vsel %vm2939, %v2927, -1e+09
    %v2948 = vsel %vm2940, %v2930, -1e+09
    %vm2949 = vcmask 261120
    %v2950 = vsel %vm2949, %v2941, -inf
    %2951 = vmax.xlane.f32.xlu0 %v2950
    %v2952 = vpop.xlane.xlu0 %2951
    %v2953 = vsel %vm2949, %v2942, -inf
    %2954 = vmax.xlane.f32.xlu0 %v2953
    %v2955 = vpop.xlane.xlu0 %2954
    %v2956 = vsel %vm2949, %v2943, -inf
    %2957 = vmax.xlane.f32.xlu0 %v2956
    %v2958 = vpop.xlane.xlu0 %2957
    %v2959 = vsel %vm2949, %v2944, -inf
    %2960 = vmax.xlane.f32.xlu0 %v2959
    %v2961 = vpop.xlane.xlu0 %2960
    %v2962 = vsel %vm2949, %v2945, -inf
    %2963 = vmax.xlane.f32.xlu0 %v2962
    %v2964 = vpop.xlane.xlu0 %2963
    %v2965 = vsel %vm2949, %v2946, -inf
    %2966 = vmax.xlane.f32.xlu0 %v2965
    %v2967 = vpop.xlane.xlu0 %2966
    %v2968 = vsel %vm2949, %v2947, -inf
    %2969 = vmax.xlane.f32.xlu0 %v2968
    %v2970 = vpop.xlane.xlu0 %2969
    %v2971 = vsel %vm2949, %v2948, -inf
    %2972 = vmax.xlane.f32.xlu0 %v2971
    %v2973 = vpop.xlane.xlu0 %2972
    %v2974 = vsub.f32 %v2941, %v2952
    %v2975 = vsub.f32 %v2942, %v2955
    %v2976 = vsub.f32 %v2943, %v2958
    %v2977 = vsub.f32 %v2944, %v2961
    %v2978 = vsub.f32 %v2945, %v2964
    %v2979 = vsub.f32 %v2946, %v2967
    %v2980 = vsub.f32 %v2947, %v2970
    %v2981 = vsub.f32 %v2948, %v2973
    %v2982 = vmul.f32 %v2974, 1.442695
    %v2983 = vpow.pop %v2982
    %v2984 = vmul.f32 %v2975, 1.442695
    %v2985 = vpow.pop %v2984
    %v2986 = vmul.f32 %v2976, 1.442695
    %v2987 = vpow.pop %v2986
    %v2988 = vmul.f32 %v2977, 1.442695
    %v2989 = vpow.pop %v2988
    %v2990 = vmul.f32 %v2978, 1.442695
    %v2991 = vpow.pop %v2990
    %v2992 = vmul.f32 %v2979, 1.442695
    %v2993 = vpow.pop %v2992
    %v2994 = vmul.f32 %v2980, 1.442695
    %v2995 = vpow.pop %v2994
    %v2996 = vmul.f32 %v2981, 1.442695
    %v2997 = vpow.pop %v2996
    %v2998 = vsel %vm2949, %v2983, 0.0
    %2999 = vadd.xlane.f32.xlu0 %v2998
    %v3000 = vpop.xlane.xlu0 %2999
    %v3001 = vsel %vm2949, %v2985, 0.0
    %3002 = vadd.xlane.f32.xlu0 %v3001
    %v3003 = vpop.xlane.xlu0 %3002
    %v3004 = vsel %vm2949, %v2987, 0.0
    %3005 = vadd.xlane.f32.xlu0 %v3004
    %v3006 = vpop.xlane.xlu0 %3005
    %v3007 = vsel %vm2949, %v2989, 0.0
    %3008 = vadd.xlane.f32.xlu0 %v3007
    %v3009 = vpop.xlane.xlu0 %3008
    %v3010 = vsel %vm2949, %v2991, 0.0
    %3011 = vadd.xlane.f32.xlu0 %v3010
    %v3012 = vpop.xlane.xlu0 %3011
    %v3013 = vsel %vm2949, %v2993, 0.0
    %3014 = vadd.xlane.f32.xlu0 %v3013
    %v3015 = vpop.xlane.xlu0 %3014
    %v3016 = vsel %vm2949, %v2995, 0.0
    %3017 = vadd.xlane.f32.xlu0 %v3016
    %v3018 = vpop.xlane.xlu0 %3017
    %v3019 = vsel %vm2949, %v2997, 0.0
    %3020 = vadd.xlane.f32.xlu0 %v3019
    %v3021 = vpop.xlane.xlu0 %3020
    %v3022 = vrcp.pop %v3000
    %v3023 = vrcp.pop %v3003
    %v3024 = vrcp.pop %v3006
    %v3025 = vrcp.pop %v3009
    %v3026 = vrcp.pop %v3012
    %v3027 = vrcp.pop %v3015
    %v3028 = vrcp.pop %v3018
    %v3029 = vrcp.pop %v3021
    %v3030 = vmul.f32 %v2983, %v3022
    %v3031 = vmul.f32 %v2985, %v3023
    %v3032 = vmul.f32 %v2987, %v3024
    %v3033 = vmul.f32 %v2989, %v3025
    %v3034 = vmul.f32 %v2991, %v3026
    %v3035 = vmul.f32 %v2993, %v3027
    %v3036 = vmul.f32 %v2995, %v3028
    %v3037 = vmul.f32 %v2997, %v3029
    %v3038 = vpack.c.bf16 %v3031, %v3030
    %v3039 = vpack.c.bf16 %v3033, %v3032
    %v3040 = vpack.c.bf16 %v3035, %v3034
    %v3041 = vpack.c.bf16 %v3037, %v3036
    %v3043 = vsel %vm2949, %v3038, 0
    %v3046 = vsel %vm2949, %v3039, 0
    %3048 = vmatprep.subr.bf16.mxu0 0
    %3049 = vmatpush1.bf16.msra.mxu0 %v2787
    %3050 = vmatprep.subr.bf16.mxu0 0
    %3051 = vmatpush1.bf16.msra.mxu0 %v2790
    %3052 = vmatprep.subr.bf16.mxu0 0
    %3053 = vmatpush1.bf16.msra.mxu0 0
    %3054 = vmatprep.subr.bf16.mxu0 0
    %3055 = vmatpush1.bf16.msra.mxu0 0
    %3056 = vmatprep.subr.bf16.mxu0 0
    %3057 = vmatpush1.bf16.msra.mxu0 0
    %3058 = vmatprep.subr.bf16.mxu0 0
    %3059 = vmatpush1.bf16.msra.mxu0 0
    %3060 = vmatprep.subr.bf16.mxu0 0
    %3061 = vmatpush1.bf16.msra.mxu0 0
    %3062 = vmatprep.subr.bf16.mxu0 0
    %3063 = vmatpush1.bf16.msra.mxu0 0
    %3064 = vmatprep.subr.bf16.mxu0 0
    %3065 = vmatpush1.bf16.msra.mxu0 0
    %3066 = vmatprep.subr.bf16.mxu0 0
    %3067 = vmatpush1.bf16.msra.mxu0 0
    %3068 = vmatprep.subr.bf16.mxu0 0
    %3069 = vmatpush1.bf16.msra.mxu0 0
    %3070 = vmatprep.subr.bf16.mxu0 0
    %3071 = vmatpush1.bf16.msra.mxu0 0
    %3072 = vmatprep.subr.bf16.mxu0 0
    %3073 = vmatpush1.bf16.msra.mxu0 0
    %3074 = vmatprep.subr.bf16.mxu0 0
    %3075 = vmatpush1.bf16.msra.mxu0 0
    %3076 = vmatprep.subr.bf16.mxu0 0
    %3077 = vmatpush1.bf16.msra.mxu0 0
    %3078 = vmatprep.subr.bf16.mxu0 0
    %3079 = vmatpush1.bf16.msra.mxu0 0
    %3080 = vmatprep.mubr.bf16.mxu0 0
    %3081 = vmatmul.mubr.bf16.gmra.mrb[0].mxu0 %v3043
    %v3082 = vpop.f32.mrb[0].mxu0
    %v3083 = vadd.f32 0.0, %v3082
    %v3084 = vpop.f32.mrb[0].mxu0
    %v3085 = vpop.f32.mrb[0].mxu0
    %v3086 = vadd.f32 0.0, %v3085
    %v3087 = vpop.f32.mrb[0].mxu0
    %3088 = vmatprep.mubr.bf16.mxu0 0
    %3089 = vmatmul.mubr.bf16.gmra.mrb[0].mxu0 %v3046
    %v3090 = vpop.f32.mrb[0].mxu0
    %v3091 = vadd.f32 0.0, %v3090
    %v3092 = vpop.f32.mrb[0].mxu0
    %v3093 = vpop.f32.mrb[0].mxu0
    %v3094 = vadd.f32 0.0, %v3093
    %v3095 = vpop.f32.mrb[0].mxu0
    %3096 = vdwg.mxu0
    %v3098 = vsel %vm2949, %v3040, 0
    %v3101 = vsel %vm2949, %v3041, 0
    %3103 = vmatprep.subr.bf16.mxu0 0
    %3104 = vmatpush1.bf16.msra.mxu0 %v2793
    %3105 = vmatprep.subr.bf16.mxu0 0
    %3106 = vmatpush1.bf16.msra.mxu0 %v2796
    %3107 = vmatprep.subr.bf16.mxu0 0
    %3108 = vmatpush1.bf16.msra.mxu0 0
    %3109 = vmatprep.subr.bf16.mxu0 0
    %3110 = vmatpush1.bf16.msra.mxu0 0
    %3111 = vmatprep.subr.bf16.mxu0 0
    %3112 = vmatpush1.bf16.msra.mxu0 0
    %3113 = vmatprep.subr.bf16.mxu0 0
    %3114 = vmatpush1.bf16.msra.mxu0 0
    %3115 = vmatprep.subr.bf16.mxu0 0
    %3116 = vmatpush1.bf16.msra.mxu0 0
    %3117 = vmatprep.subr.bf16.mxu0 0
    %3118 = vmatpush1.bf16.msra.mxu0 0
    %3119 = vmatprep.subr.bf16.mxu0 0
    %3120 = vmatpush1.bf16.msra.mxu0 0
    %3121 = vmatprep.subr.bf16.mxu0 0
    %3122 = vmatpush1.bf16.msra.mxu0 0
    %3123 = vmatprep.subr.bf16.mxu0 0
    %3124 = vmatpush1.bf16.msra.mxu0 0
    %3125 = vmatprep.subr.bf16.mxu0 0
    %3126 = vmatpush1.bf16.msra.mxu0 0
    %3127 = vmatprep.subr.bf16.mxu0 0
    %3128 = vmatpush1.bf16.msra.mxu0 0
    %3129 = vmatprep.subr.bf16.mxu0 0
    %3130 = vmatpush1.bf16.msra.mxu0 0
    %3131 = vmatprep.subr.bf16.mxu0 0
    %3132 = vmatpush1.bf16.msra.mxu0 0
    %3133 = vmatprep.subr.bf16.mxu0 0
    %3134 = vmatpush1.bf16.msra.mxu0 0
    %3135 = vmatprep.mubr.bf16.mxu0 0
    %3136 = vmatmul.mubr.bf16.gmra.mrb[0].mxu0 %v3098
    %v3137 = vpop.f32.mrb[0].mxu0
    %v3138 = vadd.f32 0.0, %v3137
    %v3139 = vpop.f32.mrb[0].mxu0
    %v3140 = vpop.f32.mrb[0].mxu0
    %v3141 = vadd.f32 0.0, %v3140
    %v3142 = vpop.f32.mrb[0].mxu0
    %3143 = vmatprep.mubr.bf16.mxu0 0
    %3144 = vmatmul.mubr.bf16.gmra.mrb[0].mxu0 %v3101
    %v3145 = vpop.f32.mrb[0].mxu0
    %v3146 = vadd.f32 0.0, %v3145
    %v3147 = vpop.f32.mrb[0].mxu0
    %v3148 = vpop.f32.mrb[0].mxu0
    %v3149 = vadd.f32 0.0, %v3148
    %v3150 = vpop.f32.mrb[0].mxu0
    %3151 = vdwg.mxu0
    %v3152 = vpack.c.bf16 %v3086, %v3083
    %v3153 = vpack.c.bf16 %v3094, %v3091
    %v3154 = vpack.c.bf16 %v3141, %v3138
    %v3155 = vpack.c.bf16 %v3149, %v3146
    %3158 = vrot.lane.b32.xlu0 %v1251, 64
    %v3159 = vpop.permute.xlu0 %3158
    %3160 = vrot.lane.b32.xlu0 %v1254, 64
    %v3161 = vpop.permute.xlu0 %3160
    %3164 = vrot.lane.b32.xlu0 %v2019, 64
    %v3165 = vpop.permute.xlu0 %3164
    %3166 = vrot.lane.b32.xlu0 %v2022, 64
    %v3167 = vpop.permute.xlu0 %3166
    %v3169 = vsel %vm2810, %v3159, 0
    %v3172 = vsel %vm2810, %v3161, 0
    %v3175 = vsel %vm2810, %v3165, 0
    %v3178 = vsel %vm2810, %v3167, 0
    %3180 = vmatprep.subr.bf16.mxu0 0
    %3181 = vmatpush1.bf16.xpose.msra.mxu0 %v3175
    %3182 = vmatprep.subr.bf16.mxu0 0
    %3183 = vmatpush1.bf16.xpose.msra.mxu0 %v3178
    %3184 = vmatprep.subr.bf16.mxu0 0
    %3185 = vmatpush1.bf16.xpose.msra.mxu0 0
    %3186 = vmatprep.subr.bf16.mxu0 0
    %3187 = vmatpush1.bf16.xpose.msra.mxu0 0
    %3188 = vmatprep.subr.bf16.mxu0 0
    %3189 = vmatpush1.bf16.xpose.msra.mxu0 0
    %3190 = vmatprep.subr.bf16.mxu0 0
    %3191 = vmatpush1.bf16.xpose.msra.mxu0 0
    %3192 = vmatprep.subr.bf16.mxu0 0
    %3193 = vmatpush1.bf16.xpose.msra.mxu0 0
    %3194 = vmatprep.subr.bf16.mxu0 0
    %3195 = vmatpush1.bf16.xpose.msra.mxu0 0
    %3196 = vmatprep.subr.bf16.mxu0 0
    %3197 = vmatpush1.bf16.xpose.msra.mxu0 0
    %3198 = vmatprep.subr.bf16.mxu0 0
    %3199 = vmatpush1.bf16.xpose.msra.mxu0 0
    %3200 = vmatprep.subr.bf16.mxu0 0
    %3201 = vmatpush1.bf16.xpose.msra.mxu0 0
    %3202 = vmatprep.subr.bf16.mxu0 0
    %3203 = vmatpush1.bf16.xpose.msra.mxu0 0
    %3204 = vmatprep.subr.bf16.mxu0 0
    %3205 = vmatpush1.bf16.xpose.msra.mxu0 0
    %3206 = vmatprep.subr.bf16.mxu0 0
    %3207 = vmatpush1.bf16.xpose.msra.mxu0 0
    %3208 = vmatprep.subr.bf16.mxu0 0
    %3209 = vmatpush1.bf16.xpose.msra.mxu0 0
    %3210 = vmatprep.subr.bf16.mxu0 0
    %3211 = vmatpush1.bf16.xpose.msra.mxu0 0
    %3212 = vmatprep.mubr.bf16.mxu0 0
    %3213 = vmatmul.mubr.bf16.gmra.mrb[0].mxu0 %v3169
    %v3214 = vpop.f32.mrb[0].mxu0
    %v3215 = vadd.f32 0.0, %v3214
    %v3216 = vpop.f32.mrb[0].mxu0
    %v3217 = vpop.f32.mrb[0].mxu0
    %v3218 = vadd.f32 0.0, %v3217
    %v3219 = vpop.f32.mrb[0].mxu0
    %3220 = vmatprep.mubr.bf16.mxu0 0
    %3221 = vmatmul.mubr.bf16.gmra.mrb[0].mxu0 %v3172
    %v3222 = vpop.f32.mrb[0].mxu0
    %v3223 = vadd.f32 0.0, %v3222
    %v3224 = vpop.f32.mrb[0].mxu0
    %v3225 = vpop.f32.mrb[0].mxu0
    %v3226 = vadd.f32 0.0, %v3225
    %v3227 = vpop.f32.mrb[0].mxu0
    %3228 = vdwg.mxu0
    %3231 = vrot.lane.b32.xlu0 %v1257, 64
    %v3232 = vpop.permute.xlu0 %3231
    %3233 = vrot.lane.b32.xlu0 %v1260, 64
    %v3234 = vpop.permute.xlu0 %3233
    %3237 = vrot.lane.b32.xlu0 %v2025, 64
    %v3238 = vpop.permute.xlu0 %3237
    %3239 = vrot.lane.b32.xlu0 %v2028, 64
    %v3240 = vpop.permute.xlu0 %3239
    %v3242 = vsel %vm2810, %v3232, 0
    %v3245 = vsel %vm2810, %v3234, 0
    %v3248 = vsel %vm2810, %v3238, 0
    %v3251 = vsel %vm2810, %v3240, 0
    %3253 = vmatprep.subr.bf16.mxu0 0
    %3254 = vmatpush1.bf16.xpose.msra.mxu0 %v3248
    %3255 = vmatprep.subr.bf16.mxu0 0
    %3256 = vmatpush1.bf16.xpose.msra.mxu0 %v3251
    %3257 = vmatprep.subr.bf16.mxu0 0
    %3258 = vmatpush1.bf16.xpose.msra.mxu0 0
    %3259 = vmatprep.subr.bf16.mxu0 0
    %3260 = vmatpush1.bf16.xpose.msra.mxu0 0
    %3261 = vmatprep.subr.bf16.mxu0 0
    %3262 = vmatpush1.bf16.xpose.msra.mxu0 0
    %3263 = vmatprep.subr.bf16.mxu0 0
    %3264 = vmatpush1.bf16.xpose.msra.mxu0 0
    %3265 = vmatprep.subr.bf16.mxu0 0
    %3266 = vmatpush1.bf16.xpose.msra.mxu0 0
    %3267 = vmatprep.subr.bf16.mxu0 0
    %3268 = vmatpush1.bf16.xpose.msra.mxu0 0
    %3269 = vmatprep.subr.bf16.mxu0 0
    %3270 = vmatpush1.bf16.xpose.msra.mxu0 0
    %3271 = vmatprep.subr.bf16.mxu0 0
    %3272 = vmatpush1.bf16.xpose.msra.mxu0 0
    %3273 = vmatprep.subr.bf16.mxu0 0
    %3274 = vmatpush1.bf16.xpose.msra.mxu0 0
    %3275 = vmatprep.subr.bf16.mxu0 0
    %3276 = vmatpush1.bf16.xpose.msra.mxu0 0
    %3277 = vmatprep.subr.bf16.mxu0 0
    %3278 = vmatpush1.bf16.xpose.msra.mxu0 0
    %3279 = vmatprep.subr.bf16.mxu0 0
    %3280 = vmatpush1.bf16.xpose.msra.mxu0 0
    %3281 = vmatprep.subr.bf16.mxu0 0
    %3282 = vmatpush1.bf16.xpose.msra.mxu0 0
    %3283 = vmatprep.subr.bf16.mxu0 0
    %3284 = vmatpush1.bf16.xpose.msra.mxu0 0
    %3285 = vmatprep.mubr.bf16.mxu0 0
    %3286 = vmatmul.mubr.bf16.gmra.mrb[0].mxu0 %v3242
    %v3287 = vpop.f32.mrb[0].mxu0
    %v3288 = vadd.f32 0.0, %v3287
    %v3289 = vpop.f32.mrb[0].mxu0
    %v3290 = vpop.f32.mrb[0].mxu0
    %v3291 = vadd.f32 0.0, %v3290
    %v3292 = vpop.f32.mrb[0].mxu0
    %3293 = vmatprep.mubr.bf16.mxu0 0
    %3294 = vmatmul.mubr.bf16.gmra.mrb[0].mxu0 %v3245
    %v3295 = vpop.f32.mrb[0].mxu0
    %v3296 = vadd.f32 0.0, %v3295
    %v3297 = vpop.f32.mrb[0].mxu0
    %v3298 = vpop.f32.mrb[0].mxu0
    %v3299 = vadd.f32 0.0, %v3298
    %v3300 = vpop.f32.mrb[0].mxu0
    %3301 = vdwg.mxu0
    %v3302 = vsel %vm2937, %v3215, -1e+09
    %v3303 = vsel %vm2938, %v3218, -1e+09
    %v3304 = vsel %vm2939, %v3223, -1e+09
    %v3305 = vsel %vm2940, %v3226, -1e+09
    %v3306 = vsel %vm2937, %v3288, -1e+09
    %v3307 = vsel %vm2938, %v3291, -1e+09
    %v3308 = vsel %vm2939, %v3296, -1e+09
    %v3309 = vsel %vm2940, %v3299, -1e+09
    %v3310 = vsel %vm2949, %v3302, -inf
    %3311 = vmax.xlane.f32.xlu0 %v3310
    %v3312 = vpop.xlane.xlu0 %3311
    %v3313 = vsel %vm2949, %v3303, -inf
    %3314 = vmax.xlane.f32.xlu0 %v3313
    %v3315 = vpop.xlane.xlu0 %3314
    %v3316 = vsel %vm2949, %v3304, -inf
    %3317 = vmax.xlane.f32.xlu0 %v3316
    %v3318 = vpop.xlane.xlu0 %3317
    %v3319 = vsel %vm2949, %v3305, -inf
    %3320 = vmax.xlane.f32.xlu0 %v3319
    %v3321 = vpop.xlane.xlu0 %3320
    %v3322 = vsel %vm2949, %v3306, -inf
    %3323 = vmax.xlane.f32.xlu0 %v3322
    %v3324 = vpop.xlane.xlu0 %3323
    %v3325 = vsel %vm2949, %v3307, -inf
    %3326 = vmax.xlane.f32.xlu0 %v3325
    %v3327 = vpop.xlane.xlu0 %3326
    %v3328 = vsel %vm2949, %v3308, -inf
    %3329 = vmax.xlane.f32.xlu0 %v3328
    %v3330 = vpop.xlane.xlu0 %3329
    %v3331 = vsel %vm2949, %v3309, -inf
    %3332 = vmax.xlane.f32.xlu0 %v3331
    %v3333 = vpop.xlane.xlu0 %3332
    %v3334 = vsub.f32 %v3302, %v3312
    %v3335 = vsub.f32 %v3303, %v3315
    %v3336 = vsub.f32 %v3304, %v3318
    %v3337 = vsub.f32 %v3305, %v3321
    %v3338 = vsub.f32 %v3306, %v3324
    %v3339 = vsub.f32 %v3307, %v3327
    %v3340 = vsub.f32 %v3308, %v3330
    %v3341 = vsub.f32 %v3309, %v3333
    %v3342 = vmul.f32 %v3334, 1.442695
    %v3343 = vpow.pop %v3342
    %v3344 = vmul.f32 %v3335, 1.442695
    %v3345 = vpow.pop %v3344
    %v3346 = vmul.f32 %v3336, 1.442695
    %v3347 = vpow.pop %v3346
    %v3348 = vmul.f32 %v3337, 1.442695
    %v3349 = vpow.pop %v3348
    %v3350 = vmul.f32 %v3338, 1.442695
    %v3351 = vpow.pop %v3350
    %v3352 = vmul.f32 %v3339, 1.442695
    %v3353 = vpow.pop %v3352
    %v3354 = vmul.f32 %v3340, 1.442695
    %v3355 = vpow.pop %v3354
    %v3356 = vmul.f32 %v3341, 1.442695
    %v3357 = vpow.pop %v3356
    %v3358 = vsel %vm2949, %v3343, 0.0
    %3359 = vadd.xlane.f32.xlu0 %v3358
    %v3360 = vpop.xlane.xlu0 %3359
    %v3361 = vsel %vm2949, %v3345, 0.0
    %3362 = vadd.xlane.f32.xlu0 %v3361
    %v3363 = vpop.xlane.xlu0 %3362
    %v3364 = vsel %vm2949, %v3347, 0.0
    %3365 = vadd.xlane.f32.xlu0 %v3364
    %v3366 = vpop.xlane.xlu0 %3365
    %v3367 = vsel %vm2949, %v3349, 0.0
    %3368 = vadd.xlane.f32.xlu0 %v3367
    %v3369 = vpop.xlane.xlu0 %3368
    %v3370 = vsel %vm2949, %v3351, 0.0
    %3371 = vadd.xlane.f32.xlu0 %v3370
    %v3372 = vpop.xlane.xlu0 %3371
    %v3373 = vsel %vm2949, %v3353, 0.0
    %3374 = vadd.xlane.f32.xlu0 %v3373
    %v3375 = vpop.xlane.xlu0 %3374
    %v3376 = vsel %vm2949, %v3355, 0.0
    %3377 = vadd.xlane.f32.xlu0 %v3376
    %v3378 = vpop.xlane.xlu0 %3377
    %v3379 = vsel %vm2949, %v3357, 0.0
    %3380 = vadd.xlane.f32.xlu0 %v3379
    %v3381 = vpop.xlane.xlu0 %3380
    %v3382 = vrcp.pop %v3360
    %v3383 = vrcp.pop %v3363
    %v3384 = vrcp.pop %v3366
    %v3385 = vrcp.pop %v3369
    %v3386 = vrcp.pop %v3372
    %v3387 = vrcp.pop %v3375
    %v3388 = vrcp.pop %v3378
    %v3389 = vrcp.pop %v3381
    %v3390 = vmul.f32 %v3343, %v3382
    %v3391 = vmul.f32 %v3345, %v3383
    %v3392 = vmul.f32 %v3347, %v3384
    %v3393 = vmul.f32 %v3349, %v3385
    %v3394 = vmul.f32 %v3351, %v3386
    %v3395 = vmul.f32 %v3353, %v3387
    %v3396 = vmul.f32 %v3355, %v3388
    %v3397 = vmul.f32 %v3357, %v3389
    %v3398 = vpack.c.bf16 %v3391, %v3390
    %v3399 = vpack.c.bf16 %v3393, %v3392
    %v3400 = vpack.c.bf16 %v3395, %v3394
    %v3401 = vpack.c.bf16 %v3397, %v3396
    %3404 = vrot.lane.b32.xlu0 %v2787, 64
    %v3405 = vpop.permute.xlu0 %3404
    %3406 = vrot.lane.b32.xlu0 %v2790, 64
    %v3407 = vpop.permute.xlu0 %3406
    %v3411 = vsel %vm2949, %v3398, 0
    %v3414 = vsel %vm2949, %v3399, 0
    %3416 = vmatprep.subr.bf16.mxu0 0
    %3417 = vmatpush1.bf16.msra.mxu0 %v3405
    %3418 = vmatprep.subr.bf16.mxu0 0
    %3419 = vmatpush1.bf16.msra.mxu0 %v3407
    %3420 = vmatprep.subr.bf16.mxu0 0
    %3421 = vmatpush1.bf16.msra.mxu0 0
    %3422 = vmatprep.subr.bf16.mxu0 0
    %3423 = vmatpush1.bf16.msra.mxu0 0
    %3424 = vmatprep.subr.bf16.mxu0 0
    %3425 = vmatpush1.bf16.msra.mxu0 0
    %3426 = vmatprep.subr.bf16.mxu0 0
    %3427 = vmatpush1.bf16.msra.mxu0 0
    %3428 = vmatprep.subr.bf16.mxu0 0
    %3429 = vmatpush1.bf16.msra.mxu0 0
    %3430 = vmatprep.subr.bf16.mxu0 0
    %3431 = vmatpush1.bf16.msra.mxu0 0
    %3432 = vmatprep.subr.bf16.mxu0 0
    %3433 = vmatpush1.bf16.msra.mxu0 0
    %3434 = vmatprep.subr.bf16.mxu0 0
    %3435 = vmatpush1.bf16.msra.mxu0 0
    %3436 = vmatprep.subr.bf16.mxu0 0
    %3437 = vmatpush1.bf16.msra.mxu0 0
    %3438 = vmatprep.subr.bf16.mxu0 0
    %3439 = vmatpush1.bf16.msra.mxu0 0
    %3440 = vmatprep.subr.bf16.mxu0 0
    %3441 = vmatpush1.bf16.msra.mxu0 0
    %3442 = vmatprep.subr.bf16.mxu0 0
    %3443 = vmatpush1.bf16.msra.mxu0 0
    %3444 = vmatprep.subr.bf16.mxu0 0
    %3445 = vmatpush1.bf16.msra.mxu0 0
    %3446 = vmatprep.subr.bf16.mxu0 0
    %3447 = vmatpush1.bf16.msra.mxu0 0
    %3448 = vmatprep.mubr.bf16.mxu0 0
    %3449 = vmatmul.mubr.bf16.gmra.mrb[0].mxu0 %v3411
    %v3450 = vpop.f32.mrb[0].mxu0
    %v3451 = vadd.f32 0.0, %v3450
    %v3452 = vpop.f32.mrb[0].mxu0
    %v3453 = vpop.f32.mrb[0].mxu0
    %v3454 = vadd.f32 0.0, %v3453
    %v3455 = vpop.f32.mrb[0].mxu0
    %3456 = vmatprep.mubr.bf16.mxu0 0
    %3457 = vmatmul.mubr.bf16.gmra.mrb[0].mxu0 %v3414
    %v3458 = vpop.f32.mrb[0].mxu0
    %v3459 = vadd.f32 0.0, %v3458
    %v3460 = vpop.f32.mrb[0].mxu0
    %v3461 = vpop.f32.mrb[0].mxu0
    %v3462 = vadd.f32 0.0, %v3461
    %v3463 = vpop.f32.mrb[0].mxu0
    %3464 = vdwg.mxu0
    %3467 = vrot.lane.b32.xlu0 %v2793, 64
    %v3468 = vpop.permute.xlu0 %3467
    %3469 = vrot.lane.b32.xlu0 %v2796, 64
    %v3470 = vpop.permute.xlu0 %3469
    %v3474 = vsel %vm2949, %v3400, 0
    %v3477 = vsel %vm2949, %v3401, 0
    %3479 = vmatprep.subr.bf16.mxu0 0
    %3480 = vmatpush1.bf16.msra.mxu0 %v3468
    %3481 = vmatprep.subr.bf16.mxu0 0
    %3482 = vmatpush1.bf16.msra.mxu0 %v3470
    %3483 = vmatprep.subr.bf16.mxu0 0
    %3484 = vmatpush1.bf16.msra.mxu0 0
    %3485 = vmatprep.subr.bf16.mxu0 0
    %3486 = vmatpush1.bf16.msra.mxu0 0
    %3487 = vmatprep.subr.bf16.mxu0 0
    %3488 = vmatpush1.bf16.msra.mxu0 0
    %3489 = vmatprep.subr.bf16.mxu0 0
    %3490 = vmatpush1.bf16.msra.mxu0 0
    %3491 = vmatprep.subr.bf16.mxu0 0
    %3492 = vmatpush1.bf16.msra.mxu0 0
    %3493 = vmatprep.subr.bf16.mxu0 0
    %3494 = vmatpush1.bf16.msra.mxu0 0
    %3495 = vmatprep.subr.bf16.mxu0 0
    %3496 = vmatpush1.bf16.msra.mxu0 0
    %3497 = vmatprep.subr.bf16.mxu0 0
    %3498 = vmatpush1.bf16.msra.mxu0 0
    %3499 = vmatprep.subr.bf16.mxu0 0
    %3500 = vmatpush1.bf16.msra.mxu0 0
    %3501 = vmatprep.subr.bf16.mxu0 0
    %3502 = vmatpush1.bf16.msra.mxu0 0
    %3503 = vmatprep.subr.bf16.mxu0 0
    %3504 = vmatpush1.bf16.msra.mxu0 0
    %3505 = vmatprep.subr.bf16.mxu0 0
    %3506 = vmatpush1.bf16.msra.mxu0 0
    %3507 = vmatprep.subr.bf16.mxu0 0
    %3508 = vmatpush1.bf16.msra.mxu0 0
    %3509 = vmatprep.subr.bf16.mxu0 0
    %3510 = vmatpush1.bf16.msra.mxu0 0
    %3511 = vmatprep.mubr.bf16.mxu0 0
    %3512 = vmatmul.mubr.bf16.gmra.mrb[0].mxu0 %v3474
    %v3513 = vpop.f32.mrb[0].mxu0
    %v3514 = vadd.f32 0.0, %v3513
    %v3515 = vpop.f32.mrb[0].mxu0
    %v3516 = vpop.f32.mrb[0].mxu0
    %v3517 = vadd.f32 0.0, %v3516
    %v3518 = vpop.f32.mrb[0].mxu0
    %3519 = vmatprep.mubr.bf16.mxu0 0
    %3520 = vmatmul.mubr.bf16.gmra.mrb[0].mxu0 %v3477
    %v3521 = vpop.f32.mrb[0].mxu0
    %v3522 = vadd.f32 0.0, %v3521
    %v3523 = vpop.f32.mrb[0].mxu0
    %v3524 = vpop.f32.mrb[0].mxu0
    %v3525 = vadd.f32 0.0, %v3524
    %v3526 = vpop.f32.mrb[0].mxu0
    %3527 = vdwg.mxu0
    %v3528 = vpack.c.bf16 %v3454, %v3451
    %v3529 = vpack.c.bf16 %v3462, %v3459
    %v3530 = vpack.c.bf16 %v3517, %v3514
    %v3531 = vpack.c.bf16 %v3525, %v3522
    %v3533 = vsel %vm2810, %v1252, 0
    %v3536 = vsel %vm2810, %v1255, 0
    %v3539 = vsel %vm2810, %v2020, 0
    %v3542 = vsel %vm2810, %v2023, 0
    %3544 = vmatprep.subr.bf16.mxu0 0
    %3545 = vmatpush1.bf16.xpose.msra.mxu0 %v3539
    %3546 = vmatprep.subr.bf16.mxu0 0
    %3547 = vmatpush1.bf16.xpose.msra.mxu0 %v3542
    %3548 = vmatprep.subr.bf16.mxu0 0
    %3549 = vmatpush1.bf16.xpose.msra.mxu0 0
    %3550 = vmatprep.subr.bf16.mxu0 0
    %3551 = vmatpush1.bf16.xpose.msra.mxu0 0
    %3552 = vmatprep.subr.bf16.mxu0 0
    %3553 = vmatpush1.bf16.xpose.msra.mxu0 0
    %3554 = vmatprep.subr.bf16.mxu0 0
    %3555 = vmatpush1.bf16.xpose.msra.mxu0 0
    %3556 = vmatprep.subr.bf16.mxu0 0
    %3557 = vmatpush1.bf16.xpose.msra.mxu0 0
    %3558 = vmatprep.subr.bf16.mxu0 0
    %3559 = vmatpush1.bf16.xpose.msra.mxu0 0
    %3560 = vmatprep.subr.bf16.mxu0 0
    %3561 = vmatpush1.bf16.xpose.msra.mxu0 0
    %3562 = vmatprep.subr.bf16.mxu0 0
    %3563 = vmatpush1.bf16.xpose.msra.mxu0 0
    %3564 = vmatprep.subr.bf16.mxu0 0
    %3565 = vmatpush1.bf16.xpose.msra.mxu0 0
    %3566 = vmatprep.subr.bf16.mxu0 0
    %3567 = vmatpush1.bf16.xpose.msra.mxu0 0
    %3568 = vmatprep.subr.bf16.mxu0 0
    %3569 = vmatpush1.bf16.xpose.msra.mxu0 0
    %3570 = vmatprep.subr.bf16.mxu0 0
    %3571 = vmatpush1.bf16.xpose.msra.mxu0 0
    %3572 = vmatprep.subr.bf16.mxu0 0
    %3573 = vmatpush1.bf16.xpose.msra.mxu0 0
    %3574 = vmatprep.subr.bf16.mxu0 0
    %3575 = vmatpush1.bf16.xpose.msra.mxu0 0
    %3576 = vmatprep.mubr.bf16.mxu0 0
    %3577 = vmatmul.mubr.bf16.gmra.mrb[0].mxu0 %v3533
    %v3578 = vpop.f32.mrb[0].mxu0
    %v3579 = vadd.f32 0.0, %v3578
    %v3580 = vpop.f32.mrb[0].mxu0
    %v3581 = vpop.f32.mrb[0].mxu0
    %v3582 = vadd.f32 0.0, %v3581
    %v3583 = vpop.f32.mrb[0].mxu0
    %3584 = vmatprep.mubr.bf16.mxu0 0
    %3585 = vmatmul.mubr.bf16.gmra.mrb[0].mxu0 %v3536
    %v3586 = vpop.f32.mrb[0].mxu0
    %v3587 = vadd.f32 0.0, %v3586
    %v3588 = vpop.f32.mrb[0].mxu0
    %v3589 = vpop.f32.mrb[0].mxu0
    %v3590 = vadd.f32 0.0, %v3589
    %v3591 = vpop.f32.mrb[0].mxu0
    %3592 = vdwg.mxu0
    %v3594 = vsel %vm2810, %v1258, 0
    %v3597 = vsel %vm2810, %v1261, 0
    %v3600 = vsel %vm2810, %v2026, 0
    %v3603 = vsel %vm2810, %v2029, 0
    %3605 = vmatprep.subr.bf16.mxu0 0
    %3606 = vmatpush1.bf16.xpose.msra.mxu0 %v3600
    %3607 = vmatprep.subr.bf16.mxu0 0
    %3608 = vmatpush1.bf16.xpose.msra.mxu0 %v3603
    %3609 = vmatprep.subr.bf16.mxu0 0
    %3610 = vmatpush1.bf16.xpose.msra.mxu0 0
    %3611 = vmatprep.subr.bf16.mxu0 0
    %3612 = vmatpush1.bf16.xpose.msra.mxu0 0
    %3613 = vmatprep.subr.bf16.mxu0 0
    %3614 = vmatpush1.bf16.xpose.msra.mxu0 0
    %3615 = vmatprep.subr.bf16.mxu0 0
    %3616 = vmatpush1.bf16.xpose.msra.mxu0 0
    %3617 = vmatprep.subr.bf16.mxu0 0
    %3618 = vmatpush1.bf16.xpose.msra.mxu0 0
    %3619 = vmatprep.subr.bf16.mxu0 0
    %3620 = vmatpush1.bf16.xpose.msra.mxu0 0
    %3621 = vmatprep.subr.bf16.mxu0 0
    %3622 = vmatpush1.bf16.xpose.msra.mxu0 0
    %3623 = vmatprep.subr.bf16.mxu0 0
    %3624 = vmatpush1.bf16.xpose.msra.mxu0 0
    %3625 = vmatprep.subr.bf16.mxu0 0
    %3626 = vmatpush1.bf16.xpose.msra.mxu0 0
    %3627 = vmatprep.subr.bf16.mxu0 0
    %3628 = vmatpush1.bf16.xpose.msra.mxu0 0
    %3629 = vmatprep.subr.bf16.mxu0 0
    %3630 = vmatpush1.bf16.xpose.msra.mxu0 0
    %3631 = vmatprep.subr.bf16.mxu0 0
    %3632 = vmatpush1.bf16.xpose.msra.mxu0 0
    %3633 = vmatprep.subr.bf16.mxu0 0
    %3634 = vmatpush1.bf16.xpose.msra.mxu0 0
    %3635 = vmatprep.subr.bf16.mxu0 0
    %3636 = vmatpush1.bf16.xpose.msra.mxu0 0
    %3637 = vmatprep.mubr.bf16.mxu0 0
    %3638 = vmatmul.mubr.bf16.gmra.mrb[0].mxu0 %v3594
    %v3639 = vpop.f32.mrb[0].mxu0
    %v3640 = vadd.f32 0.0, %v3639
    %v3641 = vpop.f32.mrb[0].mxu0
    %v3642 = vpop.f32.mrb[0].mxu0
    %v3643 = vadd.f32 0.0, %v3642
    %v3644 = vpop.f32.mrb[0].mxu0
    %3645 = vmatprep.mubr.bf16.mxu0 0
    %3646 = vmatmul.mubr.bf16.gmra.mrb[0].mxu0 %v3597
    %v3647 = vpop.f32.mrb[0].mxu0
    %v3648 = vadd.f32 0.0, %v3647
    %v3649 = vpop.f32.mrb[0].mxu0
    %v3650 = vpop.f32.mrb[0].mxu0
    %v3651 = vadd.f32 0.0, %v3650
    %v3652 = vpop.f32.mrb[0].mxu0
    %3653 = vdwg.mxu0
    %v3654 = vsel %vm2937, %v3579, -1e+09
    %v3655 = vsel %vm2938, %v3582, -1e+09
    %v3656 = vsel %vm2939, %v3587, -1e+09
    %v3657 = vsel %vm2940, %v3590, -1e+09
    %v3658 = vsel %vm2937, %v3640, -1e+09
    %v3659 = vsel %vm2938, %v3643, -1e+09
    %v3660 = vsel %vm2939, %v3648, -1e+09
    %v3661 = vsel %vm2940, %v3651, -1e+09
    %v3662 = vsel %vm2949, %v3654, -inf
    %3663 = vmax.xlane.f32.xlu0 %v3662
    %v3664 = vpop.xlane.xlu0 %3663
    %v3665 = vsel %vm2949, %v3655, -inf
    %3666 = vmax.xlane.f32.xlu0 %v3665
    %v3667 = vpop.xlane.xlu0 %3666
    %v3668 = vsel %vm2949, %v3656, -inf
    %3669 = vmax.xlane.f32.xlu0 %v3668
    %v3670 = vpop.xlane.xlu0 %3669
    %v3671 = vsel %vm2949, %v3657, -inf
    %3672 = vmax.xlane.f32.xlu0 %v3671
    %v3673 = vpop.xlane.xlu0 %3672
    %v3674 = vsel %vm2949, %v3658, -inf
    %3675 = vmax.xlane.f32.xlu0 %v3674
    %v3676 = vpop.xlane.xlu0 %3675
    %v3677 = vsel %vm2949, %v3659, -inf
    %3678 = vmax.xlane.f32.xlu0 %v3677
    %v3679 = vpop.xlane.xlu0 %3678
    %v3680 = vsel %vm2949, %v3660, -inf
    %3681 = vmax.xlane.f32.xlu0 %v3680
    %v3682 = vpop.xlane.xlu0 %3681
    %v3683 = vsel %vm2949, %v3661, -inf
    %3684 = vmax.xlane.f32.xlu0 %v3683
    %v3685 = vpop.xlane.xlu0 %3684
    %v3686 = vsub.f32 %v3654, %v3664
    %v3687 = vsub.f32 %v3655, %v3667
    %v3688 = vsub.f32 %v3656, %v3670
    %v3689 = vsub.f32 %v3657, %v3673
    %v3690 = vsub.f32 %v3658, %v3676
    %v3691 = vsub.f32 %v3659, %v3679
    %v3692 = vsub.f32 %v3660, %v3682
    %v3693 = vsub.f32 %v3661, %v3685
    %v3694 = vmul.f32 %v3686, 1.442695
    %v3695 = vpow.pop %v3694
    %v3696 = vmul.f32 %v3687, 1.442695
    %v3697 = vpow.pop %v3696
    %v3698 = vmul.f32 %v3688, 1.442695
    %v3699 = vpow.pop %v3698
    %v3700 = vmul.f32 %v3689, 1.442695
    %v3701 = vpow.pop %v3700
    %v3702 = vmul.f32 %v3690, 1.442695
    %v3703 = vpow.pop %v3702
    %v3704 = vmul.f32 %v3691, 1.442695
    %v3705 = vpow.pop %v3704
    %v3706 = vmul.f32 %v3692, 1.442695
    %v3707 = vpow.pop %v3706
    %v3708 = vmul.f32 %v3693, 1.442695
    %v3709 = vpow.pop %v3708
    %v3710 = vsel %vm2949, %v3695, 0.0
    %3711 = vadd.xlane.f32.xlu0 %v3710
    %v3712 = vpop.xlane.xlu0 %3711
    %v3713 = vsel %vm2949, %v3697, 0.0
    %3714 = vadd.xlane.f32.xlu0 %v3713
    %v3715 = vpop.xlane.xlu0 %3714
    %v3716 = vsel %vm2949, %v3699, 0.0
    %3717 = vadd.xlane.f32.xlu0 %v3716
    %v3718 = vpop.xlane.xlu0 %3717
    %v3719 = vsel %vm2949, %v3701, 0.0
    %3720 = vadd.xlane.f32.xlu0 %v3719
    %v3721 = vpop.xlane.xlu0 %3720
    %v3722 = vsel %vm2949, %v3703, 0.0
    %3723 = vadd.xlane.f32.xlu0 %v3722
    %v3724 = vpop.xlane.xlu0 %3723
    %v3725 = vsel %vm2949, %v3705, 0.0
    %3726 = vadd.xlane.f32.xlu0 %v3725
    %v3727 = vpop.xlane.xlu0 %3726
    %v3728 = vsel %vm2949, %v3707, 0.0
    %3729 = vadd.xlane.f32.xlu0 %v3728
    %v3730 = vpop.xlane.xlu0 %3729
    %v3731 = vsel %vm2949, %v3709, 0.0
    %3732 = vadd.xlane.f32.xlu0 %v3731
    %v3733 = vpop.xlane.xlu0 %3732
    %v3734 = vrcp.pop %v3712
    %v3735 = vrcp.pop %v3715
    %v3736 = vrcp.pop %v3718
    %v3737 = vrcp.pop %v3721
    %v3738 = vrcp.pop %v3724
    %v3739 = vrcp.pop %v3727
    %v3740 = vrcp.pop %v3730
    %v3741 = vrcp.pop %v3733
    %v3742 = vmul.f32 %v3695, %v3734
    %v3743 = vmul.f32 %v3697, %v3735
    %v3744 = vmul.f32 %v3699, %v3736
    %v3745 = vmul.f32 %v3701, %v3737
    %v3746 = vmul.f32 %v3703, %v3738
    %v3747 = vmul.f32 %v3705, %v3739
    %v3748 = vmul.f32 %v3707, %v3740
    %v3749 = vmul.f32 %v3709, %v3741
    %v3750 = vpack.c.bf16 %v3743, %v3742
    %v3751 = vpack.c.bf16 %v3745, %v3744
    %v3752 = vpack.c.bf16 %v3747, %v3746
    %v3753 = vpack.c.bf16 %v3749, %v3748
    %v3755 = vsel %vm2949, %v3750, 0
    %v3758 = vsel %vm2949, %v3751, 0
    %3760 = vmatprep.subr.bf16.mxu0 0
    %3761 = vmatpush1.bf16.msra.mxu0 %v2788
    %3762 = vmatprep.subr.bf16.mxu0 0
    %3763 = vmatpush1.bf16.msra.mxu0 %v2791
    %3764 = vmatprep.subr.bf16.mxu0 0
    %3765 = vmatpush1.bf16.msra.mxu0 0
    %3766 = vmatprep.subr.bf16.mxu0 0
    %3767 = vmatpush1.bf16.msra.mxu0 0
    %3768 = vmatprep.subr.bf16.mxu0 0
    %3769 = vmatpush1.bf16.msra.mxu0 0
    %3770 = vmatprep.subr.bf16.mxu0 0
    %3771 = vmatpush1.bf16.msra.mxu0 0
    %3772 = vmatprep.subr.bf16.mxu0 0
    %3773 = vmatpush1.bf16.msra.mxu0 0
    %3774 = vmatprep.subr.bf16.mxu0 0
    %3775 = vmatpush1.bf16.msra.mxu0 0
    %3776 = vmatprep.subr.bf16.mxu0 0
    %3777 = vmatpush1.bf16.msra.mxu0 0
    %3778 = vmatprep.subr.bf16.mxu0 0
    %3779 = vmatpush1.bf16.msra.mxu0 0
    %3780 = vmatprep.subr.bf16.mxu0 0
    %3781 = vmatpush1.bf16.msra.mxu0 0
    %3782 = vmatprep.subr.bf16.mxu0 0
    %3783 = vmatpush1.bf16.msra.mxu0 0
    %3784 = vmatprep.subr.bf16.mxu0 0
    %3785 = vmatpush1.bf16.msra.mxu0 0
    %3786 = vmatprep.subr.bf16.mxu0 0
    %3787 = vmatpush1.bf16.msra.mxu0 0
    %3788 = vmatprep.subr.bf16.mxu0 0
    %3789 = vmatpush1.bf16.msra.mxu0 0
    %3790 = vmatprep.subr.bf16.mxu0 0
    %3791 = vmatpush1.bf16.msra.mxu0 0
    %3792 = vmatprep.mubr.bf16.mxu0 0
    %3793 = vmatmul.mubr.bf16.gmra.mrb[0].mxu0 %v3755
    %v3794 = vpop.f32.mrb[0].mxu0
    %v3795 = vadd.f32 0.0, %v3794
    %v3796 = vpop.f32.mrb[0].mxu0
    %v3797 = vpop.f32.mrb[0].mxu0
    %v3798 = vadd.f32 0.0, %v3797
    %v3799 = vpop.f32.mrb[0].mxu0
    %3800 = vmatprep.mubr.bf16.mxu0 0
    %3801 = vmatmul.mubr.bf16.gmra.mrb[0].mxu0 %v3758
    %v3802 = vpop.f32.mrb[0].mxu0
    %v3803 = vadd.f32 0.0, %v3802
    %v3804 = vpop.f32.mrb[0].mxu0
    %v3805 = vpop.f32.mrb[0].mxu0
    %v3806 = vadd.f32 0.0, %v3805
    %v3807 = vpop.f32.mrb[0].mxu0
    %3808 = vdwg.mxu0
    %v3810 = vsel %vm2949, %v3752, 0
    %v3813 = vsel %vm2949, %v3753, 0
    %3815 = vmatprep.subr.bf16.mxu0 0
    %3816 = vmatpush1.bf16.msra.mxu0 %v2794
    %3817 = vmatprep.subr.bf16.mxu0 0
    %3818 = vmatpush1.bf16.msra.mxu0 %v2797
    %3819 = vmatprep.subr.bf16.mxu0 0
    %3820 = vmatpush1.bf16.msra.mxu0 0
    %3821 = vmatprep.subr.bf16.mxu0 0
    %3822 = vmatpush1.bf16.msra.mxu0 0
    %3823 = vmatprep.subr.bf16.mxu0 0
    %3824 = vmatpush1.bf16.msra.mxu0 0
    %3825 = vmatprep.subr.bf16.mxu0 0
    %3826 = vmatpush1.bf16.msra.mxu0 0
    %3827 = vmatprep.subr.bf16.mxu0 0
    %3828 = vmatpush1.bf16.msra.mxu0 0
    %3829 = vmatprep.subr.bf16.mxu0 0
    %3830 = vmatpush1.bf16.msra.mxu0 0
    %3831 = vmatprep.subr.bf16.mxu0 0
    %3832 = vmatpush1.bf16.msra.mxu0 0
    %3833 = vmatprep.subr.bf16.mxu0 0
    %3834 = vmatpush1.bf16.msra.mxu0 0
    %3835 = vmatprep.subr.bf16.mxu0 0
    %3836 = vmatpush1.bf16.msra.mxu0 0
    %3837 = vmatprep.subr.bf16.mxu0 0
    %3838 = vmatpush1.bf16.msra.mxu0 0
    %3839 = vmatprep.subr.bf16.mxu0 0
    %3840 = vmatpush1.bf16.msra.mxu0 0
    %3841 = vmatprep.subr.bf16.mxu0 0
    %3842 = vmatpush1.bf16.msra.mxu0 0
    %3843 = vmatprep.subr.bf16.mxu0 0
    %3844 = vmatpush1.bf16.msra.mxu0 0
    %3845 = vmatprep.subr.bf16.mxu0 0
    %3846 = vmatpush1.bf16.msra.mxu0 0
    %3847 = vmatprep.mubr.bf16.mxu0 0
    %3848 = vmatmul.mubr.bf16.gmra.mrb[0].mxu0 %v3810
    %v3849 = vpop.f32.mrb[0].mxu0
    %v3850 = vadd.f32 0.0, %v3849
    %v3851 = vpop.f32.mrb[0].mxu0
    %v3852 = vpop.f32.mrb[0].mxu0
    %v3853 = vadd.f32 0.0, %v3852
    %v3854 = vpop.f32.mrb[0].mxu0
    %3855 = vmatprep.mubr.bf16.mxu0 0
    %3856 = vmatmul.mubr.bf16.gmra.mrb[0].mxu0 %v3813
    %v3857 = vpop.f32.mrb[0].mxu0
    %v3858 = vadd.f32 0.0, %v3857
    %v3859 = vpop.f32.mrb[0].mxu0
    %v3860 = vpop.f32.mrb[0].mxu0
    %v3861 = vadd.f32 0.0, %v3860
    %v3862 = vpop.f32.mrb[0].mxu0
    %3863 = vdwg.mxu0
    %v3864 = vpack.c.bf16 %v3798, %v3795
    %v3865 = vpack.c.bf16 %v3806, %v3803
    %v3866 = vpack.c.bf16 %v3853, %v3850
    %v3867 = vpack.c.bf16 %v3861, %v3858
    %3870 = vrot.lane.b32.xlu0 %v1252, 64
    %v3871 = vpop.permute.xlu0 %3870
    %3872 = vrot.lane.b32.xlu0 %v1255, 64
    %v3873 = vpop.permute.xlu0 %3872
    %3876 = vrot.lane.b32.xlu0 %v2020, 64
    %v3877 = vpop.permute.xlu0 %3876
    %3878 = vrot.lane.b32.xlu0 %v2023, 64
    %v3879 = vpop.permute.xlu0 %3878
    %v3881 = vsel %vm2810, %v3871, 0
    %v3884 = vsel %vm2810, %v3873, 0
    %v3887 = vsel %vm2810, %v3877, 0
    %v3890 = vsel %vm2810, %v3879, 0
    %3892 = vmatprep.subr.bf16.mxu0 0
    %3893 = vmatpush1.bf16.xpose.msra.mxu0 %v3887
    %3894 = vmatprep.subr.bf16.mxu0 0
    %3895 = vmatpush1.bf16.xpose.msra.mxu0 %v3890
    %3896 = vmatprep.subr.bf16.mxu0 0
    %3897 = vmatpush1.bf16.xpose.msra.mxu0 0
    %3898 = vmatprep.subr.bf16.mxu0 0
    %3899 = vmatpush1.bf16.xpose.msra.mxu0 0
    %3900 = vmatprep.subr.bf16.mxu0 0
    %3901 = vmatpush1.bf16.xpose.msra.mxu0 0
    %3902 = vmatprep.subr.bf16.mxu0 0
    %3903 = vmatpush1.bf16.xpose.msra.mxu0 0
    %3904 = vmatprep.subr.bf16.mxu0 0
    %3905 = vmatpush1.bf16.xpose.msra.mxu0 0
    %3906 = vmatprep.subr.bf16.mxu0 0
    %3907 = vmatpush1.bf16.xpose.msra.mxu0 0
    %3908 = vmatprep.subr.bf16.mxu0 0
    %3909 = vmatpush1.bf16.xpose.msra.mxu0 0
    %3910 = vmatprep.subr.bf16.mxu0 0
    %3911 = vmatpush1.bf16.xpose.msra.mxu0 0
    %3912 = vmatprep.subr.bf16.mxu0 0
    %3913 = vmatpush1.bf16.xpose.msra.mxu0 0
    %3914 = vmatprep.subr.bf16.mxu0 0
    %3915 = vmatpush1.bf16.xpose.msra.mxu0 0
    %3916 = vmatprep.subr.bf16.mxu0 0
    %3917 = vmatpush1.bf16.xpose.msra.mxu0 0
    %3918 = vmatprep.subr.bf16.mxu0 0
    %3919 = vmatpush1.bf16.xpose.msra.mxu0 0
    %3920 = vmatprep.subr.bf16.mxu0 0
    %3921 = vmatpush1.bf16.xpose.msra.mxu0 0
    %3922 = vmatprep.subr.bf16.mxu0 0
    %3923 = vmatpush1.bf16.xpose.msra.mxu0 0
    %3924 = vmatprep.mubr.bf16.mxu0 0
    %3925 = vmatmul.mubr.bf16.gmra.mrb[0].mxu0 %v3881
    %v3926 = vpop.f32.mrb[0].mxu0
    %v3927 = vadd.f32 0.0, %v3926
    %v3928 = vpop.f32.mrb[0].mxu0
    %v3929 = vpop.f32.mrb[0].mxu0
    %v3930 = vadd.f32 0.0, %v3929
    %v3931 = vpop.f32.mrb[0].mxu0
    %3932 = vmatprep.mubr.bf16.mxu0 0
    %3933 = vmatmul.mubr.bf16.gmra.mrb[0].mxu0 %v3884
    %v3934 = vpop.f32.mrb[0].mxu0
    %v3935 = vadd.f32 0.0, %v3934
    %v3936 = vpop.f32.mrb[0].mxu0
    %v3937 = vpop.f32.mrb[0].mxu0
    %v3938 = vadd.f32 0.0, %v3937
    %v3939 = vpop.f32.mrb[0].mxu0
    %3940 = vdwg.mxu0
    %3943 = vrot.lane.b32.xlu0 %v1258, 64
    %v3944 = vpop.permute.xlu0 %3943
    %3945 = vrot.lane.b32.xlu0 %v1261, 64
    %v3946 = vpop.permute.xlu0 %3945
    %3949 = vrot.lane.b32.xlu0 %v2026, 64
    %v3950 = vpop.permute.xlu0 %3949
    %3951 = vrot.lane.b32.xlu0 %v2029, 64
    %v3952 = vpop.permute.xlu0 %3951
    %v3954 = vsel %vm2810, %v3944, 0
    %v3957 = vsel %vm2810, %v3946, 0
    %v3960 = vsel %vm2810, %v3950, 0
    %v3963 = vsel %vm2810, %v3952, 0
    %3965 = vmatprep.subr.bf16.mxu0 0
    %3966 = vmatpush1.bf16.xpose.msra.mxu0 %v3960
    %3967 = vmatprep.subr.bf16.mxu0 0
    %3968 = vmatpush1.bf16.xpose.msra.mxu0 %v3963
    %3969 = vmatprep.subr.bf16.mxu0 0
    %3970 = vmatpush1.bf16.xpose.msra.mxu0 0
    %3971 = vmatprep.subr.bf16.mxu0 0
    %3972 = vmatpush1.bf16.xpose.msra.mxu0 0
    %3973 = vmatprep.subr.bf16.mxu0 0
    %3974 = vmatpush1.bf16.xpose.msra.mxu0 0
    %3975 = vmatprep.subr.bf16.mxu0 0
    %3976 = vmatpush1.bf16.xpose.msra.mxu0 0
    %3977 = vmatprep.subr.bf16.mxu0 0
    %3978 = vmatpush1.bf16.xpose.msra.mxu0 0
    %3979 = vmatprep.subr.bf16.mxu0 0
    %3980 = vmatpush1.bf16.xpose.msra.mxu0 0
    %3981 = vmatprep.subr.bf16.mxu0 0
    %3982 = vmatpush1.bf16.xpose.msra.mxu0 0
    %3983 = vmatprep.subr.bf16.mxu0 0
    %3984 = vmatpush1.bf16.xpose.msra.mxu0 0
    %3985 = vmatprep.subr.bf16.mxu0 0
    %3986 = vmatpush1.bf16.xpose.msra.mxu0 0
    %3987 = vmatprep.subr.bf16.mxu0 0
    %3988 = vmatpush1.bf16.xpose.msra.mxu0 0
    %3989 = vmatprep.subr.bf16.mxu0 0
    %3990 = vmatpush1.bf16.xpose.msra.mxu0 0
    %3991 = vmatprep.subr.bf16.mxu0 0
    %3992 = vmatpush1.bf16.xpose.msra.mxu0 0
    %3993 = vmatprep.subr.bf16.mxu0 0
    %3994 = vmatpush1.bf16.xpose.msra.mxu0 0
    %3995 = vmatprep.subr.bf16.mxu0 0
    %3996 = vmatpush1.bf16.xpose.msra.mxu0 0
    %3997 = vmatprep.mubr.bf16.mxu0 0
    %3998 = vmatmul.mubr.bf16.gmra.mrb[0].mxu0 %v3954
    %v3999 = vpop.f32.mrb[0].mxu0
    %v4000 = vadd.f32 0.0, %v3999
    %v4001 = vpop.f32.mrb[0].mxu0
    %v4002 = vpop.f32.mrb[0].mxu0
    %v4003 = vadd.f32 0.0, %v4002
    %v4004 = vpop.f32.mrb[0].mxu0
    %4005 = vmatprep.mubr.bf16.mxu0 0
    %4006 = vmatmul.mubr.bf16.gmra.mrb[0].mxu0 %v3957
    %v4007 = vpop.f32.mrb[0].mxu0
    %v4008 = vadd.f32 0.0, %v4007
    %v4009 = vpop.f32.mrb[0].mxu0
    %v4010 = vpop.f32.mrb[0].mxu0
    %v4011 = vadd.f32 0.0, %v4010
    %v4012 = vpop.f32.mrb[0].mxu0
    %4013 = vdwg.mxu0
    %v4014 = vsel %vm2937, %v3927, -1e+09
    %v4015 = vsel %vm2938, %v3930, -1e+09
    %v4016 = vsel %vm2939, %v3935, -1e+09
    %v4017 = vsel %vm2940, %v3938, -1e+09
    %v4018 = vsel %vm2937, %v4000, -1e+09
    %v4019 = vsel %vm2938, %v4003, -1e+09
    %v4020 = vsel %vm2939, %v4008, -1e+09
    %v4021 = vsel %vm2940, %v4011, -1e+09
    %v4022 = vsel %vm2949, %v4014, -inf
    %4023 = vmax.xlane.f32.xlu0 %v4022
    %v4024 = vpop.xlane.xlu0 %4023
    %v4025 = vsel %vm2949, %v4015, -inf
    %4026 = vmax.xlane.f32.xlu0 %v4025
    %v4027 = vpop.xlane.xlu0 %4026
    %v4028 = vsel %vm2949, %v4016, -inf
    %4029 = vmax.xlane.f32.xlu0 %v4028
    %v4030 = vpop.xlane.xlu0 %4029
    %v4031 = vsel %vm2949, %v4017, -inf
    %4032 = vmax.xlane.f32.xlu0 %v4031
    %v4033 = vpop.xlane.xlu0 %4032
    %v4034 = vsel %vm2949, %v4018, -inf
    %4035 = vmax.xlane.f32.xlu0 %v4034
    %v4036 = vpop.xlane.xlu0 %4035
    %v4037 = vsel %vm2949, %v4019, -inf
    %4038 = vmax.xlane.f32.xlu0 %v4037
    %v4039 = vpop.xlane.xlu0 %4038
    %v4040 = vsel %vm2949, %v4020, -inf
    %4041 = vmax.xlane.f32.xlu0 %v4040
    %v4042 = vpop.xlane.xlu0 %4041
    %v4043 = vsel %vm2949, %v4021, -inf
    %4044 = vmax.xlane.f32.xlu0 %v4043
    %v4045 = vpop.xlane.xlu0 %4044
    %v4046 = vsub.f32 %v4014, %v4024
    %v4047 = vsub.f32 %v4015, %v4027
    %v4048 = vsub.f32 %v4016, %v4030
    %v4049 = vsub.f32 %v4017, %v4033
    %v4050 = vsub.f32 %v4018, %v4036
    %v4051 = vsub.f32 %v4019, %v4039
    %v4052 = vsub.f32 %v4020, %v4042
    %v4053 = vsub.f32 %v4021, %v4045
    %v4054 = vmul.f32 %v4046, 1.442695
    %v4055 = vpow.pop %v4054
    %v4056 = vmul.f32 %v4047, 1.442695
    %v4057 = vpow.pop %v4056
    %v4058 = vmul.f32 %v4048, 1.442695
    %v4059 = vpow.pop %v4058
    %v4060 = vmul.f32 %v4049, 1.442695
    %v4061 = vpow.pop %v4060
    %v4062 = vmul.f32 %v4050, 1.442695
    %v4063 = vpow.pop %v4062
    %v4064 = vmul.f32 %v4051, 1.442695
    %v4065 = vpow.pop %v4064
    %v4066 = vmul.f32 %v4052, 1.442695
    %v4067 = vpow.pop %v4066
    %v4068 = vmul.f32 %v4053, 1.442695
    %v4069 = vpow.pop %v4068
    %v4070 = vsel %vm2949, %v4055, 0.0
    %4071 = vadd.xlane.f32.xlu0 %v4070
    %v4072 = vpop.xlane.xlu0 %4071
    %v4073 = vsel %vm2949, %v4057, 0.0
    %4074 = vadd.xlane.f32.xlu0 %v4073
    %v4075 = vpop.xlane.xlu0 %4074
    %v4076 = vsel %vm2949, %v4059, 0.0
    %4077 = vadd.xlane.f32.xlu0 %v4076
    %v4078 = vpop.xlane.xlu0 %4077
    %v4079 = vsel %vm2949, %v4061, 0.0
    %4080 = vadd.xlane.f32.xlu0 %v4079
    %v4081 = vpop.xlane.xlu0 %4080
    %v4082 = vsel %vm2949, %v4063, 0.0
    %4083 = vadd.xlane.f32.xlu0 %v4082
    %v4084 = vpop.xlane.xlu0 %4083
    %v4085 = vsel %vm2949, %v4065, 0.0
    %4086 = vadd.xlane.f32.xlu0 %v4085
    %v4087 = vpop.xlane.xlu0 %4086
    %v4088 = vsel %vm2949, %v4067, 0.0
    %4089 = vadd.xlane.f32.xlu0 %v4088
    %v4090 = vpop.xlane.xlu0 %4089
    %v4091 = vsel %vm2949, %v4069, 0.0
    %4092 = vadd.xlane.f32.xlu0 %v4091
    %v4093 = vpop.xlane.xlu0 %4092
    %v4094 = vrcp.pop %v4072
    %v4095 = vrcp.pop %v4075
    %v4096 = vrcp.pop %v4078
    %v4097 = vrcp.pop %v4081
    %v4098 = vrcp.pop %v4084
    %v4099 = vrcp.pop %v4087
    %v4100 = vrcp.pop %v4090
    %v4101 = vrcp.pop %v4093
    %v4102 = vmul.f32 %v4055, %v4094
    %v4103 = vmul.f32 %v4057, %v4095
    %v4104 = vmul.f32 %v4059, %v4096
    %v4105 = vmul.f32 %v4061, %v4097
    %v4106 = vmul.f32 %v4063, %v4098
    %v4107 = vmul.f32 %v4065, %v4099
    %v4108 = vmul.f32 %v4067, %v4100
    %v4109 = vmul.f32 %v4069, %v4101
    %v4110 = vpack.c.bf16 %v4103, %v4102
    %v4111 = vpack.c.bf16 %v4105, %v4104
    %v4112 = vpack.c.bf16 %v4107, %v4106
    %v4113 = vpack.c.bf16 %v4109, %v4108
    %4116 = vrot.lane.b32.xlu0 %v2788, 64
    %v4117 = vpop.permute.xlu0 %4116
    %4118 = vrot.lane.b32.xlu0 %v2791, 64
    %v4119 = vpop.permute.xlu0 %4118
    %v4123 = vsel %vm2949, %v4110, 0
    %v4126 = vsel %vm2949, %v4111, 0
    %4128 = vmatprep.subr.bf16.mxu0 0
    %4129 = vmatpush1.bf16.msra.mxu0 %v4117
    %4130 = vmatprep.subr.bf16.mxu0 0
    %4131 = vmatpush1.bf16.msra.mxu0 %v4119
    %4132 = vmatprep.subr.bf16.mxu0 0
    %4133 = vmatpush1.bf16.msra.mxu0 0
    %4134 = vmatprep.subr.bf16.mxu0 0
    %4135 = vmatpush1.bf16.msra.mxu0 0
    %4136 = vmatprep.subr.bf16.mxu0 0
    %4137 = vmatpush1.bf16.msra.mxu0 0
    %4138 = vmatprep.subr.bf16.mxu0 0
    %4139 = vmatpush1.bf16.msra.mxu0 0
    %4140 = vmatprep.subr.bf16.mxu0 0
    %4141 = vmatpush1.bf16.msra.mxu0 0
    %4142 = vmatprep.subr.bf16.mxu0 0
    %4143 = vmatpush1.bf16.msra.mxu0 0
    %4144 = vmatprep.subr.bf16.mxu0 0
    %4145 = vmatpush1.bf16.msra.mxu0 0
    %4146 = vmatprep.subr.bf16.mxu0 0
    %4147 = vmatpush1.bf16.msra.mxu0 0
    %4148 = vmatprep.subr.bf16.mxu0 0
    %4149 = vmatpush1.bf16.msra.mxu0 0
    %4150 = vmatprep.subr.bf16.mxu0 0
    %4151 = vmatpush1.bf16.msra.mxu0 0
    %4152 = vmatprep.subr.bf16.mxu0 0
    %4153 = vmatpush1.bf16.msra.mxu0 0
    %4154 = vmatprep.subr.bf16.mxu0 0
    %4155 = vmatpush1.bf16.msra.mxu0 0
    %4156 = vmatprep.subr.bf16.mxu0 0
    %4157 = vmatpush1.bf16.msra.mxu0 0
    %4158 = vmatprep.subr.bf16.mxu0 0
    %4159 = vmatpush1.bf16.msra.mxu0 0
    %4160 = vmatprep.mubr.bf16.mxu0 0
    %4161 = vmatmul.mubr.bf16.gmra.mrb[0].mxu0 %v4123
    %v4162 = vpop.f32.mrb[0].mxu0
    %v4163 = vadd.f32 0.0, %v4162
    %v4164 = vpop.f32.mrb[0].mxu0
    %v4165 = vpop.f32.mrb[0].mxu0
    %v4166 = vadd.f32 0.0, %v4165
    %v4167 = vpop.f32.mrb[0].mxu0
    %4168 = vmatprep.mubr.bf16.mxu0 0
    %4169 = vmatmul.mubr.bf16.gmra.mrb[0].mxu0 %v4126
    %v4170 = vpop.f32.mrb[0].mxu0
    %v4171 = vadd.f32 0.0, %v4170
    %v4172 = vpop.f32.mrb[0].mxu0
    %v4173 = vpop.f32.mrb[0].mxu0
    %v4174 = vadd.f32 0.0, %v4173
    %v4175 = vpop.f32.mrb[0].mxu0
    %4176 = vdwg.mxu0
    %4179 = vrot.lane.b32.xlu0 %v2794, 64
    %v4180 = vpop.permute.xlu0 %4179
    %4181 = vrot.lane.b32.xlu0 %v2797, 64
    %v4182 = vpop.permute.xlu0 %4181
    %v4186 = vsel %vm2949, %v4112, 0
    %v4189 = vsel %vm2949, %v4113, 0
    %4191 = vmatprep.subr.bf16.mxu0 0
    %4192 = vmatpush1.bf16.msra.mxu0 %v4180
    %4193 = vmatprep.subr.bf16.mxu0 0
    %4194 = vmatpush1.bf16.msra.mxu0 %v4182
    %4195 = vmatprep.subr.bf16.mxu0 0
    %4196 = vmatpush1.bf16.msra.mxu0 0
    %4197 = vmatprep.subr.bf16.mxu0 0
    %4198 = vmatpush1.bf16.msra.mxu0 0
    %4199 = vmatprep.subr.bf16.mxu0 0
    %4200 = vmatpush1.bf16.msra.mxu0 0
    %4201 = vmatprep.subr.bf16.mxu0 0
    %4202 = vmatpush1.bf16.msra.mxu0 0
    %4203 = vmatprep.subr.bf16.mxu0 0
    %4204 = vmatpush1.bf16.msra.mxu0 0
    %4205 = vmatprep.subr.bf16.mxu0 0
    %4206 = vmatpush1.bf16.msra.mxu0 0
    %4207 = vmatprep.subr.bf16.mxu0 0
    %4208 = vmatpush1.bf16.msra.mxu0 0
    %4209 = vmatprep.subr.bf16.mxu0 0
    %4210 = vmatpush1.bf16.msra.mxu0 0
    %4211 = vmatprep.subr.bf16.mxu0 0
    %4212 = vmatpush1.bf16.msra.mxu0 0
    %4213 = vmatprep.subr.bf16.mxu0 0
    %4214 = vmatpush1.bf16.msra.mxu0 0
    %4215 = vmatprep.subr.bf16.mxu0 0
    %4216 = vmatpush1.bf16.msra.mxu0 0
    %4217 = vmatprep.subr.bf16.mxu0 0
    %4218 = vmatpush1.bf16.msra.mxu0 0
    %4219 = vmatprep.subr.bf16.mxu0 0
    %4220 = vmatpush1.bf16.msra.mxu0 0
    %4221 = vmatprep.subr.bf16.mxu0 0
    %4222 = vmatpush1.bf16.msra.mxu0 0
    %4223 = vmatprep.mubr.bf16.mxu0 0
    %4224 = vmatmul.mubr.bf16.gmra.mrb[0].mxu0 %v4186
    %v4225 = vpop.f32.mrb[0].mxu0
    %v4226 = vadd.f32 0.0, %v4225
    %v4227 = vpop.f32.mrb[0].mxu0
    %v4228 = vpop.f32.mrb[0].mxu0
    %v4229 = vadd.f32 0.0, %v4228
    %v4230 = vpop.f32.mrb[0].mxu0
    %4231 = vmatprep.mubr.bf16.mxu0 0
    %4232 = vmatmul.mubr.bf16.gmra.mrb[0].mxu0 %v4189
    %v4233 = vpop.f32.mrb[0].mxu0
    %v4234 = vadd.f32 0.0, %v4233
    %v4235 = vpop.f32.mrb[0].mxu0
    %v4236 = vpop.f32.mrb[0].mxu0
    %v4237 = vadd.f32 0.0, %v4236
    %v4238 = vpop.f32.mrb[0].mxu0
    %4239 = vdwg.mxu0
    %v4240 = vpack.c.bf16 %v4166, %v4163
    %v4241 = vpack.c.bf16 %v4174, %v4171
    %v4242 = vpack.c.bf16 %v4229, %v4226
    %v4243 = vpack.c.bf16 %v4237, %v4234
    %v4245 = vsel %vm2810, %v1253, 0
    %v4248 = vsel %vm2810, %v1256, 0
    %v4251 = vsel %vm2810, %v2021, 0
    %v4254 = vsel %vm2810, %v2024, 0
    %4256 = vmatprep.subr.bf16.mxu0 0
    %4257 = vmatpush1.bf16.xpose.msra.mxu0 %v4251
    %4258 = vmatprep.subr.bf16.mxu0 0
    %4259 = vmatpush1.bf16.xpose.msra.mxu0 %v4254
    %4260 = vmatprep.subr.bf16.mxu0 0
    %4261 = vmatpush1.bf16.xpose.msra.mxu0 0
    %4262 = vmatprep.subr.bf16.mxu0 0
    %4263 = vmatpush1.bf16.xpose.msra.mxu0 0
    %4264 = vmatprep.subr.bf16.mxu0 0
    %4265 = vmatpush1.bf16.xpose.msra.mxu0 0
    %4266 = vmatprep.subr.bf16.mxu0 0
    %4267 = vmatpush1.bf16.xpose.msra.mxu0 0
    %4268 = vmatprep.subr.bf16.mxu0 0
    %4269 = vmatpush1.bf16.xpose.msra.mxu0 0
    %4270 = vmatprep.subr.bf16.mxu0 0
    %4271 = vmatpush1.bf16.xpose.msra.mxu0 0
    %4272 = vmatprep.subr.bf16.mxu0 0
    %4273 = vmatpush1.bf16.xpose.msra.mxu0 0
    %4274 = vmatprep.subr.bf16.mxu0 0
    %4275 = vmatpush1.bf16.xpose.msra.mxu0 0
    %4276 = vmatprep.subr.bf16.mxu0 0
    %4277 = vmatpush1.bf16.xpose.msra.mxu0 0
    %4278 = vmatprep.subr.bf16.mxu0 0
    %4279 = vmatpush1.bf16.xpose.msra.mxu0 0
    %4280 = vmatprep.subr.bf16.mxu0 0
    %4281 = vmatpush1.bf16.xpose.msra.mxu0 0
    %4282 = vmatprep.subr.bf16.mxu0 0
    %4283 = vmatpush1.bf16.xpose.msra.mxu0 0
    %4284 = vmatprep.subr.bf16.mxu0 0
    %4285 = vmatpush1.bf16.xpose.msra.mxu0 0
    %4286 = vmatprep.subr.bf16.mxu0 0
    %4287 = vmatpush1.bf16.xpose.msra.mxu0 0
    %4288 = vmatprep.mubr.bf16.mxu0 0
    %4289 = vmatmul.mubr.bf16.gmra.mrb[0].mxu0 %v4245
    %v4290 = vpop.f32.mrb[0].mxu0
    %v4291 = vadd.f32 0.0, %v4290
    %v4292 = vpop.f32.mrb[0].mxu0
    %v4293 = vpop.f32.mrb[0].mxu0
    %v4294 = vadd.f32 0.0, %v4293
    %v4295 = vpop.f32.mrb[0].mxu0
    %4296 = vmatprep.mubr.bf16.mxu0 0
    %4297 = vmatmul.mubr.bf16.gmra.mrb[0].mxu0 %v4248
    %v4298 = vpop.f32.mrb[0].mxu0
    %v4299 = vadd.f32 0.0, %v4298
    %v4300 = vpop.f32.mrb[0].mxu0
    %v4301 = vpop.f32.mrb[0].mxu0
    %v4302 = vadd.f32 0.0, %v4301
    %v4303 = vpop.f32.mrb[0].mxu0
    %4304 = vdwg.mxu0
    %v4306 = vsel %vm2810, %v1259, 0
    %v4309 = vsel %vm2810, %v1262, 0
    %v4312 = vsel %vm2810, %v2027, 0
    %v4315 = vsel %vm2810, %v2030, 0
    %4317 = vmatprep.subr.bf16.mxu0 0
    %4318 = vmatpush1.bf16.xpose.msra.mxu0 %v4312
    %4319 = vmatprep.subr.bf16.mxu0 0
    %4320 = vmatpush1.bf16.xpose.msra.mxu0 %v4315
    %4321 = vmatprep.subr.bf16.mxu0 0
    %4322 = vmatpush1.bf16.xpose.msra.mxu0 0
    %4323 = vmatprep.subr.bf16.mxu0 0
    %4324 = vmatpush1.bf16.xpose.msra.mxu0 0
    %4325 = vmatprep.subr.bf16.mxu0 0
    %4326 = vmatpush1.bf16.xpose.msra.mxu0 0
    %4327 = vmatprep.subr.bf16.mxu0 0
    %4328 = vmatpush1.bf16.xpose.msra.mxu0 0
    %4329 = vmatprep.subr.bf16.mxu0 0
    %4330 = vmatpush1.bf16.xpose.msra.mxu0 0
    %4331 = vmatprep.subr.bf16.mxu0 0
    %4332 = vmatpush1.bf16.xpose.msra.mxu0 0
    %4333 = vmatprep.subr.bf16.mxu0 0
    %4334 = vmatpush1.bf16.xpose.msra.mxu0 0
    %4335 = vmatprep.subr.bf16.mxu0 0
    %4336 = vmatpush1.bf16.xpose.msra.mxu0 0
    %4337 = vmatprep.subr.bf16.mxu0 0
    %4338 = vmatpush1.bf16.xpose.msra.mxu0 0
    %4339 = vmatprep.subr.bf16.mxu0 0
    %4340 = vmatpush1.bf16.xpose.msra.mxu0 0
    %4341 = vmatprep.subr.bf16.mxu0 0
    %4342 = vmatpush1.bf16.xpose.msra.mxu0 0
    %4343 = vmatprep.subr.bf16.mxu0 0
    %4344 = vmatpush1.bf16.xpose.msra.mxu0 0
    %4345 = vmatprep.subr.bf16.mxu0 0
    %4346 = vmatpush1.bf16.xpose.msra.mxu0 0
    %4347 = vmatprep.subr.bf16.mxu0 0
    %4348 = vmatpush1.bf16.xpose.msra.mxu0 0
    %4349 = vmatprep.mubr.bf16.mxu0 0
    %4350 = vmatmul.mubr.bf16.gmra.mrb[0].mxu0 %v4306
    %v4351 = vpop.f32.mrb[0].mxu0
    %v4352 = vadd.f32 0.0, %v4351
    %v4353 = vpop.f32.mrb[0].mxu0
    %v4354 = vpop.f32.mrb[0].mxu0
    %v4355 = vadd.f32 0.0, %v4354
    %v4356 = vpop.f32.mrb[0].mxu0
    %4357 = vmatprep.mubr.bf16.mxu0 0
    %4358 = vmatmul.mubr.bf16.gmra.mrb[0].mxu0 %v4309
    %v4359 = vpop.f32.mrb[0].mxu0
    %v4360 = vadd.f32 0.0, %v4359
    %v4361 = vpop.f32.mrb[0].mxu0
    %v4362 = vpop.f32.mrb[0].mxu0
    %v4363 = vadd.f32 0.0, %v4362
    %v4364 = vpop.f32.mrb[0].mxu0
    %4365 = vdwg.mxu0
    %v4366 = vsel %vm2937, %v4291, -1e+09
    %v4367 = vsel %vm2938, %v4294, -1e+09
    %v4368 = vsel %vm2939, %v4299, -1e+09
    %v4369 = vsel %vm2940, %v4302, -1e+09
    %v4370 = vsel %vm2937, %v4352, -1e+09
    %v4371 = vsel %vm2938, %v4355, -1e+09
    %v4372 = vsel %vm2939, %v4360, -1e+09
    %v4373 = vsel %vm2940, %v4363, -1e+09
    %v4374 = vsel %vm2949, %v4366, -inf
    %4375 = vmax.xlane.f32.xlu0 %v4374
    %v4376 = vpop.xlane.xlu0 %4375
    %v4377 = vsel %vm2949, %v4367, -inf
    %4378 = vmax.xlane.f32.xlu0 %v4377
    %v4379 = vpop.xlane.xlu0 %4378
    %v4380 = vsel %vm2949, %v4368, -inf
    %4381 = vmax.xlane.f32.xlu0 %v4380
    %v4382 = vpop.xlane.xlu0 %4381
    %v4383 = vsel %vm2949, %v4369, -inf
    %4384 = vmax.xlane.f32.xlu0 %v4383
    %v4385 = vpop.xlane.xlu0 %4384
    %v4386 = vsel %vm2949, %v4370, -inf
    %4387 = vmax.xlane.f32.xlu0 %v4386
    %v4388 = vpop.xlane.xlu0 %4387
    %v4389 = vsel %vm2949, %v4371, -inf
    %4390 = vmax.xlane.f32.xlu0 %v4389
    %v4391 = vpop.xlane.xlu0 %4390
    %v4392 = vsel %vm2949, %v4372, -inf
    %4393 = vmax.xlane.f32.xlu0 %v4392
    %v4394 = vpop.xlane.xlu0 %4393
    %v4395 = vsel %vm2949, %v4373, -inf
    %4396 = vmax.xlane.f32.xlu0 %v4395
    %v4397 = vpop.xlane.xlu0 %4396
    %v4398 = vsub.f32 %v4366, %v4376
    %v4399 = vsub.f32 %v4367, %v4379
    %v4400 = vsub.f32 %v4368, %v4382
    %v4401 = vsub.f32 %v4369, %v4385
    %v4402 = vsub.f32 %v4370, %v4388
    %v4403 = vsub.f32 %v4371, %v4391
    %v4404 = vsub.f32 %v4372, %v4394
    %v4405 = vsub.f32 %v4373, %v4397
    %v4406 = vmul.f32 %v4398, 1.442695
    %v4407 = vpow.pop %v4406
    %v4408 = vmul.f32 %v4399, 1.442695
    %v4409 = vpow.pop %v4408
    %v4410 = vmul.f32 %v4400, 1.442695
    %v4411 = vpow.pop %v4410
    %v4412 = vmul.f32 %v4401, 1.442695
    %v4413 = vpow.pop %v4412
    %v4414 = vmul.f32 %v4402, 1.442695
    %v4415 = vpow.pop %v4414
    %v4416 = vmul.f32 %v4403, 1.442695
    %v4417 = vpow.pop %v4416
    %v4418 = vmul.f32 %v4404, 1.442695
    %v4419 = vpow.pop %v4418
    %v4420 = vmul.f32 %v4405, 1.442695
    %v4421 = vpow.pop %v4420
    %v4422 = vsel %vm2949, %v4407, 0.0
    %4423 = vadd.xlane.f32.xlu0 %v4422
    %v4424 = vpop.xlane.xlu0 %4423
    %v4425 = vsel %vm2949, %v4409, 0.0
    %4426 = vadd.xlane.f32.xlu0 %v4425
    %v4427 = vpop.xlane.xlu0 %4426
    %v4428 = vsel %vm2949, %v4411, 0.0
    %4429 = vadd.xlane.f32.xlu0 %v4428
    %v4430 = vpop.xlane.xlu0 %4429
    %v4431 = vsel %vm2949, %v4413, 0.0
    %4432 = vadd.xlane.f32.xlu0 %v4431
    %v4433 = vpop.xlane.xlu0 %4432
    %v4434 = vsel %vm2949, %v4415, 0.0
    %4435 = vadd.xlane.f32.xlu0 %v4434
    %v4436 = vpop.xlane.xlu0 %4435
    %v4437 = vsel %vm2949, %v4417, 0.0
    %4438 = vadd.xlane.f32.xlu0 %v4437
    %v4439 = vpop.xlane.xlu0 %4438
    %v4440 = vsel %vm2949, %v4419, 0.0
    %4441 = vadd.xlane.f32.xlu0 %v4440
    %v4442 = vpop.xlane.xlu0 %4441
    %v4443 = vsel %vm2949, %v4421, 0.0
    %4444 = vadd.xlane.f32.xlu0 %v4443
    %v4445 = vpop.xlane.xlu0 %4444
    %v4446 = vrcp.pop %v4424
    %v4447 = vrcp.pop %v4427
    %v4448 = vrcp.pop %v4430
    %v4449 = vrcp.pop %v4433
    %v4450 = vrcp.pop %v4436
    %v4451 = vrcp.pop %v4439
    %v4452 = vrcp.pop %v4442
    %v4453 = vrcp.pop %v4445
    %v4454 = vmul.f32 %v4407, %v4446
    %v4455 = vmul.f32 %v4409, %v4447
    %v4456 = vmul.f32 %v4411, %v4448
    %v4457 = vmul.f32 %v4413, %v4449
    %v4458 = vmul.f32 %v4415, %v4450
    %v4459 = vmul.f32 %v4417, %v4451
    %v4460 = vmul.f32 %v4419, %v4452
    %v4461 = vmul.f32 %v4421, %v4453
    %v4462 = vpack.c.bf16 %v4455, %v4454
    %v4463 = vpack.c.bf16 %v4457, %v4456
    %v4464 = vpack.c.bf16 %v4459, %v4458
    %v4465 = vpack.c.bf16 %v4461, %v4460
    %v4467 = vsel %vm2949, %v4462, 0
    %v4470 = vsel %vm2949, %v4463, 0
    %4472 = vmatprep.subr.bf16.mxu0 0
    %4473 = vmatpush1.bf16.msra.mxu0 %v2789
    %4474 = vmatprep.subr.bf16.mxu0 0
    %4475 = vmatpush1.bf16.msra.mxu0 %v2792
    %4476 = vmatprep.subr.bf16.mxu0 0
    %4477 = vmatpush1.bf16.msra.mxu0 0
    %4478 = vmatprep.subr.bf16.mxu0 0
    %4479 = vmatpush1.bf16.msra.mxu0 0
    %4480 = vmatprep.subr.bf16.mxu0 0
    %4481 = vmatpush1.bf16.msra.mxu0 0
    %4482 = vmatprep.subr.bf16.mxu0 0
    %4483 = vmatpush1.bf16.msra.mxu0 0
    %4484 = vmatprep.subr.bf16.mxu0 0
    %4485 = vmatpush1.bf16.msra.mxu0 0
    %4486 = vmatprep.subr.bf16.mxu0 0
    %4487 = vmatpush1.bf16.msra.mxu0 0
    %4488 = vmatprep.subr.bf16.mxu0 0
    %4489 = vmatpush1.bf16.msra.mxu0 0
    %4490 = vmatprep.subr.bf16.mxu0 0
    %4491 = vmatpush1.bf16.msra.mxu0 0
    %4492 = vmatprep.subr.bf16.mxu0 0
    %4493 = vmatpush1.bf16.msra.mxu0 0
    %4494 = vmatprep.subr.bf16.mxu0 0
    %4495 = vmatpush1.bf16.msra.mxu0 0
    %4496 = vmatprep.subr.bf16.mxu0 0
    %4497 = vmatpush1.bf16.msra.mxu0 0
    %4498 = vmatprep.subr.bf16.mxu0 0
    %4499 = vmatpush1.bf16.msra.mxu0 0
    %4500 = vmatprep.subr.bf16.mxu0 0
    %4501 = vmatpush1.bf16.msra.mxu0 0
    %4502 = vmatprep.subr.bf16.mxu0 0
    %4503 = vmatpush1.bf16.msra.mxu0 0
    %4504 = vmatprep.mubr.bf16.mxu0 0
    %4505 = vmatmul.mubr.bf16.gmra.mrb[0].mxu0 %v4467
    %v4506 = vpop.f32.mrb[0].mxu0
    %v4507 = vadd.f32 0.0, %v4506
    %v4508 = vpop.f32.mrb[0].mxu0
    %v4509 = vpop.f32.mrb[0].mxu0
    %v4510 = vadd.f32 0.0, %v4509
    %v4511 = vpop.f32.mrb[0].mxu0
    %4512 = vmatprep.mubr.bf16.mxu0 0
    %4513 = vmatmul.mubr.bf16.gmra.mrb[0].mxu0 %v4470
    %v4514 = vpop.f32.mrb[0].mxu0
    %v4515 = vadd.f32 0.0, %v4514
    %v4516 = vpop.f32.mrb[0].mxu0
    %v4517 = vpop.f32.mrb[0].mxu0
    %v4518 = vadd.f32 0.0, %v4517
    %v4519 = vpop.f32.mrb[0].mxu0
    %4520 = vdwg.mxu0
    %v4522 = vsel %vm2949, %v4464, 0
    %v4525 = vsel %vm2949, %v4465, 0
    %4527 = vmatprep.subr.bf16.mxu0 0
    %4528 = vmatpush1.bf16.msra.mxu0 %v2795
    %4529 = vmatprep.subr.bf16.mxu0 0
    %4530 = vmatpush1.bf16.msra.mxu0 %v2798
    %4531 = vmatprep.subr.bf16.mxu0 0
    %4532 = vmatpush1.bf16.msra.mxu0 0
    %4533 = vmatprep.subr.bf16.mxu0 0
    %4534 = vmatpush1.bf16.msra.mxu0 0
    %4535 = vmatprep.subr.bf16.mxu0 0
    %4536 = vmatpush1.bf16.msra.mxu0 0
    %4537 = vmatprep.subr.bf16.mxu0 0
    %4538 = vmatpush1.bf16.msra.mxu0 0
    %4539 = vmatprep.subr.bf16.mxu0 0
    %4540 = vmatpush1.bf16.msra.mxu0 0
    %4541 = vmatprep.subr.bf16.mxu0 0
    %4542 = vmatpush1.bf16.msra.mxu0 0
    %4543 = vmatprep.subr.bf16.mxu0 0
    %4544 = vmatpush1.bf16.msra.mxu0 0
    %4545 = vmatprep.subr.bf16.mxu0 0
    %4546 = vmatpush1.bf16.msra.mxu0 0
    %4547 = vmatprep.subr.bf16.mxu0 0
    %4548 = vmatpush1.bf16.msra.mxu0 0
    %4549 = vmatprep.subr.bf16.mxu0 0
    %4550 = vmatpush1.bf16.msra.mxu0 0
    %4551 = vmatprep.subr.bf16.mxu0 0
    %4552 = vmatpush1.bf16.msra.mxu0 0
    %4553 = vmatprep.subr.bf16.mxu0 0
    %4554 = vmatpush1.bf16.msra.mxu0 0
    %4555 = vmatprep.subr.bf16.mxu0 0
    %4556 = vmatpush1.bf16.msra.mxu0 0
    %4557 = vmatprep.subr.bf16.mxu0 0
    %4558 = vmatpush1.bf16.msra.mxu0 0
    %4559 = vmatprep.mubr.bf16.mxu0 0
    %4560 = vmatmul.mubr.bf16.gmra.mrb[0].mxu0 %v4522
    %v4561 = vpop.f32.mrb[0].mxu0
    %v4562 = vadd.f32 0.0, %v4561
    %v4563 = vpop.f32.mrb[0].mxu0
    %v4564 = vpop.f32.mrb[0].mxu0
    %v4565 = vadd.f32 0.0, %v4564
    %v4566 = vpop.f32.mrb[0].mxu0
    %4567 = vmatprep.mubr.bf16.mxu0 0
    %4568 = vmatmul.mubr.bf16.gmra.mrb[0].mxu0 %v4525
    %v4569 = vpop.f32.mrb[0].mxu0
    %v4570 = vadd.f32 0.0, %v4569
    %v4571 = vpop.f32.mrb[0].mxu0
    %v4572 = vpop.f32.mrb[0].mxu0
    %v4573 = vadd.f32 0.0, %v4572
    %v4574 = vpop.f32.mrb[0].mxu0
    %4575 = vdwg.mxu0
    %v4576 = vpack.c.bf16 %v4510, %v4507
    %v4577 = vpack.c.bf16 %v4518, %v4515
    %v4578 = vpack.c.bf16 %v4565, %v4562
    %v4579 = vpack.c.bf16 %v4573, %v4570
    %4582 = vrot.lane.b32.xlu0 %v1253, 64
    %v4583 = vpop.permute.xlu0 %4582
    %4584 = vrot.lane.b32.xlu0 %v1256, 64
    %v4585 = vpop.permute.xlu0 %4584
    %4588 = vrot.lane.b32.xlu0 %v2021, 64
    %v4589 = vpop.permute.xlu0 %4588
    %4590 = vrot.lane.b32.xlu0 %v2024, 64
    %v4591 = vpop.permute.xlu0 %4590
    %v4593 = vsel %vm2810, %v4583, 0
    %v4596 = vsel %vm2810, %v4585, 0
    %v4599 = vsel %vm2810, %v4589, 0
    %v4602 = vsel %vm2810, %v4591, 0
    %4604 = vmatprep.subr.bf16.mxu0 0
    %4605 = vmatpush1.bf16.xpose.msra.mxu0 %v4599
    %4606 = vmatprep.subr.bf16.mxu0 0
    %4607 = vmatpush1.bf16.xpose.msra.mxu0 %v4602
    %4608 = vmatprep.subr.bf16.mxu0 0
    %4609 = vmatpush1.bf16.xpose.msra.mxu0 0
    %4610 = vmatprep.subr.bf16.mxu0 0
    %4611 = vmatpush1.bf16.xpose.msra.mxu0 0
    %4612 = vmatprep.subr.bf16.mxu0 0
    %4613 = vmatpush1.bf16.xpose.msra.mxu0 0
    %4614 = vmatprep.subr.bf16.mxu0 0
    %4615 = vmatpush1.bf16.xpose.msra.mxu0 0
    %4616 = vmatprep.subr.bf16.mxu0 0
    %4617 = vmatpush1.bf16.xpose.msra.mxu0 0
    %4618 = vmatprep.subr.bf16.mxu0 0
    %4619 = vmatpush1.bf16.xpose.msra.mxu0 0
    %4620 = vmatprep.subr.bf16.mxu0 0
    %4621 = vmatpush1.bf16.xpose.msra.mxu0 0
    %4622 = vmatprep.subr.bf16.mxu0 0
    %4623 = vmatpush1.bf16.xpose.msra.mxu0 0
    %4624 = vmatprep.subr.bf16.mxu0 0
    %4625 = vmatpush1.bf16.xpose.msra.mxu0 0
    %4626 = vmatprep.subr.bf16.mxu0 0
    %4627 = vmatpush1.bf16.xpose.msra.mxu0 0
    %4628 = vmatprep.subr.bf16.mxu0 0
    %4629 = vmatpush1.bf16.xpose.msra.mxu0 0
    %4630 = vmatprep.subr.bf16.mxu0 0
    %4631 = vmatpush1.bf16.xpose.msra.mxu0 0
    %4632 = vmatprep.subr.bf16.mxu0 0
    %4633 = vmatpush1.bf16.xpose.msra.mxu0 0
    %4634 = vmatprep.subr.bf16.mxu0 0
    %4635 = vmatpush1.bf16.xpose.msra.mxu0 0
    %4636 = vmatprep.mubr.bf16.mxu0 0
    %4637 = vmatmul.mubr.bf16.gmra.mrb[0].mxu0 %v4593
    %v4638 = vpop.f32.mrb[0].mxu0
    %v4639 = vadd.f32 0.0, %v4638
    %v4640 = vpop.f32.mrb[0].mxu0
    %v4641 = vpop.f32.mrb[0].mxu0
    %v4642 = vadd.f32 0.0, %v4641
    %v4643 = vpop.f32.mrb[0].mxu0
    %4644 = vmatprep.mubr.bf16.mxu0 0
    %4645 = vmatmul.mubr.bf16.gmra.mrb[0].mxu0 %v4596
    %v4646 = vpop.f32.mrb[0].mxu0
    %v4647 = vadd.f32 0.0, %v4646
    %v4648 = vpop.f32.mrb[0].mxu0
    %v4649 = vpop.f32.mrb[0].mxu0
    %v4650 = vadd.f32 0.0, %v4649
    %v4651 = vpop.f32.mrb[0].mxu0
    %4652 = vdwg.mxu0
    %4655 = vrot.lane.b32.xlu0 %v1259, 64
    %v4656 = vpop.permute.xlu0 %4655
    %4657 = vrot.lane.b32.xlu0 %v1262, 64
    %v4658 = vpop.permute.xlu0 %4657
    %4661 = vrot.lane.b32.xlu0 %v2027, 64
    %v4662 = vpop.permute.xlu0 %4661
    %4663 = vrot.lane.b32.xlu0 %v2030, 64
    %v4664 = vpop.permute.xlu0 %4663
    %v4666 = vsel %vm2810, %v4656, 0
    %v4669 = vsel %vm2810, %v4658, 0
    %v4672 = vsel %vm2810, %v4662, 0
    %v4675 = vsel %vm2810, %v4664, 0
    %4677 = vmatprep.subr.bf16.mxu0 0
    %4678 = vmatpush1.bf16.xpose.msra.mxu0 %v4672
    %4679 = vmatprep.subr.bf16.mxu0 0
    %4680 = vmatpush1.bf16.xpose.msra.mxu0 %v4675
    %4681 = vmatprep.subr.bf16.mxu0 0
    %4682 = vmatpush1.bf16.xpose.msra.mxu0 0
    %4683 = vmatprep.subr.bf16.mxu0 0
    %4684 = vmatpush1.bf16.xpose.msra.mxu0 0
    %4685 = vmatprep.subr.bf16.mxu0 0
    %4686 = vmatpush1.bf16.xpose.msra.mxu0 0
    %4687 = vmatprep.subr.bf16.mxu0 0
    %4688 = vmatpush1.bf16.xpose.msra.mxu0 0
    %4689 = vmatprep.subr.bf16.mxu0 0
    %4690 = vmatpush1.bf16.xpose.msra.mxu0 0
    %4691 = vmatprep.subr.bf16.mxu0 0
    %4692 = vmatpush1.bf16.xpose.msra.mxu0 0
    %4693 = vmatprep.subr.bf16.mxu0 0
    %4694 = vmatpush1.bf16.xpose.msra.mxu0 0
    %4695 = vmatprep.subr.bf16.mxu0 0
    %4696 = vmatpush1.bf16.xpose.msra.mxu0 0
    %4697 = vmatprep.subr.bf16.mxu0 0
    %4698 = vmatpush1.bf16.xpose.msra.mxu0 0
    %4699 = vmatprep.subr.bf16.mxu0 0
    %4700 = vmatpush1.bf16.xpose.msra.mxu0 0
    %4701 = vmatprep.subr.bf16.mxu0 0
    %4702 = vmatpush1.bf16.xpose.msra.mxu0 0
    %4703 = vmatprep.subr.bf16.mxu0 0
    %4704 = vmatpush1.bf16.xpose.msra.mxu0 0
    %4705 = vmatprep.subr.bf16.mxu0 0
    %4706 = vmatpush1.bf16.xpose.msra.mxu0 0
    %4707 = vmatprep.subr.bf16.mxu0 0
    %4708 = vmatpush1.bf16.xpose.msra.mxu0 0
    %4709 = vmatprep.mubr.bf16.mxu0 0
    %4710 = vmatmul.mubr.bf16.gmra.mrb[0].mxu0 %v4666
    %v4711 = vpop.f32.mrb[0].mxu0
    %v4712 = vadd.f32 0.0, %v4711
    %v4713 = vpop.f32.mrb[0].mxu0
    %v4714 = vpop.f32.mrb[0].mxu0
    %v4715 = vadd.f32 0.0, %v4714
    %v4716 = vpop.f32.mrb[0].mxu0
    %4717 = vmatprep.mubr.bf16.mxu0 0
    %4718 = vmatmul.mubr.bf16.gmra.mrb[0].mxu0 %v4669
    %v4719 = vpop.f32.mrb[0].mxu0
    %v4720 = vadd.f32 0.0, %v4719
    %v4721 = vpop.f32.mrb[0].mxu0
    %v4722 = vpop.f32.mrb[0].mxu0
    %v4723 = vadd.f32 0.0, %v4722
    %v4724 = vpop.f32.mrb[0].mxu0
    %4725 = vdwg.mxu0
    %v4726 = vsel %vm2937, %v4639, -1e+09
    %v4727 = vsel %vm2938, %v4642, -1e+09
    %v4728 = vsel %vm2939, %v4647, -1e+09
    %v4729 = vsel %vm2940, %v4650, -1e+09
    %v4730 = vsel %vm2937, %v4712, -1e+09
    %v4731 = vsel %vm2938, %v4715, -1e+09
    %v4732 = vsel %vm2939, %v4720, -1e+09
    %v4733 = vsel %vm2940, %v4723, -1e+09
    %v4734 = vsel %vm2949, %v4726, -inf
    %4735 = vmax.xlane.f32.xlu0 %v4734
    %v4736 = vpop.xlane.xlu0 %4735
    %v4737 = vsel %vm2949, %v4727, -inf
    %4738 = vmax.xlane.f32.xlu0 %v4737
    %v4739 = vpop.xlane.xlu0 %4738
    %v4740 = vsel %vm2949, %v4728, -inf
    %4741 = vmax.xlane.f32.xlu0 %v4740
    %v4742 = vpop.xlane.xlu0 %4741
    %v4743 = vsel %vm2949, %v4729, -inf
    %4744 = vmax.xlane.f32.xlu0 %v4743
    %v4745 = vpop.xlane.xlu0 %4744
    %v4746 = vsel %vm2949, %v4730, -inf
    %4747 = vmax.xlane.f32.xlu0 %v4746
    %v4748 = vpop.xlane.xlu0 %4747
    %v4749 = vsel %vm2949, %v4731, -inf
    %4750 = vmax.xlane.f32.xlu0 %v4749
    %v4751 = vpop.xlane.xlu0 %4750
    %v4752 = vsel %vm2949, %v4732, -inf
    %4753 = vmax.xlane.f32.xlu0 %v4752
    %v4754 = vpop.xlane.xlu0 %4753
    %v4755 = vsel %vm2949, %v4733, -inf
    %4756 = vmax.xlane.f32.xlu0 %v4755
    %v4757 = vpop.xlane.xlu0 %4756
    %v4758 = vsub.f32 %v4726, %v4736
    %v4759 = vsub.f32 %v4727, %v4739
    %v4760 = vsub.f32 %v4728, %v4742
    %v4761 = vsub.f32 %v4729, %v4745
    %v4762 = vsub.f32 %v4730, %v4748
    %v4763 = vsub.f32 %v4731, %v4751
    %v4764 = vsub.f32 %v4732, %v4754
    %v4765 = vsub.f32 %v4733, %v4757
    %v4766 = vmul.f32 %v4758, 1.442695
    %v4767 = vpow.pop %v4766
    %v4768 = vmul.f32 %v4759, 1.442695
    %v4769 = vpow.pop %v4768
    %v4770 = vmul.f32 %v4760, 1.442695
    %v4771 = vpow.pop %v4770
    %v4772 = vmul.f32 %v4761, 1.442695
    %v4773 = vpow.pop %v4772
    %v4774 = vmul.f32 %v4762, 1.442695
    %v4775 = vpow.pop %v4774
    %v4776 = vmul.f32 %v4763, 1.442695
    %v4777 = vpow.pop %v4776
    %v4778 = vmul.f32 %v4764, 1.442695
    %v4779 = vpow.pop %v4778
    %v4780 = vmul.f32 %v4765, 1.442695
    %v4781 = vpow.pop %v4780
    %v4782 = vsel %vm2949, %v4767, 0.0
    %4783 = vadd.xlane.f32.xlu0 %v4782
    %v4784 = vpop.xlane.xlu0 %4783
    %v4785 = vsel %vm2949, %v4769, 0.0
    %4786 = vadd.xlane.f32.xlu0 %v4785
    %v4787 = vpop.xlane.xlu0 %4786
    %v4788 = vsel %vm2949, %v4771, 0.0
    %4789 = vadd.xlane.f32.xlu0 %v4788
    %v4790 = vpop.xlane.xlu0 %4789
    %v4791 = vsel %vm2949, %v4773, 0.0
    %4792 = vadd.xlane.f32.xlu0 %v4791
    %v4793 = vpop.xlane.xlu0 %4792
    %v4794 = vsel %vm2949, %v4775, 0.0
    %4795 = vadd.xlane.f32.xlu0 %v4794
    %v4796 = vpop.xlane.xlu0 %4795
    %v4797 = vsel %vm2949, %v4777, 0.0
    %4798 = vadd.xlane.f32.xlu0 %v4797
    %v4799 = vpop.xlane.xlu0 %4798
    %v4800 = vsel %vm2949, %v4779, 0.0
    %4801 = vadd.xlane.f32.xlu0 %v4800
    %v4802 = vpop.xlane.xlu0 %4801
    %v4803 = vsel %vm2949, %v4781, 0.0
    %4804 = vadd.xlane.f32.xlu0 %v4803
    %v4805 = vpop.xlane.xlu0 %4804
    %v4806 = vrcp.pop %v4784
    %v4807 = vrcp.pop %v4787
    %v4808 = vrcp.pop %v4790
    %v4809 = vrcp.pop %v4793
    %v4810 = vrcp.pop %v4796
    %v4811 = vrcp.pop %v4799
    %v4812 = vrcp.pop %v4802
    %v4813 = vrcp.pop %v4805
    %v4814 = vmul.f32 %v4767, %v4806
    %v4815 = vmul.f32 %v4769, %v4807
    %v4816 = vmul.f32 %v4771, %v4808
    %v4817 = vmul.f32 %v4773, %v4809
    %v4818 = vmul.f32 %v4775, %v4810
    %v4819 = vmul.f32 %v4777, %v4811
    %v4820 = vmul.f32 %v4779, %v4812
    %v4821 = vmul.f32 %v4781, %v4813
    %v4822 = vpack.c.bf16 %v4815, %v4814
    %v4823 = vpack.c.bf16 %v4817, %v4816
    %v4824 = vpack.c.bf16 %v4819, %v4818
    %v4825 = vpack.c.bf16 %v4821, %v4820
    %4828 = vrot.lane.b32.xlu0 %v2789, 64
    %v4829 = vpop.permute.xlu0 %4828
    %4830 = vrot.lane.b32.xlu0 %v2792, 64
    %v4831 = vpop.permute.xlu0 %4830
    %v4835 = vsel %vm2949, %v4822, 0
    %v4838 = vsel %vm2949, %v4823, 0
    %4840 = vmatprep.subr.bf16.mxu0 0
    %4841 = vmatpush1.bf16.msra.mxu0 %v4829
    %4842 = vmatprep.subr.bf16.mxu0 0
    %4843 = vmatpush1.bf16.msra.mxu0 %v4831
    %4844 = vmatprep.subr.bf16.mxu0 0
    %4845 = vmatpush1.bf16.msra.mxu0 0
    %4846 = vmatprep.subr.bf16.mxu0 0
    %4847 = vmatpush1.bf16.msra.mxu0 0
    %4848 = vmatprep.subr.bf16.mxu0 0
    %4849 = vmatpush1.bf16.msra.mxu0 0
    %4850 = vmatprep.subr.bf16.mxu0 0
    %4851 = vmatpush1.bf16.msra.mxu0 0
    %4852 = vmatprep.subr.bf16.mxu0 0
    %4853 = vmatpush1.bf16.msra.mxu0 0
    %4854 = vmatprep.subr.bf16.mxu0 0
    %4855 = vmatpush1.bf16.msra.mxu0 0
    %4856 = vmatprep.subr.bf16.mxu0 0
    %4857 = vmatpush1.bf16.msra.mxu0 0
    %4858 = vmatprep.subr.bf16.mxu0 0
    %4859 = vmatpush1.bf16.msra.mxu0 0
    %4860 = vmatprep.subr.bf16.mxu0 0
    %4861 = vmatpush1.bf16.msra.mxu0 0
    %4862 = vmatprep.subr.bf16.mxu0 0
    %4863 = vmatpush1.bf16.msra.mxu0 0
    %4864 = vmatprep.subr.bf16.mxu0 0
    %4865 = vmatpush1.bf16.msra.mxu0 0
    %4866 = vmatprep.subr.bf16.mxu0 0
    %4867 = vmatpush1.bf16.msra.mxu0 0
    %4868 = vmatprep.subr.bf16.mxu0 0
    %4869 = vmatpush1.bf16.msra.mxu0 0
    %4870 = vmatprep.subr.bf16.mxu0 0
    %4871 = vmatpush1.bf16.msra.mxu0 0
    %4872 = vmatprep.mubr.bf16.mxu0 0
    %4873 = vmatmul.mubr.bf16.gmra.mrb[0].mxu0 %v4835
    %v4874 = vpop.f32.mrb[0].mxu0
    %v4875 = vadd.f32 0.0, %v4874
    %v4876 = vpop.f32.mrb[0].mxu0
    %v4877 = vpop.f32.mrb[0].mxu0
    %v4878 = vadd.f32 0.0, %v4877
    %v4879 = vpop.f32.mrb[0].mxu0
    %4880 = vmatprep.mubr.bf16.mxu0 0
    %4881 = vmatmul.mubr.bf16.gmra.mrb[0].mxu0 %v4838
    %v4882 = vpop.f32.mrb[0].mxu0
    %v4883 = vadd.f32 0.0, %v4882
    %v4884 = vpop.f32.mrb[0].mxu0
    %v4885 = vpop.f32.mrb[0].mxu0
    %v4886 = vadd.f32 0.0, %v4885
    %v4887 = vpop.f32.mrb[0].mxu0
    %4888 = vdwg.mxu0
    %4891 = vrot.lane.b32.xlu0 %v2795, 64
    %v4892 = vpop.permute.xlu0 %4891
    %4893 = vrot.lane.b32.xlu0 %v2798, 64
    %v4894 = vpop.permute.xlu0 %4893
    %v4898 = vsel %vm2949, %v4824, 0
    %v4901 = vsel %vm2949, %v4825, 0
    %4903 = vmatprep.subr.bf16.mxu0 0
    %4904 = vmatpush1.bf16.msra.mxu0 %v4892
    %4905 = vmatprep.subr.bf16.mxu0 0
    %4906 = vmatpush1.bf16.msra.mxu0 %v4894
    %4907 = vmatprep.subr.bf16.mxu0 0
    %4908 = vmatpush1.bf16.msra.mxu0 0
    %4909 = vmatprep.subr.bf16.mxu0 0
    %4910 = vmatpush1.bf16.msra.mxu0 0
    %4911 = vmatprep.subr.bf16.mxu0 0
    %4912 = vmatpush1.bf16.msra.mxu0 0
    %4913 = vmatprep.subr.bf16.mxu0 0
    %4914 = vmatpush1.bf16.msra.mxu0 0
    %4915 = vmatprep.subr.bf16.mxu0 0
    %4916 = vmatpush1.bf16.msra.mxu0 0
    %4917 = vmatprep.subr.bf16.mxu0 0
    %4918 = vmatpush1.bf16.msra.mxu0 0
    %4919 = vmatprep.subr.bf16.mxu0 0
    %4920 = vmatpush1.bf16.msra.mxu0 0
    %4921 = vmatprep.subr.bf16.mxu0 0
    %4922 = vmatpush1.bf16.msra.mxu0 0
    %4923 = vmatprep.subr.bf16.mxu0 0
    %4924 = vmatpush1.bf16.msra.mxu0 0
    %4925 = vmatprep.subr.bf16.mxu0 0
    %4926 = vmatpush1.bf16.msra.mxu0 0
    %4927 = vmatprep.subr.bf16.mxu0 0
    %4928 = vmatpush1.bf16.msra.mxu0 0
    %4929 = vmatprep.subr.bf16.mxu0 0
    %4930 = vmatpush1.bf16.msra.mxu0 0
    %4931 = vmatprep.subr.bf16.mxu0 0
    %4932 = vmatpush1.bf16.msra.mxu0 0
    %4933 = vmatprep.subr.bf16.mxu0 0
    %4934 = vmatpush1.bf16.msra.mxu0 0
    %4935 = vmatprep.mubr.bf16.mxu0 0
    %4936 = vmatmul.mubr.bf16.gmra.mrb[0].mxu0 %v4898
    %v4937 = vpop.f32.mrb[0].mxu0
    %v4938 = vadd.f32 0.0, %v4937
    %v4939 = vpop.f32.mrb[0].mxu0
    %v4940 = vpop.f32.mrb[0].mxu0
    %v4941 = vadd.f32 0.0, %v4940
    %v4942 = vpop.f32.mrb[0].mxu0
    %4943 = vmatprep.mubr.bf16.mxu0 0
    %4944 = vmatmul.mubr.bf16.gmra.mrb[0].mxu0 %v4901
    %v4945 = vpop.f32.mrb[0].mxu0
    %v4946 = vadd.f32 0.0, %v4945
    %v4947 = vpop.f32.mrb[0].mxu0
    %v4948 = vpop.f32.mrb[0].mxu0
    %v4949 = vadd.f32 0.0, %v4948
    %v4950 = vpop.f32.mrb[0].mxu0
    %4951 = vdwg.mxu0
    %v4952 = vpack.c.bf16 %v4878, %v4875
    %v4953 = vpack.c.bf16 %v4886, %v4883
    %v4954 = vpack.c.bf16 %v4941, %v4938
    %v4955 = vpack.c.bf16 %v4949, %v4946
    %4960 = vrot.lane.b32.xlu0 %v3528, 64
    %v4961 = vpop.permute.xlu0 %4960
    %4962 = vrot.lane.b32.xlu0 %v3529, 64
    %v4963 = vpop.permute.xlu0 %4962
    %4964 = vrot.lane.b32.xlu0 %v3530, 64
    %v4965 = vpop.permute.xlu0 %4964
    %4966 = vrot.lane.b32.xlu0 %v3531, 64
    %v4967 = vpop.permute.xlu0 %4966
    %4972 = vrot.lane.b32.xlu0 %v4240, 64
    %v4973 = vpop.permute.xlu0 %4972
    %4974 = vrot.lane.b32.xlu0 %v4241, 64
    %v4975 = vpop.permute.xlu0 %4974
    %4976 = vrot.lane.b32.xlu0 %v4242, 64
    %v4977 = vpop.permute.xlu0 %4976
    %4978 = vrot.lane.b32.xlu0 %v4243, 64
    %v4979 = vpop.permute.xlu0 %4978
    %4984 = vrot.lane.b32.xlu0 %v4952, 64
    %v4985 = vpop.permute.xlu0 %4984
    %4986 = vrot.lane.b32.xlu0 %v4953, 64
    %v4987 = vpop.permute.xlu0 %4986
    %4988 = vrot.lane.b32.xlu0 %v4954, 64
    %v4989 = vpop.permute.xlu0 %4988
    %4990 = vrot.lane.b32.xlu0 %v4955, 64
    %v4991 = vpop.permute.xlu0 %4990
    %v4994 = vsel %vm2810, %v3152, %v4961
    %v4998 = vsel %vm2810, %v3153, %v4963
    %v5002 = vsel %vm2810, %v3154, %v4965
    %v5006 = vsel %vm2810, %v3155, %v4967
    %v5010 = vsel %vm2810, %v3864, %v4973
    %v5014 = vsel %vm2810, %v3865, %v4975
    %v5018 = vsel %vm2810, %v3866, %v4977
    %v5022 = vsel %vm2810, %v3867, %v4979
    %v5026 = vsel %vm2810, %v4576, %v4985
    %v5030 = vsel %vm2810, %v4577, %v4987
    %v5034 = vsel %vm2810, %v4578, %v4989
    %v5038 = vsel %vm2810, %v4579, %v4991
    %v5040 = vld [vmem:[#allocation13] sm:$0xff]
    %v5041 = vld [vmem:[#allocation13 + $0x8] sm:$0xf]
    %v5042 = vld [vmem:[#allocation13 + $0xc] sm:$0xff]
    %v5043 = vld [vmem:[#allocation13 + $0x14] sm:$0xf]
    %v5044 = vld [vmem:[#allocation13 + $0x18] sm:$0xff]
    %v5045 = vld [vmem:[#allocation13 + $0x20] sm:$0xf]
    %v5046 = vld [vmem:[#allocation13 + $0x24] sm:$0xff]
    %v5047 = vld [vmem:[#allocation13 + $0x2c] sm:$0xf]
    %v5048 = vld [vmem:[#allocation13 + $0x30] sm:$0xff]
    %v5049 = vld [vmem:[#allocation13 + $0x38] sm:$0xf]
    %v5050 = vld [vmem:[#allocation13 + $0x3c] sm:$0xff]
    %v5051 = vld [vmem:[#allocation13 + $0x44] sm:$0xf]
    %v5052 = vld [vmem:[#allocation13 + $0x48] sm:$0xff]
    %v5053 = vld [vmem:[#allocation13 + $0x50] sm:$0xf]
    %v5054 = vld [vmem:[#allocation13 + $0x54] sm:$0xff]
    %v5055 = vld [vmem:[#allocation13 + $0x5c] sm:$0xf]
    %v5056 = vld [vmem:[#allocation13 + $0x60] sm:$0xff]
    %v5057 = vld [vmem:[#allocation13 + $0x68] sm:$0xf]
    %v5058 = vld [vmem:[#allocation13 + $0x6c] sm:$0xff]
    %v5059 = vld [vmem:[#allocation13 + $0x74] sm:$0xf]
    %v5060 = vld [vmem:[#allocation13 + $0x78] sm:$0xff]
    %v5061 = vld [vmem:[#allocation13 + $0x80] sm:$0xf]
    %v5062 = vld [vmem:[#allocation13 + $0x84] sm:$0xff]
    %v5063 = vld [vmem:[#allocation13 + $0x8c] sm:$0xf]
    %v5064 = vld [vmem:[#allocation13 + $0x90] sm:$0xff]
    %v5065 = vld [vmem:[#allocation13 + $0x98] sm:$0xf]
    %v5066 = vld [vmem:[#allocation13 + $0x9c] sm:$0xff]
    %v5067 = vld [vmem:[#allocation13 + $0xa4] sm:$0xf]
    %v5068 = vld [vmem:[#allocation13 + $0xa8] sm:$0xff]
    %v5069 = vld [vmem:[#allocation13 + $0xb0] sm:$0xf]
    %v5070 = vld [vmem:[#allocation13 + $0xb4] sm:$0xff]
    %v5071 = vld [vmem:[#allocation13 + $0xbc] sm:$0xf]
    %v5072 = vld [vmem:[#allocation13 + $0xc0] sm:$0xff]
    %v5073 = vld [vmem:[#allocation13 + $0xc8] sm:$0xf]
    %v5074 = vld [vmem:[#allocation13 + $0xcc] sm:$0xff]
    %v5075 = vld [vmem:[#allocation13 + $0xd4] sm:$0xf]
    %v5076 = vld [vmem:[#allocation13 + $0xd8] sm:$0xff]
    %v5077 = vld [vmem:[#allocation13 + $0xe0] sm:$0xf]
    %v5078 = vld [vmem:[#allocation13 + $0xe4] sm:$0xff]
    %v5079 = vld [vmem:[#allocation13 + $0xec] sm:$0xf]
    %v5080 = vld [vmem:[#allocation13 + $0xf0] sm:$0xff]
    %v5081 = vld [vmem:[#allocation13 + $0xf8] sm:$0xf]
    %v5082 = vld [vmem:[#allocation13 + $0xfc] sm:$0xff]
    %v5083 = vld [vmem:[#allocation13 + $0x104] sm:$0xf]
    %v5084 = vld [vmem:[#allocation13 + $0x108] sm:$0xff]
    %v5085 = vld [vmem:[#allocation13 + $0x110] sm:$0xf]
    %v5086 = vld [vmem:[#allocation13 + $0x114] sm:$0xff]
    %v5087 = vld [vmem:[#allocation13 + $0x11c] sm:$0xf]
    %v5088 = vld [vmem:[#allocation13 + $0x120] sm:$0xff]
    %v5089 = vld [vmem:[#allocation13 + $0x128] sm:$0xf]
    %v5090 = vld [vmem:[#allocation13 + $0x12c] sm:$0xff]
    %v5091 = vld [vmem:[#allocation13 + $0x134] sm:$0xf]
    %v5092 = vld [vmem:[#allocation13 + $0x138] sm:$0xff]
    %v5093 = vld [vmem:[#allocation13 + $0x140] sm:$0xf]
    %v5094 = vld [vmem:[#allocation13 + $0x144] sm:$0xff]
    %v5095 = vld [vmem:[#allocation13 + $0x14c] sm:$0xf]
    %v5096 = vld [vmem:[#allocation13 + $0x150] sm:$0xff]
    %v5097 = vld [vmem:[#allocation13 + $0x158] sm:$0xf]
    %v5098 = vld [vmem:[#allocation13 + $0x15c] sm:$0xff]
    %v5099 = vld [vmem:[#allocation13 + $0x164] sm:$0xf]
    %v5100 = vld [vmem:[#allocation13 + $0x168] sm:$0xff]
    %v5101 = vld [vmem:[#allocation13 + $0x170] sm:$0xf]
    %v5102 = vld [vmem:[#allocation13 + $0x174] sm:$0xff]
    %v5103 = vld [vmem:[#allocation13 + $0x17c] sm:$0xf]
    %v5104 = vld [vmem:[#allocation13 + $0x180] sm:$0xff]
    %v5105 = vld [vmem:[#allocation13 + $0x188] sm:$0xf]
    %v5106 = vld [vmem:[#allocation13 + $0x18c] sm:$0xff]
    %v5107 = vld [vmem:[#allocation13 + $0x194] sm:$0xf]
    %v5108 = vld [vmem:[#allocation13 + $0x198] sm:$0xff]
    %v5109 = vld [vmem:[#allocation13 + $0x1a0] sm:$0xf]
    %v5110 = vld [vmem:[#allocation13 + $0x1a4] sm:$0xff]
    %v5111 = vld [vmem:[#allocation13 + $0x1ac] sm:$0xf]
    %v5112 = vld [vmem:[#allocation13 + $0x1b0] sm:$0xff]
    %v5113 = vld [vmem:[#allocation13 + $0x1b8] sm:$0xf]
    %v5114 = vld [vmem:[#allocation13 + $0x1bc] sm:$0xff]
    %v5115 = vld [vmem:[#allocation13 + $0x1c4] sm:$0xf]
    %v5116 = vld [vmem:[#allocation13 + $0x1c8] sm:$0xff]
    %v5117 = vld [vmem:[#allocation13 + $0x1d0] sm:$0xf]
    %v5118 = vld [vmem:[#allocation13 + $0x1d4] sm:$0xff]
    %v5119 = vld [vmem:[#allocation13 + $0x1dc] sm:$0xf]
    %v5120 = vld [vmem:[#allocation13 + $0x1e0] sm:$0xff]
    %v5121 = vld [vmem:[#allocation13 + $0x1e8] sm:$0xf]
    %v5122 = vld [vmem:[#allocation13 + $0x1ec] sm:$0xff]
    %v5123 = vld [vmem:[#allocation13 + $0x1f4] sm:$0xf]
    %v5124 = vld [vmem:[#allocation13 + $0x1f8] sm:$0xff]
    %v5125 = vld [vmem:[#allocation13 + $0x200] sm:$0xf]
    %v5126 = vld [vmem:[#allocation13 + $0x204] sm:$0xff]
    %v5127 = vld [vmem:[#allocation13 + $0x20c] sm:$0xf]
    %v5128 = vld [vmem:[#allocation13 + $0x210] sm:$0xff]
    %v5129 = vld [vmem:[#allocation13 + $0x218] sm:$0xf]
    %v5130 = vld [vmem:[#allocation13 + $0x21c] sm:$0xff]
    %v5131 = vld [vmem:[#allocation13 + $0x224] sm:$0xf]
    %v5132 = vld [vmem:[#allocation13 + $0x228] sm:$0xff]
    %v5133 = vld [vmem:[#allocation13 + $0x230] sm:$0xf]
    %v5134 = vld [vmem:[#allocation13 + $0x234] sm:$0xff]
    %v5135 = vld [vmem:[#allocation13 + $0x23c] sm:$0xf]
    %v5137 = vlaneseq
    %v5138 = vshrl.u32 %v5137, 7
    %v5139 = vsub.s32 0, %v5138
    %v5140 = vrot.slane %v209, %v5139
    %v5141 = vlaneseq
    %v5142 = vshrl.u32 %v5141, 7
    %v5143 = vsub.s32 1, %v5142
    %v5144 = vrot.slane %v209, %v5143
    %v5145 = vlaneseq
    %v5146 = vshrl.u32 %v5145, 7
    %v5147 = vsub.s32 2, %v5146
    %v5148 = vrot.slane %v209, %v5147
    %v5248 = vunpack.c.l.b16 %v5040
    %v5249 = vunpack.c.h.b16 %v5040
    %v5250 = vunpack.c.l.b16 %v5041
    %v5251 = vunpack.c.l.b16 %v5042
    %v5252 = vunpack.c.h.b16 %v5042
    %v5253 = vunpack.c.l.b16 %v5043
    %v5254 = vunpack.c.l.b16 %v5044
    %v5255 = vunpack.c.h.b16 %v5044
    %v5256 = vunpack.c.l.b16 %v5045
    %v5257 = vunpack.c.l.b16 %v5046
    %v5258 = vunpack.c.h.b16 %v5046
    %v5259 = vunpack.c.l.b16 %v5047
    %v5260 = vunpack.c.l.b16 %v5048
    %v5261 = vunpack.c.h.b16 %v5048
    %v5262 = vunpack.c.l.b16 %v5049
    %v5263 = vunpack.c.l.b16 %v5050
    %v5264 = vunpack.c.h.b16 %v5050
    %v5265 = vunpack.c.l.b16 %v5051
    %v5266 = vunpack.c.l.b16 %v5052
    %v5267 = vunpack.c.h.b16 %v5052
    %v5268 = vunpack.c.l.b16 %v5053
    %v5269 = vunpack.c.l.b16 %v5054
    %v5270 = vunpack.c.h.b16 %v5054
    %v5271 = vunpack.c.l.b16 %v5055
    %v5272 = vunpack.c.l.b16 %v5056
    %v5273 = vunpack.c.h.b16 %v5056
    %v5274 = vunpack.c.l.b16 %v5057
    %v5275 = vunpack.c.l.b16 %v5058
    %v5276 = vunpack.c.h.b16 %v5058
    %v5277 = vunpack.c.l.b16 %v5059
    %v5278 = vunpack.c.l.b16 %v5060
    %v5279 = vunpack.c.h.b16 %v5060
    %v5280 = vunpack.c.l.b16 %v5061
    %v5281 = vunpack.c.l.b16 %v5062
    %v5282 = vunpack.c.h.b16 %v5062
    %v5283 = vunpack.c.l.b16 %v5063
    %v5284 = vunpack.c.l.b16 %v5064
    %v5285 = vunpack.c.h.b16 %v5064
    %v5286 = vunpack.c.l.b16 %v5065
    %v5287 = vunpack.c.l.b16 %v5066
    %v5288 = vunpack.c.h.b16 %v5066
    %v5289 = vunpack.c.l.b16 %v5067
    %v5290 = vunpack.c.l.b16 %v5068
    %v5291 = vunpack.c.h.b16 %v5068
    %v5292 = vunpack.c.l.b16 %v5069
    %v5293 = vunpack.c.l.b16 %v5070
    %v5294 = vunpack.c.h.b16 %v5070
    %v5295 = vunpack.c.l.b16 %v5071
    %v5296 = vunpack.c.l.b16 %v5072
    %v5297 = vunpack.c.h.b16 %v5072
    %v5298 = vunpack.c.l.b16 %v5073
    %v5299 = vunpack.c.l.b16 %v5074
    %v5300 = vunpack.c.h.b16 %v5074
    %v5301 = vunpack.c.l.b16 %v5075
    %v5302 = vunpack.c.l.b16 %v5076
    %v5303 = vunpack.c.h.b16 %v5076
    %v5304 = vunpack.c.l.b16 %v5077
    %v5305 = vunpack.c.l.b16 %v5078
    %v5306 = vunpack.c.h.b16 %v5078
    %v5307 = vunpack.c.l.b16 %v5079
    %v5308 = vunpack.c.l.b16 %v5080
    %v5309 = vunpack.c.h.b16 %v5080
    %v5310 = vunpack.c.l.b16 %v5081
    %v5311 = vunpack.c.l.b16 %v5082
    %v5312 = vunpack.c.h.b16 %v5082
    %v5313 = vunpack.c.l.b16 %v5083
    %v5314 = vunpack.c.l.b16 %v5084
    %v5315 = vunpack.c.h.b16 %v5084
    %v5316 = vunpack.c.l.b16 %v5085
    %v5317 = vunpack.c.l.b16 %v5086
    %v5318 = vunpack.c.h.b16 %v5086
    %v5319 = vunpack.c.l.b16 %v5087
    %v5320 = vunpack.c.l.b16 %v5088
    %v5321 = vunpack.c.h.b16 %v5088
    %v5322 = vunpack.c.l.b16 %v5089
    %v5323 = vunpack.c.l.b16 %v5090
    %v5324 = vunpack.c.h.b16 %v5090
    %v5325 = vunpack.c.l.b16 %v5091
    %v5326 = vunpack.c.l.b16 %v5092
    %v5327 = vunpack.c.h.b16 %v5092
    %v5328 = vunpack.c.l.b16 %v5093
    %v5329 = vunpack.c.l.b16 %v5094
    %v5330 = vunpack.c.h.b16 %v5094
    %v5331 = vunpack.c.l.b16 %v5095
    %v5332 = vunpack.c.l.b16 %v5096
    %v5333 = vunpack.c.h.b16 %v5096
    %v5334 = vunpack.c.l.b16 %v5097
    %v5335 = vunpack.c.l.b16 %v5098
    %v5336 = vunpack.c.h.b16 %v5098
    %v5337 = vunpack.c.l.b16 %v5099
    %v5338 = vunpack.c.l.b16 %v5100
    %v5339 = vunpack.c.h.b16 %v5100
    %v5340 = vunpack.c.l.b16 %v5101
    %v5341 = vunpack.c.l.b16 %v5102
    %v5342 = vunpack.c.h.b16 %v5102
    %v5343 = vunpack.c.l.b16 %v5103
    %v5344 = vunpack.c.l.b16 %v5104
    %v5345 = vunpack.c.h.b16 %v5104
    %v5346 = vunpack.c.l.b16 %v5105
    %v5347 = vunpack.c.l.b16 %v5106
    %v5348 = vunpack.c.h.b16 %v5106
    %v5349 = vunpack.c.l.b16 %v5107
    %v5350 = vunpack.c.l.b16 %v5108
    %v5351 = vunpack.c.h.b16 %v5108
    %v5352 = vunpack.c.l.b16 %v5109
    %v5353 = vunpack.c.l.b16 %v5110
    %v5354 = vunpack.c.h.b16 %v5110
    %v5355 = vunpack.c.l.b16 %v5111
    %v5356 = vunpack.c.l.b16 %v5112
    %v5357 = vunpack.c.h.b16 %v5112
    %v5358 = vunpack.c.l.b16 %v5113
    %v5359 = vunpack.c.l.b16 %v5114
    %v5360 = vunpack.c.h.b16 %v5114
    %v5361 = vunpack.c.l.b16 %v5115
    %v5362 = vunpack.c.l.b16 %v5116
    %v5363 = vunpack.c.h.b16 %v5116
    %v5364 = vunpack.c.l.b16 %v5117
    %v5365 = vunpack.c.l.b16 %v5118
    %v5366 = vunpack.c.h.b16 %v5118
    %v5367 = vunpack.c.l.b16 %v5119
    %v5368 = vunpack.c.l.b16 %v5120
    %v5369 = vunpack.c.h.b16 %v5120
    %v5370 = vunpack.c.l.b16 %v5121
    %v5371 = vunpack.c.l.b16 %v5122
    %v5372 = vunpack.c.h.b16 %v5122
    %v5373 = vunpack.c.l.b16 %v5123
    %v5374 = vunpack.c.l.b16 %v5124
    %v5375 = vunpack.c.h.b16 %v5124
    %v5376 = vunpack.c.l.b16 %v5125
    %v5377 = vunpack.c.l.b16 %v5126
    %v5378 = vunpack.c.h.b16 %v5126
    %v5379 = vunpack.c.l.b16 %v5127
    %v5380 = vunpack.c.l.b16 %v5128
    %v5381 = vunpack.c.h.b16 %v5128
    %v5382 = vunpack.c.l.b16 %v5129
    %v5383 = vunpack.c.l.b16 %v5130
    %v5384 = vunpack.c.h.b16 %v5130
    %v5385 = vunpack.c.l.b16 %v5131
    %v5386 = vunpack.c.l.b16 %v5132
    %v5387 = vunpack.c.h.b16 %v5132
    %v5388 = vunpack.c.l.b16 %v5133
    %v5389 = vunpack.c.l.b16 %v5134
    %v5390 = vunpack.c.h.b16 %v5134
    %v5391 = vunpack.c.l.b16 %v5135
    %v5392 = vpack.c.b16 %v5251, %v5248
    %v5393 = vpack.c.b16 %v5252, %v5249
    %v5394 = vpack.c.b16 %v5253, %v5250
    %v5395 = vpack.c.b16 %v5257, %v5254
    %v5396 = vpack.c.b16 %v5258, %v5255
    %v5397 = vpack.c.b16 %v5259, %v5256
    %v5398 = vpack.c.b16 %v5263, %v5260
    %v5399 = vpack.c.b16 %v5264, %v5261
    %v5400 = vpack.c.b16 %v5265, %v5262
    %v5401 = vpack.c.b16 %v5269, %v5266
    %v5402 = vpack.c.b16 %v5270, %v5267
    %v5403 = vpack.c.b16 %v5271, %v5268
    %v5404 = vpack.c.b16 %v5275, %v5272
    %v5405 = vpack.c.b16 %v5276, %v5273
    %v5406 = vpack.c.b16 %v5277, %v5274
    %v5407 = vpack.c.b16 %v5281, %v5278
    %v5408 = vpack.c.b16 %v5282, %v5279
    %v5409 = vpack.c.b16 %v5283, %v5280
    %v5410 = vpack.c.b16 %v5287, %v5284
    %v5411 = vpack.c.b16 %v5288, %v5285
    %v5412 = vpack.c.b16 %v5289, %v5286
    %v5413 = vpack.c.b16 %v5293, %v5290
    %v5414 = vpack.c.b16 %v5294, %v5291
    %v5415 = vpack.c.b16 %v5295, %v5292
    %v5416 = vpack.c.b16 %v5299, %v5296
    %v5417 = vpack.c.b16 %v5300, %v5297
    %v5418 = vpack.c.b16 %v5301, %v5298
    %v5419 = vpack.c.b16 %v5305, %v5302
    %v5420 = vpack.c.b16 %v5306, %v5303
    %v5421 = vpack.c.b16 %v5307, %v5304
    %v5422 = vpack.c.b16 %v5311, %v5308
    %v5423 = vpack.c.b16 %v5312, %v5309
    %v5424 = vpack.c.b16 %v5313, %v5310
    %v5425 = vpack.c.b16 %v5317, %v5314
    %v5426 = vpack.c.b16 %v5318, %v5315
    %v5427 = vpack.c.b16 %v5319, %v5316
    %v5428 = vpack.c.b16 %v5323, %v5320
    %v5429 = vpack.c.b16 %v5324, %v5321
    %v5430 = vpack.c.b16 %v5325, %v5322
    %v5431 = vpack.c.b16 %v5329, %v5326
    %v5432 = vpack.c.b16 %v5330, %v5327
    %v5433 = vpack.c.b16 %v5331, %v5328
    %v5434 = vpack.c.b16 %v5335, %v5332
    %v5435 = vpack.c.b16 %v5336, %v5333
    %v5436 = vpack.c.b16 %v5337, %v5334
    %v5437 = vpack.c.b16 %v5341, %v5338
    %v5438 = vpack.c.b16 %v5342, %v5339
    %v5439 = vpack.c.b16 %v5343, %v5340
    %v5440 = vpack.c.b16 %v5347, %v5344
    %v5441 = vpack.c.b16 %v5348, %v5345
    %v5442 = vpack.c.b16 %v5349, %v5346
    %v5443 = vpack.c.b16 %v5353, %v5350
    %v5444 = vpack.c.b16 %v5354, %v5351
    %v5445 = vpack.c.b16 %v5355, %v5352
    %v5446 = vpack.c.b16 %v5359, %v5356
    %v5447 = vpack.c.b16 %v5360, %v5357
    %v5448 = vpack.c.b16 %v5361, %v5358
    %v5449 = vpack.c.b16 %v5365, %v5362
    %v5450 = vpack.c.b16 %v5366, %v5363
    %v5451 = vpack.c.b16 %v5367, %v5364
    %v5452 = vpack.c.b16 %v5371, %v5368
    %v5453 = vpack.c.b16 %v5372, %v5369
    %v5454 = vpack.c.b16 %v5373, %v5370
    %v5455 = vpack.c.b16 %v5377, %v5374
    %v5456 = vpack.c.b16 %v5378, %v5375
    %v5457 = vpack.c.b16 %v5379, %v5376
    %v5458 = vpack.c.b16 %v5383, %v5380
    %v5459 = vpack.c.b16 %v5384, %v5381
    %v5460 = vpack.c.b16 %v5385, %v5382
    %v5461 = vpack.c.b16 %v5389, %v5386
    %v5462 = vpack.c.b16 %v5390, %v5387
    %v5463 = vpack.c.b16 %v5391, %v5388
    %5536 = vmatprep.subr.bf16.mxu0 %v5393
    %5537 = vmatpush1.bf16.msra.mxu0 %v5392
    %5538 = vmatprep.subr.bf16.mxu0 %v5396
    %5539 = vmatpush1.bf16.msra.mxu0 %v5395
    %5540 = vmatprep.subr.bf16.mxu0 %v5399
    %5541 = vmatpush1.bf16.msra.mxu0 %v5398
    %5542 = vmatprep.subr.bf16.mxu0 %v5402
    %5543 = vmatpush1.bf16.msra.mxu0 %v5401
    %5544 = vmatprep.subr.bf16.mxu0 %v5405
    %5545 = vmatpush1.bf16.msra.mxu0 %v5404
    %5546 = vmatprep.subr.bf16.mxu0 %v5408
    %5547 = vmatpush1.bf16.msra.mxu0 %v5407
    %5548 = vmatprep.subr.bf16.mxu0 %v5411
    %5549 = vmatpush1.bf16.msra.mxu0 %v5410
    %5550 = vmatprep.subr.bf16.mxu0 %v5414
    %5551 = vmatpush1.bf16.msra.mxu0 %v5413
    %5552 = vmatprep.subr.bf16.mxu0 %v5417
    %5553 = vmatpush1.bf16.msra.mxu0 %v5416
    %5554 = vmatprep.subr.bf16.mxu0 %v5420
    %5555 = vmatpush1.bf16.msra.mxu0 %v5419
    %5556 = vmatprep.subr.bf16.mxu0 %v5423
    %5557 = vmatpush1.bf16.msra.mxu0 %v5422
    %5558 = vmatprep.subr.bf16.mxu0 %v5426
    %5559 = vmatpush1.bf16.msra.mxu0 %v5425
    %5560 = vmatprep.subr.bf16.mxu0 %v5429
    %5561 = vmatpush1.bf16.msra.mxu0 %v5428
    %5562 = vmatprep.subr.bf16.mxu0 %v5432
    %5563 = vmatpush1.bf16.msra.mxu0 %v5431
    %5564 = vmatprep.subr.bf16.mxu0 %v5435
    %5565 = vmatpush1.bf16.msra.mxu0 %v5434
    %5566 = vmatprep.subr.bf16.mxu0 %v5438
    %5567 = vmatpush1.bf16.msra.mxu0 %v5437
    %5568 = vmatprep.mubr.bf16.mxu0 %v5010
    %5569 = vmatmul.mubr.bf16.gmra.mrb[0].mxu0 %v4994
    %v5570 = vpop.f32.mrb[0].mxu0
    %v5571 = vadd.f32 %v5140, %v5570
    %v5572 = vpop.f32.mrb[0].mxu0
    %v5573 = vadd.f32 %v5144, %v5572
    %v5574 = vpop.f32.mrb[0].mxu0
    %v5575 = vadd.f32 %v5140, %v5574
    %v5576 = vpop.f32.mrb[0].mxu0
    %v5577 = vadd.f32 %v5144, %v5576
    %5578 = vmatprep.mubr.bf16.mxu0 %v5014
    %5579 = vmatmul.mubr.bf16.gmra.mrb[0].mxu0 %v4998
    %v5580 = vpop.f32.mrb[0].mxu0
    %v5581 = vadd.f32 %v5140, %v5580
    %v5582 = vpop.f32.mrb[0].mxu0
    %v5583 = vadd.f32 %v5144, %v5582
    %v5584 = vpop.f32.mrb[0].mxu0
    %v5585 = vadd.f32 %v5140, %v5584
    %v5586 = vpop.f32.mrb[0].mxu0
    %v5587 = vadd.f32 %v5144, %v5586
    %5588 = vmatprep.mubr.bf16.mxu0 %v5018
    %5589 = vmatmul.mubr.bf16.gmra.mrb[0].mxu0 %v5002
    %v5590 = vpop.f32.mrb[0].mxu0
    %v5591 = vadd.f32 %v5140, %v5590
    %v5592 = vpop.f32.mrb[0].mxu0
    %v5593 = vadd.f32 %v5144, %v5592
    %v5594 = vpop.f32.mrb[0].mxu0
    %v5595 = vadd.f32 %v5140, %v5594
    %v5596 = vpop.f32.mrb[0].mxu0
    %v5597 = vadd.f32 %v5144, %v5596
    %5598 = vmatprep.mubr.bf16.mxu0 %v5022
    %5599 = vmatmul.mubr.bf16.gmra.mrb[0].mxu0 %v5006
    %v5600 = vpop.f32.mrb[0].mxu0
    %v5601 = vadd.f32 %v5140, %v5600
    %v5602 = vpop.f32.mrb[0].mxu0
    %v5603 = vadd.f32 %v5144, %v5602
    %v5604 = vpop.f32.mrb[0].mxu0
    %v5605 = vadd.f32 %v5140, %v5604
    %v5606 = vpop.f32.mrb[0].mxu0
    %v5607 = vadd.f32 %v5144, %v5606
    %5608 = vdwg.mxu0
    %5609 = vmatprep.subr.bf16.mxu0 %v5441
    %5610 = vmatpush1.bf16.msra.mxu0 %v5440
    %5611 = vmatprep.subr.bf16.mxu0 %v5444
    %5612 = vmatpush1.bf16.msra.mxu0 %v5443
    %5613 = vmatprep.subr.bf16.mxu0 %v5447
    %5614 = vmatpush1.bf16.msra.mxu0 %v5446
    %5615 = vmatprep.subr.bf16.mxu0 %v5450
    %5616 = vmatpush1.bf16.msra.mxu0 %v5449
    %5617 = vmatprep.subr.bf16.mxu0 %v5453
    %5618 = vmatpush1.bf16.msra.mxu0 %v5452
    %5619 = vmatprep.subr.bf16.mxu0 %v5456
    %5620 = vmatpush1.bf16.msra.mxu0 %v5455
    %5621 = vmatprep.subr.bf16.mxu0 %v5459
    %5622 = vmatpush1.bf16.msra.mxu0 %v5458
    %5623 = vmatprep.subr.bf16.mxu0 %v5462
    %5624 = vmatpush1.bf16.msra.mxu0 %v5461
    %5625 = vmatprep.subr.bf16.mxu0 0
    %5626 = vmatpush1.bf16.msra.mxu0 0
    %5627 = vmatprep.subr.bf16.mxu0 0
    %5628 = vmatpush1.bf16.msra.mxu0 0
    %5629 = vmatprep.subr.bf16.mxu0 0
    %5630 = vmatpush1.bf16.msra.mxu0 0
    %5631 = vmatprep.subr.bf16.mxu0 0
    %5632 = vmatpush1.bf16.msra.mxu0 0
    %5633 = vmatprep.subr.bf16.mxu0 0
    %5634 = vmatpush1.bf16.msra.mxu0 0
    %5635 = vmatprep.subr.bf16.mxu0 0
    %5636 = vmatpush1.bf16.msra.mxu0 0
    %5637 = vmatprep.subr.bf16.mxu0 0
    %5638 = vmatpush1.bf16.msra.mxu0 0
    %5639 = vmatprep.subr.bf16.mxu0 0
    %5640 = vmatpush1.bf16.msra.mxu0 0
    %5641 = vmatprep.mubr.bf16.mxu0 0
    %5642 = vmatmul.mubr.bf16.gmra.mrb[0].mxu0 %v5026
    %v5643 = vpop.f32.mrb[0].mxu0
    %v5644 = vadd.f32 %v5571, %v5643
    %v5645 = vpop.f32.mrb[0].mxu0
    %v5646 = vadd.f32 %v5573, %v5645
    %v5647 = vpop.f32.mrb[0].mxu0
    %v5648 = vadd.f32 %v5575, %v5647
    %v5649 = vpop.f32.mrb[0].mxu0
    %v5650 = vadd.f32 %v5577, %v5649
    %5651 = vmatprep.mubr.bf16.mxu0 0
    %5652 = vmatmul.mubr.bf16.gmra.mrb[0].mxu0 %v5030
    %v5653 = vpop.f32.mrb[0].mxu0
    %v5654 = vadd.f32 %v5581, %v5653
    %v5655 = vpop.f32.mrb[0].mxu0
    %v5656 = vadd.f32 %v5583, %v5655
    %v5657 = vpop.f32.mrb[0].mxu0
    %v5658 = vadd.f32 %v5585, %v5657
    %v5659 = vpop.f32.mrb[0].mxu0
    %v5660 = vadd.f32 %v5587, %v5659
    %5661 = vmatprep.mubr.bf16.mxu0 0
    %5662 = vmatmul.mubr.bf16.gmra.mrb[0].mxu0 %v5034
    %v5663 = vpop.f32.mrb[0].mxu0
    %v5664 = vadd.f32 %v5591, %v5663
    %v5665 = vpop.f32.mrb[0].mxu0
    %v5666 = vadd.f32 %v5593, %v5665
    %v5667 = vpop.f32.mrb[0].mxu0
    %v5668 = vadd.f32 %v5595, %v5667
    %v5669 = vpop.f32.mrb[0].mxu0
    %v5670 = vadd.f32 %v5597, %v5669
    %5671 = vmatprep.mubr.bf16.mxu0 0
    %5672 = vmatmul.mubr.bf16.gmra.mrb[0].mxu0 %v5038
    %v5673 = vpop.f32.mrb[0].mxu0
    %v5674 = vadd.f32 %v5601, %v5673
    %v5675 = vpop.f32.mrb[0].mxu0
    %v5676 = vadd.f32 %v5603, %v5675
    %v5677 = vpop.f32.mrb[0].mxu0
    %v5678 = vadd.f32 %v5605, %v5677
    %v5679 = vpop.f32.mrb[0].mxu0
    %v5680 = vadd.f32 %v5607, %v5679
    %5681 = vdwg.mxu0
    %5682 = vmatprep.subr.bf16.mxu0 0
    %5683 = vmatpush1.bf16.msra.mxu0 %v5394
    %5684 = vmatprep.subr.bf16.mxu0 0
    %5685 = vmatpush1.bf16.msra.mxu0 %v5397
    %5686 = vmatprep.subr.bf16.mxu0 0
    %5687 = vmatpush1.bf16.msra.mxu0 %v5400
    %5688 = vmatprep.subr.bf16.mxu0 0
    %5689 = vmatpush1.bf16.msra.mxu0 %v5403
    %5690 = vmatprep.subr.bf16.mxu0 0
    %5691 = vmatpush1.bf16.msra.mxu0 %v5406
    %5692 = vmatprep.subr.bf16.mxu0 0
    %5693 = vmatpush1.bf16.msra.mxu0 %v5409
    %5694 = vmatprep.subr.bf16.mxu0 0
    %5695 = vmatpush1.bf16.msra.mxu0 %v5412
    %5696 = vmatprep.subr.bf16.mxu0 0
    %5697 = vmatpush1.bf16.msra.mxu0 %v5415
    %5698 = vmatprep.subr.bf16.mxu0 0
    %5699 = vmatpush1.bf16.msra.mxu0 %v5418
    %5700 = vmatprep.subr.bf16.mxu0 0
    %5701 = vmatpush1.bf16.msra.mxu0 %v5421
    %5702 = vmatprep.subr.bf16.mxu0 0
    %5703 = vmatpush1.bf16.msra.mxu0 %v5424
    %5704 = vmatprep.subr.bf16.mxu0 0
    %5705 = vmatpush1.bf16.msra.mxu0 %v5427
    %5706 = vmatprep.subr.bf16.mxu0 0
    %5707 = vmatpush1.bf16.msra.mxu0 %v5430
    %5708 = vmatprep.subr.bf16.mxu0 0
    %5709 = vmatpush1.bf16.msra.mxu0 %v5433
    %5710 = vmatprep.subr.bf16.mxu0 0
    %5711 = vmatpush1.bf16.msra.mxu0 %v5436
    %5712 = vmatprep.subr.bf16.mxu0 0
    %5713 = vmatpush1.bf16.msra.mxu0 %v5439
    %5714 = vmatprep.mubr.bf16.mxu0 %v5010
    %5715 = vmatmul.mubr.bf16.gmra.mrb[0].mxu0 %v4994
    %v5716 = vpop.f32.mrb[0].mxu0
    %v5717 = vadd.f32 %v5148, %v5716
    %v5718 = vpop.f32.mrb[0].mxu0
    %v5719 = vpop.f32.mrb[0].mxu0
    %v5720 = vadd.f32 %v5148, %v5719
    %v5721 = vpop.f32.mrb[0].mxu0
    %5722 = vmatprep.mubr.bf16.mxu0 %v5014
    %5723 = vmatmul.mubr.bf16.gmra.mrb[0].mxu0 %v4998
    %v5724 = vpop.f32.mrb[0].mxu0
    %v5725 = vadd.f32 %v5148, %v5724
    %v5726 = vpop.f32.mrb[0].mxu0
    %v5727 = vpop.f32.mrb[0].mxu0
    %v5728 = vadd.f32 %v5148, %v5727
    %v5729 = vpop.f32.mrb[0].mxu0
    %5730 = vmatprep.mubr.bf16.mxu0 %v5018
    %5731 = vmatmul.mubr.bf16.gmra.mrb[0].mxu0 %v5002
    %v5732 = vpop.f32.mrb[0].mxu0
    %v5733 = vadd.f32 %v5148, %v5732
    %v5734 = vpop.f32.mrb[0].mxu0
    %v5735 = vpop.f32.mrb[0].mxu0
    %v5736 = vadd.f32 %v5148, %v5735
    %v5737 = vpop.f32.mrb[0].mxu0
    %5738 = vmatprep.mubr.bf16.mxu0 %v5022
    %5739 = vmatmul.mubr.bf16.gmra.mrb[0].mxu0 %v5006
    %v5740 = vpop.f32.mrb[0].mxu0
    %v5741 = vadd.f32 %v5148, %v5740
    %v5742 = vpop.f32.mrb[0].mxu0
    %v5743 = vpop.f32.mrb[0].mxu0
    %v5744 = vadd.f32 %v5148, %v5743
    %v5745 = vpop.f32.mrb[0].mxu0
    %5746 = vdwg.mxu0
    %5747 = vmatprep.subr.bf16.mxu0 0
    %5748 = vmatpush1.bf16.msra.mxu0 %v5442
    %5749 = vmatprep.subr.bf16.mxu0 0
    %5750 = vmatpush1.bf16.msra.mxu0 %v5445
    %5751 = vmatprep.subr.bf16.mxu0 0
    %5752 = vmatpush1.bf16.msra.mxu0 %v5448
    %5753 = vmatprep.subr.bf16.mxu0 0
    %5754 = vmatpush1.bf16.msra.mxu0 %v5451
    %5755 = vmatprep.subr.bf16.mxu0 0
    %5756 = vmatpush1.bf16.msra.mxu0 %v5454
    %5757 = vmatprep.subr.bf16.mxu0 0
    %5758 = vmatpush1.bf16.msra.mxu0 %v5457
    %5759 = vmatprep.subr.bf16.mxu0 0
    %5760 = vmatpush1.bf16.msra.mxu0 %v5460
    %5761 = vmatprep.subr.bf16.mxu0 0
    %5762 = vmatpush1.bf16.msra.mxu0 %v5463
    %5763 = vmatprep.subr.bf16.mxu0 0
    %5764 = vmatpush1.bf16.msra.mxu0 0
    %5765 = vmatprep.subr.bf16.mxu0 0
    %5766 = vmatpush1.bf16.msra.mxu0 0
    %5767 = vmatprep.subr.bf16.mxu0 0
    %5768 = vmatpush1.bf16.msra.mxu0 0
    %5769 = vmatprep.subr.bf16.mxu0 0
    %5770 = vmatpush1.bf16.msra.mxu0 0
    %5771 = vmatprep.subr.bf16.mxu0 0
    %5772 = vmatpush1.bf16.msra.mxu0 0
    %5773 = vmatprep.subr.bf16.mxu0 0
    %5774 = vmatpush1.bf16.msra.mxu0 0
    %5775 = vmatprep.subr.bf16.mxu0 0
    %5776 = vmatpush1.bf16.msra.mxu0 0
    %5777 = vmatprep.subr.bf16.mxu0 0
    %5778 = vmatpush1.bf16.msra.mxu0 0
    %5779 = vmatprep.mubr.bf16.mxu0 0
    %5780 = vmatmul.mubr.bf16.gmra.mrb[0].mxu0 %v5026
    %v5781 = vpop.f32.mrb[0].mxu0
    %v5782 = vadd.f32 %v5717, %v5781
    %v5783 = vpop.f32.mrb[0].mxu0
    %v5784 = vpop.f32.mrb[0].mxu0
    %v5785 = vadd.f32 %v5720, %v5784
    %v5786 = vpop.f32.mrb[0].mxu0
    %5787 = vmatprep.mubr.bf16.mxu0 0
    %5788 = vmatmul.mubr.bf16.gmra.mrb[0].mxu0 %v5030
    %v5789 = vpop.f32.mrb[0].mxu0
    %v5790 = vadd.f32 %v5725, %v5789
    %v5791 = vpop.f32.mrb[0].mxu0
    %v5792 = vpop.f32.mrb[0].mxu0
    %v5793 = vadd.f32 %v5728, %v5792
    %v5794 = vpop.f32.mrb[0].mxu0
    %5795 = vmatprep.mubr.bf16.mxu0 0
    %5796 = vmatmul.mubr.bf16.gmra.mrb[0].mxu0 %v5034
    %v5797 = vpop.f32.mrb[0].mxu0
    %v5798 = vadd.f32 %v5733, %v5797
    %v5799 = vpop.f32.mrb[0].mxu0
    %v5800 = vpop.f32.mrb[0].mxu0
    %v5801 = vadd.f32 %v5736, %v5800
    %v5802 = vpop.f32.mrb[0].mxu0
    %5803 = vmatprep.mubr.bf16.mxu0 0
    %5804 = vmatmul.mubr.bf16.gmra.mrb[0].mxu0 %v5038
    %v5805 = vpop.f32.mrb[0].mxu0
    %v5806 = vadd.f32 %v5741, %v5805
    %v5807 = vpop.f32.mrb[0].mxu0
    %v5808 = vpop.f32.mrb[0].mxu0
    %v5809 = vadd.f32 %v5744, %v5808
    %v5810 = vpop.f32.mrb[0].mxu0
    %5811 = vdwg.mxu0
    %v5812 = vadd.f32 %v177, %v5644
    %v5813 = vadd.f32 %v178, %v5646
    %v5814 = vadd.f32 %v179, %v5782
    %v5815 = vadd.f32 %v180, %v5648
    %v5816 = vadd.f32 %v181, %v5650
    %v5817 = vadd.f32 %v182, %v5785
    %v5818 = vadd.f32 %v183, %v5654
    %v5819 = vadd.f32 %v184, %v5656
    %v5820 = vadd.f32 %v185, %v5790
    %v5821 = vadd.f32 %v186, %v5658
    %v5822 = vadd.f32 %v187, %v5660
    %v5823 = vadd.f32 %v188, %v5793
    %v5824 = vadd.f32 %v189, %v5664
    %v5825 = vadd.f32 %v190, %v5666
    %v5826 = vadd.f32 %v191, %v5798
    %v5827 = vadd.f32 %v192, %v5668
    %v5828 = vadd.f32 %v193, %v5670
    %v5829 = vadd.f32 %v194, %v5801
    %v5830 = vadd.f32 %v195, %v5674
    %v5831 = vadd.f32 %v196, %v5676
    %v5832 = vadd.f32 %v197, %v5806
    %v5833 = vadd.f32 %v198, %v5678
    %v5834 = vadd.f32 %v199, %v5680
    %v5835 = vadd.f32 %v200, %v5809
    %v5836 = vadd.f32 %v5812, %v5813
    %v5837 = vadd.f32 %v5836, %v5814
    %5838 = vadd.xlane.f32.xlu0 %v5837
    %v5839 = vpop.xlane.xlu0 %5838
    %v5840 = vadd.f32 %v5815, %v5816
    %v5841 = vadd.f32 %v5840, %v5817
    %5842 = vadd.xlane.f32.xlu0 %v5841
    %v5843 = vpop.xlane.xlu0 %5842
    %v5844 = vadd.f32 %v5818, %v5819
    %v5845 = vadd.f32 %v5844, %v5820
    %5846 = vadd.xlane.f32.xlu0 %v5845
    %v5847 = vpop.xlane.xlu0 %5846
    %v5848 = vadd.f32 %v5821, %v5822
    %v5849 = vadd.f32 %v5848, %v5823
    %5850 = vadd.xlane.f32.xlu0 %v5849
    %v5851 = vpop.xlane.xlu0 %5850
    %v5852 = vadd.f32 %v5824, %v5825
    %v5853 = vadd.f32 %v5852, %v5826
    %5854 = vadd.xlane.f32.xlu0 %v5853
    %v5855 = vpop.xlane.xlu0 %5854
    %v5856 = vadd.f32 %v5827, %v5828
    %v5857 = vadd.f32 %v5856, %v5829
    %5858 = vadd.xlane.f32.xlu0 %v5857
    %v5859 = vpop.xlane.xlu0 %5858
    %v5860 = vadd.f32 %v5830, %v5831
    %v5861 = vadd.f32 %v5860, %v5832
    %5862 = vadd.xlane.f32.xlu0 %v5861
    %v5863 = vpop.xlane.xlu0 %5862
    %v5864 = vadd.f32 %v5833, %v5834
    %v5865 = vadd.f32 %v5864, %v5835
    %5866 = vadd.xlane.f32.xlu0 %v5865
    %v5867 = vpop.xlane.xlu0 %5866
    %v5868 = vmul.f32 %v5839, %v250
    %v5869 = vmul.f32 %v5843, %v250
    %v5870 = vmul.f32 %v5847, %v250
    %v5871 = vmul.f32 %v5851, %v250
    %v5872 = vmul.f32 %v5855, %v250
    %v5873 = vmul.f32 %v5859, %v250
    %v5874 = vmul.f32 %v5863, %v250
    %v5875 = vmul.f32 %v5867, %v250
    %v5876 = vmul.f32 %v5812, %v5812
    %v5877 = vmul.f32 %v5813, %v5813
    %v5878 = vmul.f32 %v5814, %v5814
    %v5879 = vmul.f32 %v5815, %v5815
    %v5880 = vmul.f32 %v5816, %v5816
    %v5881 = vmul.f32 %v5817, %v5817
    %v5882 = vmul.f32 %v5818, %v5818
    %v5883 = vmul.f32 %v5819, %v5819
    %v5884 = vmul.f32 %v5820, %v5820
    %v5885 = vmul.f32 %v5821, %v5821
    %v5886 = vmul.f32 %v5822, %v5822
    %v5887 = vmul.f32 %v5823, %v5823
    %v5888 = vmul.f32 %v5824, %v5824
    %v5889 = vmul.f32 %v5825, %v5825
    %v5890 = vmul.f32 %v5826, %v5826
    %v5891 = vmul.f32 %v5827, %v5827
    %v5892 = vmul.f32 %v5828, %v5828
    %v5893 = vmul.f32 %v5829, %v5829
    %v5894 = vmul.f32 %v5830, %v5830
    %v5895 = vmul.f32 %v5831, %v5831
    %v5896 = vmul.f32 %v5832, %v5832
    %v5897 = vmul.f32 %v5833, %v5833
    %v5898 = vmul.f32 %v5834, %v5834
    %v5899 = vmul.f32 %v5835, %v5835
    %v5900 = vadd.f32 %v5876, %v5877
    %v5901 = vadd.f32 %v5900, %v5878
    %5902 = vadd.xlane.f32.xlu0 %v5901
    %v5903 = vpop.xlane.xlu0 %5902
    %v5904 = vadd.f32 %v5879, %v5880
    %v5905 = vadd.f32 %v5904, %v5881
    %5906 = vadd.xlane.f32.xlu0 %v5905
    %v5907 = vpop.xlane.xlu0 %5906
    %v5908 = vadd.f32 %v5882, %v5883
    %v5909 = vadd.f32 %v5908, %v5884
    %5910 = vadd.xlane.f32.xlu0 %v5909
    %v5911 = vpop.xlane.xlu0 %5910
    %v5912 = vadd.f32 %v5885, %v5886
    %v5913 = vadd.f32 %v5912, %v5887
    %5914 = vadd.xlane.f32.xlu0 %v5913
    %v5915 = vpop.xlane.xlu0 %5914
    %v5916 = vadd.f32 %v5888, %v5889
    %v5917 = vadd.f32 %v5916, %v5890
    %5918 = vadd.xlane.f32.xlu0 %v5917
    %v5919 = vpop.xlane.xlu0 %5918
    %v5920 = vadd.f32 %v5891, %v5892
    %v5921 = vadd.f32 %v5920, %v5893
    %5922 = vadd.xlane.f32.xlu0 %v5921
    %v5923 = vpop.xlane.xlu0 %5922
    %v5924 = vadd.f32 %v5894, %v5895
    %v5925 = vadd.f32 %v5924, %v5896
    %5926 = vadd.xlane.f32.xlu0 %v5925
    %v5927 = vpop.xlane.xlu0 %5926
    %v5928 = vadd.f32 %v5897, %v5898
    %v5929 = vadd.f32 %v5928, %v5899
    %5930 = vadd.xlane.f32.xlu0 %v5929
    %v5931 = vpop.xlane.xlu0 %5930
    %v5932 = vmul.f32 %v5903, %v250
    %v5933 = vmul.f32 %v5907, %v250
    %v5934 = vmul.f32 %v5911, %v250
    %v5935 = vmul.f32 %v5915, %v250
    %v5936 = vmul.f32 %v5919, %v250
    %v5937 = vmul.f32 %v5923, %v250
    %v5938 = vmul.f32 %v5927, %v250
    %v5939 = vmul.f32 %v5931, %v250
    %v5940 = vmul.f32 %v5868, %v5868
    %v5941 = vmul.f32 %v5869, %v5869
    %v5942 = vmul.f32 %v5870, %v5870
    %v5943 = vmul.f32 %v5871, %v5871
    %v5944 = vmul.f32 %v5872, %v5872
    %v5945 = vmul.f32 %v5873, %v5873
    %v5946 = vmul.f32 %v5874, %v5874
    %v5947 = vmul.f32 %v5875, %v5875
    %v5948 = vsub.f32 %v5932, %v5940
    %v5949 = vsub.f32 %v5933, %v5941
    %v5950 = vsub.f32 %v5934, %v5942
    %v5951 = vsub.f32 %v5935, %v5943
    %v5952 = vsub.f32 %v5936, %v5944
    %v5953 = vsub.f32 %v5937, %v5945
    %v5954 = vsub.f32 %v5938, %v5946
    %v5955 = vsub.f32 %v5939, %v5947
    %v5956 = vsub.f32 %v5812, %v5868
    %v5957 = vsub.f32 %v5813, %v5868
    %v5958 = vsub.f32 %v5814, %v5868
    %v5959 = vsub.f32 %v5815, %v5869
    %v5960 = vsub.f32 %v5816, %v5869
    %v5961 = vsub.f32 %v5817, %v5869
    %v5962 = vsub.f32 %v5818, %v5870
    %v5963 = vsub.f32 %v5819, %v5870
    %v5964 = vsub.f32 %v5820, %v5870
    %v5965 = vsub.f32 %v5821, %v5871
    %v5966 = vsub.f32 %v5822, %v5871
    %v5967 = vsub.f32 %v5823, %v5871
    %v5968 = vsub.f32 %v5824, %v5872
    %v5969 = vsub.f32 %v5825, %v5872
    %v5970 = vsub.f32 %v5826, %v5872
    %v5971 = vsub.f32 %v5827, %v5873
    %v5972 = vsub.f32 %v5828, %v5873
    %v5973 = vsub.f32 %v5829, %v5873
    %v5974 = vsub.f32 %v5830, %v5874
    %v5975 = vsub.f32 %v5831, %v5874
    %v5976 = vsub.f32 %v5832, %v5874
    %v5977 = vsub.f32 %v5833, %v5875
    %v5978 = vsub.f32 %v5834, %v5875
    %v5979 = vsub.f32 %v5835, %v5875
    %v5980 = vadd.f32 %v5948, 1e-05
    %v5981 = vadd.f32 %v5949, 1e-05
    %v5982 = vadd.f32 %v5950, 1e-05
    %v5983 = vadd.f32 %v5951, 1e-05
    %v5984 = vadd.f32 %v5952, 1e-05
    %v5985 = vadd.f32 %v5953, 1e-05
    %v5986 = vadd.f32 %v5954, 1e-05
    %v5987 = vadd.f32 %v5955, 1e-05
    %v5988 = vrsqrt.pop %v5980
    %v5989 = vrsqrt.pop %v5981
    %v5990 = vrsqrt.pop %v5982
    %v5991 = vrsqrt.pop %v5983
    %v5992 = vrsqrt.pop %v5984
    %v5993 = vrsqrt.pop %v5985
    %v5994 = vrsqrt.pop %v5986
    %v5995 = vrsqrt.pop %v5987
    %v5996 = vmul.f32 %v5956, %v5988
    %v5997 = vmul.f32 %v5957, %v5988
    %v5998 = vmul.f32 %v5958, %v5988
    %v5999 = vmul.f32 %v5959, %v5989
    %v6000 = vmul.f32 %v5960, %v5989
    %v6001 = vmul.f32 %v5961, %v5989
    %v6002 = vmul.f32 %v5962, %v5990
    %v6003 = vmul.f32 %v5963, %v5990
    %v6004 = vmul.f32 %v5964, %v5990
    %v6005 = vmul.f32 %v5965, %v5991
    %v6006 = vmul.f32 %v5966, %v5991
    %v6007 = vmul.f32 %v5967, %v5991
    %v6008 = vmul.f32 %v5968, %v5992
    %v6009 = vmul.f32 %v5969, %v5992
    %v6010 = vmul.f32 %v5970, %v5992
    %v6011 = vmul.f32 %v5971, %v5993
    %v6012 = vmul.f32 %v5972, %v5993
    %v6013 = vmul.f32 %v5973, %v5993
    %v6014 = vmul.f32 %v5974, %v5994
    %v6015 = vmul.f32 %v5975, %v5994
    %v6016 = vmul.f32 %v5976, %v5994
    %v6017 = vmul.f32 %v5977, %v5995
    %v6018 = vmul.f32 %v5978, %v5995
    %v6019 = vmul.f32 %v5979, %v5995
    %v6021 = vlaneseq
    %v6022 = vshrl.u32 %v6021, 7
    %v6023 = vsub.s32 0, %v6022
    %v6024 = vrot.slane %v205, %v6023
    %v6025 = vlaneseq
    %v6026 = vshrl.u32 %v6025, 7
    %v6027 = vsub.s32 1, %v6026
    %v6028 = vrot.slane %v205, %v6027
    %v6029 = vlaneseq
    %v6030 = vshrl.u32 %v6029, 7
    %v6031 = vsub.s32 2, %v6030
    %v6032 = vrot.slane %v205, %v6031
    %v6036 = vmul.f32 %v5996, %v6024
    %v6037 = vmul.f32 %v5997, %v6028
    %v6038 = vmul.f32 %v5998, %v6032
    %v6039 = vmul.f32 %v5999, %v6024
    %v6040 = vmul.f32 %v6000, %v6028
    %v6041 = vmul.f32 %v6001, %v6032
    %v6042 = vmul.f32 %v6002, %v6024
    %v6043 = vmul.f32 %v6003, %v6028
    %v6044 = vmul.f32 %v6004, %v6032
    %v6045 = vmul.f32 %v6005, %v6024
    %v6046 = vmul.f32 %v6006, %v6028
    %v6047 = vmul.f32 %v6007, %v6032
    %v6048 = vmul.f32 %v6008, %v6024
    %v6049 = vmul.f32 %v6009, %v6028
    %v6050 = vmul.f32 %v6010, %v6032
    %v6051 = vmul.f32 %v6011, %v6024
    %v6052 = vmul.f32 %v6012, %v6028
    %v6053 = vmul.f32 %v6013, %v6032
    %v6054 = vmul.f32 %v6014, %v6024
    %v6055 = vmul.f32 %v6015, %v6028
    %v6056 = vmul.f32 %v6016, %v6032
    %v6057 = vmul.f32 %v6017, %v6024
    %v6058 = vmul.f32 %v6018, %v6028
    %v6059 = vmul.f32 %v6019, %v6032
    %v6061 = vlaneseq
    %v6062 = vshrl.u32 %v6061, 7
    %v6063 = vsub.s32 0, %v6062
    %v6064 = vrot.slane %v207, %v6063
    %v6065 = vlaneseq
    %v6066 = vshrl.u32 %v6065, 7
    %v6067 = vsub.s32 1, %v6066
    %v6068 = vrot.slane %v207, %v6067
    %v6069 = vlaneseq
    %v6070 = vshrl.u32 %v6069, 7
    %v6071 = vsub.s32 2, %v6070
    %v6072 = vrot.slane %v207, %v6071
    %v6076 = vadd.f32 %v6036, %v6064
    %v6077 = vadd.f32 %v6037, %v6068
    %v6078 = vadd.f32 %v6038, %v6072
    %v6079 = vadd.f32 %v6039, %v6064
    %v6080 = vadd.f32 %v6040, %v6068
    %v6081 = vadd.f32 %v6041, %v6072
    %v6082 = vadd.f32 %v6042, %v6064
    %v6083 = vadd.f32 %v6043, %v6068
    %v6084 = vadd.f32 %v6044, %v6072
    %v6085 = vadd.f32 %v6045, %v6064
    %v6086 = vadd.f32 %v6046, %v6068
    %v6087 = vadd.f32 %v6047, %v6072
    %v6088 = vadd.f32 %v6048, %v6064
    %v6089 = vadd.f32 %v6049, %v6068
    %v6090 = vadd.f32 %v6050, %v6072
    %v6091 = vadd.f32 %v6051, %v6064
    %v6092 = vadd.f32 %v6052, %v6068
    %v6093 = vadd.f32 %v6053, %v6072
    %v6094 = vadd.f32 %v6054, %v6064
    %v6095 = vadd.f32 %v6055, %v6068
    %v6096 = vadd.f32 %v6056, %v6072
    %v6097 = vadd.f32 %v6057, %v6064
    %v6098 = vadd.f32 %v6058, %v6068
    %v6099 = vadd.f32 %v6059, %v6072
    %v6100 = vpack.c.bf16 %v6079, %v6076
    %v6101 = vpack.c.bf16 %v6080, %v6077
    %v6102 = vpack.c.bf16 %v6081, %v6078
    %v6103 = vpack.c.bf16 %v6085, %v6082
    %v6104 = vpack.c.bf16 %v6086, %v6083
    %v6105 = vpack.c.bf16 %v6087, %v6084
    %v6106 = vpack.c.bf16 %v6091, %v6088
    %v6107 = vpack.c.bf16 %v6092, %v6089
    %v6108 = vpack.c.bf16 %v6093, %v6090
    %v6109 = vpack.c.bf16 %v6097, %v6094
    %v6110 = vpack.c.bf16 %v6098, %v6095
    %v6111 = vpack.c.bf16 %v6099, %v6096
    %s6112 = smul.u32 4, 48
    %s6113 = smul.u32 %s6112, 12
    %s6114 = sshll.u32 %s6113, 4
    %6115 = dma.done [#allocation4], %s6114
    %v6116 = vld [vmem:[#allocation2] sm:$0xff]
    %v6117 = vld [vmem:[#allocation2 + $0x8] sm:$0xff]
    %v6118 = vld [vmem:[#allocation2 + $0x10] sm:$0xff]
    %v6119 = vld [vmem:[#allocation2 + $0x18] sm:$0xff]
    %v6120 = vld [vmem:[#allocation2 + $0x20] sm:$0xff]
    %v6121 = vld [vmem:[#allocation2 + $0x28] sm:$0xff]
    %v6122 = vld [vmem:[#allocation2 + $0x30] sm:$0xff]
    %v6123 = vld [vmem:[#allocation2 + $0x38] sm:$0xff]
    %v6124 = vld [vmem:[#allocation2 + $0x40] sm:$0xff]
    %v6125 = vld [vmem:[#allocation2 + $0x48] sm:$0xff]
    %v6126 = vld [vmem:[#allocation2 + $0x50] sm:$0xff]
    %v6127 = vld [vmem:[#allocation2 + $0x58] sm:$0xff]
    %v6128 = vld [vmem:[#allocation2 + $0x60] sm:$0xff]
    %v6129 = vld [vmem:[#allocation2 + $0x68] sm:$0xff]
    %v6130 = vld [vmem:[#allocation2 + $0x70] sm:$0xff]
    %v6131 = vld [vmem:[#allocation2 + $0x78] sm:$0xff]
    %v6132 = vld [vmem:[#allocation2 + $0x80] sm:$0xff]
    %v6133 = vld [vmem:[#allocation2 + $0x88] sm:$0xff]
    %v6134 = vld [vmem:[#allocation2 + $0x90] sm:$0xff]
    %v6135 = vld [vmem:[#allocation2 + $0x98] sm:$0xff]
    %v6136 = vld [vmem:[#allocation2 + $0xa0] sm:$0xff]
    %v6137 = vld [vmem:[#allocation2 + $0xa8] sm:$0xff]
    %v6138 = vld [vmem:[#allocation2 + $0xb0] sm:$0xff]
    %v6139 = vld [vmem:[#allocation2 + $0xb8] sm:$0xff]
    %v6140 = vld [vmem:[#allocation2 + $0xc0] sm:$0xff]
    %v6141 = vld [vmem:[#allocation2 + $0xc8] sm:$0xff]
    %v6142 = vld [vmem:[#allocation2 + $0xd0] sm:$0xff]
    %v6143 = vld [vmem:[#allocation2 + $0xd8] sm:$0xff]
    %v6144 = vld [vmem:[#allocation2 + $0xe0] sm:$0xff]
    %v6145 = vld [vmem:[#allocation2 + $0xe8] sm:$0xff]
    %v6146 = vld [vmem:[#allocation2 + $0xf0] sm:$0xff]
    %v6147 = vld [vmem:[#allocation2 + $0xf8] sm:$0xff]
    %v6148 = vld [vmem:[#allocation2 + $0x100] sm:$0xff]
    %v6149 = vld [vmem:[#allocation2 + $0x108] sm:$0xff]
    %v6150 = vld [vmem:[#allocation2 + $0x110] sm:$0xff]
    %v6151 = vld [vmem:[#allocation2 + $0x118] sm:$0xff]
    %v6152 = vld [vmem:[#allocation2 + $0x120] sm:$0xff]
    %v6153 = vld [vmem:[#allocation2 + $0x128] sm:$0xff]
    %v6154 = vld [vmem:[#allocation2 + $0x130] sm:$0xff]
    %v6155 = vld [vmem:[#allocation2 + $0x138] sm:$0xff]
    %v6156 = vld [vmem:[#allocation2 + $0x140] sm:$0xff]
    %v6157 = vld [vmem:[#allocation2 + $0x148] sm:$0xff]
    %v6158 = vld [vmem:[#allocation2 + $0x150] sm:$0xff]
    %v6159 = vld [vmem:[#allocation2 + $0x158] sm:$0xff]
    %v6160 = vld [vmem:[#allocation2 + $0x160] sm:$0xff]
    %v6161 = vld [vmem:[#allocation2 + $0x168] sm:$0xff]
    %v6162 = vld [vmem:[#allocation2 + $0x170] sm:$0xff]
    %v6163 = vld [vmem:[#allocation2 + $0x178] sm:$0xff]
    %v6164 = vld [vmem:[#allocation2 + $0x180] sm:$0xff]
    %v6165 = vld [vmem:[#allocation2 + $0x188] sm:$0xff]
    %v6166 = vld [vmem:[#allocation2 + $0x190] sm:$0xff]
    %v6167 = vld [vmem:[#allocation2 + $0x198] sm:$0xff]
    %v6168 = vld [vmem:[#allocation2 + $0x1a0] sm:$0xff]
    %v6169 = vld [vmem:[#allocation2 + $0x1a8] sm:$0xff]
    %v6170 = vld [vmem:[#allocation2 + $0x1b0] sm:$0xff]
    %v6171 = vld [vmem:[#allocation2 + $0x1b8] sm:$0xff]
    %v6172 = vld [vmem:[#allocation2 + $0x1c0] sm:$0xff]
    %v6173 = vld [vmem:[#allocation2 + $0x1c8] sm:$0xff]
    %v6174 = vld [vmem:[#allocation2 + $0x1d0] sm:$0xff]
    %v6175 = vld [vmem:[#allocation2 + $0x1d8] sm:$0xff]
    %v6176 = vld [vmem:[#allocation2 + $0x1e0] sm:$0xff]
    %v6177 = vld [vmem:[#allocation2 + $0x1e8] sm:$0xff]
    %v6178 = vld [vmem:[#allocation2 + $0x1f0] sm:$0xff]
    %v6179 = vld [vmem:[#allocation2 + $0x1f8] sm:$0xff]
    %v6180 = vld [vmem:[#allocation2 + $0x200] sm:$0xff]
    %v6181 = vld [vmem:[#allocation2 + $0x208] sm:$0xff]
    %v6182 = vld [vmem:[#allocation2 + $0x210] sm:$0xff]
    %v6183 = vld [vmem:[#allocation2 + $0x218] sm:$0xff]
    %v6184 = vld [vmem:[#allocation2 + $0x220] sm:$0xff]
    %v6185 = vld [vmem:[#allocation2 + $0x228] sm:$0xff]
    %v6186 = vld [vmem:[#allocation2 + $0x230] sm:$0xff]
    %v6187 = vld [vmem:[#allocation2 + $0x238] sm:$0xff]
    %v6188 = vld [vmem:[#allocation2 + $0x240] sm:$0xff]
    %v6189 = vld [vmem:[#allocation2 + $0x248] sm:$0xff]
    %v6190 = vld [vmem:[#allocation2 + $0x250] sm:$0xff]
    %v6191 = vld [vmem:[#allocation2 + $0x258] sm:$0xff]
    %v6192 = vld [vmem:[#allocation2 + $0x260] sm:$0xff]
    %v6193 = vld [vmem:[#allocation2 + $0x268] sm:$0xff]
    %v6194 = vld [vmem:[#allocation2 + $0x270] sm:$0xff]
    %v6195 = vld [vmem:[#allocation2 + $0x278] sm:$0xff]
    %v6196 = vld [vmem:[#allocation2 + $0x280] sm:$0xff]
    %v6197 = vld [vmem:[#allocation2 + $0x288] sm:$0xff]
    %v6198 = vld [vmem:[#allocation2 + $0x290] sm:$0xff]
    %v6199 = vld [vmem:[#allocation2 + $0x298] sm:$0xff]
    %v6200 = vld [vmem:[#allocation2 + $0x2a0] sm:$0xff]
    %v6201 = vld [vmem:[#allocation2 + $0x2a8] sm:$0xff]
    %v6202 = vld [vmem:[#allocation2 + $0x2b0] sm:$0xff]
    %v6203 = vld [vmem:[#allocation2 + $0x2b8] sm:$0xff]
    %v6204 = vld [vmem:[#allocation2 + $0x2c0] sm:$0xff]
    %v6205 = vld [vmem:[#allocation2 + $0x2c8] sm:$0xff]
    %v6206 = vld [vmem:[#allocation2 + $0x2d0] sm:$0xff]
    %v6207 = vld [vmem:[#allocation2 + $0x2d8] sm:$0xff]
    %v6208 = vld [vmem:[#allocation2 + $0x2e0] sm:$0xff]
    %v6209 = vld [vmem:[#allocation2 + $0x2e8] sm:$0xff]
    %v6210 = vld [vmem:[#allocation2 + $0x2f0] sm:$0xff]
    %v6211 = vld [vmem:[#allocation2 + $0x2f8] sm:$0xff]
    %v6212 = vld [vmem:[#allocation2 + $0x300] sm:$0xff]
    %v6213 = vld [vmem:[#allocation2 + $0x308] sm:$0xff]
    %v6214 = vld [vmem:[#allocation2 + $0x310] sm:$0xff]
    %v6215 = vld [vmem:[#allocation2 + $0x318] sm:$0xff]
    %v6216 = vld [vmem:[#allocation2 + $0x320] sm:$0xff]
    %v6217 = vld [vmem:[#allocation2 + $0x328] sm:$0xff]
    %v6218 = vld [vmem:[#allocation2 + $0x330] sm:$0xff]
    %v6219 = vld [vmem:[#allocation2 + $0x338] sm:$0xff]
    %v6220 = vld [vmem:[#allocation2 + $0x340] sm:$0xff]
    %v6221 = vld [vmem:[#allocation2 + $0x348] sm:$0xff]
    %v6222 = vld [vmem:[#allocation2 + $0x350] sm:$0xff]
    %v6223 = vld [vmem:[#allocation2 + $0x358] sm:$0xff]
    %v6224 = vld [vmem:[#allocation2 + $0x360] sm:$0xff]
    %v6225 = vld [vmem:[#allocation2 + $0x368] sm:$0xff]
    %v6226 = vld [vmem:[#allocation2 + $0x370] sm:$0xff]
    %v6227 = vld [vmem:[#allocation2 + $0x378] sm:$0xff]
    %v6228 = vld [vmem:[#allocation2 + $0x380] sm:$0xff]
    %v6229 = vld [vmem:[#allocation2 + $0x388] sm:$0xff]
    %v6230 = vld [vmem:[#allocation2 + $0x390] sm:$0xff]
    %v6231 = vld [vmem:[#allocation2 + $0x398] sm:$0xff]
    %v6232 = vld [vmem:[#allocation2 + $0x3a0] sm:$0xff]
    %v6233 = vld [vmem:[#allocation2 + $0x3a8] sm:$0xff]
    %v6234 = vld [vmem:[#allocation2 + $0x3b0] sm:$0xff]
    %v6235 = vld [vmem:[#allocation2 + $0x3b8] sm:$0xff]
    %v6236 = vld [vmem:[#allocation2 + $0x3c0] sm:$0xff]
    %v6237 = vld [vmem:[#allocation2 + $0x3c8] sm:$0xff]
    %v6238 = vld [vmem:[#allocation2 + $0x3d0] sm:$0xff]
    %v6239 = vld [vmem:[#allocation2 + $0x3d8] sm:$0xff]
    %v6240 = vld [vmem:[#allocation2 + $0x3e0] sm:$0xff]
    %v6241 = vld [vmem:[#allocation2 + $0x3e8] sm:$0xff]
    %v6242 = vld [vmem:[#allocation2 + $0x3f0] sm:$0xff]
    %v6243 = vld [vmem:[#allocation2 + $0x3f8] sm:$0xff]
    %v6244 = vld [vmem:[#allocation2 + $0x400] sm:$0xff]
    %v6245 = vld [vmem:[#allocation2 + $0x408] sm:$0xff]
    %v6246 = vld [vmem:[#allocation2 + $0x410] sm:$0xff]
    %v6247 = vld [vmem:[#allocation2 + $0x418] sm:$0xff]
    %v6248 = vld [vmem:[#allocation2 + $0x420] sm:$0xff]
    %v6249 = vld [vmem:[#allocation2 + $0x428] sm:$0xff]
    %v6250 = vld [vmem:[#allocation2 + $0x430] sm:$0xff]
    %v6251 = vld [vmem:[#allocation2 + $0x438] sm:$0xff]
    %v6252 = vld [vmem:[#allocation2 + $0x440] sm:$0xff]
    %v6253 = vld [vmem:[#allocation2 + $0x448] sm:$0xff]
    %v6254 = vld [vmem:[#allocation2 + $0x450] sm:$0xff]
    %v6255 = vld [vmem:[#allocation2 + $0x458] sm:$0xff]
    %v6256 = vld [vmem:[#allocation2 + $0x460] sm:$0xff]
    %v6257 = vld [vmem:[#allocation2 + $0x468] sm:$0xff]
    %v6258 = vld [vmem:[#allocation2 + $0x470] sm:$0xff]
    %v6259 = vld [vmem:[#allocation2 + $0x478] sm:$0xff]
    %v6260 = vld [vmem:[#allocation2 + $0x480] sm:$0xff]
    %v6261 = vld [vmem:[#allocation2 + $0x488] sm:$0xff]
    %v6262 = vld [vmem:[#allocation2 + $0x490] sm:$0xff]
    %v6263 = vld [vmem:[#allocation2 + $0x498] sm:$0xff]
    %v6264 = vld [vmem:[#allocation2 + $0x4a0] sm:$0xff]
    %v6265 = vld [vmem:[#allocation2 + $0x4a8] sm:$0xff]
    %v6266 = vld [vmem:[#allocation2 + $0x4b0] sm:$0xff]
    %v6267 = vld [vmem:[#allocation2 + $0x4b8] sm:$0xff]
    %v6268 = vld [vmem:[#allocation2 + $0x4c0] sm:$0xff]
    %v6269 = vld [vmem:[#allocation2 + $0x4c8] sm:$0xff]
    %v6270 = vld [vmem:[#allocation2 + $0x4d0] sm:$0xff]
    %v6271 = vld [vmem:[#allocation2 + $0x4d8] sm:$0xff]
    %v6272 = vld [vmem:[#allocation2 + $0x4e0] sm:$0xff]
    %v6273 = vld [vmem:[#allocation2 + $0x4e8] sm:$0xff]
    %v6274 = vld [vmem:[#allocation2 + $0x4f0] sm:$0xff]
    %v6275 = vld [vmem:[#allocation2 + $0x4f8] sm:$0xff]
    %v6276 = vld [vmem:[#allocation2 + $0x500] sm:$0xff]
    %v6277 = vld [vmem:[#allocation2 + $0x508] sm:$0xff]
    %v6278 = vld [vmem:[#allocation2 + $0x510] sm:$0xff]
    %v6279 = vld [vmem:[#allocation2 + $0x518] sm:$0xff]
    %v6280 = vld [vmem:[#allocation2 + $0x520] sm:$0xff]
    %v6281 = vld [vmem:[#allocation2 + $0x528] sm:$0xff]
    %v6282 = vld [vmem:[#allocation2 + $0x530] sm:$0xff]
    %v6283 = vld [vmem:[#allocation2 + $0x538] sm:$0xff]
    %v6284 = vld [vmem:[#allocation2 + $0x540] sm:$0xff]
    %v6285 = vld [vmem:[#allocation2 + $0x548] sm:$0xff]
    %v6286 = vld [vmem:[#allocation2 + $0x550] sm:$0xff]
    %v6287 = vld [vmem:[#allocation2 + $0x558] sm:$0xff]
    %v6288 = vld [vmem:[#allocation2 + $0x560] sm:$0xff]
    %v6289 = vld [vmem:[#allocation2 + $0x568] sm:$0xff]
    %v6290 = vld [vmem:[#allocation2 + $0x570] sm:$0xff]
    %v6291 = vld [vmem:[#allocation2 + $0x578] sm:$0xff]
    %v6292 = vld [vmem:[#allocation2 + $0x580] sm:$0xff]
    %v6293 = vld [vmem:[#allocation2 + $0x588] sm:$0xff]
    %v6294 = vld [vmem:[#allocation2 + $0x590] sm:$0xff]
    %v6295 = vld [vmem:[#allocation2 + $0x598] sm:$0xff]
    %v6296 = vld [vmem:[#allocation2 + $0x5a0] sm:$0xff]
    %v6297 = vld [vmem:[#allocation2 + $0x5a8] sm:$0xff]
    %v6298 = vld [vmem:[#allocation2 + $0x5b0] sm:$0xff]
    %v6299 = vld [vmem:[#allocation2 + $0x5b8] sm:$0xff]
    %v6300 = vld [vmem:[#allocation2 + $0x5c0] sm:$0xff]
    %v6301 = vld [vmem:[#allocation2 + $0x5c8] sm:$0xff]
    %v6302 = vld [vmem:[#allocation2 + $0x5d0] sm:$0xff]
    %v6303 = vld [vmem:[#allocation2 + $0x5d8] sm:$0xff]
    %v6304 = vld [vmem:[#allocation2 + $0x5e0] sm:$0xff]
    %v6305 = vld [vmem:[#allocation2 + $0x5e8] sm:$0xff]
    %v6306 = vld [vmem:[#allocation2 + $0x5f0] sm:$0xff]
    %v6307 = vld [vmem:[#allocation2 + $0x5f8] sm:$0xff]
    %v6308 = vld [vmem:[#allocation2 + $0x600] sm:$0xff]
    %v6309 = vld [vmem:[#allocation2 + $0x608] sm:$0xff]
    %v6310 = vld [vmem:[#allocation2 + $0x610] sm:$0xff]
    %v6311 = vld [vmem:[#allocation2 + $0x618] sm:$0xff]
    %v6312 = vld [vmem:[#allocation2 + $0x620] sm:$0xff]
    %v6313 = vld [vmem:[#allocation2 + $0x628] sm:$0xff]
    %v6314 = vld [vmem:[#allocation2 + $0x630] sm:$0xff]
    %v6315 = vld [vmem:[#allocation2 + $0x638] sm:$0xff]
    %v6316 = vld [vmem:[#allocation2 + $0x640] sm:$0xff]
    %v6317 = vld [vmem:[#allocation2 + $0x648] sm:$0xff]
    %v6318 = vld [vmem:[#allocation2 + $0x650] sm:$0xff]
    %v6319 = vld [vmem:[#allocation2 + $0x658] sm:$0xff]
    %v6320 = vld [vmem:[#allocation2 + $0x660] sm:$0xff]
    %v6321 = vld [vmem:[#allocation2 + $0x668] sm:$0xff]
    %v6322 = vld [vmem:[#allocation2 + $0x670] sm:$0xff]
    %v6323 = vld [vmem:[#allocation2 + $0x678] sm:$0xff]
    %v6324 = vld [vmem:[#allocation2 + $0x680] sm:$0xff]
    %v6325 = vld [vmem:[#allocation2 + $0x688] sm:$0xff]
    %v6326 = vld [vmem:[#allocation2 + $0x690] sm:$0xff]
    %v6327 = vld [vmem:[#allocation2 + $0x698] sm:$0xff]
    %v6328 = vld [vmem:[#allocation2 + $0x6a0] sm:$0xff]
    %v6329 = vld [vmem:[#allocation2 + $0x6a8] sm:$0xff]
    %v6330 = vld [vmem:[#allocation2 + $0x6b0] sm:$0xff]
    %v6331 = vld [vmem:[#allocation2 + $0x6b8] sm:$0xff]
    %v6332 = vld [vmem:[#allocation2 + $0x6c0] sm:$0xff]
    %v6333 = vld [vmem:[#allocation2 + $0x6c8] sm:$0xff]
    %v6334 = vld [vmem:[#allocation2 + $0x6d0] sm:$0xff]
    %v6335 = vld [vmem:[#allocation2 + $0x6d8] sm:$0xff]
    %v6336 = vld [vmem:[#allocation2 + $0x6e0] sm:$0xff]
    %v6337 = vld [vmem:[#allocation2 + $0x6e8] sm:$0xff]
    %v6338 = vld [vmem:[#allocation2 + $0x6f0] sm:$0xff]
    %v6339 = vld [vmem:[#allocation2 + $0x6f8] sm:$0xff]
    %v6340 = vld [vmem:[#allocation2 + $0x700] sm:$0xff]
    %v6341 = vld [vmem:[#allocation2 + $0x708] sm:$0xff]
    %v6342 = vld [vmem:[#allocation2 + $0x710] sm:$0xff]
    %v6343 = vld [vmem:[#allocation2 + $0x718] sm:$0xff]
    %v6344 = vld [vmem:[#allocation2 + $0x720] sm:$0xff]
    %v6345 = vld [vmem:[#allocation2 + $0x728] sm:$0xff]
    %v6346 = vld [vmem:[#allocation2 + $0x730] sm:$0xff]
    %v6347 = vld [vmem:[#allocation2 + $0x738] sm:$0xff]
    %v6348 = vld [vmem:[#allocation2 + $0x740] sm:$0xff]
    %v6349 = vld [vmem:[#allocation2 + $0x748] sm:$0xff]
    %v6350 = vld [vmem:[#allocation2 + $0x750] sm:$0xff]
    %v6351 = vld [vmem:[#allocation2 + $0x758] sm:$0xff]
    %v6352 = vld [vmem:[#allocation2 + $0x760] sm:$0xff]
    %v6353 = vld [vmem:[#allocation2 + $0x768] sm:$0xff]
    %v6354 = vld [vmem:[#allocation2 + $0x770] sm:$0xff]
    %v6355 = vld [vmem:[#allocation2 + $0x778] sm:$0xff]
    %v6356 = vld [vmem:[#allocation2 + $0x780] sm:$0xff]
    %v6357 = vld [vmem:[#allocation2 + $0x788] sm:$0xff]
    %v6358 = vld [vmem:[#allocation2 + $0x790] sm:$0xff]
    %v6359 = vld [vmem:[#allocation2 + $0x798] sm:$0xff]
    %v6360 = vld [vmem:[#allocation2 + $0x7a0] sm:$0xff]
    %v6361 = vld [vmem:[#allocation2 + $0x7a8] sm:$0xff]
    %v6362 = vld [vmem:[#allocation2 + $0x7b0] sm:$0xff]
    %v6363 = vld [vmem:[#allocation2 + $0x7b8] sm:$0xff]
    %v6364 = vld [vmem:[#allocation2 + $0x7c0] sm:$0xff]
    %v6365 = vld [vmem:[#allocation2 + $0x7c8] sm:$0xff]
    %v6366 = vld [vmem:[#allocation2 + $0x7d0] sm:$0xff]
    %v6367 = vld [vmem:[#allocation2 + $0x7d8] sm:$0xff]
    %v6368 = vld [vmem:[#allocation2 + $0x7e0] sm:$0xff]
    %v6369 = vld [vmem:[#allocation2 + $0x7e8] sm:$0xff]
    %v6370 = vld [vmem:[#allocation2 + $0x7f0] sm:$0xff]
    %v6371 = vld [vmem:[#allocation2 + $0x7f8] sm:$0xff]
    %v6372 = vld [vmem:[#allocation2 + $0x800] sm:$0xff]
    %v6373 = vld [vmem:[#allocation2 + $0x808] sm:$0xff]
    %v6374 = vld [vmem:[#allocation2 + $0x810] sm:$0xff]
    %v6375 = vld [vmem:[#allocation2 + $0x818] sm:$0xff]
    %v6376 = vld [vmem:[#allocation2 + $0x820] sm:$0xff]
    %v6377 = vld [vmem:[#allocation2 + $0x828] sm:$0xff]
    %v6378 = vld [vmem:[#allocation2 + $0x830] sm:$0xff]
    %v6379 = vld [vmem:[#allocation2 + $0x838] sm:$0xff]
    %v6380 = vld [vmem:[#allocation2 + $0x840] sm:$0xff]
    %v6381 = vld [vmem:[#allocation2 + $0x848] sm:$0xff]
    %v6382 = vld [vmem:[#allocation2 + $0x850] sm:$0xff]
    %v6383 = vld [vmem:[#allocation2 + $0x858] sm:$0xff]
    %v6384 = vld [vmem:[#allocation2 + $0x860] sm:$0xff]
    %v6385 = vld [vmem:[#allocation2 + $0x868] sm:$0xff]
    %v6386 = vld [vmem:[#allocation2 + $0x870] sm:$0xff]
    %v6387 = vld [vmem:[#allocation2 + $0x878] sm:$0xff]
    %v6388 = vld [vmem:[#allocation2 + $0x880] sm:$0xff]
    %v6389 = vld [vmem:[#allocation2 + $0x888] sm:$0xff]
    %v6390 = vld [vmem:[#allocation2 + $0x890] sm:$0xff]
    %v6391 = vld [vmem:[#allocation2 + $0x898] sm:$0xff]
    %v6392 = vld [vmem:[#allocation2 + $0x8a0] sm:$0xff]
    %v6393 = vld [vmem:[#allocation2 + $0x8a8] sm:$0xff]
    %v6394 = vld [vmem:[#allocation2 + $0x8b0] sm:$0xff]
    %v6395 = vld [vmem:[#allocation2 + $0x8b8] sm:$0xff]
    %v6396 = vld [vmem:[#allocation2 + $0x8c0] sm:$0xff]
    %v6397 = vld [vmem:[#allocation2 + $0x8c8] sm:$0xff]
    %v6398 = vld [vmem:[#allocation2 + $0x8d0] sm:$0xff]
    %v6399 = vld [vmem:[#allocation2 + $0x8d8] sm:$0xff]
    %v6400 = vld [vmem:[#allocation2 + $0x8e0] sm:$0xff]
    %v6401 = vld [vmem:[#allocation2 + $0x8e8] sm:$0xff]
    %v6402 = vld [vmem:[#allocation2 + $0x8f0] sm:$0xff]
    %v6403 = vld [vmem:[#allocation2 + $0x8f8] sm:$0xff]
    %v6406 = vlaneseq
    %v6407 = vshrl.u32 %v6406, 7
    %v6408 = vsub.s32 0, %v6407
    %v6409 = vrot.slane %v215, %v6408
    %v6410 = vlaneseq
    %v6411 = vshrl.u32 %v6410, 7
    %v6412 = vsub.s32 1, %v6411
    %v6413 = vrot.slane %v215, %v6412
    %v6414 = vlaneseq
    %v6415 = vshrl.u32 %v6414, 7
    %v6416 = vsub.s32 2, %v6415
    %v6417 = vrot.slane %v215, %v6416
    %v6418 = vlaneseq
    %v6419 = vshrl.u32 %v6418, 7
    %v6420 = vsub.s32 3, %v6419
    %v6421 = vrot.slane %v215, %v6420
    %v6422 = vlaneseq
    %v6423 = vshrl.u32 %v6422, 7
    %v6424 = vsub.s32 4, %v6423
    %v6425 = vrot.slane %v215, %v6424
    %v6426 = vlaneseq
    %v6427 = vshrl.u32 %v6426, 7
    %v6428 = vsub.s32 5, %v6427
    %v6429 = vrot.slane %v215, %v6428
    %v6430 = vlaneseq
    %v6431 = vshrl.u32 %v6430, 7
    %v6432 = vsub.s32 6, %v6431
    %v6433 = vrot.slane %v215, %v6432
    %v6434 = vlaneseq
    %v6435 = vshrl.u32 %v6434, 7
    %v6436 = vsub.s32 7, %v6435
    %v6437 = vrot.slane %v215, %v6436
    %v6438 = vlaneseq
    %v6439 = vshrl.u32 %v6438, 7
    %v6440 = vsub.s32 0, %v6439
    %v6441 = vrot.slane %v217, %v6440
    %v6442 = vlaneseq
    %v6443 = vshrl.u32 %v6442, 7
    %v6444 = vsub.s32 1, %v6443
    %v6445 = vrot.slane %v217, %v6444
    %v6446 = vlaneseq
    %v6447 = vshrl.u32 %v6446, 7
    %v6448 = vsub.s32 2, %v6447
    %v6449 = vrot.slane %v217, %v6448
    %v6450 = vlaneseq
    %v6451 = vshrl.u32 %v6450, 7
    %v6452 = vsub.s32 3, %v6451
    %v6453 = vrot.slane %v217, %v6452
    %6466 = vmatprep.subr.bf16.mxu0 %v6117
    %6467 = vmatpush1.bf16.msra.mxu0 %v6116
    %6468 = vmatprep.subr.bf16.mxu0 %v6129
    %6469 = vmatpush1.bf16.msra.mxu0 %v6128
    %6470 = vmatprep.subr.bf16.mxu0 %v6141
    %6471 = vmatpush1.bf16.msra.mxu0 %v6140
    %6472 = vmatprep.subr.bf16.mxu0 %v6153
    %6473 = vmatpush1.bf16.msra.mxu0 %v6152
    %6474 = vmatprep.subr.bf16.mxu0 %v6165
    %6475 = vmatpush1.bf16.msra.mxu0 %v6164
    %6476 = vmatprep.subr.bf16.mxu0 %v6177
    %6477 = vmatpush1.bf16.msra.mxu0 %v6176
    %6478 = vmatprep.subr.bf16.mxu0 %v6189
    %6479 = vmatpush1.bf16.msra.mxu0 %v6188
    %6480 = vmatprep.subr.bf16.mxu0 %v6201
    %6481 = vmatpush1.bf16.msra.mxu0 %v6200
    %6482 = vmatprep.subr.bf16.mxu0 %v6213
    %6483 = vmatpush1.bf16.msra.mxu0 %v6212
    %6484 = vmatprep.subr.bf16.mxu0 %v6225
    %6485 = vmatpush1.bf16.msra.mxu0 %v6224
    %6486 = vmatprep.subr.bf16.mxu0 %v6237
    %6487 = vmatpush1.bf16.msra.mxu0 %v6236
    %6488 = vmatprep.subr.bf16.mxu0 %v6249
    %6489 = vmatpush1.bf16.msra.mxu0 %v6248
    %6490 = vmatprep.subr.bf16.mxu0 %v6261
    %6491 = vmatpush1.bf16.msra.mxu0 %v6260
    %6492 = vmatprep.subr.bf16.mxu0 %v6273
    %6493 = vmatpush1.bf16.msra.mxu0 %v6272
    %6494 = vmatprep.subr.bf16.mxu0 %v6285
    %6495 = vmatpush1.bf16.msra.mxu0 %v6284
    %6496 = vmatprep.subr.bf16.mxu0 %v6297
    %6497 = vmatpush1.bf16.msra.mxu0 %v6296
    %6498 = vmatprep.mubr.bf16.mxu0 %v6101
    %6499 = vmatmul.mubr.bf16.gmra.mrb[0].mxu0 %v6100
    %v6500 = vpop.f32.mrb[0].mxu0
    %v6501 = vadd.f32 %v6409, %v6500
    %v6502 = vpop.f32.mrb[0].mxu0
    %v6503 = vadd.f32 %v6413, %v6502
    %v6504 = vpop.f32.mrb[0].mxu0
    %v6505 = vadd.f32 %v6409, %v6504
    %v6506 = vpop.f32.mrb[0].mxu0
    %v6507 = vadd.f32 %v6413, %v6506
    %6508 = vmatprep.mubr.bf16.mxu0 %v6104
    %6509 = vmatmul.mubr.bf16.gmra.mrb[0].mxu0 %v6103
    %v6510 = vpop.f32.mrb[0].mxu0
    %v6511 = vadd.f32 %v6409, %v6510
    %v6512 = vpop.f32.mrb[0].mxu0
    %v6513 = vadd.f32 %v6413, %v6512
    %v6514 = vpop.f32.mrb[0].mxu0
    %v6515 = vadd.f32 %v6409, %v6514
    %v6516 = vpop.f32.mrb[0].mxu0
    %v6517 = vadd.f32 %v6413, %v6516
    %6518 = vmatprep.mubr.bf16.mxu0 %v6107
    %6519 = vmatmul.mubr.bf16.gmra.mrb[0].mxu0 %v6106
    %v6520 = vpop.f32.mrb[0].mxu0
    %v6521 = vadd.f32 %v6409, %v6520
    %v6522 = vpop.f32.mrb[0].mxu0
    %v6523 = vadd.f32 %v6413, %v6522
    %v6524 = vpop.f32.mrb[0].mxu0
    %v6525 = vadd.f32 %v6409, %v6524
    %v6526 = vpop.f32.mrb[0].mxu0
    %v6527 = vadd.f32 %v6413, %v6526
    %6528 = vmatprep.mubr.bf16.mxu0 %v6110
    %6529 = vmatmul.mubr.bf16.gmra.mrb[0].mxu0 %v6109
    %v6530 = vpop.f32.mrb[0].mxu0
    %v6531 = vadd.f32 %v6409, %v6530
    %v6532 = vpop.f32.mrb[0].mxu0
    %v6533 = vadd.f32 %v6413, %v6532
    %v6534 = vpop.f32.mrb[0].mxu0
    %v6535 = vadd.f32 %v6409, %v6534
    %v6536 = vpop.f32.mrb[0].mxu0
    %v6537 = vadd.f32 %v6413, %v6536
    %6538 = vdwg.mxu0
    %6539 = vmatprep.subr.bf16.mxu0 %v6309
    %6540 = vmatpush1.bf16.msra.mxu0 %v6308
    %6541 = vmatprep.subr.bf16.mxu0 %v6321
    %6542 = vmatpush1.bf16.msra.mxu0 %v6320
    %6543 = vmatprep.subr.bf16.mxu0 %v6333
    %6544 = vmatpush1.bf16.msra.mxu0 %v6332
    %6545 = vmatprep.subr.bf16.mxu0 %v6345
    %6546 = vmatpush1.bf16.msra.mxu0 %v6344
    %6547 = vmatprep.subr.bf16.mxu0 %v6357
    %6548 = vmatpush1.bf16.msra.mxu0 %v6356
    %6549 = vmatprep.subr.bf16.mxu0 %v6369
    %6550 = vmatpush1.bf16.msra.mxu0 %v6368
    %6551 = vmatprep.subr.bf16.mxu0 %v6381
    %6552 = vmatpush1.bf16.msra.mxu0 %v6380
    %6553 = vmatprep.subr.bf16.mxu0 %v6393
    %6554 = vmatpush1.bf16.msra.mxu0 %v6392
    %6555 = vmatprep.subr.bf16.mxu0 0
    %6556 = vmatpush1.bf16.msra.mxu0 0
    %6557 = vmatprep.subr.bf16.mxu0 0
    %6558 = vmatpush1.bf16.msra.mxu0 0
    %6559 = vmatprep.subr.bf16.mxu0 0
    %6560 = vmatpush1.bf16.msra.mxu0 0
    %6561 = vmatprep.subr.bf16.mxu0 0
    %6562 = vmatpush1.bf16.msra.mxu0 0
    %6563 = vmatprep.subr.bf16.mxu0 0
    %6564 = vmatpush1.bf16.msra.mxu0 0
    %6565 = vmatprep.subr.bf16.mxu0 0
    %6566 = vmatpush1.bf16.msra.mxu0 0
    %6567 = vmatprep.subr.bf16.mxu0 0
    %6568 = vmatpush1.bf16.msra.mxu0 0
    %6569 = vmatprep.subr.bf16.mxu0 0
    %6570 = vmatpush1.bf16.msra.mxu0 0
    %6571 = vmatprep.mubr.bf16.mxu0 0
    %6572 = vmatmul.mubr.bf16.gmra.mrb[0].mxu0 %v6102
    %v6573 = vpop.f32.mrb[0].mxu0
    %v6574 = vadd.f32 %v6501, %v6573
    %v6575 = vpop.f32.mrb[0].mxu0
    %v6576 = vadd.f32 %v6503, %v6575
    %v6577 = vpop.f32.mrb[0].mxu0
    %v6578 = vadd.f32 %v6505, %v6577
    %v6579 = vpop.f32.mrb[0].mxu0
    %v6580 = vadd.f32 %v6507, %v6579
    %6581 = vmatprep.mubr.bf16.mxu0 0
    %6582 = vmatmul.mubr.bf16.gmra.mrb[0].mxu0 %v6105
    %v6583 = vpop.f32.mrb[0].mxu0
    %v6584 = vadd.f32 %v6511, %v6583
    %v6585 = vpop.f32.mrb[0].mxu0
    %v6586 = vadd.f32 %v6513, %v6585
    %v6587 = vpop.f32.mrb[0].mxu0
    %v6588 = vadd.f32 %v6515, %v6587
    %v6589 = vpop.f32.mrb[0].mxu0
    %v6590 = vadd.f32 %v6517, %v6589
    %6591 = vmatprep.mubr.bf16.mxu0 0
    %6592 = vmatmul.mubr.bf16.gmra.mrb[0].mxu0 %v6108
    %v6593 = vpop.f32.mrb[0].mxu0
    %v6594 = vadd.f32 %v6521, %v6593
    %v6595 = vpop.f32.mrb[0].mxu0
    %v6596 = vadd.f32 %v6523, %v6595
    %v6597 = vpop.f32.mrb[0].mxu0
    %v6598 = vadd.f32 %v6525, %v6597
    %v6599 = vpop.f32.mrb[0].mxu0
    %v6600 = vadd.f32 %v6527, %v6599
    %6601 = vmatprep.mubr.bf16.mxu0 0
    %6602 = vmatmul.mubr.bf16.gmra.mrb[0].mxu0 %v6111
    %v6603 = vpop.f32.mrb[0].mxu0
    %v6604 = vadd.f32 %v6531, %v6603
    %v6605 = vpop.f32.mrb[0].mxu0
    %v6606 = vadd.f32 %v6533, %v6605
    %v6607 = vpop.f32.mrb[0].mxu0
    %v6608 = vadd.f32 %v6535, %v6607
    %v6609 = vpop.f32.mrb[0].mxu0
    %v6610 = vadd.f32 %v6537, %v6609
    %6611 = vdwg.mxu0
    %6612 = vmatprep.subr.bf16.mxu0 %v6119
    %6613 = vmatpush1.bf16.msra.mxu0 %v6118
    %6614 = vmatprep.subr.bf16.mxu0 %v6131
    %6615 = vmatpush1.bf16.msra.mxu0 %v6130
    %6616 = vmatprep.subr.bf16.mxu0 %v6143
    %6617 = vmatpush1.bf16.msra.mxu0 %v6142
    %6618 = vmatprep.subr.bf16.mxu0 %v6155
    %6619 = vmatpush1.bf16.msra.mxu0 %v6154
    %6620 = vmatprep.subr.bf16.mxu0 %v6167
    %6621 = vmatpush1.bf16.msra.mxu0 %v6166
    %6622 = vmatprep.subr.bf16.mxu0 %v6179
    %6623 = vmatpush1.bf16.msra.mxu0 %v6178
    %6624 = vmatprep.subr.bf16.mxu0 %v6191
    %6625 = vmatpush1.bf16.msra.mxu0 %v6190
    %6626 = vmatprep.subr.bf16.mxu0 %v6203
    %6627 = vmatpush1.bf16.msra.mxu0 %v6202
    %6628 = vmatprep.subr.bf16.mxu0 %v6215
    %6629 = vmatpush1.bf16.msra.mxu0 %v6214
    %6630 = vmatprep.subr.bf16.mxu0 %v6227
    %6631 = vmatpush1.bf16.msra.mxu0 %v6226
    %6632 = vmatprep.subr.bf16.mxu0 %v6239
    %6633 = vmatpush1.bf16.msra.mxu0 %v6238
    %6634 = vmatprep.subr.bf16.mxu0 %v6251
    %6635 = vmatpush1.bf16.msra.mxu0 %v6250
    %6636 = vmatprep.subr.bf16.mxu0 %v6263
    %6637 = vmatpush1.bf16.msra.mxu0 %v6262
    %6638 = vmatprep.subr.bf16.mxu0 %v6275
    %6639 = vmatpush1.bf16.msra.mxu0 %v6274
    %6640 = vmatprep.subr.bf16.mxu0 %v6287
    %6641 = vmatpush1.bf16.msra.mxu0 %v6286
    %6642 = vmatprep.subr.bf16.mxu0 %v6299
    %6643 = vmatpush1.bf16.msra.mxu0 %v6298
    %6644 = vmatprep.mubr.bf16.mxu0 %v6101
    %6645 = vmatmul.mubr.bf16.gmra.mrb[0].mxu0 %v6100
    %v6646 = vpop.f32.mrb[0].mxu0
    %v6647 = vadd.f32 %v6417, %v6646
    %v6648 = vpop.f32.mrb[0].mxu0
    %v6649 = vadd.f32 %v6421, %v6648
    %v6650 = vpop.f32.mrb[0].mxu0
    %v6651 = vadd.f32 %v6417, %v6650
    %v6652 = vpop.f32.mrb[0].mxu0
    %v6653 = vadd.f32 %v6421, %v6652
    %6654 = vmatprep.mubr.bf16.mxu0 %v6104
    %6655 = vmatmul.mubr.bf16.gmra.mrb[0].mxu0 %v6103
    %v6656 = vpop.f32.mrb[0].mxu0
    %v6657 = vadd.f32 %v6417, %v6656
    %v6658 = vpop.f32.mrb[0].mxu0
    %v6659 = vadd.f32 %v6421, %v6658
    %v6660 = vpop.f32.mrb[0].mxu0
    %v6661 = vadd.f32 %v6417, %v6660
    %v6662 = vpop.f32.mrb[0].mxu0
    %v6663 = vadd.f32 %v6421, %v6662
    %6664 = vmatprep.mubr.bf16.mxu0 %v6107
    %6665 = vmatmul.mubr.bf16.gmra.mrb[0].mxu0 %v6106
    %v6666 = vpop.f32.mrb[0].mxu0
    %v6667 = vadd.f32 %v6417, %v6666
    %v6668 = vpop.f32.mrb[0].mxu0
    %v6669 = vadd.f32 %v6421, %v6668
    %v6670 = vpop.f32.mrb[0].mxu0
    %v6671 = vadd.f32 %v6417, %v6670
    %v6672 = vpop.f32.mrb[0].mxu0
    %v6673 = vadd.f32 %v6421, %v6672
    %6674 = vmatprep.mubr.bf16.mxu0 %v6110
    %6675 = vmatmul.mubr.bf16.gmra.mrb[0].mxu0 %v6109
    %v6676 = vpop.f32.mrb[0].mxu0
    %v6677 = vadd.f32 %v6417, %v6676
    %v6678 = vpop.f32.mrb[0].mxu0
    %v6679 = vadd.f32 %v6421, %v6678
    %v6680 = vpop.f32.mrb[0].mxu0
    %v6681 = vadd.f32 %v6417, %v6680
    %v6682 = vpop.f32.mrb[0].mxu0
    %v6683 = vadd.f32 %v6421, %v6682
    %6684 = vdwg.mxu0
    %6685 = vmatprep.subr.bf16.mxu0 %v6311
    %6686 = vmatpush1.bf16.msra.mxu0 %v6310
    %6687 = vmatprep.subr.bf16.mxu0 %v6323
    %6688 = vmatpush1.bf16.msra.mxu0 %v6322
    %6689 = vmatprep.subr.bf16.mxu0 %v6335
    %6690 = vmatpush1.bf16.msra.mxu0 %v6334
    %6691 = vmatprep.subr.bf16.mxu0 %v6347
    %6692 = vmatpush1.bf16.msra.mxu0 %v6346
    %6693 = vmatprep.subr.bf16.mxu0 %v6359
    %6694 = vmatpush1.bf16.msra.mxu0 %v6358
    %6695 = vmatprep.subr.bf16.mxu0 %v6371
    %6696 = vmatpush1.bf16.msra.mxu0 %v6370
    %6697 = vmatprep.subr.bf16.mxu0 %v6383
    %6698 = vmatpush1.bf16.msra.mxu0 %v6382
    %6699 = vmatprep.subr.bf16.mxu0 %v6395
    %6700 = vmatpush1.bf16.msra.mxu0 %v6394
    %6701 = vmatprep.subr.bf16.mxu0 0
    %6702 = vmatpush1.bf16.msra.mxu0 0
    %6703 = vmatprep.subr.bf16.mxu0 0
    %6704 = vmatpush1.bf16.msra.mxu0 0
    %6705 = vmatprep.subr.bf16.mxu0 0
    %6706 = vmatpush1.bf16.msra.mxu0 0
    %6707 = vmatprep.subr.bf16.mxu0 0
    %6708 = vmatpush1.bf16.msra.mxu0 0
    %6709 = vmatprep.subr.bf16.mxu0 0
    %6710 = vmatpush1.bf16.msra.mxu0 0
    %6711 = vmatprep.subr.bf16.mxu0 0
    %6712 = vmatpush1.bf16.msra.mxu0 0
    %6713 = vmatprep.subr.bf16.mxu0 0
    %6714 = vmatpush1.bf16.msra.mxu0 0
    %6715 = vmatprep.subr.bf16.mxu0 0
    %6716 = vmatpush1.bf16.msra.mxu0 0
    %6717 = vmatprep.mubr.bf16.mxu0 0
    %6718 = vmatmul.mubr.bf16.gmra.mrb[0].mxu0 %v6102
    %v6719 = vpop.f32.mrb[0].mxu0
    %v6720 = vadd.f32 %v6647, %v6719
    %v6721 = vpop.f32.mrb[0].mxu0
    %v6722 = vadd.f32 %v6649, %v6721
    %v6723 = vpop.f32.mrb[0].mxu0
    %v6724 = vadd.f32 %v6651, %v6723
    %v6725 = vpop.f32.mrb[0].mxu0
    %v6726 = vadd.f32 %v6653, %v6725
    %6727 = vmatprep.mubr.bf16.mxu0 0
    %6728 = vmatmul.mubr.bf16.gmra.mrb[0].mxu0 %v6105
    %v6729 = vpop.f32.mrb[0].mxu0
    %v6730 = vadd.f32 %v6657, %v6729
    %v6731 = vpop.f32.mrb[0].mxu0
    %v6732 = vadd.f32 %v6659, %v6731
    %v6733 = vpop.f32.mrb[0].mxu0
    %v6734 = vadd.f32 %v6661, %v6733
    %v6735 = vpop.f32.mrb[0].mxu0
    %v6736 = vadd.f32 %v6663, %v6735
    %6737 = vmatprep.mubr.bf16.mxu0 0
    %6738 = vmatmul.mubr.bf16.gmra.mrb[0].mxu0 %v6108
    %v6739 = vpop.f32.mrb[0].mxu0
    %v6740 = vadd.f32 %v6667, %v6739
    %v6741 = vpop.f32.mrb[0].mxu0
    %v6742 = vadd.f32 %v6669, %v6741
    %v6743 = vpop.f32.mrb[0].mxu0
    %v6744 = vadd.f32 %v6671, %v6743
    %v6745 = vpop.f32.mrb[0].mxu0
    %v6746 = vadd.f32 %v6673, %v6745
    %6747 = vmatprep.mubr.bf16.mxu0 0
    %6748 = vmatmul.mubr.bf16.gmra.mrb[0].mxu0 %v6111
    %v6749 = vpop.f32.mrb[0].mxu0
    %v6750 = vadd.f32 %v6677, %v6749
    %v6751 = vpop.f32.mrb[0].mxu0
    %v6752 = vadd.f32 %v6679, %v6751
    %v6753 = vpop.f32.mrb[0].mxu0
    %v6754 = vadd.f32 %v6681, %v6753
    %v6755 = vpop.f32.mrb[0].mxu0
    %v6756 = vadd.f32 %v6683, %v6755
    %6757 = vdwg.mxu0
    %6758 = vmatprep.subr.bf16.mxu0 %v6121
    %6759 = vmatpush1.bf16.msra.mxu0 %v6120
    %6760 = vmatprep.subr.bf16.mxu0 %v6133
    %6761 = vmatpush1.bf16.msra.mxu0 %v6132
    %6762 = vmatprep.subr.bf16.mxu0 %v6145
    %6763 = vmatpush1.bf16.msra.mxu0 %v6144
    %6764 = vmatprep.subr.bf16.mxu0 %v6157
    %6765 = vmatpush1.bf16.msra.mxu0 %v6156
    %6766 = vmatprep.subr.bf16.mxu0 %v6169
    %6767 = vmatpush1.bf16.msra.mxu0 %v6168
    %6768 = vmatprep.subr.bf16.mxu0 %v6181
    %6769 = vmatpush1.bf16.msra.mxu0 %v6180
    %6770 = vmatprep.subr.bf16.mxu0 %v6193
    %6771 = vmatpush1.bf16.msra.mxu0 %v6192
    %6772 = vmatprep.subr.bf16.mxu0 %v6205
    %6773 = vmatpush1.bf16.msra.mxu0 %v6204
    %6774 = vmatprep.subr.bf16.mxu0 %v6217
    %6775 = vmatpush1.bf16.msra.mxu0 %v6216
    %6776 = vmatprep.subr.bf16.mxu0 %v6229
    %6777 = vmatpush1.bf16.msra.mxu0 %v6228
    %6778 = vmatprep.subr.bf16.mxu0 %v6241
    %6779 = vmatpush1.bf16.msra.mxu0 %v6240
    %6780 = vmatprep.subr.bf16.mxu0 %v6253
    %6781 = vmatpush1.bf16.msra.mxu0 %v6252
    %6782 = vmatprep.subr.bf16.mxu0 %v6265
    %6783 = vmatpush1.bf16.msra.mxu0 %v6264
    %6784 = vmatprep.subr.bf16.mxu0 %v6277
    %6785 = vmatpush1.bf16.msra.mxu0 %v6276
    %6786 = vmatprep.subr.bf16.mxu0 %v6289
    %6787 = vmatpush1.bf16.msra.mxu0 %v6288
    %6788 = vmatprep.subr.bf16.mxu0 %v6301
    %6789 = vmatpush1.bf16.msra.mxu0 %v6300
    %6790 = vmatprep.mubr.bf16.mxu0 %v6101
    %6791 = vmatmul.mubr.bf16.gmra.mrb[0].mxu0 %v6100
    %v6792 = vpop.f32.mrb[0].mxu0
    %v6793 = vadd.f32 %v6425, %v6792
    %v6794 = vpop.f32.mrb[0].mxu0
    %v6795 = vadd.f32 %v6429, %v6794
    %v6796 = vpop.f32.mrb[0].mxu0
    %v6797 = vadd.f32 %v6425, %v6796
    %v6798 = vpop.f32.mrb[0].mxu0
    %v6799 = vadd.f32 %v6429, %v6798
    %6800 = vmatprep.mubr.bf16.mxu0 %v6104
    %6801 = vmatmul.mubr.bf16.gmra.mrb[0].mxu0 %v6103
    %v6802 = vpop.f32.mrb[0].mxu0
    %v6803 = vadd.f32 %v6425, %v6802
    %v6804 = vpop.f32.mrb[0].mxu0
    %v6805 = vadd.f32 %v6429, %v6804
    %v6806 = vpop.f32.mrb[0].mxu0
    %v6807 = vadd.f32 %v6425, %v6806
    %v6808 = vpop.f32.mrb[0].mxu0
    %v6809 = vadd.f32 %v6429, %v6808
    %6810 = vmatprep.mubr.bf16.mxu0 %v6107
    %6811 = vmatmul.mubr.bf16.gmra.mrb[0].mxu0 %v6106
    %v6812 = vpop.f32.mrb[0].mxu0
    %v6813 = vadd.f32 %v6425, %v6812
    %v6814 = vpop.f32.mrb[0].mxu0
    %v6815 = vadd.f32 %v6429, %v6814
    %v6816 = vpop.f32.mrb[0].mxu0
    %v6817 = vadd.f32 %v6425, %v6816
    %v6818 = vpop.f32.mrb[0].mxu0
    %v6819 = vadd.f32 %v6429, %v6818
    %6820 = vmatprep.mubr.bf16.mxu0 %v6110
    %6821 = vmatmul.mubr.bf16.gmra.mrb[0].mxu0 %v6109
    %v6822 = vpop.f32.mrb[0].mxu0
    %v6823 = vadd.f32 %v6425, %v6822
    %v6824 = vpop.f32.mrb[0].mxu0
    %v6825 = vadd.f32 %v6429, %v6824
    %v6826 = vpop.f32.mrb[0].mxu0
    %v6827 = vadd.f32 %v6425, %v6826
    %v6828 = vpop.f32.mrb[0].mxu0
    %v6829 = vadd.f32 %v6429, %v6828
    %6830 = vdwg.mxu0
    %6831 = vmatprep.subr.bf16.mxu0 %v6313
    %6832 = vmatpush1.bf16.msra.mxu0 %v6312
    %6833 = vmatprep.subr.bf16.mxu0 %v6325
    %6834 = vmatpush1.bf16.msra.mxu0 %v6324
    %6835 = vmatprep.subr.bf16.mxu0 %v6337
    %6836 = vmatpush1.bf16.msra.mxu0 %v6336
    %6837 = vmatprep.subr.bf16.mxu0 %v6349
    %6838 = vmatpush1.bf16.msra.mxu0 %v6348
    %6839 = vmatprep.subr.bf16.mxu0 %v6361
    %6840 = vmatpush1.bf16.msra.mxu0 %v6360
    %6841 = vmatprep.subr.bf16.mxu0 %v6373
    %6842 = vmatpush1.bf16.msra.mxu0 %v6372
    %6843 = vmatprep.subr.bf16.mxu0 %v6385
    %6844 = vmatpush1.bf16.msra.mxu0 %v6384
    %6845 = vmatprep.subr.bf16.mxu0 %v6397
    %6846 = vmatpush1.bf16.msra.mxu0 %v6396
    %6847 = vmatprep.subr.bf16.mxu0 0
    %6848 = vmatpush1.bf16.msra.mxu0 0
    %6849 = vmatprep.subr.bf16.mxu0 0
    %6850 = vmatpush1.bf16.msra.mxu0 0
    %6851 = vmatprep.subr.bf16.mxu0 0
    %6852 = vmatpush1.bf16.msra.mxu0 0
    %6853 = vmatprep.subr.bf16.mxu0 0
    %6854 = vmatpush1.bf16.msra.mxu0 0
    %6855 = vmatprep.subr.bf16.mxu0 0
    %6856 = vmatpush1.bf16.msra.mxu0 0
    %6857 = vmatprep.subr.bf16.mxu0 0
    %6858 = vmatpush1.bf16.msra.mxu0 0
    %6859 = vmatprep.subr.bf16.mxu0 0
    %6860 = vmatpush1.bf16.msra.mxu0 0
    %6861 = vmatprep.subr.bf16.mxu0 0
    %6862 = vmatpush1.bf16.msra.mxu0 0
    %6863 = vmatprep.mubr.bf16.mxu0 0
    %6864 = vmatmul.mubr.bf16.gmra.mrb[0].mxu0 %v6102
    %v6865 = vpop.f32.mrb[0].mxu0
    %v6866 = vadd.f32 %v6793, %v6865
    %v6867 = vpop.f32.mrb[0].mxu0
    %v6868 = vadd.f32 %v6795, %v6867
    %v6869 = vpop.f32.mrb[0].mxu0
    %v6870 = vadd.f32 %v6797, %v6869
    %v6871 = vpop.f32.mrb[0].mxu0
    %v6872 = vadd.f32 %v6799, %v6871
    %6873 = vmatprep.mubr.bf16.mxu0 0
    %6874 = vmatmul.mubr.bf16.gmra.mrb[0].mxu0 %v6105
    %v6875 = vpop.f32.mrb[0].mxu0
    %v6876 = vadd.f32 %v6803, %v6875
    %v6877 = vpop.f32.mrb[0].mxu0
    %v6878 = vadd.f32 %v6805, %v6877
    %v6879 = vpop.f32.mrb[0].mxu0
    %v6880 = vadd.f32 %v6807, %v6879
    %v6881 = vpop.f32.mrb[0].mxu0
    %v6882 = vadd.f32 %v6809, %v6881
    %6883 = vmatprep.mubr.bf16.mxu0 0
    %6884 = vmatmul.mubr.bf16.gmra.mrb[0].mxu0 %v6108
    %v6885 = vpop.f32.mrb[0].mxu0
    %v6886 = vadd.f32 %v6813, %v6885
    %v6887 = vpop.f32.mrb[0].mxu0
    %v6888 = vadd.f32 %v6815, %v6887
    %v6889 = vpop.f32.mrb[0].mxu0
    %v6890 = vadd.f32 %v6817, %v6889
    %v6891 = vpop.f32.mrb[0].mxu0
    %v6892 = vadd.f32 %v6819, %v6891
    %6893 = vmatprep.mubr.bf16.mxu0 0
    %6894 = vmatmul.mubr.bf16.gmra.mrb[0].mxu0 %v6111
    %v6895 = vpop.f32.mrb[0].mxu0
    %v6896 = vadd.f32 %v6823, %v6895
    %v6897 = vpop.f32.mrb[0].mxu0
    %v6898 = vadd.f32 %v6825, %v6897
    %v6899 = vpop.f32.mrb[0].mxu0
    %v6900 = vadd.f32 %v6827, %v6899
    %v6901 = vpop.f32.mrb[0].mxu0
    %v6902 = vadd.f32 %v6829, %v6901
    %6903 = vdwg.mxu0
    %6904 = vmatprep.subr.bf16.mxu0 %v6123
    %6905 = vmatpush1.bf16.msra.mxu0 %v6122
    %6906 = vmatprep.subr.bf16.mxu0 %v6135
    %6907 = vmatpush1.bf16.msra.mxu0 %v6134
    %6908 = vmatprep.subr.bf16.mxu0 %v6147
    %6909 = vmatpush1.bf16.msra.mxu0 %v6146
    %6910 = vmatprep.subr.bf16.mxu0 %v6159
    %6911 = vmatpush1.bf16.msra.mxu0 %v6158
    %6912 = vmatprep.subr.bf16.mxu0 %v6171
    %6913 = vmatpush1.bf16.msra.mxu0 %v6170
    %6914 = vmatprep.subr.bf16.mxu0 %v6183
    %6915 = vmatpush1.bf16.msra.mxu0 %v6182
    %6916 = vmatprep.subr.bf16.mxu0 %v6195
    %6917 = vmatpush1.bf16.msra.mxu0 %v6194
    %6918 = vmatprep.subr.bf16.mxu0 %v6207
    %6919 = vmatpush1.bf16.msra.mxu0 %v6206
    %6920 = vmatprep.subr.bf16.mxu0 %v6219
    %6921 = vmatpush1.bf16.msra.mxu0 %v6218
    %6922 = vmatprep.subr.bf16.mxu0 %v6231
    %6923 = vmatpush1.bf16.msra.mxu0 %v6230
    %6924 = vmatprep.subr.bf16.mxu0 %v6243
    %6925 = vmatpush1.bf16.msra.mxu0 %v6242
    %6926 = vmatprep.subr.bf16.mxu0 %v6255
    %6927 = vmatpush1.bf16.msra.mxu0 %v6254
    %6928 = vmatprep.subr.bf16.mxu0 %v6267
    %6929 = vmatpush1.bf16.msra.mxu0 %v6266
    %6930 = vmatprep.subr.bf16.mxu0 %v6279
    %6931 = vmatpush1.bf16.msra.mxu0 %v6278
    %6932 = vmatprep.subr.bf16.mxu0 %v6291
    %6933 = vmatpush1.bf16.msra.mxu0 %v6290
    %6934 = vmatprep.subr.bf16.mxu0 %v6303
    %6935 = vmatpush1.bf16.msra.mxu0 %v6302
    %6936 = vmatprep.mubr.bf16.mxu0 %v6101
    %6937 = vmatmul.mubr.bf16.gmra.mrb[0].mxu0 %v6100
    %v6938 = vpop.f32.mrb[0].mxu0
    %v6939 = vadd.f32 %v6433, %v6938
    %v6940 = vpop.f32.mrb[0].mxu0
    %v6941 = vadd.f32 %v6437, %v6940
    %v6942 = vpop.f32.mrb[0].mxu0
    %v6943 = vadd.f32 %v6433, %v6942
    %v6944 = vpop.f32.mrb[0].mxu0
    %v6945 = vadd.f32 %v6437, %v6944
    %6946 = vmatprep.mubr.bf16.mxu0 %v6104
    %6947 = vmatmul.mubr.bf16.gmra.mrb[0].mxu0 %v6103
    %v6948 = vpop.f32.mrb[0].mxu0
    %v6949 = vadd.f32 %v6433, %v6948
    %v6950 = vpop.f32.mrb[0].mxu0
    %v6951 = vadd.f32 %v6437, %v6950
    %v6952 = vpop.f32.mrb[0].mxu0
    %v6953 = vadd.f32 %v6433, %v6952
    %v6954 = vpop.f32.mrb[0].mxu0
    %v6955 = vadd.f32 %v6437, %v6954
    %6956 = vmatprep.mubr.bf16.mxu0 %v6107
    %6957 = vmatmul.mubr.bf16.gmra.mrb[0].mxu0 %v6106
    %v6958 = vpop.f32.mrb[0].mxu0
    %v6959 = vadd.f32 %v6433, %v6958
    %v6960 = vpop.f32.mrb[0].mxu0
    %v6961 = vadd.f32 %v6437, %v6960
    %v6962 = vpop.f32.mrb[0].mxu0
    %v6963 = vadd.f32 %v6433, %v6962
    %v6964 = vpop.f32.mrb[0].mxu0
    %v6965 = vadd.f32 %v6437, %v6964
    %6966 = vmatprep.mubr.bf16.mxu0 %v6110
    %6967 = vmatmul.mubr.bf16.gmra.mrb[0].mxu0 %v6109
    %v6968 = vpop.f32.mrb[0].mxu0
    %v6969 = vadd.f32 %v6433, %v6968
    %v6970 = vpop.f32.mrb[0].mxu0
    %v6971 = vadd.f32 %v6437, %v6970
    %v6972 = vpop.f32.mrb[0].mxu0
    %v6973 = vadd.f32 %v6433, %v6972
    %v6974 = vpop.f32.mrb[0].mxu0
    %v6975 = vadd.f32 %v6437, %v6974
    %6976 = vdwg.mxu0
    %6977 = vmatprep.subr.bf16.mxu0 %v6315
    %6978 = vmatpush1.bf16.msra.mxu0 %v6314
    %6979 = vmatprep.subr.bf16.mxu0 %v6327
    %6980 = vmatpush1.bf16.msra.mxu0 %v6326
    %6981 = vmatprep.subr.bf16.mxu0 %v6339
    %6982 = vmatpush1.bf16.msra.mxu0 %v6338
    %6983 = vmatprep.subr.bf16.mxu0 %v6351
    %6984 = vmatpush1.bf16.msra.mxu0 %v6350
    %6985 = vmatprep.subr.bf16.mxu0 %v6363
    %6986 = vmatpush1.bf16.msra.mxu0 %v6362
    %6987 = vmatprep.subr.bf16.mxu0 %v6375
    %6988 = vmatpush1.bf16.msra.mxu0 %v6374
    %6989 = vmatprep.subr.bf16.mxu0 %v6387
    %6990 = vmatpush1.bf16.msra.mxu0 %v6386
    %6991 = vmatprep.subr.bf16.mxu0 %v6399
    %6992 = vmatpush1.bf16.msra.mxu0 %v6398
    %6993 = vmatprep.subr.bf16.mxu0 0
    %6994 = vmatpush1.bf16.msra.mxu0 0
    %6995 = vmatprep.subr.bf16.mxu0 0
    %6996 = vmatpush1.bf16.msra.mxu0 0
    %6997 = vmatprep.subr.bf16.mxu0 0
    %6998 = vmatpush1.bf16.msra.mxu0 0
    %6999 = vmatprep.subr.bf16.mxu0 0
    %7000 = vmatpush1.bf16.msra.mxu0 0
    %7001 = vmatprep.subr.bf16.mxu0 0
    %7002 = vmatpush1.bf16.msra.mxu0 0
    %7003 = vmatprep.subr.bf16.mxu0 0
    %7004 = vmatpush1.bf16.msra.mxu0 0
    %7005 = vmatprep.subr.bf16.mxu0 0
    %7006 = vmatpush1.bf16.msra.mxu0 0
    %7007 = vmatprep.subr.bf16.mxu0 0
    %7008 = vmatpush1.bf16.msra.mxu0 0
    %7009 = vmatprep.mubr.bf16.mxu0 0
    %7010 = vmatmul.mubr.bf16.gmra.mrb[0].mxu0 %v6102
    %v7011 = vpop.f32.mrb[0].mxu0
    %v7012 = vadd.f32 %v6939, %v7011
    %v7013 = vpop.f32.mrb[0].mxu0
    %v7014 = vadd.f32 %v6941, %v7013
    %v7015 = vpop.f32.mrb[0].mxu0
    %v7016 = vadd.f32 %v6943, %v7015
    %v7017 = vpop.f32.mrb[0].mxu0
    %v7018 = vadd.f32 %v6945, %v7017
    %7019 = vmatprep.mubr.bf16.mxu0 0
    %7020 = vmatmul.mubr.bf16.gmra.mrb[0].mxu0 %v6105
    %v7021 = vpop.f32.mrb[0].mxu0
    %v7022 = vadd.f32 %v6949, %v7021
    %v7023 = vpop.f32.mrb[0].mxu0
    %v7024 = vadd.f32 %v6951, %v7023
    %v7025 = vpop.f32.mrb[0].mxu0
    %v7026 = vadd.f32 %v6953, %v7025
    %v7027 = vpop.f32.mrb[0].mxu0
    %v7028 = vadd.f32 %v6955, %v7027
    %7029 = vmatprep.mubr.bf16.mxu0 0
    %7030 = vmatmul.mubr.bf16.gmra.mrb[0].mxu0 %v6108
    %v7031 = vpop.f32.mrb[0].mxu0
    %v7032 = vadd.f32 %v6959, %v7031
    %v7033 = vpop.f32.mrb[0].mxu0
    %v7034 = vadd.f32 %v6961, %v7033
    %v7035 = vpop.f32.mrb[0].mxu0
    %v7036 = vadd.f32 %v6963, %v7035
    %v7037 = vpop.f32.mrb[0].mxu0
    %v7038 = vadd.f32 %v6965, %v7037
    %7039 = vmatprep.mubr.bf16.mxu0 0
    %7040 = vmatmul.mubr.bf16.gmra.mrb[0].mxu0 %v6111
    %v7041 = vpop.f32.mrb[0].mxu0
    %v7042 = vadd.f32 %v6969, %v7041
    %v7043 = vpop.f32.mrb[0].mxu0
    %v7044 = vadd.f32 %v6971, %v7043
    %v7045 = vpop.f32.mrb[0].mxu0
    %v7046 = vadd.f32 %v6973, %v7045
    %v7047 = vpop.f32.mrb[0].mxu0
    %v7048 = vadd.f32 %v6975, %v7047
    %7049 = vdwg.mxu0
    %7050 = vmatprep.subr.bf16.mxu0 %v6125
    %7051 = vmatpush1.bf16.msra.mxu0 %v6124
    %7052 = vmatprep.subr.bf16.mxu0 %v6137
    %7053 = vmatpush1.bf16.msra.mxu0 %v6136
    %7054 = vmatprep.subr.bf16.mxu0 %v6149
    %7055 = vmatpush1.bf16.msra.mxu0 %v6148
    %7056 = vmatprep.subr.bf16.mxu0 %v6161
    %7057 = vmatpush1.bf16.msra.mxu0 %v6160
    %7058 = vmatprep.subr.bf16.mxu0 %v6173
    %7059 = vmatpush1.bf16.msra.mxu0 %v6172
    %7060 = vmatprep.subr.bf16.mxu0 %v6185
    %7061 = vmatpush1.bf16.msra.mxu0 %v6184
    %7062 = vmatprep.subr.bf16.mxu0 %v6197
    %7063 = vmatpush1.bf16.msra.mxu0 %v6196
    %7064 = vmatprep.subr.bf16.mxu0 %v6209
    %7065 = vmatpush1.bf16.msra.mxu0 %v6208
    %7066 = vmatprep.subr.bf16.mxu0 %v6221
    %7067 = vmatpush1.bf16.msra.mxu0 %v6220
    %7068 = vmatprep.subr.bf16.mxu0 %v6233
    %7069 = vmatpush1.bf16.msra.mxu0 %v6232
    %7070 = vmatprep.subr.bf16.mxu0 %v6245
    %7071 = vmatpush1.bf16.msra.mxu0 %v6244
    %7072 = vmatprep.subr.bf16.mxu0 %v6257
    %7073 = vmatpush1.bf16.msra.mxu0 %v6256
    %7074 = vmatprep.subr.bf16.mxu0 %v6269
    %7075 = vmatpush1.bf16.msra.mxu0 %v6268
    %7076 = vmatprep.subr.bf16.mxu0 %v6281
    %7077 = vmatpush1.bf16.msra.mxu0 %v6280
    %7078 = vmatprep.subr.bf16.mxu0 %v6293
    %7079 = vmatpush1.bf16.msra.mxu0 %v6292
    %7080 = vmatprep.subr.bf16.mxu0 %v6305
    %7081 = vmatpush1.bf16.msra.mxu0 %v6304
    %7082 = vmatprep.mubr.bf16.mxu0 %v6101
    %7083 = vmatmul.mubr.bf16.gmra.mrb[0].mxu0 %v6100
    %v7084 = vpop.f32.mrb[0].mxu0
    %v7085 = vadd.f32 %v6441, %v7084
    %v7086 = vpop.f32.mrb[0].mxu0
    %v7087 = vadd.f32 %v6445, %v7086
    %v7088 = vpop.f32.mrb[0].mxu0
    %v7089 = vadd.f32 %v6441, %v7088
    %v7090 = vpop.f32.mrb[0].mxu0
    %v7091 = vadd.f32 %v6445, %v7090
    %7092 = vmatprep.mubr.bf16.mxu0 %v6104
    %7093 = vmatmul.mubr.bf16.gmra.mrb[0].mxu0 %v6103
    %v7094 = vpop.f32.mrb[0].mxu0
    %v7095 = vadd.f32 %v6441, %v7094
    %v7096 = vpop.f32.mrb[0].mxu0
    %v7097 = vadd.f32 %v6445, %v7096
    %v7098 = vpop.f32.mrb[0].mxu0
    %v7099 = vadd.f32 %v6441, %v7098
    %v7100 = vpop.f32.mrb[0].mxu0
    %v7101 = vadd.f32 %v6445, %v7100
    %7102 = vmatprep.mubr.bf16.mxu0 %v6107
    %7103 = vmatmul.mubr.bf16.gmra.mrb[0].mxu0 %v6106
    %v7104 = vpop.f32.mrb[0].mxu0
    %v7105 = vadd.f32 %v6441, %v7104
    %v7106 = vpop.f32.mrb[0].mxu0
    %v7107 = vadd.f32 %v6445, %v7106
    %v7108 = vpop.f32.mrb[0].mxu0
    %v7109 = vadd.f32 %v6441, %v7108
    %v7110 = vpop.f32.mrb[0].mxu0
    %v7111 = vadd.f32 %v6445, %v7110
    %7112 = vmatprep.mubr.bf16.mxu0 %v6110
    %7113 = vmatmul.mubr.bf16.gmra.mrb[0].mxu0 %v6109
    %v7114 = vpop.f32.mrb[0].mxu0
    %v7115 = vadd.f32 %v6441, %v7114
    %v7116 = vpop.f32.mrb[0].mxu0
    %v7117 = vadd.f32 %v6445, %v7116
    %v7118 = vpop.f32.mrb[0].mxu0
    %v7119 = vadd.f32 %v6441, %v7118
    %v7120 = vpop.f32.mrb[0].mxu0
    %v7121 = vadd.f32 %v6445, %v7120
    %7122 = vdwg.mxu0
    %7123 = vmatprep.subr.bf16.mxu0 %v6317
    %7124 = vmatpush1.bf16.msra.mxu0 %v6316
    %7125 = vmatprep.subr.bf16.mxu0 %v6329
    %7126 = vmatpush1.bf16.msra.mxu0 %v6328
    %7127 = vmatprep.subr.bf16.mxu0 %v6341
    %7128 = vmatpush1.bf16.msra.mxu0 %v6340
    %7129 = vmatprep.subr.bf16.mxu0 %v6353
    %7130 = vmatpush1.bf16.msra.mxu0 %v6352
    %7131 = vmatprep.subr.bf16.mxu0 %v6365
    %7132 = vmatpush1.bf16.msra.mxu0 %v6364
    %7133 = vmatprep.subr.bf16.mxu0 %v6377
    %7134 = vmatpush1.bf16.msra.mxu0 %v6376
    %7135 = vmatprep.subr.bf16.mxu0 %v6389
    %7136 = vmatpush1.bf16.msra.mxu0 %v6388
    %7137 = vmatprep.subr.bf16.mxu0 %v6401
    %7138 = vmatpush1.bf16.msra.mxu0 %v6400
    %7139 = vmatprep.subr.bf16.mxu0 0
    %7140 = vmatpush1.bf16.msra.mxu0 0
    %7141 = vmatprep.subr.bf16.mxu0 0
    %7142 = vmatpush1.bf16.msra.mxu0 0
    %7143 = vmatprep.subr.bf16.mxu0 0
    %7144 = vmatpush1.bf16.msra.mxu0 0
    %7145 = vmatprep.subr.bf16.mxu0 0
    %7146 = vmatpush1.bf16.msra.mxu0 0
    %7147 = vmatprep.subr.bf16.mxu0 0
    %7148 = vmatpush1.bf16.msra.mxu0 0
    %7149 = vmatprep.subr.bf16.mxu0 0
    %7150 = vmatpush1.bf16.msra.mxu0 0
    %7151 = vmatprep.subr.bf16.mxu0 0
    %7152 = vmatpush1.bf16.msra.mxu0 0
    %7153 = vmatprep.subr.bf16.mxu0 0
    %7154 = vmatpush1.bf16.msra.mxu0 0
    %7155 = vmatprep.mubr.bf16.mxu0 0
    %7156 = vmatmul.mubr.bf16.gmra.mrb[0].mxu0 %v6102
    %v7157 = vpop.f32.mrb[0].mxu0
    %v7158 = vadd.f32 %v7085, %v7157
    %v7159 = vpop.f32.mrb[0].mxu0
    %v7160 = vadd.f32 %v7087, %v7159
    %v7161 = vpop.f32.mrb[0].mxu0
    %v7162 = vadd.f32 %v7089, %v7161
    %v7163 = vpop.f32.mrb[0].mxu0
    %v7164 = vadd.f32 %v7091, %v7163
    %7165 = vmatprep.mubr.bf16.mxu0 0
    %7166 = vmatmul.mubr.bf16.gmra.mrb[0].mxu0 %v6105
    %v7167 = vpop.f32.mrb[0].mxu0
    %v7168 = vadd.f32 %v7095, %v7167
    %v7169 = vpop.f32.mrb[0].mxu0
    %v7170 = vadd.f32 %v7097, %v7169
    %v7171 = vpop.f32.mrb[0].mxu0
    %v7172 = vadd.f32 %v7099, %v7171
    %v7173 = vpop.f32.mrb[0].mxu0
    %v7174 = vadd.f32 %v7101, %v7173
    %7175 = vmatprep.mubr.bf16.mxu0 0
    %7176 = vmatmul.mubr.bf16.gmra.mrb[0].mxu0 %v6108
    %v7177 = vpop.f32.mrb[0].mxu0
    %v7178 = vadd.f32 %v7105, %v7177
    %v7179 = vpop.f32.mrb[0].mxu0
    %v7180 = vadd.f32 %v7107, %v7179
    %v7181 = vpop.f32.mrb[0].mxu0
    %v7182 = vadd.f32 %v7109, %v7181
    %v7183 = vpop.f32.mrb[0].mxu0
    %v7184 = vadd.f32 %v7111, %v7183
    %7185 = vmatprep.mubr.bf16.mxu0 0
    %7186 = vmatmul.mubr.bf16.gmra.mrb[0].mxu0 %v6111
    %v7187 = vpop.f32.mrb[0].mxu0
    %v7188 = vadd.f32 %v7115, %v7187
    %v7189 = vpop.f32.mrb[0].mxu0
    %v7190 = vadd.f32 %v7117, %v7189
    %v7191 = vpop.f32.mrb[0].mxu0
    %v7192 = vadd.f32 %v7119, %v7191
    %v7193 = vpop.f32.mrb[0].mxu0
    %v7194 = vadd.f32 %v7121, %v7193
    %7195 = vdwg.mxu0
    %7196 = vmatprep.subr.bf16.mxu0 %v6127
    %7197 = vmatpush1.bf16.msra.mxu0 %v6126
    %7198 = vmatprep.subr.bf16.mxu0 %v6139
    %7199 = vmatpush1.bf16.msra.mxu0 %v6138
    %7200 = vmatprep.subr.bf16.mxu0 %v6151
    %7201 = vmatpush1.bf16.msra.mxu0 %v6150
    %7202 = vmatprep.subr.bf16.mxu0 %v6163
    %7203 = vmatpush1.bf16.msra.mxu0 %v6162
    %7204 = vmatprep.subr.bf16.mxu0 %v6175
    %7205 = vmatpush1.bf16.msra.mxu0 %v6174
    %7206 = vmatprep.subr.bf16.mxu0 %v6187
    %7207 = vmatpush1.bf16.msra.mxu0 %v6186
    %7208 = vmatprep.subr.bf16.mxu0 %v6199
    %7209 = vmatpush1.bf16.msra.mxu0 %v6198
    %7210 = vmatprep.subr.bf16.mxu0 %v6211
    %7211 = vmatpush1.bf16.msra.mxu0 %v6210
    %7212 = vmatprep.subr.bf16.mxu0 %v6223
    %7213 = vmatpush1.bf16.msra.mxu0 %v6222
    %7214 = vmatprep.subr.bf16.mxu0 %v6235
    %7215 = vmatpush1.bf16.msra.mxu0 %v6234
    %7216 = vmatprep.subr.bf16.mxu0 %v6247
    %7217 = vmatpush1.bf16.msra.mxu0 %v6246
    %7218 = vmatprep.subr.bf16.mxu0 %v6259
    %7219 = vmatpush1.bf16.msra.mxu0 %v6258
    %7220 = vmatprep.subr.bf16.mxu0 %v6271
    %7221 = vmatpush1.bf16.msra.mxu0 %v6270
    %7222 = vmatprep.subr.bf16.mxu0 %v6283
    %7223 = vmatpush1.bf16.msra.mxu0 %v6282
    %7224 = vmatprep.subr.bf16.mxu0 %v6295
    %7225 = vmatpush1.bf16.msra.mxu0 %v6294
    %7226 = vmatprep.subr.bf16.mxu0 %v6307
    %7227 = vmatpush1.bf16.msra.mxu0 %v6306
    %7228 = vmatprep.mubr.bf16.mxu0 %v6101
    %7229 = vmatmul.mubr.bf16.gmra.mrb[0].mxu0 %v6100
    %v7230 = vpop.f32.mrb[0].mxu0
    %v7231 = vadd.f32 %v6449, %v7230
    %v7232 = vpop.f32.mrb[0].mxu0
    %v7233 = vadd.f32 %v6453, %v7232
    %v7234 = vpop.f32.mrb[0].mxu0
    %v7235 = vadd.f32 %v6449, %v7234
    %v7236 = vpop.f32.mrb[0].mxu0
    %v7237 = vadd.f32 %v6453, %v7236
    %7238 = vmatprep.mubr.bf16.mxu0 %v6104
    %7239 = vmatmul.mubr.bf16.gmra.mrb[0].mxu0 %v6103
    %v7240 = vpop.f32.mrb[0].mxu0
    %v7241 = vadd.f32 %v6449, %v7240
    %v7242 = vpop.f32.mrb[0].mxu0
    %v7243 = vadd.f32 %v6453, %v7242
    %v7244 = vpop.f32.mrb[0].mxu0
    %v7245 = vadd.f32 %v6449, %v7244
    %v7246 = vpop.f32.mrb[0].mxu0
    %v7247 = vadd.f32 %v6453, %v7246
    %7248 = vmatprep.mubr.bf16.mxu0 %v6107
    %7249 = vmatmul.mubr.bf16.gmra.mrb[0].mxu0 %v6106
    %v7250 = vpop.f32.mrb[0].mxu0
    %v7251 = vadd.f32 %v6449, %v7250
    %v7252 = vpop.f32.mrb[0].mxu0
    %v7253 = vadd.f32 %v6453, %v7252
    %v7254 = vpop.f32.mrb[0].mxu0
    %v7255 = vadd.f32 %v6449, %v7254
    %v7256 = vpop.f32.mrb[0].mxu0
    %v7257 = vadd.f32 %v6453, %v7256
    %7258 = vmatprep.mubr.bf16.mxu0 %v6110
    %7259 = vmatmul.mubr.bf16.gmra.mrb[0].mxu0 %v6109
    %v7260 = vpop.f32.mrb[0].mxu0
    %v7261 = vadd.f32 %v6449, %v7260
    %v7262 = vpop.f32.mrb[0].mxu0
    %v7263 = vadd.f32 %v6453, %v7262
    %v7264 = vpop.f32.mrb[0].mxu0
    %v7265 = vadd.f32 %v6449, %v7264
    %v7266 = vpop.f32.mrb[0].mxu0
    %v7267 = vadd.f32 %v6453, %v7266
    %7268 = vdwg.mxu0
    %7269 = vmatprep.subr.bf16.mxu0 %v6319
    %7270 = vmatpush1.bf16.msra.mxu0 %v6318
    %7271 = vmatprep.subr.bf16.mxu0 %v6331
    %7272 = vmatpush1.bf16.msra.mxu0 %v6330
    %7273 = vmatprep.subr.bf16.mxu0 %v6343
    %7274 = vmatpush1.bf16.msra.mxu0 %v6342
    %7275 = vmatprep.subr.bf16.mxu0 %v6355
    %7276 = vmatpush1.bf16.msra.mxu0 %v6354
    %7277 = vmatprep.subr.bf16.mxu0 %v6367
    %7278 = vmatpush1.bf16.msra.mxu0 %v6366
    %7279 = vmatprep.subr.bf16.mxu0 %v6379
    %7280 = vmatpush1.bf16.msra.mxu0 %v6378
    %7281 = vmatprep.subr.bf16.mxu0 %v6391
    %7282 = vmatpush1.bf16.msra.mxu0 %v6390
    %7283 = vmatprep.subr.bf16.mxu0 %v6403
    %7284 = vmatpush1.bf16.msra.mxu0 %v6402
    %7285 = vmatprep.subr.bf16.mxu0 0
    %7286 = vmatpush1.bf16.msra.mxu0 0
    %7287 = vmatprep.subr.bf16.mxu0 0
    %7288 = vmatpush1.bf16.msra.mxu0 0
    %7289 = vmatprep.subr.bf16.mxu0 0
    %7290 = vmatpush1.bf16.msra.mxu0 0
    %7291 = vmatprep.subr.bf16.mxu0 0
    %7292 = vmatpush1.bf16.msra.mxu0 0
    %7293 = vmatprep.subr.bf16.mxu0 0
    %7294 = vmatpush1.bf16.msra.mxu0 0
    %7295 = vmatprep.subr.bf16.mxu0 0
    %7296 = vmatpush1.bf16.msra.mxu0 0
    %7297 = vmatprep.subr.bf16.mxu0 0
    %7298 = vmatpush1.bf16.msra.mxu0 0
    %7299 = vmatprep.subr.bf16.mxu0 0
    %7300 = vmatpush1.bf16.msra.mxu0 0
    %7301 = vmatprep.mubr.bf16.mxu0 0
    %7302 = vmatmul.mubr.bf16.gmra.mrb[0].mxu0 %v6102
    %v7303 = vpop.f32.mrb[0].mxu0
    %v7304 = vadd.f32 %v7231, %v7303
    %v7305 = vpop.f32.mrb[0].mxu0
    %v7306 = vadd.f32 %v7233, %v7305
    %v7307 = vpop.f32.mrb[0].mxu0
    %v7308 = vadd.f32 %v7235, %v7307
    %v7309 = vpop.f32.mrb[0].mxu0
    %v7310 = vadd.f32 %v7237, %v7309
    %7311 = vmatprep.mubr.bf16.mxu0 0
    %7312 = vmatmul.mubr.bf16.gmra.mrb[0].mxu0 %v6105
    %v7313 = vpop.f32.mrb[0].mxu0
    %v7314 = vadd.f32 %v7241, %v7313
    %v7315 = vpop.f32.mrb[0].mxu0
    %v7316 = vadd.f32 %v7243, %v7315
    %v7317 = vpop.f32.mrb[0].mxu0
    %v7318 = vadd.f32 %v7245, %v7317
    %v7319 = vpop.f32.mrb[0].mxu0
    %v7320 = vadd.f32 %v7247, %v7319
    %7321 = vmatprep.mubr.bf16.mxu0 0
    %7322 = vmatmul.mubr.bf16.gmra.mrb[0].mxu0 %v6108
    %v7323 = vpop.f32.mrb[0].mxu0
    %v7324 = vadd.f32 %v7251, %v7323
    %v7325 = vpop.f32.mrb[0].mxu0
    %v7326 = vadd.f32 %v7253, %v7325
    %v7327 = vpop.f32.mrb[0].mxu0
    %v7328 = vadd.f32 %v7255, %v7327
    %v7329 = vpop.f32.mrb[0].mxu0
    %v7330 = vadd.f32 %v7257, %v7329
    %7331 = vmatprep.mubr.bf16.mxu0 0
    %7332 = vmatmul.mubr.bf16.gmra.mrb[0].mxu0 %v6111
    %v7333 = vpop.f32.mrb[0].mxu0
    %v7334 = vadd.f32 %v7261, %v7333
    %v7335 = vpop.f32.mrb[0].mxu0
    %v7336 = vadd.f32 %v7263, %v7335
    %v7337 = vpop.f32.mrb[0].mxu0
    %v7338 = vadd.f32 %v7265, %v7337
    %v7339 = vpop.f32.mrb[0].mxu0
    %v7340 = vadd.f32 %v7267, %v7339
    %7341 = vdwg.mxu0
    %v7342 = vmax.f32 %v6574, 0.0
    %v7343 = vmax.f32 %v6576, 0.0
    %v7344 = vmax.f32 %v6720, 0.0
    %v7345 = vmax.f32 %v6722, 0.0
    %v7346 = vmax.f32 %v6866, 0.0
    %v7347 = vmax.f32 %v6868, 0.0
    %v7348 = vmax.f32 %v7012, 0.0
    %v7349 = vmax.f32 %v7014, 0.0
    %v7350 = vmax.f32 %v7158, 0.0
    %v7351 = vmax.f32 %v7160, 0.0
    %v7352 = vmax.f32 %v7304, 0.0
    %v7353 = vmax.f32 %v7306, 0.0
    %v7354 = vmax.f32 %v6578, 0.0
    %v7355 = vmax.f32 %v6580, 0.0
    %v7356 = vmax.f32 %v6724, 0.0
    %v7357 = vmax.f32 %v6726, 0.0
    %v7358 = vmax.f32 %v6870, 0.0
    %v7359 = vmax.f32 %v6872, 0.0
    %v7360 = vmax.f32 %v7016, 0.0
    %v7361 = vmax.f32 %v7018, 0.0
    %v7362 = vmax.f32 %v7162, 0.0
    %v7363 = vmax.f32 %v7164, 0.0
    %v7364 = vmax.f32 %v7308, 0.0
    %v7365 = vmax.f32 %v7310, 0.0
    %v7366 = vmax.f32 %v6584, 0.0
    %v7367 = vmax.f32 %v6586, 0.0
    %v7368 = vmax.f32 %v6730, 0.0
    %v7369 = vmax.f32 %v6732, 0.0
    %v7370 = vmax.f32 %v6876, 0.0
    %v7371 = vmax.f32 %v6878, 0.0
    %v7372 = vmax.f32 %v7022, 0.0
    %v7373 = vmax.f32 %v7024, 0.0
    %v7374 = vmax.f32 %v7168, 0.0
    %v7375 = vmax.f32 %v7170, 0.0
    %v7376 = vmax.f32 %v7314, 0.0
    %v7377 = vmax.f32 %v7316, 0.0
    %v7378 = vmax.f32 %v6588, 0.0
    %v7379 = vmax.f32 %v6590, 0.0
    %v7380 = vmax.f32 %v6734, 0.0
    %v7381 = vmax.f32 %v6736, 0.0
    %v7382 = vmax.f32 %v6880, 0.0
    %v7383 = vmax.f32 %v6882, 0.0
    %v7384 = vmax.f32 %v7026, 0.0
    %v7385 = vmax.f32 %v7028, 0.0
    %v7386 = vmax.f32 %v7172, 0.0
    %v7387 = vmax.f32 %v7174, 0.0
    %v7388 = vmax.f32 %v7318, 0.0
    %v7389 = vmax.f32 %v7320, 0.0
    %v7390 = vmax.f32 %v6594, 0.0
    %v7391 = vmax.f32 %v6596, 0.0
    %v7392 = vmax.f32 %v6740, 0.0
    %v7393 = vmax.f32 %v6742, 0.0
    %v7394 = vmax.f32 %v6886, 0.0
    %v7395 = vmax.f32 %v6888, 0.0
    %v7396 = vmax.f32 %v7032, 0.0
    %v7397 = vmax.f32 %v7034, 0.0
    %v7398 = vmax.f32 %v7178, 0.0
    %v7399 = vmax.f32 %v7180, 0.0
    %v7400 = vmax.f32 %v7324, 0.0
    %v7401 = vmax.f32 %v7326, 0.0
    %v7402 = vmax.f32 %v6598, 0.0
    %v7403 = vmax.f32 %v6600, 0.0
    %v7404 = vmax.f32 %v6744, 0.0
    %v7405 = vmax.f32 %v6746, 0.0
    %v7406 = vmax.f32 %v6890, 0.0
    %v7407 = vmax.f32 %v6892, 0.0
    %v7408 = vmax.f32 %v7036, 0.0
    %v7409 = vmax.f32 %v7038, 0.0
    %v7410 = vmax.f32 %v7182, 0.0
    %v7411 = vmax.f32 %v7184, 0.0
    %v7412 = vmax.f32 %v7328, 0.0
    %v7413 = vmax.f32 %v7330, 0.0
    %v7414 = vmax.f32 %v6604, 0.0
    %v7415 = vmax.f32 %v6606, 0.0
    %v7416 = vmax.f32 %v6750, 0.0
    %v7417 = vmax.f32 %v6752, 0.0
    %v7418 = vmax.f32 %v6896, 0.0
    %v7419 = vmax.f32 %v6898, 0.0
    %v7420 = vmax.f32 %v7042, 0.0
    %v7421 = vmax.f32 %v7044, 0.0
    %v7422 = vmax.f32 %v7188, 0.0
    %v7423 = vmax.f32 %v7190, 0.0
    %v7424 = vmax.f32 %v7334, 0.0
    %v7425 = vmax.f32 %v7336, 0.0
    %v7426 = vmax.f32 %v6608, 0.0
    %v7427 = vmax.f32 %v6610, 0.0
    %v7428 = vmax.f32 %v6754, 0.0
    %v7429 = vmax.f32 %v6756, 0.0
    %v7430 = vmax.f32 %v6900, 0.0
    %v7431 = vmax.f32 %v6902, 0.0
    %v7432 = vmax.f32 %v7046, 0.0
    %v7433 = vmax.f32 %v7048, 0.0
    %v7434 = vmax.f32 %v7192, 0.0
    %v7435 = vmax.f32 %v7194, 0.0
    %v7436 = vmax.f32 %v7338, 0.0
    %v7437 = vmax.f32 %v7340, 0.0
    %s7438 = smul.u32 4, 192
    %s7439 = smul.u32 %s7438, 3
    %s7440 = sshll.u32 %s7439, 4
    %7441 = dma.done %s142, %s7440
    %v7442 = vpack.c.bf16 %v7354, %v7342
    %v7443 = vpack.c.bf16 %v7355, %v7343
    %v7444 = vpack.c.bf16 %v7356, %v7344
    %v7445 = vpack.c.bf16 %v7357, %v7345
    %v7446 = vpack.c.bf16 %v7358, %v7346
    %v7447 = vpack.c.bf16 %v7359, %v7347
    %v7448 = vpack.c.bf16 %v7360, %v7348
    %v7449 = vpack.c.bf16 %v7361, %v7349
    %v7450 = vpack.c.bf16 %v7362, %v7350
    %v7451 = vpack.c.bf16 %v7363, %v7351
    %v7452 = vpack.c.bf16 %v7364, %v7352
    %v7453 = vpack.c.bf16 %v7365, %v7353
    %v7454 = vpack.c.bf16 %v7378, %v7366
    %v7455 = vpack.c.bf16 %v7379, %v7367
    %v7456 = vpack.c.bf16 %v7380, %v7368
    %v7457 = vpack.c.bf16 %v7381, %v7369
    %v7458 = vpack.c.bf16 %v7382, %v7370
    %v7459 = vpack.c.bf16 %v7383, %v7371
    %v7460 = vpack.c.bf16 %v7384, %v7372
    %v7461 = vpack.c.bf16 %v7385, %v7373
    %v7462 = vpack.c.bf16 %v7386, %v7374
    %v7463 = vpack.c.bf16 %v7387, %v7375
    %v7464 = vpack.c.bf16 %v7388, %v7376
    %v7465 = vpack.c.bf16 %v7389, %v7377
    %v7466 = vpack.c.bf16 %v7402, %v7390
    %v7467 = vpack.c.bf16 %v7403, %v7391
    %v7468 = vpack.c.bf16 %v7404, %v7392
    %v7469 = vpack.c.bf16 %v7405, %v7393
    %v7470 = vpack.c.bf16 %v7406, %v7394
    %v7471 = vpack.c.bf16 %v7407, %v7395
    %v7472 = vpack.c.bf16 %v7408, %v7396
    %v7473 = vpack.c.bf16 %v7409, %v7397
    %v7474 = vpack.c.bf16 %v7410, %v7398
    %v7475 = vpack.c.bf16 %v7411, %v7399
    %v7476 = vpack.c.bf16 %v7412, %v7400
    %v7477 = vpack.c.bf16 %v7413, %v7401
    %v7478 = vpack.c.bf16 %v7426, %v7414
    %v7479 = vpack.c.bf16 %v7427, %v7415
    %v7480 = vpack.c.bf16 %v7428, %v7416
    %v7481 = vpack.c.bf16 %v7429, %v7417
    %v7482 = vpack.c.bf16 %v7430, %v7418
    %v7483 = vpack.c.bf16 %v7431, %v7419
    %v7484 = vpack.c.bf16 %v7432, %v7420
    %v7485 = vpack.c.bf16 %v7433, %v7421
    %v7486 = vpack.c.bf16 %v7434, %v7422
    %v7487 = vpack.c.bf16 %v7435, %v7423
    %v7488 = vpack.c.bf16 %v7436, %v7424
    %v7489 = vpack.c.bf16 %v7437, %v7425
    %v7490 = vld [vmem:[#allocation3] sm:$0xff]
    %v7491 = vld [vmem:[#allocation3 + $0x8] sm:$0xff]
    %v7492 = vld [vmem:[#allocation3 + $0x10] sm:$0xff]
    %v7493 = vld [vmem:[#allocation3 + $0x18] sm:$0xff]
    %v7494 = vld [vmem:[#allocation3 + $0x20] sm:$0xff]
    %v7495 = vld [vmem:[#allocation3 + $0x28] sm:$0xff]
    %v7496 = vld [vmem:[#allocation3 + $0x30] sm:$0xff]
    %v7497 = vld [vmem:[#allocation3 + $0x38] sm:$0xff]
    %v7498 = vld [vmem:[#allocation3 + $0x40] sm:$0xff]
    %v7499 = vld [vmem:[#allocation3 + $0x48] sm:$0xff]
    %v7500 = vld [vmem:[#allocation3 + $0x50] sm:$0xff]
    %v7501 = vld [vmem:[#allocation3 + $0x58] sm:$0xff]
    %v7502 = vld [vmem:[#allocation3 + $0x60] sm:$0xff]
    %v7503 = vld [vmem:[#allocation3 + $0x68] sm:$0xff]
    %v7504 = vld [vmem:[#allocation3 + $0x70] sm:$0xff]
    %v7505 = vld [vmem:[#allocation3 + $0x78] sm:$0xff]
    %v7506 = vld [vmem:[#allocation3 + $0x80] sm:$0xff]
    %v7507 = vld [vmem:[#allocation3 + $0x88] sm:$0xff]
    %v7508 = vld [vmem:[#allocation3 + $0x90] sm:$0xff]
    %v7509 = vld [vmem:[#allocation3 + $0x98] sm:$0xff]
    %v7510 = vld [vmem:[#allocation3 + $0xa0] sm:$0xff]
    %v7511 = vld [vmem:[#allocation3 + $0xa8] sm:$0xff]
    %v7512 = vld [vmem:[#allocation3 + $0xb0] sm:$0xff]
    %v7513 = vld [vmem:[#allocation3 + $0xb8] sm:$0xff]
    %v7514 = vld [vmem:[#allocation3 + $0xc0] sm:$0xff]
    %v7515 = vld [vmem:[#allocation3 + $0xc8] sm:$0xff]
    %v7516 = vld [vmem:[#allocation3 + $0xd0] sm:$0xff]
    %v7517 = vld [vmem:[#allocation3 + $0xd8] sm:$0xff]
    %v7518 = vld [vmem:[#allocation3 + $0xe0] sm:$0xff]
    %v7519 = vld [vmem:[#allocation3 + $0xe8] sm:$0xff]
    %v7520 = vld [vmem:[#allocation3 + $0xf0] sm:$0xff]
    %v7521 = vld [vmem:[#allocation3 + $0xf8] sm:$0xff]
    %v7522 = vld [vmem:[#allocation3 + $0x100] sm:$0xff]
    %v7523 = vld [vmem:[#allocation3 + $0x108] sm:$0xff]
    %v7524 = vld [vmem:[#allocation3 + $0x110] sm:$0xff]
    %v7525 = vld [vmem:[#allocation3 + $0x118] sm:$0xff]
    %v7526 = vld [vmem:[#allocation3 + $0x120] sm:$0xff]
    %v7527 = vld [vmem:[#allocation3 + $0x128] sm:$0xff]
    %v7528 = vld [vmem:[#allocation3 + $0x130] sm:$0xff]
    %v7529 = vld [vmem:[#allocation3 + $0x138] sm:$0xff]
    %v7530 = vld [vmem:[#allocation3 + $0x140] sm:$0xff]
    %v7531 = vld [vmem:[#allocation3 + $0x148] sm:$0xff]
    %v7532 = vld [vmem:[#allocation3 + $0x150] sm:$0xff]
    %v7533 = vld [vmem:[#allocation3 + $0x158] sm:$0xff]
    %v7534 = vld [vmem:[#allocation3 + $0x160] sm:$0xff]
    %v7535 = vld [vmem:[#allocation3 + $0x168] sm:$0xff]
    %v7536 = vld [vmem:[#allocation3 + $0x170] sm:$0xff]
    %v7537 = vld [vmem:[#allocation3 + $0x178] sm:$0xff]
    %v7538 = vld [vmem:[#allocation3 + $0x180] sm:$0xff]
    %v7539 = vld [vmem:[#allocation3 + $0x188] sm:$0xff]
    %v7540 = vld [vmem:[#allocation3 + $0x190] sm:$0xff]
    %v7541 = vld [vmem:[#allocation3 + $0x198] sm:$0xff]
    %v7542 = vld [vmem:[#allocation3 + $0x1a0] sm:$0xff]
    %v7543 = vld [vmem:[#allocation3 + $0x1a8] sm:$0xff]
    %v7544 = vld [vmem:[#allocation3 + $0x1b0] sm:$0xff]
    %v7545 = vld [vmem:[#allocation3 + $0x1b8] sm:$0xff]
    %v7546 = vld [vmem:[#allocation3 + $0x1c0] sm:$0xff]
    %v7547 = vld [vmem:[#allocation3 + $0x1c8] sm:$0xff]
    %v7548 = vld [vmem:[#allocation3 + $0x1d0] sm:$0xff]
    %v7549 = vld [vmem:[#allocation3 + $0x1d8] sm:$0xff]
    %v7550 = vld [vmem:[#allocation3 + $0x1e0] sm:$0xff]
    %v7551 = vld [vmem:[#allocation3 + $0x1e8] sm:$0xff]
    %v7552 = vld [vmem:[#allocation3 + $0x1f0] sm:$0xff]
    %v7553 = vld [vmem:[#allocation3 + $0x1f8] sm:$0xff]
    %v7554 = vld [vmem:[#allocation3 + $0x200] sm:$0xff]
    %v7555 = vld [vmem:[#allocation3 + $0x208] sm:$0xff]
    %v7556 = vld [vmem:[#allocation3 + $0x210] sm:$0xff]
    %v7557 = vld [vmem:[#allocation3 + $0x218] sm:$0xff]
    %v7558 = vld [vmem:[#allocation3 + $0x220] sm:$0xff]
    %v7559 = vld [vmem:[#allocation3 + $0x228] sm:$0xff]
    %v7560 = vld [vmem:[#allocation3 + $0x230] sm:$0xff]
    %v7561 = vld [vmem:[#allocation3 + $0x238] sm:$0xff]
    %v7562 = vld [vmem:[#allocation3 + $0x240] sm:$0xff]
    %v7563 = vld [vmem:[#allocation3 + $0x248] sm:$0xff]
    %v7564 = vld [vmem:[#allocation3 + $0x250] sm:$0xff]
    %v7565 = vld [vmem:[#allocation3 + $0x258] sm:$0xff]
    %v7566 = vld [vmem:[#allocation3 + $0x260] sm:$0xff]
    %v7567 = vld [vmem:[#allocation3 + $0x268] sm:$0xff]
    %v7568 = vld [vmem:[#allocation3 + $0x270] sm:$0xff]
    %v7569 = vld [vmem:[#allocation3 + $0x278] sm:$0xff]
    %v7570 = vld [vmem:[#allocation3 + $0x280] sm:$0xff]
    %v7571 = vld [vmem:[#allocation3 + $0x288] sm:$0xff]
    %v7572 = vld [vmem:[#allocation3 + $0x290] sm:$0xff]
    %v7573 = vld [vmem:[#allocation3 + $0x298] sm:$0xff]
    %v7574 = vld [vmem:[#allocation3 + $0x2a0] sm:$0xff]
    %v7575 = vld [vmem:[#allocation3 + $0x2a8] sm:$0xff]
    %v7576 = vld [vmem:[#allocation3 + $0x2b0] sm:$0xff]
    %v7577 = vld [vmem:[#allocation3 + $0x2b8] sm:$0xff]
    %v7578 = vld [vmem:[#allocation3 + $0x2c0] sm:$0xff]
    %v7579 = vld [vmem:[#allocation3 + $0x2c8] sm:$0xff]
    %v7580 = vld [vmem:[#allocation3 + $0x2d0] sm:$0xff]
    %v7581 = vld [vmem:[#allocation3 + $0x2d8] sm:$0xff]
    %v7582 = vld [vmem:[#allocation3 + $0x2e0] sm:$0xff]
    %v7583 = vld [vmem:[#allocation3 + $0x2e8] sm:$0xff]
    %v7584 = vld [vmem:[#allocation3 + $0x2f0] sm:$0xff]
    %v7585 = vld [vmem:[#allocation3 + $0x2f8] sm:$0xff]
    %v7586 = vld [vmem:[#allocation3 + $0x300] sm:$0xff]
    %v7587 = vld [vmem:[#allocation3 + $0x308] sm:$0xff]
    %v7588 = vld [vmem:[#allocation3 + $0x310] sm:$0xff]
    %v7589 = vld [vmem:[#allocation3 + $0x318] sm:$0xff]
    %v7590 = vld [vmem:[#allocation3 + $0x320] sm:$0xff]
    %v7591 = vld [vmem:[#allocation3 + $0x328] sm:$0xff]
    %v7592 = vld [vmem:[#allocation3 + $0x330] sm:$0xff]
    %v7593 = vld [vmem:[#allocation3 + $0x338] sm:$0xff]
    %v7594 = vld [vmem:[#allocation3 + $0x340] sm:$0xff]
    %v7595 = vld [vmem:[#allocation3 + $0x348] sm:$0xff]
    %v7596 = vld [vmem:[#allocation3 + $0x350] sm:$0xff]
    %v7597 = vld [vmem:[#allocation3 + $0x358] sm:$0xff]
    %v7598 = vld [vmem:[#allocation3 + $0x360] sm:$0xff]
    %v7599 = vld [vmem:[#allocation3 + $0x368] sm:$0xff]
    %v7600 = vld [vmem:[#allocation3 + $0x370] sm:$0xff]
    %v7601 = vld [vmem:[#allocation3 + $0x378] sm:$0xff]
    %v7602 = vld [vmem:[#allocation3 + $0x380] sm:$0xff]
    %v7603 = vld [vmem:[#allocation3 + $0x388] sm:$0xff]
    %v7604 = vld [vmem:[#allocation3 + $0x390] sm:$0xff]
    %v7605 = vld [vmem:[#allocation3 + $0x398] sm:$0xff]
    %v7606 = vld [vmem:[#allocation3 + $0x3a0] sm:$0xff]
    %v7607 = vld [vmem:[#allocation3 + $0x3a8] sm:$0xff]
    %v7608 = vld [vmem:[#allocation3 + $0x3b0] sm:$0xff]
    %v7609 = vld [vmem:[#allocation3 + $0x3b8] sm:$0xff]
    %v7610 = vld [vmem:[#allocation3 + $0x3c0] sm:$0xff]
    %v7611 = vld [vmem:[#allocation3 + $0x3c8] sm:$0xff]
    %v7612 = vld [vmem:[#allocation3 + $0x3d0] sm:$0xff]
    %v7613 = vld [vmem:[#allocation3 + $0x3d8] sm:$0xff]
    %v7614 = vld [vmem:[#allocation3 + $0x3e0] sm:$0xff]
    %v7615 = vld [vmem:[#allocation3 + $0x3e8] sm:$0xff]
    %v7616 = vld [vmem:[#allocation3 + $0x3f0] sm:$0xff]
    %v7617 = vld [vmem:[#allocation3 + $0x3f8] sm:$0xff]
    %v7618 = vld [vmem:[#allocation3 + $0x400] sm:$0xff]
    %v7619 = vld [vmem:[#allocation3 + $0x408] sm:$0xff]
    %v7620 = vld [vmem:[#allocation3 + $0x410] sm:$0xff]
    %v7621 = vld [vmem:[#allocation3 + $0x418] sm:$0xff]
    %v7622 = vld [vmem:[#allocation3 + $0x420] sm:$0xff]
    %v7623 = vld [vmem:[#allocation3 + $0x428] sm:$0xff]
    %v7624 = vld [vmem:[#allocation3 + $0x430] sm:$0xff]
    %v7625 = vld [vmem:[#allocation3 + $0x438] sm:$0xff]
    %v7626 = vld [vmem:[#allocation3 + $0x440] sm:$0xff]
    %v7627 = vld [vmem:[#allocation3 + $0x448] sm:$0xff]
    %v7628 = vld [vmem:[#allocation3 + $0x450] sm:$0xff]
    %v7629 = vld [vmem:[#allocation3 + $0x458] sm:$0xff]
    %v7630 = vld [vmem:[#allocation3 + $0x460] sm:$0xff]
    %v7631 = vld [vmem:[#allocation3 + $0x468] sm:$0xff]
    %v7632 = vld [vmem:[#allocation3 + $0x470] sm:$0xff]
    %v7633 = vld [vmem:[#allocation3 + $0x478] sm:$0xff]
    %v7634 = vld [vmem:[#allocation3 + $0x480] sm:$0xff]
    %v7635 = vld [vmem:[#allocation3 + $0x488] sm:$0xff]
    %v7636 = vld [vmem:[#allocation3 + $0x490] sm:$0xff]
    %v7637 = vld [vmem:[#allocation3 + $0x498] sm:$0xff]
    %v7638 = vld [vmem:[#allocation3 + $0x4a0] sm:$0xff]
    %v7639 = vld [vmem:[#allocation3 + $0x4a8] sm:$0xff]
    %v7640 = vld [vmem:[#allocation3 + $0x4b0] sm:$0xff]
    %v7641 = vld [vmem:[#allocation3 + $0x4b8] sm:$0xff]
    %v7642 = vld [vmem:[#allocation3 + $0x4c0] sm:$0xff]
    %v7643 = vld [vmem:[#allocation3 + $0x4c8] sm:$0xff]
    %v7644 = vld [vmem:[#allocation3 + $0x4d0] sm:$0xff]
    %v7645 = vld [vmem:[#allocation3 + $0x4d8] sm:$0xff]
    %v7646 = vld [vmem:[#allocation3 + $0x4e0] sm:$0xff]
    %v7647 = vld [vmem:[#allocation3 + $0x4e8] sm:$0xff]
    %v7648 = vld [vmem:[#allocation3 + $0x4f0] sm:$0xff]
    %v7649 = vld [vmem:[#allocation3 + $0x4f8] sm:$0xff]
    %v7650 = vld [vmem:[#allocation3 + $0x500] sm:$0xff]
    %v7651 = vld [vmem:[#allocation3 + $0x508] sm:$0xff]
    %v7652 = vld [vmem:[#allocation3 + $0x510] sm:$0xff]
    %v7653 = vld [vmem:[#allocation3 + $0x518] sm:$0xff]
    %v7654 = vld [vmem:[#allocation3 + $0x520] sm:$0xff]
    %v7655 = vld [vmem:[#allocation3 + $0x528] sm:$0xff]
    %v7656 = vld [vmem:[#allocation3 + $0x530] sm:$0xff]
    %v7657 = vld [vmem:[#allocation3 + $0x538] sm:$0xff]
    %v7658 = vld [vmem:[#allocation3 + $0x540] sm:$0xff]
    %v7659 = vld [vmem:[#allocation3 + $0x548] sm:$0xff]
    %v7660 = vld [vmem:[#allocation3 + $0x550] sm:$0xff]
    %v7661 = vld [vmem:[#allocation3 + $0x558] sm:$0xff]
    %v7662 = vld [vmem:[#allocation3 + $0x560] sm:$0xff]
    %v7663 = vld [vmem:[#allocation3 + $0x568] sm:$0xff]
    %v7664 = vld [vmem:[#allocation3 + $0x570] sm:$0xff]
    %v7665 = vld [vmem:[#allocation3 + $0x578] sm:$0xff]
    %v7666 = vld [vmem:[#allocation3 + $0x580] sm:$0xff]
    %v7667 = vld [vmem:[#allocation3 + $0x588] sm:$0xff]
    %v7668 = vld [vmem:[#allocation3 + $0x590] sm:$0xff]
    %v7669 = vld [vmem:[#allocation3 + $0x598] sm:$0xff]
    %v7670 = vld [vmem:[#allocation3 + $0x5a0] sm:$0xff]
    %v7671 = vld [vmem:[#allocation3 + $0x5a8] sm:$0xff]
    %v7672 = vld [vmem:[#allocation3 + $0x5b0] sm:$0xff]
    %v7673 = vld [vmem:[#allocation3 + $0x5b8] sm:$0xff]
    %v7674 = vld [vmem:[#allocation3 + $0x5c0] sm:$0xff]
    %v7675 = vld [vmem:[#allocation3 + $0x5c8] sm:$0xff]
    %v7676 = vld [vmem:[#allocation3 + $0x5d0] sm:$0xff]
    %v7677 = vld [vmem:[#allocation3 + $0x5d8] sm:$0xff]
    %v7678 = vld [vmem:[#allocation3 + $0x5e0] sm:$0xff]
    %v7679 = vld [vmem:[#allocation3 + $0x5e8] sm:$0xff]
    %v7680 = vld [vmem:[#allocation3 + $0x5f0] sm:$0xff]
    %v7681 = vld [vmem:[#allocation3 + $0x5f8] sm:$0xff]
    %v7682 = vld [vmem:[#allocation3 + $0x600] sm:$0xff]
    %v7683 = vld [vmem:[#allocation3 + $0x608] sm:$0xff]
    %v7684 = vld [vmem:[#allocation3 + $0x610] sm:$0xff]
    %v7685 = vld [vmem:[#allocation3 + $0x618] sm:$0xff]
    %v7686 = vld [vmem:[#allocation3 + $0x620] sm:$0xff]
    %v7687 = vld [vmem:[#allocation3 + $0x628] sm:$0xff]
    %v7688 = vld [vmem:[#allocation3 + $0x630] sm:$0xff]
    %v7689 = vld [vmem:[#allocation3 + $0x638] sm:$0xff]
    %v7690 = vld [vmem:[#allocation3 + $0x640] sm:$0xff]
    %v7691 = vld [vmem:[#allocation3 + $0x648] sm:$0xff]
    %v7692 = vld [vmem:[#allocation3 + $0x650] sm:$0xff]
    %v7693 = vld [vmem:[#allocation3 + $0x658] sm:$0xff]
    %v7694 = vld [vmem:[#allocation3 + $0x660] sm:$0xff]
    %v7695 = vld [vmem:[#allocation3 + $0x668] sm:$0xff]
    %v7696 = vld [vmem:[#allocation3 + $0x670] sm:$0xff]
    %v7697 = vld [vmem:[#allocation3 + $0x678] sm:$0xff]
    %v7698 = vld [vmem:[#allocation3 + $0x680] sm:$0xff]
    %v7699 = vld [vmem:[#allocation3 + $0x688] sm:$0xff]
    %v7700 = vld [vmem:[#allocation3 + $0x690] sm:$0xff]
    %v7701 = vld [vmem:[#allocation3 + $0x698] sm:$0xff]
    %v7702 = vld [vmem:[#allocation3 + $0x6a0] sm:$0xff]
    %v7703 = vld [vmem:[#allocation3 + $0x6a8] sm:$0xff]
    %v7704 = vld [vmem:[#allocation3 + $0x6b0] sm:$0xff]
    %v7705 = vld [vmem:[#allocation3 + $0x6b8] sm:$0xff]
    %v7706 = vld [vmem:[#allocation3 + $0x6c0] sm:$0xff]
    %v7707 = vld [vmem:[#allocation3 + $0x6c8] sm:$0xff]
    %v7708 = vld [vmem:[#allocation3 + $0x6d0] sm:$0xff]
    %v7709 = vld [vmem:[#allocation3 + $0x6d8] sm:$0xff]
    %v7710 = vld [vmem:[#allocation3 + $0x6e0] sm:$0xff]
    %v7711 = vld [vmem:[#allocation3 + $0x6e8] sm:$0xff]
    %v7712 = vld [vmem:[#allocation3 + $0x6f0] sm:$0xff]
    %v7713 = vld [vmem:[#allocation3 + $0x6f8] sm:$0xff]
    %v7714 = vld [vmem:[#allocation3 + $0x700] sm:$0xff]
    %v7715 = vld [vmem:[#allocation3 + $0x708] sm:$0xff]
    %v7716 = vld [vmem:[#allocation3 + $0x710] sm:$0xff]
    %v7717 = vld [vmem:[#allocation3 + $0x718] sm:$0xff]
    %v7718 = vld [vmem:[#allocation3 + $0x720] sm:$0xff]
    %v7719 = vld [vmem:[#allocation3 + $0x728] sm:$0xff]
    %v7720 = vld [vmem:[#allocation3 + $0x730] sm:$0xff]
    %v7721 = vld [vmem:[#allocation3 + $0x738] sm:$0xff]
    %v7722 = vld [vmem:[#allocation3 + $0x740] sm:$0xff]
    %v7723 = vld [vmem:[#allocation3 + $0x748] sm:$0xff]
    %v7724 = vld [vmem:[#allocation3 + $0x750] sm:$0xff]
    %v7725 = vld [vmem:[#allocation3 + $0x758] sm:$0xff]
    %v7726 = vld [vmem:[#allocation3 + $0x760] sm:$0xff]
    %v7727 = vld [vmem:[#allocation3 + $0x768] sm:$0xff]
    %v7728 = vld [vmem:[#allocation3 + $0x770] sm:$0xff]
    %v7729 = vld [vmem:[#allocation3 + $0x778] sm:$0xff]
    %v7730 = vld [vmem:[#allocation3 + $0x780] sm:$0xff]
    %v7731 = vld [vmem:[#allocation3 + $0x788] sm:$0xff]
    %v7732 = vld [vmem:[#allocation3 + $0x790] sm:$0xff]
    %v7733 = vld [vmem:[#allocation3 + $0x798] sm:$0xff]
    %v7734 = vld [vmem:[#allocation3 + $0x7a0] sm:$0xff]
    %v7735 = vld [vmem:[#allocation3 + $0x7a8] sm:$0xff]
    %v7736 = vld [vmem:[#allocation3 + $0x7b0] sm:$0xff]
    %v7737 = vld [vmem:[#allocation3 + $0x7b8] sm:$0xff]
    %v7738 = vld [vmem:[#allocation3 + $0x7c0] sm:$0xff]
    %v7739 = vld [vmem:[#allocation3 + $0x7c8] sm:$0xff]
    %v7740 = vld [vmem:[#allocation3 + $0x7d0] sm:$0xff]
    %v7741 = vld [vmem:[#allocation3 + $0x7d8] sm:$0xff]
    %v7742 = vld [vmem:[#allocation3 + $0x7e0] sm:$0xff]
    %v7743 = vld [vmem:[#allocation3 + $0x7e8] sm:$0xff]
    %v7744 = vld [vmem:[#allocation3 + $0x7f0] sm:$0xff]
    %v7745 = vld [vmem:[#allocation3 + $0x7f8] sm:$0xff]
    %v7746 = vld [vmem:[#allocation3 + $0x800] sm:$0xff]
    %v7747 = vld [vmem:[#allocation3 + $0x808] sm:$0xff]
    %v7748 = vld [vmem:[#allocation3 + $0x810] sm:$0xff]
    %v7749 = vld [vmem:[#allocation3 + $0x818] sm:$0xff]
    %v7750 = vld [vmem:[#allocation3 + $0x820] sm:$0xff]
    %v7751 = vld [vmem:[#allocation3 + $0x828] sm:$0xff]
    %v7752 = vld [vmem:[#allocation3 + $0x830] sm:$0xff]
    %v7753 = vld [vmem:[#allocation3 + $0x838] sm:$0xff]
    %v7754 = vld [vmem:[#allocation3 + $0x840] sm:$0xff]
    %v7755 = vld [vmem:[#allocation3 + $0x848] sm:$0xff]
    %v7756 = vld [vmem:[#allocation3 + $0x850] sm:$0xff]
    %v7757 = vld [vmem:[#allocation3 + $0x858] sm:$0xff]
    %v7758 = vld [vmem:[#allocation3 + $0x860] sm:$0xff]
    %v7759 = vld [vmem:[#allocation3 + $0x868] sm:$0xff]
    %v7760 = vld [vmem:[#allocation3 + $0x870] sm:$0xff]
    %v7761 = vld [vmem:[#allocation3 + $0x878] sm:$0xff]
    %v7762 = vld [vmem:[#allocation3 + $0x880] sm:$0xff]
    %v7763 = vld [vmem:[#allocation3 + $0x888] sm:$0xff]
    %v7764 = vld [vmem:[#allocation3 + $0x890] sm:$0xff]
    %v7765 = vld [vmem:[#allocation3 + $0x898] sm:$0xff]
    %v7766 = vld [vmem:[#allocation3 + $0x8a0] sm:$0xff]
    %v7767 = vld [vmem:[#allocation3 + $0x8a8] sm:$0xff]
    %v7768 = vld [vmem:[#allocation3 + $0x8b0] sm:$0xff]
    %v7769 = vld [vmem:[#allocation3 + $0x8b8] sm:$0xff]
    %v7770 = vld [vmem:[#allocation3 + $0x8c0] sm:$0xff]
    %v7771 = vld [vmem:[#allocation3 + $0x8c8] sm:$0xff]
    %v7772 = vld [vmem:[#allocation3 + $0x8d0] sm:$0xff]
    %v7773 = vld [vmem:[#allocation3 + $0x8d8] sm:$0xff]
    %v7774 = vld [vmem:[#allocation3 + $0x8e0] sm:$0xff]
    %v7775 = vld [vmem:[#allocation3 + $0x8e8] sm:$0xff]
    %v7776 = vld [vmem:[#allocation3 + $0x8f0] sm:$0xff]
    %v7777 = vld [vmem:[#allocation3 + $0x8f8] sm:$0xff]
    %v7779 = vlaneseq
    %v7780 = vshrl.u32 %v7779, 7
    %v7781 = vsub.s32 0, %v7780
    %v7782 = vrot.slane %v211, %v7781
    %v7783 = vlaneseq
    %v7784 = vshrl.u32 %v7783, 7
    %v7785 = vsub.s32 1, %v7784
    %v7786 = vrot.slane %v211, %v7785
    %v7787 = vlaneseq
    %v7788 = vshrl.u32 %v7787, 7
    %v7789 = vsub.s32 2, %v7788
    %v7790 = vrot.slane %v211, %v7789
    %7794 = vmatprep.subr.bf16.mxu0 %v7491
    %7795 = vmatpush1.bf16.msra.mxu0 %v7490
    %7796 = vmatprep.subr.bf16.mxu0 %v7494
    %7797 = vmatpush1.bf16.msra.mxu0 %v7493
    %7798 = vmatprep.subr.bf16.mxu0 %v7497
    %7799 = vmatpush1.bf16.msra.mxu0 %v7496
    %7800 = vmatprep.subr.bf16.mxu0 %v7500
    %7801 = vmatpush1.bf16.msra.mxu0 %v7499
    %7802 = vmatprep.subr.bf16.mxu0 %v7503
    %7803 = vmatpush1.bf16.msra.mxu0 %v7502
    %7804 = vmatprep.subr.bf16.mxu0 %v7506
    %7805 = vmatpush1.bf16.msra.mxu0 %v7505
    %7806 = vmatprep.subr.bf16.mxu0 %v7509
    %7807 = vmatpush1.bf16.msra.mxu0 %v7508
    %7808 = vmatprep.subr.bf16.mxu0 %v7512
    %7809 = vmatpush1.bf16.msra.mxu0 %v7511
    %7810 = vmatprep.subr.bf16.mxu0 %v7515
    %7811 = vmatpush1.bf16.msra.mxu0 %v7514
    %7812 = vmatprep.subr.bf16.mxu0 %v7518
    %7813 = vmatpush1.bf16.msra.mxu0 %v7517
    %7814 = vmatprep.subr.bf16.mxu0 %v7521
    %7815 = vmatpush1.bf16.msra.mxu0 %v7520
    %7816 = vmatprep.subr.bf16.mxu0 %v7524
    %7817 = vmatpush1.bf16.msra.mxu0 %v7523
    %7818 = vmatprep.subr.bf16.mxu0 %v7527
    %7819 = vmatpush1.bf16.msra.mxu0 %v7526
    %7820 = vmatprep.subr.bf16.mxu0 %v7530
    %7821 = vmatpush1.bf16.msra.mxu0 %v7529
    %7822 = vmatprep.subr.bf16.mxu0 %v7533
    %7823 = vmatpush1.bf16.msra.mxu0 %v7532
    %7824 = vmatprep.subr.bf16.mxu0 %v7536
    %7825 = vmatpush1.bf16.msra.mxu0 %v7535
    %7826 = vmatprep.mubr.bf16.mxu0 %v7443
    %7827 = vmatmul.mubr.bf16.gmra.mrb[0].mxu0 %v7442
    %v7828 = vpop.f32.mrb[0].mxu0
    %v7829 = vadd.f32 %v7782, %v7828
    %v7830 = vpop.f32.mrb[0].mxu0
    %v7831 = vadd.f32 %v7786, %v7830
    %v7832 = vpop.f32.mrb[0].mxu0
    %v7833 = vadd.f32 %v7782, %v7832
    %v7834 = vpop.f32.mrb[0].mxu0
    %v7835 = vadd.f32 %v7786, %v7834
    %7836 = vmatprep.mubr.bf16.mxu0 %v7455
    %7837 = vmatmul.mubr.bf16.gmra.mrb[0].mxu0 %v7454
    %v7838 = vpop.f32.mrb[0].mxu0
    %v7839 = vadd.f32 %v7782, %v7838
    %v7840 = vpop.f32.mrb[0].mxu0
    %v7841 = vadd.f32 %v7786, %v7840
    %v7842 = vpop.f32.mrb[0].mxu0
    %v7843 = vadd.f32 %v7782, %v7842
    %v7844 = vpop.f32.mrb[0].mxu0
    %v7845 = vadd.f32 %v7786, %v7844
    %7846 = vmatprep.mubr.bf16.mxu0 %v7467
    %7847 = vmatmul.mubr.bf16.gmra.mrb[0].mxu0 %v7466
    %v7848 = vpop.f32.mrb[0].mxu0
    %v7849 = vadd.f32 %v7782, %v7848
    %v7850 = vpop.f32.mrb[0].mxu0
    %v7851 = vadd.f32 %v7786, %v7850
    %v7852 = vpop.f32.mrb[0].mxu0
    %v7853 = vadd.f32 %v7782, %v7852
    %v7854 = vpop.f32.mrb[0].mxu0
    %v7855 = vadd.f32 %v7786, %v7854
    %7856 = vmatprep.mubr.bf16.mxu0 %v7479
    %7857 = vmatmul.mubr.bf16.gmra.mrb[0].mxu0 %v7478
    %v7858 = vpop.f32.mrb[0].mxu0
    %v7859 = vadd.f32 %v7782, %v7858
    %v7860 = vpop.f32.mrb[0].mxu0
    %v7861 = vadd.f32 %v7786, %v7860
    %v7862 = vpop.f32.mrb[0].mxu0
    %v7863 = vadd.f32 %v7782, %v7862
    %v7864 = vpop.f32.mrb[0].mxu0
    %v7865 = vadd.f32 %v7786, %v7864
    %7866 = vdwg.mxu0
    %7867 = vmatprep.subr.bf16.mxu0 %v7539
    %7868 = vmatpush1.bf16.msra.mxu0 %v7538
    %7869 = vmatprep.subr.bf16.mxu0 %v7542
    %7870 = vmatpush1.bf16.msra.mxu0 %v7541
    %7871 = vmatprep.subr.bf16.mxu0 %v7545
    %7872 = vmatpush1.bf16.msra.mxu0 %v7544
    %7873 = vmatprep.subr.bf16.mxu0 %v7548
    %7874 = vmatpush1.bf16.msra.mxu0 %v7547
    %7875 = vmatprep.subr.bf16.mxu0 %v7551
    %7876 = vmatpush1.bf16.msra.mxu0 %v7550
    %7877 = vmatprep.subr.bf16.mxu0 %v7554
    %7878 = vmatpush1.bf16.msra.mxu0 %v7553
    %7879 = vmatprep.subr.bf16.mxu0 %v7557
    %7880 = vmatpush1.bf16.msra.mxu0 %v7556
    %7881 = vmatprep.subr.bf16.mxu0 %v7560
    %7882 = vmatpush1.bf16.msra.mxu0 %v7559
    %7883 = vmatprep.subr.bf16.mxu0 %v7563
    %7884 = vmatpush1.bf16.msra.mxu0 %v7562
    %7885 = vmatprep.subr.bf16.mxu0 %v7566
    %7886 = vmatpush1.bf16.msra.mxu0 %v7565
    %7887 = vmatprep.subr.bf16.mxu0 %v7569
    %7888 = vmatpush1.bf16.msra.mxu0 %v7568
    %7889 = vmatprep.subr.bf16.mxu0 %v7572
    %7890 = vmatpush1.bf16.msra.mxu0 %v7571
    %7891 = vmatprep.subr.bf16.mxu0 %v7575
    %7892 = vmatpush1.bf16.msra.mxu0 %v7574
    %7893 = vmatprep.subr.bf16.mxu0 %v7578
    %7894 = vmatpush1.bf16.msra.mxu0 %v7577
    %7895 = vmatprep.subr.bf16.mxu0 %v7581
    %7896 = vmatpush1.bf16.msra.mxu0 %v7580
    %7897 = vmatprep.subr.bf16.mxu0 %v7584
    %7898 = vmatpush1.bf16.msra.mxu0 %v7583
    %7899 = vmatprep.mubr.bf16.mxu0 %v7445
    %7900 = vmatmul.mubr.bf16.gmra.mrb[0].mxu0 %v7444
    %v7901 = vpop.f32.mrb[0].mxu0
    %v7902 = vadd.f32 %v7829, %v7901
    %v7903 = vpop.f32.mrb[0].mxu0
    %v7904 = vadd.f32 %v7831, %v7903
    %v7905 = vpop.f32.mrb[0].mxu0
    %v7906 = vadd.f32 %v7833, %v7905
    %v7907 = vpop.f32.mrb[0].mxu0
    %v7908 = vadd.f32 %v7835, %v7907
    %7909 = vmatprep.mubr.bf16.mxu0 %v7457
    %7910 = vmatmul.mubr.bf16.gmra.mrb[0].mxu0 %v7456
    %v7911 = vpop.f32.mrb[0].mxu0
    %v7912 = vadd.f32 %v7839, %v7911
    %v7913 = vpop.f32.mrb[0].mxu0
    %v7914 = vadd.f32 %v7841, %v7913
    %v7915 = vpop.f32.mrb[0].mxu0
    %v7916 = vadd.f32 %v7843, %v7915
    %v7917 = vpop.f32.mrb[0].mxu0
    %v7918 = vadd.f32 %v7845, %v7917
    %7919 = vmatprep.mubr.bf16.mxu0 %v7469
    %7920 = vmatmul.mubr.bf16.gmra.mrb[0].mxu0 %v7468
    %v7921 = vpop.f32.mrb[0].mxu0
    %v7922 = vadd.f32 %v7849, %v7921
    %v7923 = vpop.f32.mrb[0].mxu0
    %v7924 = vadd.f32 %v7851, %v7923
    %v7925 = vpop.f32.mrb[0].mxu0
    %v7926 = vadd.f32 %v7853, %v7925
    %v7927 = vpop.f32.mrb[0].mxu0
    %v7928 = vadd.f32 %v7855, %v7927
    %7929 = vmatprep.mubr.bf16.mxu0 %v7481
    %7930 = vmatmul.mubr.bf16.gmra.mrb[0].mxu0 %v7480
    %v7931 = vpop.f32.mrb[0].mxu0
    %v7932 = vadd.f32 %v7859, %v7931
    %v7933 = vpop.f32.mrb[0].mxu0
    %v7934 = vadd.f32 %v7861, %v7933
    %v7935 = vpop.f32.mrb[0].mxu0
    %v7936 = vadd.f32 %v7863, %v7935
    %v7937 = vpop.f32.mrb[0].mxu0
    %v7938 = vadd.f32 %v7865, %v7937
    %7939 = vdwg.mxu0
    %7940 = vmatprep.subr.bf16.mxu0 %v7587
    %7941 = vmatpush1.bf16.msra.mxu0 %v7586
    %7942 = vmatprep.subr.bf16.mxu0 %v7590
    %7943 = vmatpush1.bf16.msra.mxu0 %v7589
    %7944 = vmatprep.subr.bf16.mxu0 %v7593
    %7945 = vmatpush1.bf16.msra.mxu0 %v7592
    %7946 = vmatprep.subr.bf16.mxu0 %v7596
    %7947 = vmatpush1.bf16.msra.mxu0 %v7595
    %7948 = vmatprep.subr.bf16.mxu0 %v7599
    %7949 = vmatpush1.bf16.msra.mxu0 %v7598
    %7950 = vmatprep.subr.bf16.mxu0 %v7602
    %7951 = vmatpush1.bf16.msra.mxu0 %v7601
    %7952 = vmatprep.subr.bf16.mxu0 %v7605
    %7953 = vmatpush1.bf16.msra.mxu0 %v7604
    %7954 = vmatprep.subr.bf16.mxu0 %v7608
    %7955 = vmatpush1.bf16.msra.mxu0 %v7607
    %7956 = vmatprep.subr.bf16.mxu0 %v7611
    %7957 = vmatpush1.bf16.msra.mxu0 %v7610
    %7958 = vmatprep.subr.bf16.mxu0 %v7614
    %7959 = vmatpush1.bf16.msra.mxu0 %v7613
    %7960 = vmatprep.subr.bf16.mxu0 %v7617
    %7961 = vmatpush1.bf16.msra.mxu0 %v7616
    %7962 = vmatprep.subr.bf16.mxu0 %v7620
    %7963 = vmatpush1.bf16.msra.mxu0 %v7619
    %7964 = vmatprep.subr.bf16.mxu0 %v7623
    %7965 = vmatpush1.bf16.msra.mxu0 %v7622
    %7966 = vmatprep.subr.bf16.mxu0 %v7626
    %7967 = vmatpush1.bf16.msra.mxu0 %v7625
    %7968 = vmatprep.subr.bf16.mxu0 %v7629
    %7969 = vmatpush1.bf16.msra.mxu0 %v7628
    %7970 = vmatprep.subr.bf16.mxu0 %v7632
    %7971 = vmatpush1.bf16.msra.mxu0 %v7631
    %7972 = vmatprep.mubr.bf16.mxu0 %v7447
    %7973 = vmatmul.mubr.bf16.gmra.mrb[0].mxu0 %v7446
    %v7974 = vpop.f32.mrb[0].mxu0
    %v7975 = vadd.f32 %v7902, %v7974
    %v7976 = vpop.f32.mrb[0].mxu0
    %v7977 = vadd.f32 %v7904, %v7976
    %v7978 = vpop.f32.mrb[0].mxu0
    %v7979 = vadd.f32 %v7906, %v7978
    %v7980 = vpop.f32.mrb[0].mxu0
    %v7981 = vadd.f32 %v7908, %v7980
    %7982 = vmatprep.mubr.bf16.mxu0 %v7459
    %7983 = vmatmul.mubr.bf16.gmra.mrb[0].mxu0 %v7458
    %v7984 = vpop.f32.mrb[0].mxu0
    %v7985 = vadd.f32 %v7912, %v7984
    %v7986 = vpop.f32.mrb[0].mxu0
    %v7987 = vadd.f32 %v7914, %v7986
    %v7988 = vpop.f32.mrb[0].mxu0
    %v7989 = vadd.f32 %v7916, %v7988
    %v7990 = vpop.f32.mrb[0].mxu0
    %v7991 = vadd.f32 %v7918, %v7990
    %7992 = vmatprep.mubr.bf16.mxu0 %v7471
    %7993 = vmatmul.mubr.bf16.gmra.mrb[0].mxu0 %v7470
    %v7994 = vpop.f32.mrb[0].mxu0
    %v7995 = vadd.f32 %v7922, %v7994
    %v7996 = vpop.f32.mrb[0].mxu0
    %v7997 = vadd.f32 %v7924, %v7996
    %v7998 = vpop.f32.mrb[0].mxu0
    %v7999 = vadd.f32 %v7926, %v7998
    %v8000 = vpop.f32.mrb[0].mxu0
    %v8001 = vadd.f32 %v7928, %v8000
    %8002 = vmatprep.mubr.bf16.mxu0 %v7483
    %8003 = vmatmul.mubr.bf16.gmra.mrb[0].mxu0 %v7482
    %v8004 = vpop.f32.mrb[0].mxu0
    %v8005 = vadd.f32 %v7932, %v8004
    %v8006 = vpop.f32.mrb[0].mxu0
    %v8007 = vadd.f32 %v7934, %v8006
    %v8008 = vpop.f32.mrb[0].mxu0
    %v8009 = vadd.f32 %v7936, %v8008
    %v8010 = vpop.f32.mrb[0].mxu0
    %v8011 = vadd.f32 %v7938, %v8010
    %8012 = vdwg.mxu0
    %8013 = vmatprep.subr.bf16.mxu0 %v7635
    %8014 = vmatpush1.bf16.msra.mxu0 %v7634
    %8015 = vmatprep.subr.bf16.mxu0 %v7638
    %8016 = vmatpush1.bf16.msra.mxu0 %v7637
    %8017 = vmatprep.subr.bf16.mxu0 %v7641
    %8018 = vmatpush1.bf16.msra.mxu0 %v7640
    %8019 = vmatprep.subr.bf16.mxu0 %v7644
    %8020 = vmatpush1.bf16.msra.mxu0 %v7643
    %8021 = vmatprep.subr.bf16.mxu0 %v7647
    %8022 = vmatpush1.bf16.msra.mxu0 %v7646
    %8023 = vmatprep.subr.bf16.mxu0 %v7650
    %8024 = vmatpush1.bf16.msra.mxu0 %v7649
    %8025 = vmatprep.subr.bf16.mxu0 %v7653
    %8026 = vmatpush1.bf16.msra.mxu0 %v7652
    %8027 = vmatprep.subr.bf16.mxu0 %v7656
    %8028 = vmatpush1.bf16.msra.mxu0 %v7655
    %8029 = vmatprep.subr.bf16.mxu0 %v7659
    %8030 = vmatpush1.bf16.msra.mxu0 %v7658
    %8031 = vmatprep.subr.bf16.mxu0 %v7662
    %8032 = vmatpush1.bf16.msra.mxu0 %v7661
    %8033 = vmatprep.subr.bf16.mxu0 %v7665
    %8034 = vmatpush1.bf16.msra.mxu0 %v7664
    %8035 = vmatprep.subr.bf16.mxu0 %v7668
    %8036 = vmatpush1.bf16.msra.mxu0 %v7667
    %8037 = vmatprep.subr.bf16.mxu0 %v7671
    %8038 = vmatpush1.bf16.msra.mxu0 %v7670
    %8039 = vmatprep.subr.bf16.mxu0 %v7674
    %8040 = vmatpush1.bf16.msra.mxu0 %v7673
    %8041 = vmatprep.subr.bf16.mxu0 %v7677
    %8042 = vmatpush1.bf16.msra.mxu0 %v7676
    %8043 = vmatprep.subr.bf16.mxu0 %v7680
    %8044 = vmatpush1.bf16.msra.mxu0 %v7679
    %8045 = vmatprep.mubr.bf16.mxu0 %v7449
    %8046 = vmatmul.mubr.bf16.gmra.mrb[0].mxu0 %v7448
    %v8047 = vpop.f32.mrb[0].mxu0
    %v8048 = vadd.f32 %v7975, %v8047
    %v8049 = vpop.f32.mrb[0].mxu0
    %v8050 = vadd.f32 %v7977, %v8049
    %v8051 = vpop.f32.mrb[0].mxu0
    %v8052 = vadd.f32 %v7979, %v8051
    %v8053 = vpop.f32.mrb[0].mxu0
    %v8054 = vadd.f32 %v7981, %v8053
    %8055 = vmatprep.mubr.bf16.mxu0 %v7461
    %8056 = vmatmul.mubr.bf16.gmra.mrb[0].mxu0 %v7460
    %v8057 = vpop.f32.mrb[0].mxu0
    %v8058 = vadd.f32 %v7985, %v8057
    %v8059 = vpop.f32.mrb[0].mxu0
    %v8060 = vadd.f32 %v7987, %v8059
    %v8061 = vpop.f32.mrb[0].mxu0
    %v8062 = vadd.f32 %v7989, %v8061
    %v8063 = vpop.f32.mrb[0].mxu0
    %v8064 = vadd.f32 %v7991, %v8063
    %8065 = vmatprep.mubr.bf16.mxu0 %v7473
    %8066 = vmatmul.mubr.bf16.gmra.mrb[0].mxu0 %v7472
    %v8067 = vpop.f32.mrb[0].mxu0
    %v8068 = vadd.f32 %v7995, %v8067
    %v8069 = vpop.f32.mrb[0].mxu0
    %v8070 = vadd.f32 %v7997, %v8069
    %v8071 = vpop.f32.mrb[0].mxu0
    %v8072 = vadd.f32 %v7999, %v8071
    %v8073 = vpop.f32.mrb[0].mxu0
    %v8074 = vadd.f32 %v8001, %v8073
    %8075 = vmatprep.mubr.bf16.mxu0 %v7485
    %8076 = vmatmul.mubr.bf16.gmra.mrb[0].mxu0 %v7484
    %v8077 = vpop.f32.mrb[0].mxu0
    %v8078 = vadd.f32 %v8005, %v8077
    %v8079 = vpop.f32.mrb[0].mxu0
    %v8080 = vadd.f32 %v8007, %v8079
    %v8081 = vpop.f32.mrb[0].mxu0
    %v8082 = vadd.f32 %v8009, %v8081
    %v8083 = vpop.f32.mrb[0].mxu0
    %v8084 = vadd.f32 %v8011, %v8083
    %8085 = vdwg.mxu0
    %8086 = vmatprep.subr.bf16.mxu0 %v7683
    %8087 = vmatpush1.bf16.msra.mxu0 %v7682
    %8088 = vmatprep.subr.bf16.mxu0 %v7686
    %8089 = vmatpush1.bf16.msra.mxu0 %v7685
    %8090 = vmatprep.subr.bf16.mxu0 %v7689
    %8091 = vmatpush1.bf16.msra.mxu0 %v7688
    %8092 = vmatprep.subr.bf16.mxu0 %v7692
    %8093 = vmatpush1.bf16.msra.mxu0 %v7691
    %8094 = vmatprep.subr.bf16.mxu0 %v7695
    %8095 = vmatpush1.bf16.msra.mxu0 %v7694
    %8096 = vmatprep.subr.bf16.mxu0 %v7698
    %8097 = vmatpush1.bf16.msra.mxu0 %v7697
    %8098 = vmatprep.subr.bf16.mxu0 %v7701
    %8099 = vmatpush1.bf16.msra.mxu0 %v7700
    %8100 = vmatprep.subr.bf16.mxu0 %v7704
    %8101 = vmatpush1.bf16.msra.mxu0 %v7703
    %8102 = vmatprep.subr.bf16.mxu0 %v7707
    %8103 = vmatpush1.bf16.msra.mxu0 %v7706
    %8104 = vmatprep.subr.bf16.mxu0 %v7710
    %8105 = vmatpush1.bf16.msra.mxu0 %v7709
    %8106 = vmatprep.subr.bf16.mxu0 %v7713
    %8107 = vmatpush1.bf16.msra.mxu0 %v7712
    %8108 = vmatprep.subr.bf16.mxu0 %v7716
    %8109 = vmatpush1.bf16.msra.mxu0 %v7715
    %8110 = vmatprep.subr.bf16.mxu0 %v7719
    %8111 = vmatpush1.bf16.msra.mxu0 %v7718
    %8112 = vmatprep.subr.bf16.mxu0 %v7722
    %8113 = vmatpush1.bf16.msra.mxu0 %v7721
    %8114 = vmatprep.subr.bf16.mxu0 %v7725
    %8115 = vmatpush1.bf16.msra.mxu0 %v7724
    %8116 = vmatprep.subr.bf16.mxu0 %v7728
    %8117 = vmatpush1.bf16.msra.mxu0 %v7727
    %8118 = vmatprep.mubr.bf16.mxu0 %v7451
    %8119 = vmatmul.mubr.bf16.gmra.mrb[0].mxu0 %v7450
    %v8120 = vpop.f32.mrb[0].mxu0
    %v8121 = vadd.f32 %v8048, %v8120
    %v8122 = vpop.f32.mrb[0].mxu0
    %v8123 = vadd.f32 %v8050, %v8122
    %v8124 = vpop.f32.mrb[0].mxu0
    %v8125 = vadd.f32 %v8052, %v8124
    %v8126 = vpop.f32.mrb[0].mxu0
    %v8127 = vadd.f32 %v8054, %v8126
    %8128 = vmatprep.mubr.bf16.mxu0 %v7463
    %8129 = vmatmul.mubr.bf16.gmra.mrb[0].mxu0 %v7462
    %v8130 = vpop.f32.mrb[0].mxu0
    %v8131 = vadd.f32 %v8058, %v8130
    %v8132 = vpop.f32.mrb[0].mxu0
    %v8133 = vadd.f32 %v8060, %v8132
    %v8134 = vpop.f32.mrb[0].mxu0
    %v8135 = vadd.f32 %v8062, %v8134
    %v8136 = vpop.f32.mrb[0].mxu0
    %v8137 = vadd.f32 %v8064, %v8136
    %8138 = vmatprep.mubr.bf16.mxu0 %v7475
    %8139 = vmatmul.mubr.bf16.gmra.mrb[0].mxu0 %v7474
    %v8140 = vpop.f32.mrb[0].mxu0
    %v8141 = vadd.f32 %v8068, %v8140
    %v8142 = vpop.f32.mrb[0].mxu0
    %v8143 = vadd.f32 %v8070, %v8142
    %v8144 = vpop.f32.mrb[0].mxu0
    %v8145 = vadd.f32 %v8072, %v8144
    %v8146 = vpop.f32.mrb[0].mxu0
    %v8147 = vadd.f32 %v8074, %v8146
    %8148 = vmatprep.mubr.bf16.mxu0 %v7487
    %8149 = vmatmul.mubr.bf16.gmra.mrb[0].mxu0 %v7486
    %v8150 = vpop.f32.mrb[0].mxu0
    %v8151 = vadd.f32 %v8078, %v8150
    %v8152 = vpop.f32.mrb[0].mxu0
    %v8153 = vadd.f32 %v8080, %v8152
    %v8154 = vpop.f32.mrb[0].mxu0
    %v8155 = vadd.f32 %v8082, %v8154
    %v8156 = vpop.f32.mrb[0].mxu0
    %v8157 = vadd.f32 %v8084, %v8156
    %8158 = vdwg.mxu0
    %8159 = vmatprep.subr.bf16.mxu0 %v7731
    %8160 = vmatpush1.bf16.msra.mxu0 %v7730
    %8161 = vmatprep.subr.bf16.mxu0 %v7734
    %8162 = vmatpush1.bf16.msra.mxu0 %v7733
    %8163 = vmatprep.subr.bf16.mxu0 %v7737
    %8164 = vmatpush1.bf16.msra.mxu0 %v7736
    %8165 = vmatprep.subr.bf16.mxu0 %v7740
    %8166 = vmatpush1.bf16.msra.mxu0 %v7739
    %8167 = vmatprep.subr.bf16.mxu0 %v7743
    %8168 = vmatpush1.bf16.msra.mxu0 %v7742
    %8169 = vmatprep.subr.bf16.mxu0 %v7746
    %8170 = vmatpush1.bf16.msra.mxu0 %v7745
    %8171 = vmatprep.subr.bf16.mxu0 %v7749
    %8172 = vmatpush1.bf16.msra.mxu0 %v7748
    %8173 = vmatprep.subr.bf16.mxu0 %v7752
    %8174 = vmatpush1.bf16.msra.mxu0 %v7751
    %8175 = vmatprep.subr.bf16.mxu0 %v7755
    %8176 = vmatpush1.bf16.msra.mxu0 %v7754
    %8177 = vmatprep.subr.bf16.mxu0 %v7758
    %8178 = vmatpush1.bf16.msra.mxu0 %v7757
    %8179 = vmatprep.subr.bf16.mxu0 %v7761
    %8180 = vmatpush1.bf16.msra.mxu0 %v7760
    %8181 = vmatprep.subr.bf16.mxu0 %v7764
    %8182 = vmatpush1.bf16.msra.mxu0 %v7763
    %8183 = vmatprep.subr.bf16.mxu0 %v7767
    %8184 = vmatpush1.bf16.msra.mxu0 %v7766
    %8185 = vmatprep.subr.bf16.mxu0 %v7770
    %8186 = vmatpush1.bf16.msra.mxu0 %v7769
    %8187 = vmatprep.subr.bf16.mxu0 %v7773
    %8188 = vmatpush1.bf16.msra.mxu0 %v7772
    %8189 = vmatprep.subr.bf16.mxu0 %v7776
    %8190 = vmatpush1.bf16.msra.mxu0 %v7775
    %8191 = vmatprep.mubr.bf16.mxu0 %v7453
    %8192 = vmatmul.mubr.bf16.gmra.mrb[0].mxu0 %v7452
    %v8193 = vpop.f32.mrb[0].mxu0
    %v8194 = vadd.f32 %v8121, %v8193
    %v8195 = vpop.f32.mrb[0].mxu0
    %v8196 = vadd.f32 %v8123, %v8195
    %v8197 = vpop.f32.mrb[0].mxu0
    %v8198 = vadd.f32 %v8125, %v8197
    %v8199 = vpop.f32.mrb[0].mxu0
    %v8200 = vadd.f32 %v8127, %v8199
    %8201 = vmatprep.mubr.bf16.mxu0 %v7465
    %8202 = vmatmul.mubr.bf16.gmra.mrb[0].mxu0 %v7464
    %v8203 = vpop.f32.mrb[0].mxu0
    %v8204 = vadd.f32 %v8131, %v8203
    %v8205 = vpop.f32.mrb[0].mxu0
    %v8206 = vadd.f32 %v8133, %v8205
    %v8207 = vpop.f32.mrb[0].mxu0
    %v8208 = vadd.f32 %v8135, %v8207
    %v8209 = vpop.f32.mrb[0].mxu0
    %v8210 = vadd.f32 %v8137, %v8209
    %8211 = vmatprep.mubr.bf16.mxu0 %v7477
    %8212 = vmatmul.mubr.bf16.gmra.mrb[0].mxu0 %v7476
    %v8213 = vpop.f32.mrb[0].mxu0
    %v8214 = vadd.f32 %v8141, %v8213
    %v8215 = vpop.f32.mrb[0].mxu0
    %v8216 = vadd.f32 %v8143, %v8215
    %v8217 = vpop.f32.mrb[0].mxu0
    %v8218 = vadd.f32 %v8145, %v8217
    %v8219 = vpop.f32.mrb[0].mxu0
    %v8220 = vadd.f32 %v8147, %v8219
    %8221 = vmatprep.mubr.bf16.mxu0 %v7489
    %8222 = vmatmul.mubr.bf16.gmra.mrb[0].mxu0 %v7488
    %v8223 = vpop.f32.mrb[0].mxu0
    %v8224 = vadd.f32 %v8151, %v8223
    %v8225 = vpop.f32.mrb[0].mxu0
    %v8226 = vadd.f32 %v8153, %v8225
    %v8227 = vpop.f32.mrb[0].mxu0
    %v8228 = vadd.f32 %v8155, %v8227
    %v8229 = vpop.f32.mrb[0].mxu0
    %v8230 = vadd.f32 %v8157, %v8229
    %8231 = vdwg.mxu0
    %8232 = vmatprep.subr.bf16.mxu0 0
    %8233 = vmatpush1.bf16.msra.mxu0 %v7492
    %8234 = vmatprep.subr.bf16.mxu0 0
    %8235 = vmatpush1.bf16.msra.mxu0 %v7495
    %8236 = vmatprep.subr.bf16.mxu0 0
    %8237 = vmatpush1.bf16.msra.mxu0 %v7498
    %8238 = vmatprep.subr.bf16.mxu0 0
    %8239 = vmatpush1.bf16.msra.mxu0 %v7501
    %8240 = vmatprep.subr.bf16.mxu0 0
    %8241 = vmatpush1.bf16.msra.mxu0 %v7504
    %8242 = vmatprep.subr.bf16.mxu0 0
    %8243 = vmatpush1.bf16.msra.mxu0 %v7507
    %8244 = vmatprep.subr.bf16.mxu0 0
    %8245 = vmatpush1.bf16.msra.mxu0 %v7510
    %8246 = vmatprep.subr.bf16.mxu0 0
    %8247 = vmatpush1.bf16.msra.mxu0 %v7513
    %8248 = vmatprep.subr.bf16.mxu0 0
    %8249 = vmatpush1.bf16.msra.mxu0 %v7516
    %8250 = vmatprep.subr.bf16.mxu0 0
    %8251 = vmatpush1.bf16.msra.mxu0 %v7519
    %8252 = vmatprep.subr.bf16.mxu0 0
    %8253 = vmatpush1.bf16.msra.mxu0 %v7522
    %8254 = vmatprep.subr.bf16.mxu0 0
    %8255 = vmatpush1.bf16.msra.mxu0 %v7525
    %8256 = vmatprep.subr.bf16.mxu0 0
    %8257 = vmatpush1.bf16.msra.mxu0 %v7528
    %8258 = vmatprep.subr.bf16.mxu0 0
    %8259 = vmatpush1.bf16.msra.mxu0 %v7531
    %8260 = vmatprep.subr.bf16.mxu0 0
    %8261 = vmatpush1.bf16.msra.mxu0 %v7534
    %8262 = vmatprep.subr.bf16.mxu0 0
    %8263 = vmatpush1.bf16.msra.mxu0 %v7537
    %8264 = vmatprep.mubr.bf16.mxu0 %v7443
    %8265 = vmatmul.mubr.bf16.gmra.mrb[0].mxu0 %v7442
    %v8266 = vpop.f32.mrb[0].mxu0
    %v8267 = vadd.f32 %v7790, %v8266
    %v8268 = vpop.f32.mrb[0].mxu0
    %v8269 = vpop.f32.mrb[0].mxu0
    %v8270 = vadd.f32 %v7790, %v8269
    %v8271 = vpop.f32.mrb[0].mxu0
    %8272 = vmatprep.mubr.bf16.mxu0 %v7455
    %8273 = vmatmul.mubr.bf16.gmra.mrb[0].mxu0 %v7454
    %v8274 = vpop.f32.mrb[0].mxu0
    %v8275 = vadd.f32 %v7790, %v8274
    %v8276 = vpop.f32.mrb[0].mxu0
    %v8277 = vpop.f32.mrb[0].mxu0
    %v8278 = vadd.f32 %v7790, %v8277
    %v8279 = vpop.f32.mrb[0].mxu0
    %8280 = vmatprep.mubr.bf16.mxu0 %v7467
    %8281 = vmatmul.mubr.bf16.gmra.mrb[0].mxu0 %v7466
    %v8282 = vpop.f32.mrb[0].mxu0
    %v8283 = vadd.f32 %v7790, %v8282
    %v8284 = vpop.f32.mrb[0].mxu0
    %v8285 = vpop.f32.mrb[0].mxu0
    %v8286 = vadd.f32 %v7790, %v8285
    %v8287 = vpop.f32.mrb[0].mxu0
    %8288 = vmatprep.mubr.bf16.mxu0 %v7479
    %8289 = vmatmul.mubr.bf16.gmra.mrb[0].mxu0 %v7478
    %v8290 = vpop.f32.mrb[0].mxu0
    %v8291 = vadd.f32 %v7790, %v8290
    %v8292 = vpop.f32.mrb[0].mxu0
    %v8293 = vpop.f32.mrb[0].mxu0
    %v8294 = vadd.f32 %v7790, %v8293
    %v8295 = vpop.f32.mrb[0].mxu0
    %8296 = vdwg.mxu0
    %8297 = vmatprep.subr.bf16.mxu0 0
    %8298 = vmatpush1.bf16.msra.mxu0 %v7540
    %8299 = vmatprep.subr.bf16.mxu0 0
    %8300 = vmatpush1.bf16.msra.mxu0 %v7543
    %8301 = vmatprep.subr.bf16.mxu0 0
    %8302 = vmatpush1.bf16.msra.mxu0 %v7546
    %8303 = vmatprep.subr.bf16.mxu0 0
    %8304 = vmatpush1.bf16.msra.mxu0 %v7549
    %8305 = vmatprep.subr.bf16.mxu0 0
    %8306 = vmatpush1.bf16.msra.mxu0 %v7552
    %8307 = vmatprep.subr.bf16.mxu0 0
    %8308 = vmatpush1.bf16.msra.mxu0 %v7555
    %8309 = vmatprep.subr.bf16.mxu0 0
    %8310 = vmatpush1.bf16.msra.mxu0 %v7558
    %8311 = vmatprep.subr.bf16.mxu0 0
    %8312 = vmatpush1.bf16.msra.mxu0 %v7561
    %8313 = vmatprep.subr.bf16.mxu0 0
    %8314 = vmatpush1.bf16.msra.mxu0 %v7564
    %8315 = vmatprep.subr.bf16.mxu0 0
    %8316 = vmatpush1.bf16.msra.mxu0 %v7567
    %8317 = vmatprep.subr.bf16.mxu0 0
    %8318 = vmatpush1.bf16.msra.mxu0 %v7570
    %8319 = vmatprep.subr.bf16.mxu0 0
    %8320 = vmatpush1.bf16.msra.mxu0 %v7573
    %8321 = vmatprep.subr.bf16.mxu0 0
    %8322 = vmatpush1.bf16.msra.mxu0 %v7576
    %8323 = vmatprep.subr.bf16.mxu0 0
    %8324 = vmatpush1.bf16.msra.mxu0 %v7579
    %8325 = vmatprep.subr.bf16.mxu0 0
    %8326 = vmatpush1.bf16.msra.mxu0 %v7582
    %8327 = vmatprep.subr.bf16.mxu0 0
    %8328 = vmatpush1.bf16.msra.mxu0 %v7585
    %8329 = vmatprep.mubr.bf16.mxu0 %v7445
    %8330 = vmatmul.mubr.bf16.gmra.mrb[0].mxu0 %v7444
    %v8331 = vpop.f32.mrb[0].mxu0
    %v8332 = vadd.f32 %v8267, %v8331
    %v8333 = vpop.f32.mrb[0].mxu0
    %v8334 = vpop.f32.mrb[0].mxu0
    %v8335 = vadd.f32 %v8270, %v8334
    %v8336 = vpop.f32.mrb[0].mxu0
    %8337 = vmatprep.mubr.bf16.mxu0 %v7457
    %8338 = vmatmul.mubr.bf16.gmra.mrb[0].mxu0 %v7456
    %v8339 = vpop.f32.mrb[0].mxu0
    %v8340 = vadd.f32 %v8275, %v8339
    %v8341 = vpop.f32.mrb[0].mxu0
    %v8342 = vpop.f32.mrb[0].mxu0
    %v8343 = vadd.f32 %v8278, %v8342
    %v8344 = vpop.f32.mrb[0].mxu0
    %8345 = vmatprep.mubr.bf16.mxu0 %v7469
    %8346 = vmatmul.mubr.bf16.gmra.mrb[0].mxu0 %v7468
    %v8347 = vpop.f32.mrb[0].mxu0
    %v8348 = vadd.f32 %v8283, %v8347
    %v8349 = vpop.f32.mrb[0].mxu0
    %v8350 = vpop.f32.mrb[0].mxu0
    %v8351 = vadd.f32 %v8286, %v8350
    %v8352 = vpop.f32.mrb[0].mxu0
    %8353 = vmatprep.mubr.bf16.mxu0 %v7481
    %8354 = vmatmul.mubr.bf16.gmra.mrb[0].mxu0 %v7480
    %v8355 = vpop.f32.mrb[0].mxu0
    %v8356 = vadd.f32 %v8291, %v8355
    %v8357 = vpop.f32.mrb[0].mxu0
    %v8358 = vpop.f32.mrb[0].mxu0
    %v8359 = vadd.f32 %v8294, %v8358
    %v8360 = vpop.f32.mrb[0].mxu0
    %8361 = vdwg.mxu0
    %8362 = vmatprep.subr.bf16.mxu0 0
    %8363 = vmatpush1.bf16.msra.mxu0 %v7588
    %8364 = vmatprep.subr.bf16.mxu0 0
    %8365 = vmatpush1.bf16.msra.mxu0 %v7591
    %8366 = vmatprep.subr.bf16.mxu0 0
    %8367 = vmatpush1.bf16.msra.mxu0 %v7594
    %8368 = vmatprep.subr.bf16.mxu0 0
    %8369 = vmatpush1.bf16.msra.mxu0 %v7597
    %8370 = vmatprep.subr.bf16.mxu0 0
    %8371 = vmatpush1.bf16.msra.mxu0 %v7600
    %8372 = vmatprep.subr.bf16.mxu0 0
    %8373 = vmatpush1.bf16.msra.mxu0 %v7603
    %8374 = vmatprep.subr.bf16.mxu0 0
    %8375 = vmatpush1.bf16.msra.mxu0 %v7606
    %8376 = vmatprep.subr.bf16.mxu0 0
    %8377 = vmatpush1.bf16.msra.mxu0 %v7609
    %8378 = vmatprep.subr.bf16.mxu0 0
    %8379 = vmatpush1.bf16.msra.mxu0 %v7612
    %8380 = vmatprep.subr.bf16.mxu0 0
    %8381 = vmatpush1.bf16.msra.mxu0 %v7615
    %8382 = vmatprep.subr.bf16.mxu0 0
    %8383 = vmatpush1.bf16.msra.mxu0 %v7618
    %8384 = vmatprep.subr.bf16.mxu0 0
    %8385 = vmatpush1.bf16.msra.mxu0 %v7621
    %8386 = vmatprep.subr.bf16.mxu0 0
    %8387 = vmatpush1.bf16.msra.mxu0 %v7624
    %8388 = vmatprep.subr.bf16.mxu0 0
    %8389 = vmatpush1.bf16.msra.mxu0 %v7627
    %8390 = vmatprep.subr.bf16.mxu0 0
    %8391 = vmatpush1.bf16.msra.mxu0 %v7630
    %8392 = vmatprep.subr.bf16.mxu0 0
    %8393 = vmatpush1.bf16.msra.mxu0 %v7633
    %8394 = vmatprep.mubr.bf16.mxu0 %v7447
    %8395 = vmatmul.mubr.bf16.gmra.mrb[0].mxu0 %v7446
    %v8396 = vpop.f32.mrb[0].mxu0
    %v8397 = vadd.f32 %v8332, %v8396
    %v8398 = vpop.f32.mrb[0].mxu0
    %v8399 = vpop.f32.mrb[0].mxu0
    %v8400 = vadd.f32 %v8335, %v8399
    %v8401 = vpop.f32.mrb[0].mxu0
    %8402 = vmatprep.mubr.bf16.mxu0 %v7459
    %8403 = vmatmul.mubr.bf16.gmra.mrb[0].mxu0 %v7458
    %v8404 = vpop.f32.mrb[0].mxu0
    %v8405 = vadd.f32 %v8340, %v8404
    %v8406 = vpop.f32.mrb[0].mxu0
    %v8407 = vpop.f32.mrb[0].mxu0
    %v8408 = vadd.f32 %v8343, %v8407
    %v8409 = vpop.f32.mrb[0].mxu0
    %8410 = vmatprep.mubr.bf16.mxu0 %v7471
    %8411 = vmatmul.mubr.bf16.gmra.mrb[0].mxu0 %v7470
    %v8412 = vpop.f32.mrb[0].mxu0
    %v8413 = vadd.f32 %v8348, %v8412
    %v8414 = vpop.f32.mrb[0].mxu0
    %v8415 = vpop.f32.mrb[0].mxu0
    %v8416 = vadd.f32 %v8351, %v8415
    %v8417 = vpop.f32.mrb[0].mxu0
    %8418 = vmatprep.mubr.bf16.mxu0 %v7483
    %8419 = vmatmul.mubr.bf16.gmra.mrb[0].mxu0 %v7482
    %v8420 = vpop.f32.mrb[0].mxu0
    %v8421 = vadd.f32 %v8356, %v8420
    %v8422 = vpop.f32.mrb[0].mxu0
    %v8423 = vpop.f32.mrb[0].mxu0
    %v8424 = vadd.f32 %v8359, %v8423
    %v8425 = vpop.f32.mrb[0].mxu0
    %8426 = vdwg.mxu0
    %8427 = vmatprep.subr.bf16.mxu0 0
    %8428 = vmatpush1.bf16.msra.mxu0 %v7636
    %8429 = vmatprep.subr.bf16.mxu0 0
    %8430 = vmatpush1.bf16.msra.mxu0 %v7639
    %8431 = vmatprep.subr.bf16.mxu0 0
    %8432 = vmatpush1.bf16.msra.mxu0 %v7642
    %8433 = vmatprep.subr.bf16.mxu0 0
    %8434 = vmatpush1.bf16.msra.mxu0 %v7645
    %8435 = vmatprep.subr.bf16.mxu0 0
    %8436 = vmatpush1.bf16.msra.mxu0 %v7648
    %8437 = vmatprep.subr.bf16.mxu0 0
    %8438 = vmatpush1.bf16.msra.mxu0 %v7651
    %8439 = vmatprep.subr.bf16.mxu0 0
    %8440 = vmatpush1.bf16.msra.mxu0 %v7654
    %8441 = vmatprep.subr.bf16.mxu0 0
    %8442 = vmatpush1.bf16.msra.mxu0 %v7657
    %8443 = vmatprep.subr.bf16.mxu0 0
    %8444 = vmatpush1.bf16.msra.mxu0 %v7660
    %8445 = vmatprep.subr.bf16.mxu0 0
    %8446 = vmatpush1.bf16.msra.mxu0 %v7663
    %8447 = vmatprep.subr.bf16.mxu0 0
    %8448 = vmatpush1.bf16.msra.mxu0 %v7666
    %8449 = vmatprep.subr.bf16.mxu0 0
    %8450 = vmatpush1.bf16.msra.mxu0 %v7669
    %8451 = vmatprep.subr.bf16.mxu0 0
    %8452 = vmatpush1.bf16.msra.mxu0 %v7672
    %8453 = vmatprep.subr.bf16.mxu0 0
    %8454 = vmatpush1.bf16.msra.mxu0 %v7675
    %8455 = vmatprep.subr.bf16.mxu0 0
    %8456 = vmatpush1.bf16.msra.mxu0 %v7678
    %8457 = vmatprep.subr.bf16.mxu0 0
    %8458 = vmatpush1.bf16.msra.mxu0 %v7681
    %8459 = vmatprep.mubr.bf16.mxu0 %v7449
    %8460 = vmatmul.mubr.bf16.gmra.mrb[0].mxu0 %v7448
    %v8461 = vpop.f32.mrb[0].mxu0
    %v8462 = vadd.f32 %v8397, %v8461
    %v8463 = vpop.f32.mrb[0].mxu0
    %v8464 = vpop.f32.mrb[0].mxu0
    %v8465 = vadd.f32 %v8400, %v8464
    %v8466 = vpop.f32.mrb[0].mxu0
    %8467 = vmatprep.mubr.bf16.mxu0 %v7461
    %8468 = vmatmul.mubr.bf16.gmra.mrb[0].mxu0 %v7460
    %v8469 = vpop.f32.mrb[0].mxu0
    %v8470 = vadd.f32 %v8405, %v8469
    %v8471 = vpop.f32.mrb[0].mxu0
    %v8472 = vpop.f32.mrb[0].mxu0
    %v8473 = vadd.f32 %v8408, %v8472
    %v8474 = vpop.f32.mrb[0].mxu0
    %8475 = vmatprep.mubr.bf16.mxu0 %v7473
    %8476 = vmatmul.mubr.bf16.gmra.mrb[0].mxu0 %v7472
    %v8477 = vpop.f32.mrb[0].mxu0
    %v8478 = vadd.f32 %v8413, %v8477
    %v8479 = vpop.f32.mrb[0].mxu0
    %v8480 = vpop.f32.mrb[0].mxu0
    %v8481 = vadd.f32 %v8416, %v8480
    %v8482 = vpop.f32.mrb[0].mxu0
    %8483 = vmatprep.mubr.bf16.mxu0 %v7485
    %8484 = vmatmul.mubr.bf16.gmra.mrb[0].mxu0 %v7484
    %v8485 = vpop.f32.mrb[0].mxu0
    %v8486 = vadd.f32 %v8421, %v8485
    %v8487 = vpop.f32.mrb[0].mxu0
    %v8488 = vpop.f32.mrb[0].mxu0
    %v8489 = vadd.f32 %v8424, %v8488
    %v8490 = vpop.f32.mrb[0].mxu0
    %8491 = vdwg.mxu0
    %8492 = vmatprep.subr.bf16.mxu0 0
    %8493 = vmatpush1.bf16.msra.mxu0 %v7684
    %8494 = vmatprep.subr.bf16.mxu0 0
    %8495 = vmatpush1.bf16.msra.mxu0 %v7687
    %8496 = vmatprep.subr.bf16.mxu0 0
    %8497 = vmatpush1.bf16.msra.mxu0 %v7690
    %8498 = vmatprep.subr.bf16.mxu0 0
    %8499 = vmatpush1.bf16.msra.mxu0 %v7693
    %8500 = vmatprep.subr.bf16.mxu0 0
    %8501 = vmatpush1.bf16.msra.mxu0 %v7696
    %8502 = vmatprep.subr.bf16.mxu0 0
    %8503 = vmatpush1.bf16.msra.mxu0 %v7699
    %8504 = vmatprep.subr.bf16.mxu0 0
    %8505 = vmatpush1.bf16.msra.mxu0 %v7702
    %8506 = vmatprep.subr.bf16.mxu0 0
    %8507 = vmatpush1.bf16.msra.mxu0 %v7705
    %8508 = vmatprep.subr.bf16.mxu0 0
    %8509 = vmatpush1.bf16.msra.mxu0 %v7708
    %8510 = vmatprep.subr.bf16.mxu0 0
    %8511 = vmatpush1.bf16.msra.mxu0 %v7711
    %8512 = vmatprep.subr.bf16.mxu0 0
    %8513 = vmatpush1.bf16.msra.mxu0 %v7714
    %8514 = vmatprep.subr.bf16.mxu0 0
    %8515 = vmatpush1.bf16.msra.mxu0 %v7717
    %8516 = vmatprep.subr.bf16.mxu0 0
    %8517 = vmatpush1.bf16.msra.mxu0 %v7720
    %8518 = vmatprep.subr.bf16.mxu0 0
    %8519 = vmatpush1.bf16.msra.mxu0 %v7723
    %8520 = vmatprep.subr.bf16.mxu0 0
    %8521 = vmatpush1.bf16.msra.mxu0 %v7726
    %8522 = vmatprep.subr.bf16.mxu0 0
    %8523 = vmatpush1.bf16.msra.mxu0 %v7729
    %8524 = vmatprep.mubr.bf16.mxu0 %v7451
    %8525 = vmatmul.mubr.bf16.gmra.mrb[0].mxu0 %v7450
    %v8526 = vpop.f32.mrb[0].mxu0
    %v8527 = vadd.f32 %v8462, %v8526
    %v8528 = vpop.f32.mrb[0].mxu0
    %v8529 = vpop.f32.mrb[0].mxu0
    %v8530 = vadd.f32 %v8465, %v8529
    %v8531 = vpop.f32.mrb[0].mxu0
    %8532 = vmatprep.mubr.bf16.mxu0 %v7463
    %8533 = vmatmul.mubr.bf16.gmra.mrb[0].mxu0 %v7462
    %v8534 = vpop.f32.mrb[0].mxu0
    %v8535 = vadd.f32 %v8470, %v8534
    %v8536 = vpop.f32.mrb[0].mxu0
    %v8537 = vpop.f32.mrb[0].mxu0
    %v8538 = vadd.f32 %v8473, %v8537
    %v8539 = vpop.f32.mrb[0].mxu0
    %8540 = vmatprep.mubr.bf16.mxu0 %v7475
    %8541 = vmatmul.mubr.bf16.gmra.mrb[0].mxu0 %v7474
    %v8542 = vpop.f32.mrb[0].mxu0
    %v8543 = vadd.f32 %v8478, %v8542
    %v8544 = vpop.f32.mrb[0].mxu0
    %v8545 = vpop.f32.mrb[0].mxu0
    %v8546 = vadd.f32 %v8481, %v8545
    %v8547 = vpop.f32.mrb[0].mxu0
    %8548 = vmatprep.mubr.bf16.mxu0 %v7487
    %8549 = vmatmul.mubr.bf16.gmra.mrb[0].mxu0 %v7486
    %v8550 = vpop.f32.mrb[0].mxu0
    %v8551 = vadd.f32 %v8486, %v8550
    %v8552 = vpop.f32.mrb[0].mxu0
    %v8553 = vpop.f32.mrb[0].mxu0
    %v8554 = vadd.f32 %v8489, %v8553
    %v8555 = vpop.f32.mrb[0].mxu0
    %8556 = vdwg.mxu0
    %8557 = vmatprep.subr.bf16.mxu0 0
    %8558 = vmatpush1.bf16.msra.mxu0 %v7732
    %8559 = vmatprep.subr.bf16.mxu0 0
    %8560 = vmatpush1.bf16.msra.mxu0 %v7735
    %8561 = vmatprep.subr.bf16.mxu0 0
    %8562 = vmatpush1.bf16.msra.mxu0 %v7738
    %8563 = vmatprep.subr.bf16.mxu0 0
    %8564 = vmatpush1.bf16.msra.mxu0 %v7741
    %8565 = vmatprep.subr.bf16.mxu0 0
    %8566 = vmatpush1.bf16.msra.mxu0 %v7744
    %8567 = vmatprep.subr.bf16.mxu0 0
    %8568 = vmatpush1.bf16.msra.mxu0 %v7747
    %8569 = vmatprep.subr.bf16.mxu0 0
    %8570 = vmatpush1.bf16.msra.mxu0 %v7750
    %8571 = vmatprep.subr.bf16.mxu0 0
    %8572 = vmatpush1.bf16.msra.mxu0 %v7753
    %8573 = vmatprep.subr.bf16.mxu0 0
    %8574 = vmatpush1.bf16.msra.mxu0 %v7756
    %8575 = vmatprep.subr.bf16.mxu0 0
    %8576 = vmatpush1.bf16.msra.mxu0 %v7759
    %8577 = vmatprep.subr.bf16.mxu0 0
    %8578 = vmatpush1.bf16.msra.mxu0 %v7762
    %8579 = vmatprep.subr.bf16.mxu0 0
    %8580 = vmatpush1.bf16.msra.mxu0 %v7765
    %8581 = vmatprep.subr.bf16.mxu0 0
    %8582 = vmatpush1.bf16.msra.mxu0 %v7768
    %8583 = vmatprep.subr.bf16.mxu0 0
    %8584 = vmatpush1.bf16.msra.mxu0 %v7771
    %8585 = vmatprep.subr.bf16.mxu0 0
    %8586 = vmatpush1.bf16.msra.mxu0 %v7774
    %8587 = vmatprep.subr.bf16.mxu0 0
    %8588 = vmatpush1.bf16.msra.mxu0 %v7777
    %8589 = vmatprep.mubr.bf16.mxu0 %v7453
    %8590 = vmatmul.mubr.bf16.gmra.mrb[0].mxu0 %v7452
    %v8591 = vpop.f32.mrb[0].mxu0
    %v8592 = vadd.f32 %v8527, %v8591
    %v8593 = vpop.f32.mrb[0].mxu0
    %v8594 = vpop.f32.mrb[0].mxu0
    %v8595 = vadd.f32 %v8530, %v8594
    %v8596 = vpop.f32.mrb[0].mxu0
    %8597 = vmatprep.mubr.bf16.mxu0 %v7465
    %8598 = vmatmul.mubr.bf16.gmra.mrb[0].mxu0 %v7464
    %v8599 = vpop.f32.mrb[0].mxu0
    %v8600 = vadd.f32 %v8535, %v8599
    %v8601 = vpop.f32.mrb[0].mxu0
    %v8602 = vpop.f32.mrb[0].mxu0
    %v8603 = vadd.f32 %v8538, %v8602
    %v8604 = vpop.f32.mrb[0].mxu0
    %8605 = vmatprep.mubr.bf16.mxu0 %v7477
    %8606 = vmatmul.mubr.bf16.gmra.mrb[0].mxu0 %v7476
    %v8607 = vpop.f32.mrb[0].mxu0
    %v8608 = vadd.f32 %v8543, %v8607
    %v8609 = vpop.f32.mrb[0].mxu0
    %v8610 = vpop.f32.mrb[0].mxu0
    %v8611 = vadd.f32 %v8546, %v8610
    %v8612 = vpop.f32.mrb[0].mxu0
    %8613 = vmatprep.mubr.bf16.mxu0 %v7489
    %8614 = vmatmul.mubr.bf16.gmra.mrb[0].mxu0 %v7488
    %v8615 = vpop.f32.mrb[0].mxu0
    %v8616 = vadd.f32 %v8551, %v8615
    %v8617 = vpop.f32.mrb[0].mxu0
    %v8618 = vpop.f32.mrb[0].mxu0
    %v8619 = vadd.f32 %v8554, %v8618
    %v8620 = vpop.f32.mrb[0].mxu0
    %8621 = vdwg.mxu0
    %v8622 = vadd.f32 %v5812, %v8194
    %v8623 = vadd.f32 %v5813, %v8196
    %v8624 = vadd.f32 %v5814, %v8592
    %v8625 = vadd.f32 %v5815, %v8198
    %v8626 = vadd.f32 %v5816, %v8200
    %v8627 = vadd.f32 %v5817, %v8595
    %v8628 = vadd.f32 %v5818, %v8204
    %v8629 = vadd.f32 %v5819, %v8206
    %v8630 = vadd.f32 %v5820, %v8600
    %v8631 = vadd.f32 %v5821, %v8208
    %v8632 = vadd.f32 %v5822, %v8210
    %v8633 = vadd.f32 %v5823, %v8603
    %v8634 = vadd.f32 %v5824, %v8214
    %v8635 = vadd.f32 %v5825, %v8216
    %v8636 = vadd.f32 %v5826, %v8608
    %v8637 = vadd.f32 %v5827, %v8218
    %v8638 = vadd.f32 %v5828, %v8220
    %v8639 = vadd.f32 %v5829, %v8611
    %v8640 = vadd.f32 %v5830, %v8224
    %v8641 = vadd.f32 %v5831, %v8226
    %v8642 = vadd.f32 %v5832, %v8616
    %v8643 = vadd.f32 %v5833, %v8228
    %v8644 = vadd.f32 %v5834, %v8230
    %v8645 = vadd.f32 %v5835, %v8619
    %8646 = vst [vmem:[#allocation16] sm:$0xff] %v8622
    %8647 = vst [vmem:[#allocation16 + $0x8] sm:$0xff] %v8623
    %8648 = vst [vmem:[#allocation16 + $0x10] sm:$0xff] %v8624
    %8649 = vst [vmem:[#allocation16 + $0x18] sm:$0xff] %v8625
    %8650 = vst [vmem:[#allocation16 + $0x20] sm:$0xff] %v8626
    %8651 = vst [vmem:[#allocation16 + $0x28] sm:$0xff] %v8627
    %8652 = vst [vmem:[#allocation16 + $0x30] sm:$0xff] %v8628
    %8653 = vst [vmem:[#allocation16 + $0x38] sm:$0xff] %v8629
    %8654 = vst [vmem:[#allocation16 + $0x40] sm:$0xff] %v8630
    %8655 = vst [vmem:[#allocation16 + $0x48] sm:$0xff] %v8631
    %8656 = vst [vmem:[#allocation16 + $0x50] sm:$0xff] %v8632
    %8657 = vst [vmem:[#allocation16 + $0x58] sm:$0xff] %v8633
    %8658 = vst [vmem:[#allocation16 + $0x60] sm:$0xff] %v8634
    %8659 = vst [vmem:[#allocation16 + $0x68] sm:$0xff] %v8635
    %8660 = vst [vmem:[#allocation16 + $0x70] sm:$0xff] %v8636
    %8661 = vst [vmem:[#allocation16 + $0x78] sm:$0xff] %v8637
    %8662 = vst [vmem:[#allocation16 + $0x80] sm:$0xff] %v8638
    %8663 = vst [vmem:[#allocation16 + $0x88] sm:$0xff] %v8639
    %8664 = vst [vmem:[#allocation16 + $0x90] sm:$0xff] %v8640
    %8665 = vst [vmem:[#allocation16 + $0x98] sm:$0xff] %v8641
    %8666 = vst [vmem:[#allocation16 + $0xa0] sm:$0xff] %v8642
    %8667 = vst [vmem:[#allocation16 + $0xa8] sm:$0xff] %v8643
    %8668 = vst [vmem:[#allocation16 + $0xb0] sm:$0xff] %v8644
    %8669 = vst [vmem:[#allocation16 + $0xb8] sm:$0xff] %v8645
    // Predicated region
    $region50: #{tpu_custom_call.1} parent=1 // pred_check
      _
    $region51: #{tpu_custom_call.1} parent=1 // pred_check_branch
      %8671 = sbr.rel (0) target = $region53
    $region52: #{tpu_custom_call.1} parent=1 // pred_region
      %s8673 = ssub.s32 3072, 3072
      %8674 = vsyncadd [#allocation7], %s8673
      %s8675 = sshll.u32 [#allocation16], 4
      %s8676 = int_to_ptr.vmem [resolvable:$true] %s8675
      %8681 = dma.vmem_to_hbm [thread:$0]  %s8676, 3072, %s8, [#allocation7], 384, 384, 24
    $region53: #{tpu_custom_call.1} parent=1 // pred_fallthru
      _
    // Predicated region
    $region54: #{tpu_custom_call.1} parent=1 // pred_check
      _
    $region55: #{tpu_custom_call.1} parent=1 // pred_check_branch
      %8683 = sbr.rel (0) target = $region57
    $region56: #{tpu_custom_call.1} parent=1 // pred_region
      %8684 = dma.done [#allocation7], 3072
    $region57: #{tpu_custom_call.1} parent=1 // pred_fallthru
      _
    %8685 = vsyncpa [#allocation6], 1
    %8686 = vsyncpa [#allocation9], 1
    %8687 = vsyncpa [#allocation12], 1
    %8688 = vsyncpa [#allocation15], 1
    %8689 = vsyncpa [#allocation7], 1
  %8690 = vsyncmov [#allocation4]
  %s8691 = vpop.sfrf %8690
  %p8692 = scmp.eq.s32.totalorder %s8691, 0
  %p8693 = pneg %p8692
  %8695 = shalt.err (%p8693)
  %s8696 = scalar_lea.sflag [#allocation4], 1
  %8697 = vsyncmov %s8696
  %s8698 = vpop.sfrf %8697
  %p8699 = scmp.eq.s32.totalorder %s8698, 0
  %p8700 = pneg %p8699
  %8702 = shalt.err (%p8700)

</llo_original>
